<compile_context>
chip_gen: v5e
topology: v5e:2x2
jax: 0.10.0
libtpu: 0.0.40
codegen_flags: <defaults>
</compile_context>

<pallas_src>
import math
from functools import partial

import numpy as np
import jax
import jax.numpy as jnp
from jax.experimental import pallas as pl
from jax.experimental.pallas import tpu as pltpu


# ---------------------------------------------------------------------------
# Fused kernel: 1x1 conv -> Haar split -> MHA(a) + depthwise chain(h+v+d) -> add
# One grid step == one batch element; channels-first (C, positions) layout.
# ---------------------------------------------------------------------------
def _wds_kernel(x_ref, w1_ref, b1_ref, wq_ref, bq_ref, wk_ref, bk_ref,
                wv_ref, bv_ref, wo_ref, bo_ref,
                wd1_ref, bd1_ref, wd2_ref, bd2_ref, mask_ref,
                o_ref, ctx_ref,
                *, S, C, W2, num_heads, mxu_dtype):
    f32 = jnp.float32
    dh = C // num_heads

    def mx(t):                       # MXU operand dtype (bf16 at production scale)
        return t.astype(mxu_dtype)

    # ---- WFD: 1x1 conv (channels-first NN matmul) + Haar quadrant split ------
    x = x_ref[0]                                              # (C, 4S) NCHW slab
    y = jnp.dot(mx(w1_ref[...]), mx(x), preferred_element_type=f32) + b1_ref[...]
    a = y[:, 0 * S:1 * S]                                     # quadrant 0, (C, S)
    hvd = y[:, 1 * S:2 * S] + y[:, 2 * S:3 * S] + y[:, 3 * S:4 * S]

    # ---- multi-head self-attention over `a` (channels-first) -----------------
    # 1/sqrt(dh) is pre-folded into wq/bq by the wrapper (zero in-kernel cost).
    a_m = mx(a)
    q = jnp.dot(mx(wq_ref[...]), a_m, preferred_element_type=f32) + bq_ref[...]
    k = jnp.dot(mx(wk_ref[...]), a_m, preferred_element_type=f32) + bk_ref[...]
    v = jnp.dot(mx(wv_ref[...]), a_m, preferred_element_type=f32) + bv_ref[...]

    for h in range(num_heads):                                # static unroll
        lo, hi = h * dh, (h + 1) * dh
        qh, kh, vh = q[lo:hi, :], k[lo:hi, :], v[lo:hi, :]    # (dh, S)
        # logits[s_q, s_k] = sum_d q[d, s_q] * k[d, s_k]
        logits = jax.lax.dot_general(mx(qh), mx(kh),
                                     (((0,), (0,)), ((), ())),
                                     preferred_element_type=f32)        # (S, S)
        logits = logits - jnp.max(logits, axis=-1, keepdims=True)
        p = jnp.exp(logits)
        p = p * pl.reciprocal(jnp.sum(p, axis=-1, keepdims=True), approx=True)
        # ctx[d, s_q] = sum_{s_k} v[d, s_k] * p[s_q, s_k]
        ctx_h = jax.lax.dot_general(mx(vh), mx(p),
                                    (((1,), (1,)), ((), ())),
                                    preferred_element_type=f32)         # (dh, S)
        ctx_ref[lo:hi, :] = ctx_h
    # output projection hoisted out of the head loop: one full-K matmul
    attn = jnp.dot(mx(wo_ref[...]), mx(ctx_ref[...]),
                   preferred_element_type=f32) + bo_ref[...]            # (C, S)

    # ---- depthwise 3x3 / dilated-3x3 chain on hvd (rolls + boundary masks) ---
    masks = mask_ref[...]                                     # (18, S) 0/1 taps

    def dwconv(inp, wd, bias_col, dilation, mask_row0):
        acc = None
        for ky in range(3):
            for kx in range(3):
                t = ky * 3 + kx
                delta = dilation * ((ky - 1) * W2 + (kx - 1))
                if delta == 0:                                # centre tap: no mask
                    contrib = inp * wd[:, t:t + 1]
                else:
                    shifted = pltpu.roll(inp, shift=(-delta) % S, axis=1)
                    r = mask_row0 + t
                    contrib = shifted * wd[:, t:t + 1] * masks[r:r + 1, :]
                acc = contrib if acc is None else acc + contrib
        return acc + bias_col

    c1 = dwconv(hvd, wd1_ref[...], bd1_ref[...], dilation=1, mask_row0=0)
    c2 = dwconv(c1, wd2_ref[...], bd2_ref[...], dilation=2, mask_row0=9)

    o_ref[0] = (attn + c2).astype(o_ref.dtype)


# ---------------------------------------------------------------------------
# Wrapper
# ---------------------------------------------------------------------------
def _tap_masks_np(H2, W2):
    """(18, S) 0/1 tap-validity masks for both depthwise convs (numpy constant)."""
    S = H2 * W2
    i = np.arange(S) // W2
    j = np.arange(S) % W2
    rows = []
    for dilation in (1, 2):
        for ky in range(3):
            for kx in range(3):
                dy, dx = dilation * (ky - 1), dilation * (kx - 1)
                ok = (i + dy >= 0) & (i + dy < H2) & (j + dx >= 0) & (j + dx < W2)
                rows.append(ok.astype(np.float32))
    return np.stack(rows, axis=0)


def wavelet_downsample_forward(x_nchw, params, *, num_heads,
                               mxu_dtype=jnp.float32):
    """x_nchw: (B, C, H, W) float32 -> (B, C, H//2, W//2) float32."""
    B, C, H, W = x_nchw.shape
    assert H % 2 == 0 and W % 2 == 0 and C % num_heads == 0
    H2, W2 = H // 2, W // 2
    S = H2 * W2
    dh = C // num_heads
    scale = 1.0 / math.sqrt(dh)

    # NCHW stays NCHW: the kernel consumes (C, H*W) slabs directly, so this reshape
    # (and the output one below) is metadata-only -- no HBM transpose round trip.
    x_flat = x_nchw.reshape(B, C, H * W)

    # fold the attention scale into the Q projection once at trace time
    wq_s = params["wq"] * scale
    bq_s = params["bq"] * scale

    masks = jnp.asarray(_tap_masks_np(H2, W2))                # compile-time constant

    weights = (params["w1"], params["b1"], wq_s, bq_s,
               params["wk"], params["bk"], params["wv"], params["bv"],
               params["wo"], params["bo"],
               params["wd1"], params["bd1"], params["wd2"], params["bd2"], masks)

    def full(arr):
        n = arr.ndim
        return pl.BlockSpec(arr.shape, lambda b, n=n: (0,) * n)

    out = pl.pallas_call(
        partial(_wds_kernel, S=S, C=C, W2=W2, num_heads=num_heads,
                mxu_dtype=mxu_dtype),
        out_shape=jax.ShapeDtypeStruct((B, C, S), jnp.float32),
        grid=(B,),
        in_specs=[pl.BlockSpec((1, C, 4 * S), lambda b: (b, 0, 0))]
                 + [full(w) for w in weights],
        out_specs=pl.BlockSpec((1, C, S), lambda b: (b, 0, 0)),
        scratch_shapes=[pltpu.VMEM((C, S), jnp.float32)],     # head-context assembly
        compiler_params=pltpu.CompilerParams(
            dimension_semantics=("parallel",),                # >=2 steps -> both v7x TCs
            vmem_limit_bytes=32 * 1024 * 1024),
    )(x_flat, *weights)

    return out.reshape(B, C, H2, W2)


# ---------------------------------------------------------------------------
# Deterministic synthetic parameters (torch-native (out, in) layouts)
# ---------------------------------------------------------------------------
def make_params(key, C):
    ks = jax.random.split(key, 14)
    inv = 1.0 / math.sqrt(C)

    def n(k, shape, s):
        return s * jax.random.normal(k, shape, jnp.float32)

    return {
        "w1": n(ks[0], (C, C), inv),   "b1": n(ks[1], (C, 1), 0.1),
        "wq": n(ks[2], (C, C), inv),   "bq": n(ks[3], (C, 1), 0.05),
        "wk": n(ks[4], (C, C), inv),   "bk": n(ks[5], (C, 1), 0.05),
        "wv": n(ks[6], (C, C), inv),   "bv": n(ks[7], (C, 1), 0.05),
        "wo": n(ks[8], (C, C), inv),   "bo": n(ks[9], (C, 1), 0.05),
        # depthwise weights (C, 9) with column t = ky*3 + kx
        "wd1": n(ks[10], (C, 9), 0.25), "bd1": n(ks[11], (C, 1), 0.05),
        "wd2": n(ks[12], (C, 9), 0.25), "bd2": n(ks[13], (C, 1), 0.05),
    }


# ---------------------------------------------------------------------------
# Pure-JAX reference mirroring the PyTorch module (for correctness checking)
# ---------------------------------------------------------------------------
def reference_forward(x, p, *, num_heads):
    B, C, H, W = x.shape
    H2, W2 = H // 2, W // 2
    S = H2 * W2
    dh = C // num_heads
    scale = 1.0 / math.sqrt(dh)
    hp = jax.lax.Precision.HIGHEST

    # WFD.first_conv (1x1, bias)
    y = jnp.einsum("oi,bihw->bohw", p["w1"], x, precision=hp) \
        + p["b1"].reshape(1, C, 1, 1)
    # HaarWavelet(rev=False) + narrow
    haar = jnp.transpose(y.reshape(B, C, 4, H2, W2), (0, 2, 1, 3, 4))
    a = haar[:, 0]
    hvd = haar[:, 1] + haar[:, 2] + haar[:, 3]

    # nn.MultiheadAttention(batch_first=True) self-attention over a_flat
    af = jnp.transpose(a.reshape(B, C, S), (0, 2, 1))                 # (B, S, C)
    q = jnp.einsum("bsc,oc->bso", af, p["wq"], precision=hp) + p["bq"].reshape(1, 1, C)
    k = jnp.einsum("bsc,oc->bso", af, p["wk"], precision=hp) + p["bk"].reshape(1, 1, C)
    v = jnp.einsum("bsc,oc->bso", af, p["wv"], precision=hp) + p["bv"].reshape(1, 1, C)

    def split(t):
        return jnp.transpose(t.reshape(B, S, num_heads, dh), (0, 2, 1, 3))

    qh, kh, vh = split(q), split(k), split(v)
    logits = jnp.einsum("bnsd,bntd->bnst", qh, kh, precision=hp) * scale
    probs = jax.nn.softmax(logits, axis=-1)
    ctx = jnp.einsum("bnst,bntd->bnsd", probs, vh, precision=hp)
    ctx = jnp.transpose(ctx, (0, 2, 1, 3)).reshape(B, S, C)
    attn = jnp.einsum("bsc,oc->bso", ctx, p["wo"], precision=hp) + p["bo"].reshape(1, 1, C)
    attn = jnp.transpose(attn, (0, 2, 1)).reshape(B, C, H2, W2)

    # depthwise conv chain on hvd
    def dw(inp, wd, bias, dilation, pad):
        w_hwio = jnp.transpose(wd.reshape(C, 3, 3), (1, 2, 0))[:, :, None, :]
        return jax.lax.conv_general_dilated(
            inp, w_hwio, (1, 1), ((pad, pad), (pad, pad)),
            rhs_dilation=(dilation, dilation),
            dimension_numbers=("NCHW", "HWIO", "NCHW"),
            feature_group_count=C, precision=hp) + bias.reshape(1, C, 1, 1)

    c1 = dw(hvd, p["wd1"], p["bd1"], 1, 1)
    c2 = dw(c1, p["wd2"], p["bd2"], 2, 2)
    return attn + c2


if __name__ == "__main__":
    key = jax.random.PRNGKey(0)
    k_x, k_p = jax.random.split(key)

    # in_channels must be divisible by the module's fixed num_heads=8;
    # H=W=32 keeps S=(H/2)*(W/2)=256 a multiple of 128 (lane-aligned blocks).
    B, C, H, W = 2, 16, 32, 32
    NUM_HEADS = 8

    x = jax.random.normal(k_x, (B, C, H, W), jnp.float32)
    params = make_params(k_p, C)

    fwd = jax.jit(partial(wavelet_downsample_forward, num_heads=NUM_HEADS))
    out = jax.block_until_ready(fwd(x, params))
    ref = jax.block_until_ready(reference_forward(x, params, num_heads=NUM_HEADS))

    assert out.shape == (B, C, H // 2, W // 2), out.shape
    err = float(jnp.max(jnp.abs(out - ref)))
    # tolerance covers MXU f32 pass emulation + approx softmax reciprocal
    assert err < 2e-2, f"max abs err {err}"
    print("KERNEL_OK")
</pallas_src>

<mosaic_0001>
module attributes {stable_mosaic.version = 11 : i64} {
  func.func @_wds_kernel(%arg0: i32, %arg1: memref<1x16x1024xf32, #tpu.memory_space<vmem>>, %arg2: memref<16x16xf32, #tpu.memory_space<vmem>>, %arg3: memref<16x1xf32, #tpu.memory_space<vmem>>, %arg4: memref<16x16xf32, #tpu.memory_space<vmem>>, %arg5: memref<16x1xf32, #tpu.memory_space<vmem>>, %arg6: memref<16x16xf32, #tpu.memory_space<vmem>>, %arg7: memref<16x1xf32, #tpu.memory_space<vmem>>, %arg8: memref<16x16xf32, #tpu.memory_space<vmem>>, %arg9: memref<16x1xf32, #tpu.memory_space<vmem>>, %arg10: memref<16x16xf32, #tpu.memory_space<vmem>>, %arg11: memref<16x1xf32, #tpu.memory_space<vmem>>, %arg12: memref<16x9xf32, #tpu.memory_space<vmem>>, %arg13: memref<16x1xf32, #tpu.memory_space<vmem>>, %arg14: memref<16x9xf32, #tpu.memory_space<vmem>>, %arg15: memref<16x1xf32, #tpu.memory_space<vmem>>, %arg16: memref<18x256xf32, #tpu.memory_space<vmem>>, %arg17: memref<1x16x256xf32, #tpu.memory_space<vmem>>, %arg18: memref<16x256xf32, #tpu.memory_space<vmem>>) attributes {dimension_semantics = [#tpu.dimension_semantics<parallel>], iteration_bounds = array<i64: 2>, scalar_prefetch = 0 : i64, scratch_operands = 1 : i64, tpu.core_type = #tpu.core_type<tc>, window_params = [{transform_indices = @transform_0, window_bounds = array<i64: 1, 16, 1024>}, {pipeline_mode = #tpu.pipeline_mode<synchronous>, transform_indices = @transform_1, window_bounds = array<i64: 16, 16>}, {pipeline_mode = #tpu.pipeline_mode<synchronous>, transform_indices = @transform_2, window_bounds = array<i64: 16, 1>}, {pipeline_mode = #tpu.pipeline_mode<synchronous>, transform_indices = @transform_3, window_bounds = array<i64: 16, 16>}, {pipeline_mode = #tpu.pipeline_mode<synchronous>, transform_indices = @transform_4, window_bounds = array<i64: 16, 1>}, {pipeline_mode = #tpu.pipeline_mode<synchronous>, transform_indices = @transform_5, window_bounds = array<i64: 16, 16>}, {pipeline_mode = #tpu.pipeline_mode<synchronous>, transform_indices = @transform_6, window_bounds = array<i64: 16, 1>}, {pipeline_mode = #tpu.pipeline_mode<synchronous>, transform_indices = @transform_7, window_bounds = array<i64: 16, 16>}, {pipeline_mode = #tpu.pipeline_mode<synchronous>, transform_indices = @transform_8, window_bounds = array<i64: 16, 1>}, {pipeline_mode = #tpu.pipeline_mode<synchronous>, transform_indices = @transform_9, window_bounds = array<i64: 16, 16>}, {pipeline_mode = #tpu.pipeline_mode<synchronous>, transform_indices = @transform_10, window_bounds = array<i64: 16, 1>}, {pipeline_mode = #tpu.pipeline_mode<synchronous>, transform_indices = @transform_11, window_bounds = array<i64: 16, 9>}, {pipeline_mode = #tpu.pipeline_mode<synchronous>, transform_indices = @transform_12, window_bounds = array<i64: 16, 1>}, {pipeline_mode = #tpu.pipeline_mode<synchronous>, transform_indices = @transform_13, window_bounds = array<i64: 16, 9>}, {pipeline_mode = #tpu.pipeline_mode<synchronous>, transform_indices = @transform_14, window_bounds = array<i64: 16, 1>}, {pipeline_mode = #tpu.pipeline_mode<synchronous>, transform_indices = @transform_15, window_bounds = array<i64: 18, 256>}, {transform_indices = @transform_16, window_bounds = array<i64: 1, 16, 256>}]} {
    %c0 = arith.constant 0 : index
    %c0_0 = arith.constant 0 : index
    %c0_1 = arith.constant 0 : index
    %0 = vector.load %arg1[%c0, %c0_0, %c0_1] : memref<1x16x1024xf32, #tpu.memory_space<vmem>>, vector<1x16x1024xf32>
    %1 = vector.shape_cast %0 : vector<1x16x1024xf32> to vector<16x1024xf32>
    %c0_2 = arith.constant 0 : index
    %c0_3 = arith.constant 0 : index
    %2 = vector.load %arg2[%c0_2, %c0_3] : memref<16x16xf32, #tpu.memory_space<vmem>>, vector<16x16xf32>
    %cst = arith.constant dense<0.000000e+00> : vector<16x1024xf32>
    %3 = tpu.matmul %2, %1, %cst {dimension_numbers = #tpu.dot_dimension_numbers<[1], [0], [0], [1], [0, 0, 1, 1], [], []>} : vector<16x16xf32>, vector<16x1024xf32>, vector<16x1024xf32> -> vector<16x1024xf32>
    %c0_4 = arith.constant 0 : index
    %c0_5 = arith.constant 0 : index
    %4 = vector.load %arg3[%c0_4, %c0_5] : memref<16x1xf32, #tpu.memory_space<vmem>>, vector<16x1xf32>
    %5 = vector.broadcast %4 : vector<16x1xf32> to vector<16x1024xf32>
    %6 = arith.addf %3, %5 : vector<16x1024xf32>
    %7 = vector.extract_strided_slice %6 {offsets = [0, 0], sizes = [16, 256], strides = [1, 1]} : vector<16x1024xf32> to vector<16x256xf32>
    %8 = vector.extract_strided_slice %6 {offsets = [0, 256], sizes = [16, 256], strides = [1, 1]} : vector<16x1024xf32> to vector<16x256xf32>
    %9 = vector.extract_strided_slice %6 {offsets = [0, 512], sizes = [16, 256], strides = [1, 1]} : vector<16x1024xf32> to vector<16x256xf32>
    %10 = arith.addf %8, %9 : vector<16x256xf32>
    %11 = vector.extract_strided_slice %6 {offsets = [0, 768], sizes = [16, 256], strides = [1, 1]} : vector<16x1024xf32> to vector<16x256xf32>
    %12 = arith.addf %10, %11 : vector<16x256xf32>
    %c0_6 = arith.constant 0 : index
    %c0_7 = arith.constant 0 : index
    %13 = vector.load %arg4[%c0_6, %c0_7] : memref<16x16xf32, #tpu.memory_space<vmem>>, vector<16x16xf32>
    %cst_8 = arith.constant dense<0.000000e+00> : vector<16x256xf32>
    %14 = tpu.matmul %13, %7, %cst_8 {dimension_numbers = #tpu.dot_dimension_numbers<[1], [0], [0], [1], [0, 0, 1, 1], [], []>} : vector<16x16xf32>, vector<16x256xf32>, vector<16x256xf32> -> vector<16x256xf32>
    %c0_9 = arith.constant 0 : index
    %c0_10 = arith.constant 0 : index
    %15 = vector.load %arg5[%c0_9, %c0_10] : memref<16x1xf32, #tpu.memory_space<vmem>>, vector<16x1xf32>
    %16 = vector.broadcast %15 : vector<16x1xf32> to vector<16x256xf32>
    %17 = arith.addf %14, %16 : vector<16x256xf32>
    %c0_11 = arith.constant 0 : index
    %c0_12 = arith.constant 0 : index
    %18 = vector.load %arg6[%c0_11, %c0_12] : memref<16x16xf32, #tpu.memory_space<vmem>>, vector<16x16xf32>
    %cst_13 = arith.constant dense<0.000000e+00> : vector<16x256xf32>
    %19 = tpu.matmul %18, %7, %cst_13 {dimension_numbers = #tpu.dot_dimension_numbers<[1], [0], [0], [1], [0, 0, 1, 1], [], []>} : vector<16x16xf32>, vector<16x256xf32>, vector<16x256xf32> -> vector<16x256xf32>
    %c0_14 = arith.constant 0 : index
    %c0_15 = arith.constant 0 : index
    %20 = vector.load %arg7[%c0_14, %c0_15] : memref<16x1xf32, #tpu.memory_space<vmem>>, vector<16x1xf32>
    %21 = vector.broadcast %20 : vector<16x1xf32> to vector<16x256xf32>
    %22 = arith.addf %19, %21 : vector<16x256xf32>
    %c0_16 = arith.constant 0 : index
    %c0_17 = arith.constant 0 : index
    %23 = vector.load %arg8[%c0_16, %c0_17] : memref<16x16xf32, #tpu.memory_space<vmem>>, vector<16x16xf32>
    %cst_18 = arith.constant dense<0.000000e+00> : vector<16x256xf32>
    %24 = tpu.matmul %23, %7, %cst_18 {dimension_numbers = #tpu.dot_dimension_numbers<[1], [0], [0], [1], [0, 0, 1, 1], [], []>} : vector<16x16xf32>, vector<16x256xf32>, vector<16x256xf32> -> vector<16x256xf32>
    %c0_19 = arith.constant 0 : index
    %c0_20 = arith.constant 0 : index
    %25 = vector.load %arg9[%c0_19, %c0_20] : memref<16x1xf32, #tpu.memory_space<vmem>>, vector<16x1xf32>
    %26 = vector.broadcast %25 : vector<16x1xf32> to vector<16x256xf32>
    %27 = arith.addf %24, %26 : vector<16x256xf32>
    %28 = vector.extract_strided_slice %17 {offsets = [0, 0], sizes = [2, 256], strides = [1, 1]} : vector<16x256xf32> to vector<2x256xf32>
    %29 = vector.extract_strided_slice %22 {offsets = [0, 0], sizes = [2, 256], strides = [1, 1]} : vector<16x256xf32> to vector<2x256xf32>
    %30 = vector.extract_strided_slice %27 {offsets = [0, 0], sizes = [2, 256], strides = [1, 1]} : vector<16x256xf32> to vector<2x256xf32>
    %cst_21 = arith.constant dense<0.000000e+00> : vector<256x256xf32>
    %31 = tpu.matmul %28, %29, %cst_21 {dimension_numbers = #tpu.dot_dimension_numbers<[0], [0], [1], [1], [0, 1, 1, 1], [], []>} : vector<2x256xf32>, vector<2x256xf32>, vector<256x256xf32> -> vector<256x256xf32>
    %cst_22 = arith.constant dense<0xFF800000> : vector<256xf32>
    %32 = vector.multi_reduction <maximumf>, %31, %cst_22 [1] : vector<256x256xf32> to vector<256xf32>
    %33 = vector.shape_cast %32 : vector<256xf32> to vector<256x1xf32>
    %34 = vector.broadcast %33 : vector<256x1xf32> to vector<256x256xf32>
    %35 = arith.subf %31, %34 : vector<256x256xf32>
    %36 = math.exp %35 : vector<256x256xf32>
    %cst_23 = arith.constant dense<0.000000e+00> : vector<256xf32>
    %37 = vector.multi_reduction <add>, %36, %cst_23 [1] : vector<256x256xf32> to vector<256xf32>
    %38 = vector.shape_cast %37 : vector<256xf32> to vector<256x1xf32>
    %39 = tpu.reciprocal %38 {approx = true} : vector<256x1xf32> -> vector<256x1xf32>
    %40 = vector.broadcast %39 : vector<256x1xf32> to vector<256x256xf32>
    %41 = arith.mulf %36, %40 : vector<256x256xf32>
    %cst_24 = arith.constant dense<0.000000e+00> : vector<2x256xf32>
    %42 = tpu.matmul %30, %41, %cst_24 {dimension_numbers = #tpu.dot_dimension_numbers<[1], [1], [0], [0], [0, 0, 1, 0], [], []>} : vector<2x256xf32>, vector<256x256xf32>, vector<2x256xf32> -> vector<2x256xf32>
    %c0_25 = arith.constant 0 : index
    %c0_26 = arith.constant 0 : index
    %43 = vector.load %arg18[%c0_25, %c0_26] : memref<16x256xf32, #tpu.memory_space<vmem>>, vector<2x256xf32>
    tpu.vector_store %arg18[%c0_25, %c0_26], %42 {strides = array<i32>} : memref<16x256xf32, #tpu.memory_space<vmem>>, vector<2x256xf32>,
    %44 = vector.extract_strided_slice %17 {offsets = [2, 0], sizes = [2, 256], strides = [1, 1]} : vector<16x256xf32> to vector<2x256xf32>
    %45 = vector.extract_strided_slice %22 {offsets = [2, 0], sizes = [2, 256], strides = [1, 1]} : vector<16x256xf32> to vector<2x256xf32>
    %46 = vector.extract_strided_slice %27 {offsets = [2, 0], sizes = [2, 256], strides = [1, 1]} : vector<16x256xf32> to vector<2x256xf32>
    %cst_27 = arith.constant dense<0.000000e+00> : vector<256x256xf32>
    %47 = tpu.matmul %44, %45, %cst_27 {dimension_numbers = #tpu.dot_dimension_numbers<[0], [0], [1], [1], [0, 1, 1, 1], [], []>} : vector<2x256xf32>, vector<2x256xf32>, vector<256x256xf32> -> vector<256x256xf32>
    %cst_28 = arith.constant dense<0xFF800000> : vector<256xf32>
    %48 = vector.multi_reduction <maximumf>, %47, %cst_28 [1] : vector<256x256xf32> to vector<256xf32>
    %49 = vector.shape_cast %48 : vector<256xf32> to vector<256x1xf32>
    %50 = vector.broadcast %49 : vector<256x1xf32> to vector<256x256xf32>
    %51 = arith.subf %47, %50 : vector<256x256xf32>
    %52 = math.exp %51 : vector<256x256xf32>
    %cst_29 = arith.constant dense<0.000000e+00> : vector<256xf32>
    %53 = vector.multi_reduction <add>, %52, %cst_29 [1] : vector<256x256xf32> to vector<256xf32>
    %54 = vector.shape_cast %53 : vector<256xf32> to vector<256x1xf32>
    %55 = tpu.reciprocal %54 {approx = true} : vector<256x1xf32> -> vector<256x1xf32>
    %56 = vector.broadcast %55 : vector<256x1xf32> to vector<256x256xf32>
    %57 = arith.mulf %52, %56 : vector<256x256xf32>
    %cst_30 = arith.constant dense<0.000000e+00> : vector<2x256xf32>
    %58 = tpu.matmul %46, %57, %cst_30 {dimension_numbers = #tpu.dot_dimension_numbers<[1], [1], [0], [0], [0, 0, 1, 0], [], []>} : vector<2x256xf32>, vector<256x256xf32>, vector<2x256xf32> -> vector<2x256xf32>
    %c2 = arith.constant 2 : index
    %c0_31 = arith.constant 0 : index
    %59 = vector.load %arg18[%c2, %c0_31] : memref<16x256xf32, #tpu.memory_space<vmem>>, vector<2x256xf32>
    tpu.vector_store %arg18[%c2, %c0_31], %58 {strides = array<i32>} : memref<16x256xf32, #tpu.memory_space<vmem>>, vector<2x256xf32>,
    %60 = vector.extract_strided_slice %17 {offsets = [4, 0], sizes = [2, 256], strides = [1, 1]} : vector<16x256xf32> to vector<2x256xf32>
    %61 = vector.extract_strided_slice %22 {offsets = [4, 0], sizes = [2, 256], strides = [1, 1]} : vector<16x256xf32> to vector<2x256xf32>
    %62 = vector.extract_strided_slice %27 {offsets = [4, 0], sizes = [2, 256], strides = [1, 1]} : vector<16x256xf32> to vector<2x256xf32>
    %cst_32 = arith.constant dense<0.000000e+00> : vector<256x256xf32>
    %63 = tpu.matmul %60, %61, %cst_32 {dimension_numbers = #tpu.dot_dimension_numbers<[0], [0], [1], [1], [0, 1, 1, 1], [], []>} : vector<2x256xf32>, vector<2x256xf32>, vector<256x256xf32> -> vector<256x256xf32>
    %cst_33 = arith.constant dense<0xFF800000> : vector<256xf32>
    %64 = vector.multi_reduction <maximumf>, %63, %cst_33 [1] : vector<256x256xf32> to vector<256xf32>
    %65 = vector.shape_cast %64 : vector<256xf32> to vector<256x1xf32>
    %66 = vector.broadcast %65 : vector<256x1xf32> to vector<256x256xf32>
    %67 = arith.subf %63, %66 : vector<256x256xf32>
    %68 = math.exp %67 : vector<256x256xf32>
    %cst_34 = arith.constant dense<0.000000e+00> : vector<256xf32>
    %69 = vector.multi_reduction <add>, %68, %cst_34 [1] : vector<256x256xf32> to vector<256xf32>
    %70 = vector.shape_cast %69 : vector<256xf32> to vector<256x1xf32>
    %71 = tpu.reciprocal %70 {approx = true} : vector<256x1xf32> -> vector<256x1xf32>
    %72 = vector.broadcast %71 : vector<256x1xf32> to vector<256x256xf32>
    %73 = arith.mulf %68, %72 : vector<256x256xf32>
    %cst_35 = arith.constant dense<0.000000e+00> : vector<2x256xf32>
    %74 = tpu.matmul %62, %73, %cst_35 {dimension_numbers = #tpu.dot_dimension_numbers<[1], [1], [0], [0], [0, 0, 1, 0], [], []>} : vector<2x256xf32>, vector<256x256xf32>, vector<2x256xf32> -> vector<2x256xf32>
    %c4 = arith.constant 4 : index
    %c0_36 = arith.constant 0 : index
    %75 = vector.load %arg18[%c4, %c0_36] : memref<16x256xf32, #tpu.memory_space<vmem>>, vector<2x256xf32>
    tpu.vector_store %arg18[%c4, %c0_36], %74 {strides = array<i32>} : memref<16x256xf32, #tpu.memory_space<vmem>>, vector<2x256xf32>,
    %76 = vector.extract_strided_slice %17 {offsets = [6, 0], sizes = [2, 256], strides = [1, 1]} : vector<16x256xf32> to vector<2x256xf32>
    %77 = vector.extract_strided_slice %22 {offsets = [6, 0], sizes = [2, 256], strides = [1, 1]} : vector<16x256xf32> to vector<2x256xf32>
    %78 = vector.extract_strided_slice %27 {offsets = [6, 0], sizes = [2, 256], strides = [1, 1]} : vector<16x256xf32> to vector<2x256xf32>
    %cst_37 = arith.constant dense<0.000000e+00> : vector<256x256xf32>
    %79 = tpu.matmul %76, %77, %cst_37 {dimension_numbers = #tpu.dot_dimension_numbers<[0], [0], [1], [1], [0, 1, 1, 1], [], []>} : vector<2x256xf32>, vector<2x256xf32>, vector<256x256xf32> -> vector<256x256xf32>
    %cst_38 = arith.constant dense<0xFF800000> : vector<256xf32>
    %80 = vector.multi_reduction <maximumf>, %79, %cst_38 [1] : vector<256x256xf32> to vector<256xf32>
    %81 = vector.shape_cast %80 : vector<256xf32> to vector<256x1xf32>
    %82 = vector.broadcast %81 : vector<256x1xf32> to vector<256x256xf32>
    %83 = arith.subf %79, %82 : vector<256x256xf32>
    %84 = math.exp %83 : vector<256x256xf32>
    %cst_39 = arith.constant dense<0.000000e+00> : vector<256xf32>
    %85 = vector.multi_reduction <add>, %84, %cst_39 [1] : vector<256x256xf32> to vector<256xf32>
    %86 = vector.shape_cast %85 : vector<256xf32> to vector<256x1xf32>
    %87 = tpu.reciprocal %86 {approx = true} : vector<256x1xf32> -> vector<256x1xf32>
    %88 = vector.broadcast %87 : vector<256x1xf32> to vector<256x256xf32>
    %89 = arith.mulf %84, %88 : vector<256x256xf32>
    %cst_40 = arith.constant dense<0.000000e+00> : vector<2x256xf32>
    %90 = tpu.matmul %78, %89, %cst_40 {dimension_numbers = #tpu.dot_dimension_numbers<[1], [1], [0], [0], [0, 0, 1, 0], [], []>} : vector<2x256xf32>, vector<256x256xf32>, vector<2x256xf32> -> vector<2x256xf32>
    %c6 = arith.constant 6 : index
    %c0_41 = arith.constant 0 : index
    %91 = vector.load %arg18[%c6, %c0_41] : memref<16x256xf32, #tpu.memory_space<vmem>>, vector<2x256xf32>
    tpu.vector_store %arg18[%c6, %c0_41], %90 {strides = array<i32>} : memref<16x256xf32, #tpu.memory_space<vmem>>, vector<2x256xf32>,
    %92 = vector.extract_strided_slice %17 {offsets = [8, 0], sizes = [2, 256], strides = [1, 1]} : vector<16x256xf32> to vector<2x256xf32>
    %93 = vector.extract_strided_slice %22 {offsets = [8, 0], sizes = [2, 256], strides = [1, 1]} : vector<16x256xf32> to vector<2x256xf32>
    %94 = vector.extract_strided_slice %27 {offsets = [8, 0], sizes = [2, 256], strides = [1, 1]} : vector<16x256xf32> to vector<2x256xf32>
    %cst_42 = arith.constant dense<0.000000e+00> : vector<256x256xf32>
    %95 = tpu.matmul %92, %93, %cst_42 {dimension_numbers = #tpu.dot_dimension_numbers<[0], [0], [1], [1], [0, 1, 1, 1], [], []>} : vector<2x256xf32>, vector<2x256xf32>, vector<256x256xf32> -> vector<256x256xf32>
    %cst_43 = arith.constant dense<0xFF800000> : vector<256xf32>
    %96 = vector.multi_reduction <maximumf>, %95, %cst_43 [1] : vector<256x256xf32> to vector<256xf32>
    %97 = vector.shape_cast %96 : vector<256xf32> to vector<256x1xf32>
    %98 = vector.broadcast %97 : vector<256x1xf32> to vector<256x256xf32>
    %99 = arith.subf %95, %98 : vector<256x256xf32>
    %100 = math.exp %99 : vector<256x256xf32>
    %cst_44 = arith.constant dense<0.000000e+00> : vector<256xf32>
    %101 = vector.multi_reduction <add>, %100, %cst_44 [1] : vector<256x256xf32> to vector<256xf32>
    %102 = vector.shape_cast %101 : vector<256xf32> to vector<256x1xf32>
    %103 = tpu.reciprocal %102 {approx = true} : vector<256x1xf32> -> vector<256x1xf32>
    %104 = vector.broadcast %103 : vector<256x1xf32> to vector<256x256xf32>
    %105 = arith.mulf %100, %104 : vector<256x256xf32>
    %cst_45 = arith.constant dense<0.000000e+00> : vector<2x256xf32>
    %106 = tpu.matmul %94, %105, %cst_45 {dimension_numbers = #tpu.dot_dimension_numbers<[1], [1], [0], [0], [0, 0, 1, 0], [], []>} : vector<2x256xf32>, vector<256x256xf32>, vector<2x256xf32> -> vector<2x256xf32>
    %c8 = arith.constant 8 : index
    %c0_46 = arith.constant 0 : index
    %107 = vector.load %arg18[%c8, %c0_46] : memref<16x256xf32, #tpu.memory_space<vmem>>, vector<2x256xf32>
    tpu.vector_store %arg18[%c8, %c0_46], %106 {strides = array<i32>} : memref<16x256xf32, #tpu.memory_space<vmem>>, vector<2x256xf32>,
    %108 = vector.extract_strided_slice %17 {offsets = [10, 0], sizes = [2, 256], strides = [1, 1]} : vector<16x256xf32> to vector<2x256xf32>
    %109 = vector.extract_strided_slice %22 {offsets = [10, 0], sizes = [2, 256], strides = [1, 1]} : vector<16x256xf32> to vector<2x256xf32>
    %110 = vector.extract_strided_slice %27 {offsets = [10, 0], sizes = [2, 256], strides = [1, 1]} : vector<16x256xf32> to vector<2x256xf32>
    %cst_47 = arith.constant dense<0.000000e+00> : vector<256x256xf32>
    %111 = tpu.matmul %108, %109, %cst_47 {dimension_numbers = #tpu.dot_dimension_numbers<[0], [0], [1], [1], [0, 1, 1, 1], [], []>} : vector<2x256xf32>, vector<2x256xf32>, vector<256x256xf32> -> vector<256x256xf32>
    %cst_48 = arith.constant dense<0xFF800000> : vector<256xf32>
    %112 = vector.multi_reduction <maximumf>, %111, %cst_48 [1] : vector<256x256xf32> to vector<256xf32>
    %113 = vector.shape_cast %112 : vector<256xf32> to vector<256x1xf32>
    %114 = vector.broadcast %113 : vector<256x1xf32> to vector<256x256xf32>
    %115 = arith.subf %111, %114 : vector<256x256xf32>
    %116 = math.exp %115 : vector<256x256xf32>
    %cst_49 = arith.constant dense<0.000000e+00> : vector<256xf32>
    %117 = vector.multi_reduction <add>, %116, %cst_49 [1] : vector<256x256xf32> to vector<256xf32>
    %118 = vector.shape_cast %117 : vector<256xf32> to vector<256x1xf32>
    %119 = tpu.reciprocal %118 {approx = true} : vector<256x1xf32> -> vector<256x1xf32>
    %120 = vector.broadcast %119 : vector<256x1xf32> to vector<256x256xf32>
    %121 = arith.mulf %116, %120 : vector<256x256xf32>
    %cst_50 = arith.constant dense<0.000000e+00> : vector<2x256xf32>
    %122 = tpu.matmul %110, %121, %cst_50 {dimension_numbers = #tpu.dot_dimension_numbers<[1], [1], [0], [0], [0, 0, 1, 0], [], []>} : vector<2x256xf32>, vector<256x256xf32>, vector<2x256xf32> -> vector<2x256xf32>
    %c10 = arith.constant 10 : index
    %c0_51 = arith.constant 0 : index
    %123 = vector.load %arg18[%c10, %c0_51] : memref<16x256xf32, #tpu.memory_space<vmem>>, vector<2x256xf32>
    tpu.vector_store %arg18[%c10, %c0_51], %122 {strides = array<i32>} : memref<16x256xf32, #tpu.memory_space<vmem>>, vector<2x256xf32>,
    %124 = vector.extract_strided_slice %17 {offsets = [12, 0], sizes = [2, 256], strides = [1, 1]} : vector<16x256xf32> to vector<2x256xf32>
    %125 = vector.extract_strided_slice %22 {offsets = [12, 0], sizes = [2, 256], strides = [1, 1]} : vector<16x256xf32> to vector<2x256xf32>
    %126 = vector.extract_strided_slice %27 {offsets = [12, 0], sizes = [2, 256], strides = [1, 1]} : vector<16x256xf32> to vector<2x256xf32>
    %cst_52 = arith.constant dense<0.000000e+00> : vector<256x256xf32>
    %127 = tpu.matmul %124, %125, %cst_52 {dimension_numbers = #tpu.dot_dimension_numbers<[0], [0], [1], [1], [0, 1, 1, 1], [], []>} : vector<2x256xf32>, vector<2x256xf32>, vector<256x256xf32> -> vector<256x256xf32>
    %cst_53 = arith.constant dense<0xFF800000> : vector<256xf32>
    %128 = vector.multi_reduction <maximumf>, %127, %cst_53 [1] : vector<256x256xf32> to vector<256xf32>
    %129 = vector.shape_cast %128 : vector<256xf32> to vector<256x1xf32>
    %130 = vector.broadcast %129 : vector<256x1xf32> to vector<256x256xf32>
    %131 = arith.subf %127, %130 : vector<256x256xf32>
    %132 = math.exp %131 : vector<256x256xf32>
    %cst_54 = arith.constant dense<0.000000e+00> : vector<256xf32>
    %133 = vector.multi_reduction <add>, %132, %cst_54 [1] : vector<256x256xf32> to vector<256xf32>
    %134 = vector.shape_cast %133 : vector<256xf32> to vector<256x1xf32>
    %135 = tpu.reciprocal %134 {approx = true} : vector<256x1xf32> -> vector<256x1xf32>
    %136 = vector.broadcast %135 : vector<256x1xf32> to vector<256x256xf32>
    %137 = arith.mulf %132, %136 : vector<256x256xf32>
    %cst_55 = arith.constant dense<0.000000e+00> : vector<2x256xf32>
    %138 = tpu.matmul %126, %137, %cst_55 {dimension_numbers = #tpu.dot_dimension_numbers<[1], [1], [0], [0], [0, 0, 1, 0], [], []>} : vector<2x256xf32>, vector<256x256xf32>, vector<2x256xf32> -> vector<2x256xf32>
    %c12 = arith.constant 12 : index
    %c0_56 = arith.constant 0 : index
    %139 = vector.load %arg18[%c12, %c0_56] : memref<16x256xf32, #tpu.memory_space<vmem>>, vector<2x256xf32>
    tpu.vector_store %arg18[%c12, %c0_56], %138 {strides = array<i32>} : memref<16x256xf32, #tpu.memory_space<vmem>>, vector<2x256xf32>,
    %140 = vector.extract_strided_slice %17 {offsets = [14, 0], sizes = [2, 256], strides = [1, 1]} : vector<16x256xf32> to vector<2x256xf32>
    %141 = vector.extract_strided_slice %22 {offsets = [14, 0], sizes = [2, 256], strides = [1, 1]} : vector<16x256xf32> to vector<2x256xf32>
    %142 = vector.extract_strided_slice %27 {offsets = [14, 0], sizes = [2, 256], strides = [1, 1]} : vector<16x256xf32> to vector<2x256xf32>
    %cst_57 = arith.constant dense<0.000000e+00> : vector<256x256xf32>
    %143 = tpu.matmul %140, %141, %cst_57 {dimension_numbers = #tpu.dot_dimension_numbers<[0], [0], [1], [1], [0, 1, 1, 1], [], []>} : vector<2x256xf32>, vector<2x256xf32>, vector<256x256xf32> -> vector<256x256xf32>
    %cst_58 = arith.constant dense<0xFF800000> : vector<256xf32>
    %144 = vector.multi_reduction <maximumf>, %143, %cst_58 [1] : vector<256x256xf32> to vector<256xf32>
    %145 = vector.shape_cast %144 : vector<256xf32> to vector<256x1xf32>
    %146 = vector.broadcast %145 : vector<256x1xf32> to vector<256x256xf32>
    %147 = arith.subf %143, %146 : vector<256x256xf32>
    %148 = math.exp %147 : vector<256x256xf32>
    %cst_59 = arith.constant dense<0.000000e+00> : vector<256xf32>
    %149 = vector.multi_reduction <add>, %148, %cst_59 [1] : vector<256x256xf32> to vector<256xf32>
    %150 = vector.shape_cast %149 : vector<256xf32> to vector<256x1xf32>
    %151 = tpu.reciprocal %150 {approx = true} : vector<256x1xf32> -> vector<256x1xf32>
    %152 = vector.broadcast %151 : vector<256x1xf32> to vector<256x256xf32>
    %153 = arith.mulf %148, %152 : vector<256x256xf32>
    %cst_60 = arith.constant dense<0.000000e+00> : vector<2x256xf32>
    %154 = tpu.matmul %142, %153, %cst_60 {dimension_numbers = #tpu.dot_dimension_numbers<[1], [1], [0], [0], [0, 0, 1, 0], [], []>} : vector<2x256xf32>, vector<256x256xf32>, vector<2x256xf32> -> vector<2x256xf32>
    %c14 = arith.constant 14 : index
    %c0_61 = arith.constant 0 : index
    %155 = vector.load %arg18[%c14, %c0_61] : memref<16x256xf32, #tpu.memory_space<vmem>>, vector<2x256xf32>
    tpu.vector_store %arg18[%c14, %c0_61], %154 {strides = array<i32>} : memref<16x256xf32, #tpu.memory_space<vmem>>, vector<2x256xf32>,
    %c0_62 = arith.constant 0 : index
    %c0_63 = arith.constant 0 : index
    %156 = vector.load %arg10[%c0_62, %c0_63] : memref<16x16xf32, #tpu.memory_space<vmem>>, vector<16x16xf32>
    %c0_64 = arith.constant 0 : index
    %c0_65 = arith.constant 0 : index
    %157 = vector.load %arg18[%c0_64, %c0_65] : memref<16x256xf32, #tpu.memory_space<vmem>>, vector<16x256xf32>
    %cst_66 = arith.constant dense<0.000000e+00> : vector<16x256xf32>
    %158 = tpu.matmul %156, %157, %cst_66 {dimension_numbers = #tpu.dot_dimension_numbers<[1], [0], [0], [1], [0, 0, 1, 1], [], []>} : vector<16x16xf32>, vector<16x256xf32>, vector<16x256xf32> -> vector<16x256xf32>
    %c0_67 = arith.constant 0 : index
    %c0_68 = arith.constant 0 : index
    %159 = vector.load %arg11[%c0_67, %c0_68] : memref<16x1xf32, #tpu.memory_space<vmem>>, vector<16x1xf32>
    %160 = vector.broadcast %159 : vector<16x1xf32> to vector<16x256xf32>
    %161 = arith.addf %158, %160 : vector<16x256xf32>
    %c0_69 = arith.constant 0 : index
    %c0_70 = arith.constant 0 : index
    %162 = vector.load %arg16[%c0_69, %c0_70] : memref<18x256xf32, #tpu.memory_space<vmem>>, vector<18x256xf32>
    %c0_71 = arith.constant 0 : index
    %c0_72 = arith.constant 0 : index
    %163 = vector.load %arg12[%c0_71, %c0_72] : memref<16x9xf32, #tpu.memory_space<vmem>>, vector<16x9xf32>
    %c0_73 = arith.constant 0 : index
    %c0_74 = arith.constant 0 : index
    %164 = vector.load %arg13[%c0_73, %c0_74] : memref<16x1xf32, #tpu.memory_space<vmem>>, vector<16x1xf32>
    %c17_i32 = arith.constant 17 : i32
    %165 = tpu.dynamic_rotate %12 by %c17_i32 dim 1 : vector<16x256xf32>, i32 -> vector<16x256xf32>
    %166 = vector.extract_strided_slice %163 {offsets = [0, 0], sizes = [16, 1], strides = [1, 1]} : vector<16x9xf32> to vector<16x1xf32>
    %167 = vector.broadcast %166 : vector<16x1xf32> to vector<16x256xf32>
    %168 = arith.mulf %165, %167 : vector<16x256xf32>
    %169 = vector.extract_strided_slice %162 {offsets = [0, 0], sizes = [1, 256], strides = [1, 1]} : vector<18x256xf32> to vector<1x256xf32>
    %170 = vector.broadcast %169 : vector<1x256xf32> to vector<16x256xf32>
    %171 = arith.mulf %168, %170 : vector<16x256xf32>
    %c16_i32 = arith.constant 16 : i32
    %172 = tpu.dynamic_rotate %12 by %c16_i32 dim 1 : vector<16x256xf32>, i32 -> vector<16x256xf32>
    %173 = vector.extract_strided_slice %163 {offsets = [0, 1], sizes = [16, 1], strides = [1, 1]} : vector<16x9xf32> to vector<16x1xf32>
    %174 = vector.broadcast %173 : vector<16x1xf32> to vector<16x256xf32>
    %175 = arith.mulf %172, %174 : vector<16x256xf32>
    %176 = vector.extract_strided_slice %162 {offsets = [1, 0], sizes = [1, 256], strides = [1, 1]} : vector<18x256xf32> to vector<1x256xf32>
    %177 = vector.broadcast %176 : vector<1x256xf32> to vector<16x256xf32>
    %178 = arith.mulf %175, %177 : vector<16x256xf32>
    %179 = arith.addf %171, %178 : vector<16x256xf32>
    %c15_i32 = arith.constant 15 : i32
    %180 = tpu.dynamic_rotate %12 by %c15_i32 dim 1 : vector<16x256xf32>, i32 -> vector<16x256xf32>
    %181 = vector.extract_strided_slice %163 {offsets = [0, 2], sizes = [16, 1], strides = [1, 1]} : vector<16x9xf32> to vector<16x1xf32>
    %182 = vector.broadcast %181 : vector<16x1xf32> to vector<16x256xf32>
    %183 = arith.mulf %180, %182 : vector<16x256xf32>
    %184 = vector.extract_strided_slice %162 {offsets = [2, 0], sizes = [1, 256], strides = [1, 1]} : vector<18x256xf32> to vector<1x256xf32>
    %185 = vector.broadcast %184 : vector<1x256xf32> to vector<16x256xf32>
    %186 = arith.mulf %183, %185 : vector<16x256xf32>
    %187 = arith.addf %179, %186 : vector<16x256xf32>
    %c1_i32 = arith.constant 1 : i32
    %188 = tpu.dynamic_rotate %12 by %c1_i32 dim 1 : vector<16x256xf32>, i32 -> vector<16x256xf32>
    %189 = vector.extract_strided_slice %163 {offsets = [0, 3], sizes = [16, 1], strides = [1, 1]} : vector<16x9xf32> to vector<16x1xf32>
    %190 = vector.broadcast %189 : vector<16x1xf32> to vector<16x256xf32>
    %191 = arith.mulf %188, %190 : vector<16x256xf32>
    %192 = vector.extract_strided_slice %162 {offsets = [3, 0], sizes = [1, 256], strides = [1, 1]} : vector<18x256xf32> to vector<1x256xf32>
    %193 = vector.broadcast %192 : vector<1x256xf32> to vector<16x256xf32>
    %194 = arith.mulf %191, %193 : vector<16x256xf32>
    %195 = arith.addf %187, %194 : vector<16x256xf32>
    %196 = vector.extract_strided_slice %163 {offsets = [0, 4], sizes = [16, 1], strides = [1, 1]} : vector<16x9xf32> to vector<16x1xf32>
    %197 = vector.broadcast %196 : vector<16x1xf32> to vector<16x256xf32>
    %198 = arith.mulf %12, %197 : vector<16x256xf32>
    %199 = arith.addf %195, %198 : vector<16x256xf32>
    %c255_i32 = arith.constant 255 : i32
    %200 = tpu.dynamic_rotate %12 by %c255_i32 dim 1 : vector<16x256xf32>, i32 -> vector<16x256xf32>
    %201 = vector.extract_strided_slice %163 {offsets = [0, 5], sizes = [16, 1], strides = [1, 1]} : vector<16x9xf32> to vector<16x1xf32>
    %202 = vector.broadcast %201 : vector<16x1xf32> to vector<16x256xf32>
    %203 = arith.mulf %200, %202 : vector<16x256xf32>
    %204 = vector.extract_strided_slice %162 {offsets = [5, 0], sizes = [1, 256], strides = [1, 1]} : vector<18x256xf32> to vector<1x256xf32>
    %205 = vector.broadcast %204 : vector<1x256xf32> to vector<16x256xf32>
    %206 = arith.mulf %203, %205 : vector<16x256xf32>
    %207 = arith.addf %199, %206 : vector<16x256xf32>
    %c241_i32 = arith.constant 241 : i32
    %208 = tpu.dynamic_rotate %12 by %c241_i32 dim 1 : vector<16x256xf32>, i32 -> vector<16x256xf32>
    %209 = vector.extract_strided_slice %163 {offsets = [0, 6], sizes = [16, 1], strides = [1, 1]} : vector<16x9xf32> to vector<16x1xf32>
    %210 = vector.broadcast %209 : vector<16x1xf32> to vector<16x256xf32>
    %211 = arith.mulf %208, %210 : vector<16x256xf32>
    %212 = vector.extract_strided_slice %162 {offsets = [6, 0], sizes = [1, 256], strides = [1, 1]} : vector<18x256xf32> to vector<1x256xf32>
    %213 = vector.broadcast %212 : vector<1x256xf32> to vector<16x256xf32>
    %214 = arith.mulf %211, %213 : vector<16x256xf32>
    %215 = arith.addf %207, %214 : vector<16x256xf32>
    %c240_i32 = arith.constant 240 : i32
    %216 = tpu.dynamic_rotate %12 by %c240_i32 dim 1 : vector<16x256xf32>, i32 -> vector<16x256xf32>
    %217 = vector.extract_strided_slice %163 {offsets = [0, 7], sizes = [16, 1], strides = [1, 1]} : vector<16x9xf32> to vector<16x1xf32>
    %218 = vector.broadcast %217 : vector<16x1xf32> to vector<16x256xf32>
    %219 = arith.mulf %216, %218 : vector<16x256xf32>
    %220 = vector.extract_strided_slice %162 {offsets = [7, 0], sizes = [1, 256], strides = [1, 1]} : vector<18x256xf32> to vector<1x256xf32>
    %221 = vector.broadcast %220 : vector<1x256xf32> to vector<16x256xf32>
    %222 = arith.mulf %219, %221 : vector<16x256xf32>
    %223 = arith.addf %215, %222 : vector<16x256xf32>
    %c239_i32 = arith.constant 239 : i32
    %224 = tpu.dynamic_rotate %12 by %c239_i32 dim 1 : vector<16x256xf32>, i32 -> vector<16x256xf32>
    %225 = vector.extract_strided_slice %163 {offsets = [0, 8], sizes = [16, 1], strides = [1, 1]} : vector<16x9xf32> to vector<16x1xf32>
    %226 = vector.broadcast %225 : vector<16x1xf32> to vector<16x256xf32>
    %227 = arith.mulf %224, %226 : vector<16x256xf32>
    %228 = vector.extract_strided_slice %162 {offsets = [8, 0], sizes = [1, 256], strides = [1, 1]} : vector<18x256xf32> to vector<1x256xf32>
    %229 = vector.broadcast %228 : vector<1x256xf32> to vector<16x256xf32>
    %230 = arith.mulf %227, %229 : vector<16x256xf32>
    %231 = arith.addf %223, %230 : vector<16x256xf32>
    %232 = vector.broadcast %164 : vector<16x1xf32> to vector<16x256xf32>
    %233 = arith.addf %231, %232 : vector<16x256xf32>
    %c0_75 = arith.constant 0 : index
    %c0_76 = arith.constant 0 : index
    %234 = vector.load %arg14[%c0_75, %c0_76] : memref<16x9xf32, #tpu.memory_space<vmem>>, vector<16x9xf32>
    %c0_77 = arith.constant 0 : index
    %c0_78 = arith.constant 0 : index
    %235 = vector.load %arg15[%c0_77, %c0_78] : memref<16x1xf32, #tpu.memory_space<vmem>>, vector<16x1xf32>
    %c34_i32 = arith.constant 34 : i32
    %236 = tpu.dynamic_rotate %233 by %c34_i32 dim 1 : vector<16x256xf32>, i32 -> vector<16x256xf32>
    %237 = vector.extract_strided_slice %234 {offsets = [0, 0], sizes = [16, 1], strides = [1, 1]} : vector<16x9xf32> to vector<16x1xf32>
    %238 = vector.broadcast %237 : vector<16x1xf32> to vector<16x256xf32>
    %239 = arith.mulf %236, %238 : vector<16x256xf32>
    %240 = vector.extract_strided_slice %162 {offsets = [9, 0], sizes = [1, 256], strides = [1, 1]} : vector<18x256xf32> to vector<1x256xf32>
    %241 = vector.broadcast %240 : vector<1x256xf32> to vector<16x256xf32>
    %242 = arith.mulf %239, %241 : vector<16x256xf32>
    %c32_i32 = arith.constant 32 : i32
    %243 = tpu.dynamic_rotate %233 by %c32_i32 dim 1 : vector<16x256xf32>, i32 -> vector<16x256xf32>
    %244 = vector.extract_strided_slice %234 {offsets = [0, 1], sizes = [16, 1], strides = [1, 1]} : vector<16x9xf32> to vector<16x1xf32>
    %245 = vector.broadcast %244 : vector<16x1xf32> to vector<16x256xf32>
    %246 = arith.mulf %243, %245 : vector<16x256xf32>
    %247 = vector.extract_strided_slice %162 {offsets = [10, 0], sizes = [1, 256], strides = [1, 1]} : vector<18x256xf32> to vector<1x256xf32>
    %248 = vector.broadcast %247 : vector<1x256xf32> to vector<16x256xf32>
    %249 = arith.mulf %246, %248 : vector<16x256xf32>
    %250 = arith.addf %242, %249 : vector<16x256xf32>
    %c30_i32 = arith.constant 30 : i32
    %251 = tpu.dynamic_rotate %233 by %c30_i32 dim 1 : vector<16x256xf32>, i32 -> vector<16x256xf32>
    %252 = vector.extract_strided_slice %234 {offsets = [0, 2], sizes = [16, 1], strides = [1, 1]} : vector<16x9xf32> to vector<16x1xf32>
    %253 = vector.broadcast %252 : vector<16x1xf32> to vector<16x256xf32>
    %254 = arith.mulf %251, %253 : vector<16x256xf32>
    %255 = vector.extract_strided_slice %162 {offsets = [11, 0], sizes = [1, 256], strides = [1, 1]} : vector<18x256xf32> to vector<1x256xf32>
    %256 = vector.broadcast %255 : vector<1x256xf32> to vector<16x256xf32>
    %257 = arith.mulf %254, %256 : vector<16x256xf32>
    %258 = arith.addf %250, %257 : vector<16x256xf32>
    %c2_i32 = arith.constant 2 : i32
    %259 = tpu.dynamic_rotate %233 by %c2_i32 dim 1 : vector<16x256xf32>, i32 -> vector<16x256xf32>
    %260 = vector.extract_strided_slice %234 {offsets = [0, 3], sizes = [16, 1], strides = [1, 1]} : vector<16x9xf32> to vector<16x1xf32>
    %261 = vector.broadcast %260 : vector<16x1xf32> to vector<16x256xf32>
    %262 = arith.mulf %259, %261 : vector<16x256xf32>
    %263 = vector.extract_strided_slice %162 {offsets = [12, 0], sizes = [1, 256], strides = [1, 1]} : vector<18x256xf32> to vector<1x256xf32>
    %264 = vector.broadcast %263 : vector<1x256xf32> to vector<16x256xf32>
    %265 = arith.mulf %262, %264 : vector<16x256xf32>
    %266 = arith.addf %258, %265 : vector<16x256xf32>
    %267 = vector.extract_strided_slice %234 {offsets = [0, 4], sizes = [16, 1], strides = [1, 1]} : vector<16x9xf32> to vector<16x1xf32>
    %268 = vector.broadcast %267 : vector<16x1xf32> to vector<16x256xf32>
    %269 = arith.mulf %233, %268 : vector<16x256xf32>
    %270 = arith.addf %266, %269 : vector<16x256xf32>
    %c254_i32 = arith.constant 254 : i32
    %271 = tpu.dynamic_rotate %233 by %c254_i32 dim 1 : vector<16x256xf32>, i32 -> vector<16x256xf32>
    %272 = vector.extract_strided_slice %234 {offsets = [0, 5], sizes = [16, 1], strides = [1, 1]} : vector<16x9xf32> to vector<16x1xf32>
    %273 = vector.broadcast %272 : vector<16x1xf32> to vector<16x256xf32>
    %274 = arith.mulf %271, %273 : vector<16x256xf32>
    %275 = vector.extract_strided_slice %162 {offsets = [14, 0], sizes = [1, 256], strides = [1, 1]} : vector<18x256xf32> to vector<1x256xf32>
    %276 = vector.broadcast %275 : vector<1x256xf32> to vector<16x256xf32>
    %277 = arith.mulf %274, %276 : vector<16x256xf32>
    %278 = arith.addf %270, %277 : vector<16x256xf32>
    %c226_i32 = arith.constant 226 : i32
    %279 = tpu.dynamic_rotate %233 by %c226_i32 dim 1 : vector<16x256xf32>, i32 -> vector<16x256xf32>
    %280 = vector.extract_strided_slice %234 {offsets = [0, 6], sizes = [16, 1], strides = [1, 1]} : vector<16x9xf32> to vector<16x1xf32>
    %281 = vector.broadcast %280 : vector<16x1xf32> to vector<16x256xf32>
    %282 = arith.mulf %279, %281 : vector<16x256xf32>
    %283 = vector.extract_strided_slice %162 {offsets = [15, 0], sizes = [1, 256], strides = [1, 1]} : vector<18x256xf32> to vector<1x256xf32>
    %284 = vector.broadcast %283 : vector<1x256xf32> to vector<16x256xf32>
    %285 = arith.mulf %282, %284 : vector<16x256xf32>
    %286 = arith.addf %278, %285 : vector<16x256xf32>
    %c224_i32 = arith.constant 224 : i32
    %287 = tpu.dynamic_rotate %233 by %c224_i32 dim 1 : vector<16x256xf32>, i32 -> vector<16x256xf32>
    %288 = vector.extract_strided_slice %234 {offsets = [0, 7], sizes = [16, 1], strides = [1, 1]} : vector<16x9xf32> to vector<16x1xf32>
    %289 = vector.broadcast %288 : vector<16x1xf32> to vector<16x256xf32>
    %290 = arith.mulf %287, %289 : vector<16x256xf32>
    %291 = vector.extract_strided_slice %162 {offsets = [16, 0], sizes = [1, 256], strides = [1, 1]} : vector<18x256xf32> to vector<1x256xf32>
    %292 = vector.broadcast %291 : vector<1x256xf32> to vector<16x256xf32>
    %293 = arith.mulf %290, %292 : vector<16x256xf32>
    %294 = arith.addf %286, %293 : vector<16x256xf32>
    %c222_i32 = arith.constant 222 : i32
    %295 = tpu.dynamic_rotate %233 by %c222_i32 dim 1 : vector<16x256xf32>, i32 -> vector<16x256xf32>
    %296 = vector.extract_strided_slice %234 {offsets = [0, 8], sizes = [16, 1], strides = [1, 1]} : vector<16x9xf32> to vector<16x1xf32>
    %297 = vector.broadcast %296 : vector<16x1xf32> to vector<16x256xf32>
    %298 = arith.mulf %295, %297 : vector<16x256xf32>
    %299 = vector.extract_strided_slice %162 {offsets = [17, 0], sizes = [1, 256], strides = [1, 1]} : vector<18x256xf32> to vector<1x256xf32>
    %300 = vector.broadcast %299 : vector<1x256xf32> to vector<16x256xf32>
    %301 = arith.mulf %298, %300 : vector<16x256xf32>
    %302 = arith.addf %294, %301 : vector<16x256xf32>
    %303 = vector.broadcast %235 : vector<16x1xf32> to vector<16x256xf32>
    %304 = arith.addf %302, %303 : vector<16x256xf32>
    %305 = arith.addf %161, %304 : vector<16x256xf32>
    %c0_79 = arith.constant 0 : index
    %c0_80 = arith.constant 0 : index
    %c0_81 = arith.constant 0 : index
    %306 = vector.load %arg17[%c0_79, %c0_80, %c0_81] : memref<1x16x256xf32, #tpu.memory_space<vmem>>, vector<1x16x256xf32>
    %307 = vector.shape_cast %306 : vector<1x16x256xf32> to vector<16x256xf32>
    %308 = vector.shape_cast %305 : vector<16x256xf32> to vector<1x16x256xf32>
    tpu.vector_store %arg17[%c0_79, %c0_80, %c0_81], %308 {strides = array<i32>} : memref<1x16x256xf32, #tpu.memory_space<vmem>>, vector<1x16x256xf32>,
    return
  }
  func.func @transform_0(%arg0: i32) -> (i32, i32, i32) {
    %c0_i32 = arith.constant 0 : i32
    %c0_i32_0 = arith.constant 0 : i32
    %c0_i32_1 = arith.constant 0 : i32
    return %arg0, %c0_i32, %c0_i32_0 : i32, i32, i32
  }
  func.func @transform_1(%arg0: i32) -> (i32, i32) {
    %c0_i32 = arith.constant 0 : i32
    %c0_i32_0 = arith.constant 0 : i32
    %c0_i32_1 = arith.constant 0 : i32
    return %c0_i32, %c0_i32_0 : i32, i32
  }
  func.func @transform_2(%arg0: i32) -> (i32, i32) {
    %c0_i32 = arith.constant 0 : i32
    %c0_i32_0 = arith.constant 0 : i32
    %c0_i32_1 = arith.constant 0 : i32
    return %c0_i32, %c0_i32_0 : i32, i32
  }
  func.func @transform_3(%arg0: i32) -> (i32, i32) {
    %c0_i32 = arith.constant 0 : i32
    %c0_i32_0 = arith.constant 0 : i32
    %c0_i32_1 = arith.constant 0 : i32
    return %c0_i32, %c0_i32_0 : i32, i32
  }
  func.func @transform_4(%arg0: i32) -> (i32, i32) {
    %c0_i32 = arith.constant 0 : i32
    %c0_i32_0 = arith.constant 0 : i32
    %c0_i32_1 = arith.constant 0 : i32
    return %c0_i32, %c0_i32_0 : i32, i32
  }
  func.func @transform_5(%arg0: i32) -> (i32, i32) {
    %c0_i32 = arith.constant 0 : i32
    %c0_i32_0 = arith.constant 0 : i32
    %c0_i32_1 = arith.constant 0 : i32
    return %c0_i32, %c0_i32_0 : i32, i32
  }
  func.func @transform_6(%arg0: i32) -> (i32, i32) {
    %c0_i32 = arith.constant 0 : i32
    %c0_i32_0 = arith.constant 0 : i32
    %c0_i32_1 = arith.constant 0 : i32
    return %c0_i32, %c0_i32_0 : i32, i32
  }
  func.func @transform_7(%arg0: i32) -> (i32, i32) {
    %c0_i32 = arith.constant 0 : i32
    %c0_i32_0 = arith.constant 0 : i32
    %c0_i32_1 = arith.constant 0 : i32
    return %c0_i32, %c0_i32_0 : i32, i32
  }
  func.func @transform_8(%arg0: i32) -> (i32, i32) {
    %c0_i32 = arith.constant 0 : i32
    %c0_i32_0 = arith.constant 0 : i32
    %c0_i32_1 = arith.constant 0 : i32
    return %c0_i32, %c0_i32_0 : i32, i32
  }
  func.func @transform_9(%arg0: i32) -> (i32, i32) {
    %c0_i32 = arith.constant 0 : i32
    %c0_i32_0 = arith.constant 0 : i32
    %c0_i32_1 = arith.constant 0 : i32
    return %c0_i32, %c0_i32_0 : i32, i32
  }
  func.func @transform_10(%arg0: i32) -> (i32, i32) {
    %c0_i32 = arith.constant 0 : i32
    %c0_i32_0 = arith.constant 0 : i32
    %c0_i32_1 = arith.constant 0 : i32
    return %c0_i32, %c0_i32_0 : i32, i32
  }
  func.func @transform_11(%arg0: i32) -> (i32, i32) {
    %c0_i32 = arith.constant 0 : i32
    %c0_i32_0 = arith.constant 0 : i32
    %c0_i32_1 = arith.constant 0 : i32
    return %c0_i32, %c0_i32_0 : i32, i32
  }
  func.func @transform_12(%arg0: i32) -> (i32, i32) {
    %c0_i32 = arith.constant 0 : i32
    %c0_i32_0 = arith.constant 0 : i32
    %c0_i32_1 = arith.constant 0 : i32
    return %c0_i32, %c0_i32_0 : i32, i32
  }
  func.func @transform_13(%arg0: i32) -> (i32, i32) {
    %c0_i32 = arith.constant 0 : i32
    %c0_i32_0 = arith.constant 0 : i32
    %c0_i32_1 = arith.constant 0 : i32
    return %c0_i32, %c0_i32_0 : i32, i32
  }
  func.func @transform_14(%arg0: i32) -> (i32, i32) {
    %c0_i32 = arith.constant 0 : i32
    %c0_i32_0 = arith.constant 0 : i32
    %c0_i32_1 = arith.constant 0 : i32
    return %c0_i32, %c0_i32_0 : i32, i32
  }
  func.func @transform_15(%arg0: i32) -> (i32, i32) {
    %c0_i32 = arith.constant 0 : i32
    %c0_i32_0 = arith.constant 0 : i32
    %c0_i32_1 = arith.constant 0 : i32
    return %c0_i32, %c0_i32_0 : i32, i32
  }
  func.func @transform_16(%arg0: i32) -> (i32, i32, i32) {
    %c0_i32 = arith.constant 0 : i32
    %c0_i32_0 = arith.constant 0 : i32
    %c0_i32_1 = arith.constant 0 : i32
    return %arg0, %c0_i32, %c0_i32_0 : i32, i32, i32
  }
}

</mosaic_0001>

<llo_original>
// kernel: wavelet_downsample_forward.1
$region0: #{wavelet_downsample_forward.1}
  #allocation0 [shape = 'u32[]', space=smem, size = 0x4, offset = 0x4, fixed_abs, tag = 'smem constant byte address 0x4 - core index']
  #allocation1 [shape = 'u32[72,128]{1,0:T(1,128)}', space=vmem, size = 0x9000, scoped, tag = 'internal scratch']
  #allocation2 [shape = 'f32[16,256]{1,0:T(8,128)}', space=vmem, size = 0x4000, scoped, tag = 'scratch operand']
  %s0 = inlined_call_operand.vmem [shape: f32[2,16,1024], index: 0, kind: input, shape index: {}]
  %s1 = inlined_call_operand.vmem [shape: f32[16,16], index: 1, kind: input, shape index: {}]
  %s2 = inlined_call_operand.vmem [shape: f32[16,1], index: 2, kind: input, shape index: {}]
  %s3 = inlined_call_operand.vmem [shape: f32[16,16], index: 3, kind: input, shape index: {}]
  %s4 = inlined_call_operand.vmem [shape: f32[16,1], index: 4, kind: input, shape index: {}]
  %s5 = inlined_call_operand.vmem [shape: f32[16,16], index: 5, kind: input, shape index: {}]
  %s6 = inlined_call_operand.vmem [shape: f32[16,1], index: 6, kind: input, shape index: {}]
  %s7 = inlined_call_operand.vmem [shape: f32[16,16], index: 7, kind: input, shape index: {}]
  %s8 = inlined_call_operand.vmem [shape: f32[16,1], index: 8, kind: input, shape index: {}]
  %s9 = inlined_call_operand.vmem [shape: f32[16,16], index: 9, kind: input, shape index: {}]
  %s10 = inlined_call_operand.vmem [shape: f32[16,1], index: 10, kind: input, shape index: {}]
  %s11 = inlined_call_operand.vmem [shape: f32[16,9], index: 11, kind: input, shape index: {}]
  %s12 = inlined_call_operand.vmem [shape: f32[16,1], index: 12, kind: input, shape index: {}]
  %s13 = inlined_call_operand.vmem [shape: f32[16,9], index: 13, kind: input, shape index: {}]
  %s14 = inlined_call_operand.vmem [shape: f32[16,1], index: 14, kind: input, shape index: {}]
  %s15 = inlined_call_operand.vmem [shape: f32[18,256], index: 15, kind: input, shape index: {}]
  %s16 = inlined_call_operand.vmem [shape: f32[2,16,256], index: 16, kind: output, shape index: {}]
  %s17 = sld [smem:[#allocation0]]
  $region97: #{wavelet_downsample_forward.1} parent=0
    _
  %s19 = ssub.s32 1, %s17
  %s20 = scalar_select 0, %s19, %s17
  loop: start=0, step=1, limit=4
  $region2: #{wavelet_downsample_forward.1} parent=0 // loop_pre_header
    _
  $region3: #{wavelet_downsample_forward.1} parent=0 // loop_header
    %s22 = sphi 0, %s26
    %p23 = scmp.ge.s32.totalorder %s22, 4
    %s32 = sphi 0, %s34
    %s35 = sphi 0, %s32
    %s36 = sphi 0, %s35
    %s52 = sphi 0, %s36
    %s56 = sphi 0, %s56
    %s58 = sphi 0, %s56
    %s59 = sphi 0, %s58
    %s73 = sphi 0, %s59
    %s77 = sphi 0, %s77
    %s79 = sphi 0, %s77
    %s80 = sphi 0, %s79
    %s94 = sphi 0, %s80
    %s98 = sphi 0, %s98
    %s100 = sphi 0, %s98
    %s101 = sphi 0, %s100
    %s115 = sphi 0, %s101
    %s119 = sphi 0, %s119
    %s121 = sphi 0, %s119
    %s122 = sphi 0, %s121
    %s136 = sphi 0, %s122
    %s140 = sphi 0, %s140
    %s142 = sphi 0, %s140
    %s143 = sphi 0, %s142
    %s157 = sphi 0, %s143
    %s161 = sphi 0, %s161
    %s163 = sphi 0, %s161
    %s164 = sphi 0, %s163
    %s178 = sphi 0, %s164
    %s182 = sphi 0, %s182
    %s184 = sphi 0, %s182
    %s185 = sphi 0, %s184
    %s199 = sphi 0, %s185
    %s203 = sphi 0, %s203
    %s205 = sphi 0, %s203
    %s206 = sphi 0, %s205
    %s220 = sphi 0, %s206
    %s224 = sphi 0, %s224
    %s226 = sphi 0, %s224
    %s227 = sphi 0, %s226
    %s241 = sphi 0, %s227
    %s245 = sphi 0, %s245
    %s247 = sphi 0, %s245
    %s248 = sphi 0, %s247
    %s262 = sphi 0, %s248
    %s266 = sphi 0, %s266
    %s268 = sphi 0, %s266
    %s269 = sphi 0, %s268
    %s283 = sphi 0, %s269
    %s287 = sphi 0, %s287
    %s289 = sphi 0, %s287
    %s290 = sphi 0, %s289
    %s304 = sphi 0, %s290
    %s308 = sphi 0, %s308
    %s310 = sphi 0, %s308
    %s311 = sphi 0, %s310
    %s325 = sphi 0, %s311
    %s329 = sphi 0, %s329
    %s331 = sphi 0, %s329
    %s332 = sphi 0, %s331
    %s346 = sphi 0, %s332
    %s350 = sphi 0, %s350
    %s352 = sphi 0, %s350
    %s353 = sphi 0, %s352
    %s367 = sphi 0, %s353
    %s373 = sphi 0, %s375
    %s376 = sphi 0, %s373
    %s377 = sphi 0, %s376
    %s393 = sphi 0, %s377
  $region4: #{wavelet_downsample_forward.1} parent=0 // loop_header_branch
    %25 = sbr.rel (%p23) target = $region8
  $region5: #{wavelet_downsample_forward.1} parent=0 // loop_body
    %s27 = ssub.s32 %s22, 1
    %s28 = ssub.s32 %s22, 2
    %s29 = sadd.s32 %s22, 1
    %s30 = ssub.s32 %s22, %s29
    %p31 = scmp.eq.s32.totalorder %s30, 0
    %s33 = sadd.s32 %s32, 1
    %s34 = scalar_select %p31, %s32, %s33
    %p37 = pneg %p31
    %p38 = scmp.eq.s32.totalorder %s22, 1
    %p39 = por %p37, %p38
    %p40 = scmp.ne.s32.totalorder %s32, %s35
    %p41 = scmp.eq.s32.totalorder %s22, 0
    %p42 = por %p40, %p41
    %p43 = scmp.ne.s32.totalorder %s32, %s35
    %p44 = scmp.eq.s32.totalorder %s27, 1
    %p45 = por %p43, %p44
    %p46 = scmp.ne.s32.totalorder %s35, %s36
    %p47 = scmp.eq.s32.totalorder %s27, 0
    %p48 = por %p46, %p47
    %p49 = scmp.ne.s32.totalorder %s35, %s36
    %p50 = scmp.eq.s32.totalorder %s28, 1
    %p51 = por %p49, %p50
    %p53 = scmp.ne.s32.totalorder %s36, %s52
    %p54 = scmp.eq.s32.totalorder %s28, 0
    %p55 = por %p53, %p54
    %s57 = sadd.s32 %s56, 1
    %p60 = scmp.eq.s32.totalorder %s22, 1
    %p61 = scmp.ne.s32.totalorder %s56, %s58
    %p62 = scmp.eq.s32.totalorder %s22, 0
    %p63 = por %p61, %p62
    %p64 = scmp.ne.s32.totalorder %s56, %s58
    %p65 = scmp.eq.s32.totalorder %s27, 1
    %p66 = por %p64, %p65
    %p67 = scmp.ne.s32.totalorder %s58, %s59
    %p68 = scmp.eq.s32.totalorder %s27, 0
    %p69 = por %p67, %p68
    %p70 = scmp.ne.s32.totalorder %s58, %s59
    %p71 = scmp.eq.s32.totalorder %s28, 1
    %p72 = por %p70, %p71
    %p74 = scmp.ne.s32.totalorder %s59, %s73
    %p75 = scmp.eq.s32.totalorder %s28, 0
    %p76 = por %p74, %p75
    %s78 = sadd.s32 %s77, 1
    %p81 = scmp.eq.s32.totalorder %s22, 1
    %p82 = scmp.ne.s32.totalorder %s77, %s79
    %p83 = scmp.eq.s32.totalorder %s22, 0
    %p84 = por %p82, %p83
    %p85 = scmp.ne.s32.totalorder %s77, %s79
    %p86 = scmp.eq.s32.totalorder %s27, 1
    %p87 = por %p85, %p86
    %p88 = scmp.ne.s32.totalorder %s79, %s80
    %p89 = scmp.eq.s32.totalorder %s27, 0
    %p90 = por %p88, %p89
    %p91 = scmp.ne.s32.totalorder %s79, %s80
    %p92 = scmp.eq.s32.totalorder %s28, 1
    %p93 = por %p91, %p92
    %p95 = scmp.ne.s32.totalorder %s80, %s94
    %p96 = scmp.eq.s32.totalorder %s28, 0
    %p97 = por %p95, %p96
    %s99 = sadd.s32 %s98, 1
    %p102 = scmp.eq.s32.totalorder %s22, 1
    %p103 = scmp.ne.s32.totalorder %s98, %s100
    %p104 = scmp.eq.s32.totalorder %s22, 0
    %p105 = por %p103, %p104
    %p106 = scmp.ne.s32.totalorder %s98, %s100
    %p107 = scmp.eq.s32.totalorder %s27, 1
    %p108 = por %p106, %p107
    %p109 = scmp.ne.s32.totalorder %s100, %s101
    %p110 = scmp.eq.s32.totalorder %s27, 0
    %p111 = por %p109, %p110
    %p112 = scmp.ne.s32.totalorder %s100, %s101
    %p113 = scmp.eq.s32.totalorder %s28, 1
    %p114 = por %p112, %p113
    %p116 = scmp.ne.s32.totalorder %s101, %s115
    %p117 = scmp.eq.s32.totalorder %s28, 0
    %p118 = por %p116, %p117
    %s120 = sadd.s32 %s119, 1
    %p123 = scmp.eq.s32.totalorder %s22, 1
    %p124 = scmp.ne.s32.totalorder %s119, %s121
    %p125 = scmp.eq.s32.totalorder %s22, 0
    %p126 = por %p124, %p125
    %p127 = scmp.ne.s32.totalorder %s119, %s121
    %p128 = scmp.eq.s32.totalorder %s27, 1
    %p129 = por %p127, %p128
    %p130 = scmp.ne.s32.totalorder %s121, %s122
    %p131 = scmp.eq.s32.totalorder %s27, 0
    %p132 = por %p130, %p131
    %p133 = scmp.ne.s32.totalorder %s121, %s122
    %p134 = scmp.eq.s32.totalorder %s28, 1
    %p135 = por %p133, %p134
    %p137 = scmp.ne.s32.totalorder %s122, %s136
    %p138 = scmp.eq.s32.totalorder %s28, 0
    %p139 = por %p137, %p138
    %s141 = sadd.s32 %s140, 1
    %p144 = scmp.eq.s32.totalorder %s22, 1
    %p145 = scmp.ne.s32.totalorder %s140, %s142
    %p146 = scmp.eq.s32.totalorder %s22, 0
    %p147 = por %p145, %p146
    %p148 = scmp.ne.s32.totalorder %s140, %s142
    %p149 = scmp.eq.s32.totalorder %s27, 1
    %p150 = por %p148, %p149
    %p151 = scmp.ne.s32.totalorder %s142, %s143
    %p152 = scmp.eq.s32.totalorder %s27, 0
    %p153 = por %p151, %p152
    %p154 = scmp.ne.s32.totalorder %s142, %s143
    %p155 = scmp.eq.s32.totalorder %s28, 1
    %p156 = por %p154, %p155
    %p158 = scmp.ne.s32.totalorder %s143, %s157
    %p159 = scmp.eq.s32.totalorder %s28, 0
    %p160 = por %p158, %p159
    %s162 = sadd.s32 %s161, 1
    %p165 = scmp.eq.s32.totalorder %s22, 1
    %p166 = scmp.ne.s32.totalorder %s161, %s163
    %p167 = scmp.eq.s32.totalorder %s22, 0
    %p168 = por %p166, %p167
    %p169 = scmp.ne.s32.totalorder %s161, %s163
    %p170 = scmp.eq.s32.totalorder %s27, 1
    %p171 = por %p169, %p170
    %p172 = scmp.ne.s32.totalorder %s163, %s164
    %p173 = scmp.eq.s32.totalorder %s27, 0
    %p174 = por %p172, %p173
    %p175 = scmp.ne.s32.totalorder %s163, %s164
    %p176 = scmp.eq.s32.totalorder %s28, 1
    %p177 = por %p175, %p176
    %p179 = scmp.ne.s32.totalorder %s164, %s178
    %p180 = scmp.eq.s32.totalorder %s28, 0
    %p181 = por %p179, %p180
    %s183 = sadd.s32 %s182, 1
    %p186 = scmp.eq.s32.totalorder %s22, 1
    %p187 = scmp.ne.s32.totalorder %s182, %s184
    %p188 = scmp.eq.s32.totalorder %s22, 0
    %p189 = por %p187, %p188
    %p190 = scmp.ne.s32.totalorder %s182, %s184
    %p191 = scmp.eq.s32.totalorder %s27, 1
    %p192 = por %p190, %p191
    %p193 = scmp.ne.s32.totalorder %s184, %s185
    %p194 = scmp.eq.s32.totalorder %s27, 0
    %p195 = por %p193, %p194
    %p196 = scmp.ne.s32.totalorder %s184, %s185
    %p197 = scmp.eq.s32.totalorder %s28, 1
    %p198 = por %p196, %p197
    %p200 = scmp.ne.s32.totalorder %s185, %s199
    %p201 = scmp.eq.s32.totalorder %s28, 0
    %p202 = por %p200, %p201
    %s204 = sadd.s32 %s203, 1
    %p207 = scmp.eq.s32.totalorder %s22, 1
    %p208 = scmp.ne.s32.totalorder %s203, %s205
    %p209 = scmp.eq.s32.totalorder %s22, 0
    %p210 = por %p208, %p209
    %p211 = scmp.ne.s32.totalorder %s203, %s205
    %p212 = scmp.eq.s32.totalorder %s27, 1
    %p213 = por %p211, %p212
    %p214 = scmp.ne.s32.totalorder %s205, %s206
    %p215 = scmp.eq.s32.totalorder %s27, 0
    %p216 = por %p214, %p215
    %p217 = scmp.ne.s32.totalorder %s205, %s206
    %p218 = scmp.eq.s32.totalorder %s28, 1
    %p219 = por %p217, %p218
    %p221 = scmp.ne.s32.totalorder %s206, %s220
    %p222 = scmp.eq.s32.totalorder %s28, 0
    %p223 = por %p221, %p222
    %s225 = sadd.s32 %s224, 1
    %p228 = scmp.eq.s32.totalorder %s22, 1
    %p229 = scmp.ne.s32.totalorder %s224, %s226
    %p230 = scmp.eq.s32.totalorder %s22, 0
    %p231 = por %p229, %p230
    %p232 = scmp.ne.s32.totalorder %s224, %s226
    %p233 = scmp.eq.s32.totalorder %s27, 1
    %p234 = por %p232, %p233
    %p235 = scmp.ne.s32.totalorder %s226, %s227
    %p236 = scmp.eq.s32.totalorder %s27, 0
    %p237 = por %p235, %p236
    %p238 = scmp.ne.s32.totalorder %s226, %s227
    %p239 = scmp.eq.s32.totalorder %s28, 1
    %p240 = por %p238, %p239
    %p242 = scmp.ne.s32.totalorder %s227, %s241
    %p243 = scmp.eq.s32.totalorder %s28, 0
    %p244 = por %p242, %p243
    %s246 = sadd.s32 %s245, 1
    %p249 = scmp.eq.s32.totalorder %s22, 1
    %p250 = scmp.ne.s32.totalorder %s245, %s247
    %p251 = scmp.eq.s32.totalorder %s22, 0
    %p252 = por %p250, %p251
    %p253 = scmp.ne.s32.totalorder %s245, %s247
    %p254 = scmp.eq.s32.totalorder %s27, 1
    %p255 = por %p253, %p254
    %p256 = scmp.ne.s32.totalorder %s247, %s248
    %p257 = scmp.eq.s32.totalorder %s27, 0
    %p258 = por %p256, %p257
    %p259 = scmp.ne.s32.totalorder %s247, %s248
    %p260 = scmp.eq.s32.totalorder %s28, 1
    %p261 = por %p259, %p260
    %p263 = scmp.ne.s32.totalorder %s248, %s262
    %p264 = scmp.eq.s32.totalorder %s28, 0
    %p265 = por %p263, %p264
    %s267 = sadd.s32 %s266, 1
    %p270 = scmp.eq.s32.totalorder %s22, 1
    %p271 = scmp.ne.s32.totalorder %s266, %s268
    %p272 = scmp.eq.s32.totalorder %s22, 0
    %p273 = por %p271, %p272
    %p274 = scmp.ne.s32.totalorder %s266, %s268
    %p275 = scmp.eq.s32.totalorder %s27, 1
    %p276 = por %p274, %p275
    %p277 = scmp.ne.s32.totalorder %s268, %s269
    %p278 = scmp.eq.s32.totalorder %s27, 0
    %p279 = por %p277, %p278
    %p280 = scmp.ne.s32.totalorder %s268, %s269
    %p281 = scmp.eq.s32.totalorder %s28, 1
    %p282 = por %p280, %p281
    %p284 = scmp.ne.s32.totalorder %s269, %s283
    %p285 = scmp.eq.s32.totalorder %s28, 0
    %p286 = por %p284, %p285
    %s288 = sadd.s32 %s287, 1
    %p291 = scmp.eq.s32.totalorder %s22, 1
    %p292 = scmp.ne.s32.totalorder %s287, %s289
    %p293 = scmp.eq.s32.totalorder %s22, 0
    %p294 = por %p292, %p293
    %p295 = scmp.ne.s32.totalorder %s287, %s289
    %p296 = scmp.eq.s32.totalorder %s27, 1
    %p297 = por %p295, %p296
    %p298 = scmp.ne.s32.totalorder %s289, %s290
    %p299 = scmp.eq.s32.totalorder %s27, 0
    %p300 = por %p298, %p299
    %p301 = scmp.ne.s32.totalorder %s289, %s290
    %p302 = scmp.eq.s32.totalorder %s28, 1
    %p303 = por %p301, %p302
    %p305 = scmp.ne.s32.totalorder %s290, %s304
    %p306 = scmp.eq.s32.totalorder %s28, 0
    %p307 = por %p305, %p306
    %s309 = sadd.s32 %s308, 1
    %p312 = scmp.eq.s32.totalorder %s22, 1
    %p313 = scmp.ne.s32.totalorder %s308, %s310
    %p314 = scmp.eq.s32.totalorder %s22, 0
    %p315 = por %p313, %p314
    %p316 = scmp.ne.s32.totalorder %s308, %s310
    %p317 = scmp.eq.s32.totalorder %s27, 1
    %p318 = por %p316, %p317
    %p319 = scmp.ne.s32.totalorder %s310, %s311
    %p320 = scmp.eq.s32.totalorder %s27, 0
    %p321 = por %p319, %p320
    %p322 = scmp.ne.s32.totalorder %s310, %s311
    %p323 = scmp.eq.s32.totalorder %s28, 1
    %p324 = por %p322, %p323
    %p326 = scmp.ne.s32.totalorder %s311, %s325
    %p327 = scmp.eq.s32.totalorder %s28, 0
    %p328 = por %p326, %p327
    %s330 = sadd.s32 %s329, 1
    %p333 = scmp.eq.s32.totalorder %s22, 1
    %p334 = scmp.ne.s32.totalorder %s329, %s331
    %p335 = scmp.eq.s32.totalorder %s22, 0
    %p336 = por %p334, %p335
    %p337 = scmp.ne.s32.totalorder %s329, %s331
    %p338 = scmp.eq.s32.totalorder %s27, 1
    %p339 = por %p337, %p338
    %p340 = scmp.ne.s32.totalorder %s331, %s332
    %p341 = scmp.eq.s32.totalorder %s27, 0
    %p342 = por %p340, %p341
    %p343 = scmp.ne.s32.totalorder %s331, %s332
    %p344 = scmp.eq.s32.totalorder %s28, 1
    %p345 = por %p343, %p344
    %p347 = scmp.ne.s32.totalorder %s332, %s346
    %p348 = scmp.eq.s32.totalorder %s28, 0
    %p349 = por %p347, %p348
    %s351 = sadd.s32 %s350, 1
    %p354 = scmp.eq.s32.totalorder %s22, 1
    %p355 = scmp.ne.s32.totalorder %s350, %s352
    %p356 = scmp.eq.s32.totalorder %s22, 0
    %p357 = por %p355, %p356
    %p358 = scmp.ne.s32.totalorder %s350, %s352
    %p359 = scmp.eq.s32.totalorder %s27, 1
    %p360 = por %p358, %p359
    %p361 = scmp.ne.s32.totalorder %s352, %s353
    %p362 = scmp.eq.s32.totalorder %s27, 0
    %p363 = por %p361, %p362
    %p364 = scmp.ne.s32.totalorder %s352, %s353
    %p365 = scmp.eq.s32.totalorder %s28, 1
    %p366 = por %p364, %p365
    %p368 = scmp.ne.s32.totalorder %s353, %s367
    %p369 = scmp.eq.s32.totalorder %s28, 0
    %p370 = por %p368, %p369
    %s371 = ssub.s32 %s22, %s29
    %p372 = scmp.eq.s32.totalorder %s371, 0
    %s374 = sadd.s32 %s373, 1
    %s375 = scalar_select %p372, %s373, %s374
    %p378 = pneg %p372
    %p379 = scmp.eq.s32.totalorder %s22, 1
    %p380 = por %p378, %p379
    %p381 = scmp.ne.s32.totalorder %s373, %s376
    %p382 = scmp.eq.s32.totalorder %s22, 0
    %p383 = por %p381, %p382
    %p384 = scmp.ne.s32.totalorder %s373, %s376
    %p385 = scmp.eq.s32.totalorder %s27, 1
    %p386 = por %p384, %p385
    %p387 = scmp.ne.s32.totalorder %s376, %s377
    %p388 = scmp.eq.s32.totalorder %s27, 0
    %p389 = por %p387, %p388
    %p390 = scmp.ne.s32.totalorder %s376, %s377
    %p391 = scmp.eq.s32.totalorder %s28, 1
    %p392 = por %p390, %p391
    %p394 = scmp.ne.s32.totalorder %s377, %s393
    %p395 = scmp.eq.s32.totalorder %s28, 0
    %p396 = por %p394, %p395
    %p397 = scmp.le.s32.totalorder 1, %s22
    %p398 = scmp.lt.s32.totalorder %s22, 3
    %p399 = pnand %p397, %p398
    %p400 = pneg %p399
    // Predicated region
    $region9: #{wavelet_downsample_forward.1} parent=5 // pred_check
      _
    $region10: #{wavelet_downsample_forward.1} parent=5 // pred_check_branch
      %402 = sbr.rel (%p399) target = $region12
    $region11: #{wavelet_downsample_forward.1} parent=5 // pred_region
      %s403 = ssub.s32 %s22, 1
      // Predicated region
      $region13: #{wavelet_downsample_forward.1} parent=11 // pred_check
        %p404 = pneg %p69
      $region14: #{wavelet_downsample_forward.1} parent=11 // pred_check_branch
        %406 = sbr.rel (%p404) target = $region16
      $region15: #{wavelet_downsample_forward.1} parent=11 // pred_region
        _
      $region16: #{wavelet_downsample_forward.1} parent=11 // pred_fallthru
        _
      // Predicated region
      $region17: #{wavelet_downsample_forward.1} parent=11 // pred_check
        %p407 = pneg %p90
      $region18: #{wavelet_downsample_forward.1} parent=11 // pred_check_branch
        %409 = sbr.rel (%p407) target = $region20
      $region19: #{wavelet_downsample_forward.1} parent=11 // pred_region
        _
      $region20: #{wavelet_downsample_forward.1} parent=11 // pred_fallthru
        _
      // Predicated region
      $region21: #{wavelet_downsample_forward.1} parent=11 // pred_check
        %p410 = pneg %p111
      $region22: #{wavelet_downsample_forward.1} parent=11 // pred_check_branch
        %412 = sbr.rel (%p410) target = $region24
      $region23: #{wavelet_downsample_forward.1} parent=11 // pred_region
        _
      $region24: #{wavelet_downsample_forward.1} parent=11 // pred_fallthru
        _
      // Predicated region
      $region25: #{wavelet_downsample_forward.1} parent=11 // pred_check
        %p413 = pneg %p132
      $region26: #{wavelet_downsample_forward.1} parent=11 // pred_check_branch
        %415 = sbr.rel (%p413) target = $region28
      $region27: #{wavelet_downsample_forward.1} parent=11 // pred_region
        _
      $region28: #{wavelet_downsample_forward.1} parent=11 // pred_fallthru
        _
      // Predicated region
      $region29: #{wavelet_downsample_forward.1} parent=11 // pred_check
        %p416 = pneg %p153
      $region30: #{wavelet_downsample_forward.1} parent=11 // pred_check_branch
        %418 = sbr.rel (%p416) target = $region32
      $region31: #{wavelet_downsample_forward.1} parent=11 // pred_region
        _
      $region32: #{wavelet_downsample_forward.1} parent=11 // pred_fallthru
        _
      // Predicated region
      $region33: #{wavelet_downsample_forward.1} parent=11 // pred_check
        %p419 = pneg %p174
      $region34: #{wavelet_downsample_forward.1} parent=11 // pred_check_branch
        %421 = sbr.rel (%p419) target = $region36
      $region35: #{wavelet_downsample_forward.1} parent=11 // pred_region
        _
      $region36: #{wavelet_downsample_forward.1} parent=11 // pred_fallthru
        _
      // Predicated region
      $region37: #{wavelet_downsample_forward.1} parent=11 // pred_check
        %p422 = pneg %p195
      $region38: #{wavelet_downsample_forward.1} parent=11 // pred_check_branch
        %424 = sbr.rel (%p422) target = $region40
      $region39: #{wavelet_downsample_forward.1} parent=11 // pred_region
        _
      $region40: #{wavelet_downsample_forward.1} parent=11 // pred_fallthru
        _
      // Predicated region
      $region41: #{wavelet_downsample_forward.1} parent=11 // pred_check
        %p425 = pneg %p216
      $region42: #{wavelet_downsample_forward.1} parent=11 // pred_check_branch
        %427 = sbr.rel (%p425) target = $region44
      $region43: #{wavelet_downsample_forward.1} parent=11 // pred_region
        _
      $region44: #{wavelet_downsample_forward.1} parent=11 // pred_fallthru
        _
      // Predicated region
      $region45: #{wavelet_downsample_forward.1} parent=11 // pred_check
        %p428 = pneg %p237
      $region46: #{wavelet_downsample_forward.1} parent=11 // pred_check_branch
        %430 = sbr.rel (%p428) target = $region48
      $region47: #{wavelet_downsample_forward.1} parent=11 // pred_region
        _
      $region48: #{wavelet_downsample_forward.1} parent=11 // pred_fallthru
        _
      // Predicated region
      $region49: #{wavelet_downsample_forward.1} parent=11 // pred_check
        %p431 = pneg %p258
      $region50: #{wavelet_downsample_forward.1} parent=11 // pred_check_branch
        %433 = sbr.rel (%p431) target = $region52
      $region51: #{wavelet_downsample_forward.1} parent=11 // pred_region
        _
      $region52: #{wavelet_downsample_forward.1} parent=11 // pred_fallthru
        _
      // Predicated region
      $region53: #{wavelet_downsample_forward.1} parent=11 // pred_check
        %p434 = pneg %p279
      $region54: #{wavelet_downsample_forward.1} parent=11 // pred_check_branch
        %436 = sbr.rel (%p434) target = $region56
      $region55: #{wavelet_downsample_forward.1} parent=11 // pred_region
        _
      $region56: #{wavelet_downsample_forward.1} parent=11 // pred_fallthru
        _
      // Predicated region
      $region57: #{wavelet_downsample_forward.1} parent=11 // pred_check
        %p437 = pneg %p300
      $region58: #{wavelet_downsample_forward.1} parent=11 // pred_check_branch
        %439 = sbr.rel (%p437) target = $region60
      $region59: #{wavelet_downsample_forward.1} parent=11 // pred_region
        _
      $region60: #{wavelet_downsample_forward.1} parent=11 // pred_fallthru
        _
      // Predicated region
      $region61: #{wavelet_downsample_forward.1} parent=11 // pred_check
        %p440 = pneg %p321
      $region62: #{wavelet_downsample_forward.1} parent=11 // pred_check_branch
        %442 = sbr.rel (%p440) target = $region64
      $region63: #{wavelet_downsample_forward.1} parent=11 // pred_region
        _
      $region64: #{wavelet_downsample_forward.1} parent=11 // pred_fallthru
        _
      // Predicated region
      $region65: #{wavelet_downsample_forward.1} parent=11 // pred_check
        %p443 = pneg %p342
      $region66: #{wavelet_downsample_forward.1} parent=11 // pred_check_branch
        %445 = sbr.rel (%p443) target = $region68
      $region67: #{wavelet_downsample_forward.1} parent=11 // pred_region
        _
      $region68: #{wavelet_downsample_forward.1} parent=11 // pred_fallthru
        _
      // Predicated region
      $region69: #{wavelet_downsample_forward.1} parent=11 // pred_check
        %p446 = pneg %p363
      $region70: #{wavelet_downsample_forward.1} parent=11 // pred_check_branch
        %448 = sbr.rel (%p446) target = $region72
      $region71: #{wavelet_downsample_forward.1} parent=11 // pred_region
        _
      $region72: #{wavelet_downsample_forward.1} parent=11 // pred_fallthru
        _
    $region12: #{wavelet_downsample_forward.1} parent=5 // pred_fallthru
      _
    %p449 = scmp.lt.s32.totalorder %s22, 2
    // Predicated region
    $region73: #{wavelet_downsample_forward.1} parent=5 // pred_check
      %p450 = pneg %p449
    $region74: #{wavelet_downsample_forward.1} parent=5 // pred_check_branch
      %452 = sbr.rel (%p450) target = $region76
    $region75: #{wavelet_downsample_forward.1} parent=5 // pred_region
      // Predicated region
      $region77: #{wavelet_downsample_forward.1} parent=75 // pred_check
        %p453 = pneg %p42
      $region78: #{wavelet_downsample_forward.1} parent=75 // pred_check_branch
        %455 = sbr.rel (%p453) target = $region80
      $region79: #{wavelet_downsample_forward.1} parent=75 // pred_region
        %p456 = scmp.lt.s32.totalorder %s22, 1
        %s457 = scalar_select %p456, %s22, 1
        %s458 = smul.addr %s457, 16
        %s459 = smul.addr %s458, 8
        %s460 = scalar_lea.vmem %s0, %s459
      $region80: #{wavelet_downsample_forward.1} parent=75 // pred_fallthru
        _
    $region76: #{wavelet_downsample_forward.1} parent=5 // pred_fallthru
      _
    %p461 = scmp.le.s32.totalorder 1, %s22
    %p462 = scmp.lt.s32.totalorder %s22, 3
    %p463 = pnand %p461, %p462
    %p464 = pneg %p463
    // Predicated region
    $region81: #{wavelet_downsample_forward.1} parent=5 // pred_check
      _
    $region82: #{wavelet_downsample_forward.1} parent=5 // pred_check_branch
      %466 = sbr.rel (%p463) target = $region84
    $region83: #{wavelet_downsample_forward.1} parent=5 // pred_region
      %s467 = ssub.s32 %s22, 1
      %p468 = scmp.lt.s32.totalorder %s27, 1
      %s469 = scalar_select %p468, %s27, 1
      %s470 = smul.addr %s469, 16
      %s471 = smul.addr %s470, 8
      %s472 = scalar_lea.vmem %s0, %s471
      %p473 = pneg %p48
      %p474 = pneg %p45
      %p475 = pneg %p69
      %p476 = pneg %p66
      %p477 = pneg %p90
      %p478 = pneg %p87
      %p479 = pneg %p111
      %p480 = pneg %p108
      %p481 = pneg %p132
      %p482 = pneg %p129
      %p483 = pneg %p153
      %p484 = pneg %p150
      %p485 = pneg %p174
      %p486 = pneg %p171
      %p487 = pneg %p195
      %p488 = pneg %p192
      %p489 = pneg %p216
      %p490 = pneg %p213
      %p491 = pneg %p237
      %p492 = pneg %p234
      %p493 = pneg %p258
      %p494 = pneg %p255
      %p495 = pneg %p279
      %p496 = pneg %p276
      %p497 = pneg %p300
      %p498 = pneg %p297
      %p499 = pneg %p321
      %p500 = pneg %p318
      %p501 = pneg %p342
      %p502 = pneg %p339
      %p503 = pneg %p363
      %p504 = pneg %p360
      %p505 = pneg %p389
      %p506 = pneg %p386
      %p507 = scmp.lt.s32.totalorder %s27, 1
      %s508 = scalar_select %p507, %s27, 1
      %s509 = smul.addr %s508, 4
      %s510 = smul.addr %s509, 8
      %s511 = scalar_lea.vmem %s16, %s510
      %p512 = scmp.lt.s32.totalorder %s27, 1
      %s513 = scalar_select %p512, %s27, 1
      %s514 = smul.addr %s513, 16
      %s515 = smul.addr %s514, 8
      %s516 = scalar_lea.vmem %s0, %s515
      %p517 = scmp.lt.s32.totalorder %s27, 1
      %s518 = scalar_select %p517, %s27, 1
      %s519 = smul.addr %s518, 4
      %s520 = smul.addr %s519, 8
      %s521 = scalar_lea.vmem %s16, %s520
      %v522 = vld [vmem:[%s516] sm:$0xff]
      %v523 = vld [vmem:[%s516 + $0x8] sm:$0xff]
      %v524 = vld [vmem:[%s516 + $0x10] sm:$0xff]
      %v525 = vld [vmem:[%s516 + $0x18] sm:$0xff]
      %v526 = vld [vmem:[%s516 + $0x20] sm:$0xff]
      %v527 = vld [vmem:[%s516 + $0x28] sm:$0xff]
      %v528 = vld [vmem:[%s516 + $0x30] sm:$0xff]
      %v529 = vld [vmem:[%s516 + $0x38] sm:$0xff]
      %v530 = vld [vmem:[%s516 + $0x40] sm:$0xff]
      %v531 = vld [vmem:[%s516 + $0x48] sm:$0xff]
      %v532 = vld [vmem:[%s516 + $0x50] sm:$0xff]
      %v533 = vld [vmem:[%s516 + $0x58] sm:$0xff]
      %v534 = vld [vmem:[%s516 + $0x60] sm:$0xff]
      %v535 = vld [vmem:[%s516 + $0x68] sm:$0xff]
      %v536 = vld [vmem:[%s516 + $0x70] sm:$0xff]
      %v537 = vld [vmem:[%s516 + $0x78] sm:$0xff]
      %v538 = vld [vmem:[%s1] sm:$0xff]
      %v539 = vld [vmem:[%s1 + $0x8] sm:$0xff]
      %v540 = vld [vmem:[%s2] sm:$0xff]
      %v541 = vld [vmem:[%s2 + $0x8] sm:$0xff]
      %543 = vset.pattern.permute.xlu0 0
      %544 = vperm.xlu0 %543, %v540
      %v545 = vpop.permute.xlu0 %544
      %548 = vset.pattern.permute.xlu0 0
      %549 = vperm.xlu0 %548, %v541
      %v550 = vpop.permute.xlu0 %549
      %vm552 = vcmask 130048
      %v554 = vsel %vm552, %v538, 0
      %v557 = vsel %vm552, %v539, 0
      %559 = vmatpush.msra.mxu0 0.0
      %560 = vmatpush.msra.mxu0 0.0
      %561 = vmatpush.msra.mxu0 0.0
      %562 = vmatpush.msra.mxu0 0.0
      %563 = vmatpush.msra.mxu0 0.0
      %564 = vmatpush.msra.mxu0 0.0
      %565 = vmatpush.msra.mxu0 0.0
      %566 = vmatpush.msra.mxu0 0.0
      %567 = vmatpush.msra.mxu0 0.0
      %568 = vmatpush.msra.mxu0 0.0
      %569 = vmatpush.msra.mxu0 0.0
      %570 = vmatpush.msra.mxu0 0.0
      %571 = vmatpush.msra.mxu0 0.0
      %572 = vmatpush.msra.mxu0 0.0
      %573 = vmatpush.msra.mxu0 %v530
      %574 = vmatpush.msra.mxu0 %v522
      %575 = vmatmul.f32.gmra.mxu0 %v554
      %v576 = vpop.f32.mrf.mxu0
      %v577 = vadd.f32 %v545, %v576
      %578 = vmatmul.f32.gmra.mxu0 %v557
      %v579 = vpop.f32.mrf.mxu0
      %v580 = vadd.f32 %v550, %v579
      %581 = vdwg.mxu0
      %582 = vmatpush.msra.mxu0 0.0
      %583 = vmatpush.msra.mxu0 0.0
      %584 = vmatpush.msra.mxu0 0.0
      %585 = vmatpush.msra.mxu0 0.0
      %586 = vmatpush.msra.mxu0 0.0
      %587 = vmatpush.msra.mxu0 0.0
      %588 = vmatpush.msra.mxu0 0.0
      %589 = vmatpush.msra.mxu0 0.0
      %590 = vmatpush.msra.mxu0 0.0
      %591 = vmatpush.msra.mxu0 0.0
      %592 = vmatpush.msra.mxu0 0.0
      %593 = vmatpush.msra.mxu0 0.0
      %594 = vmatpush.msra.mxu0 0.0
      %595 = vmatpush.msra.mxu0 0.0
      %596 = vmatpush.msra.mxu0 %v531
      %597 = vmatpush.msra.mxu0 %v523
      %598 = vmatmul.f32.gmra.mxu0 %v554
      %v599 = vpop.f32.mrf.mxu0
      %v600 = vadd.f32 %v545, %v599
      %601 = vmatmul.f32.gmra.mxu0 %v557
      %v602 = vpop.f32.mrf.mxu0
      %v603 = vadd.f32 %v550, %v602
      %604 = vdwg.mxu0
      %605 = vmatpush.msra.mxu0 0.0
      %606 = vmatpush.msra.mxu0 0.0
      %607 = vmatpush.msra.mxu0 0.0
      %608 = vmatpush.msra.mxu0 0.0
      %609 = vmatpush.msra.mxu0 0.0
      %610 = vmatpush.msra.mxu0 0.0
      %611 = vmatpush.msra.mxu0 0.0
      %612 = vmatpush.msra.mxu0 0.0
      %613 = vmatpush.msra.mxu0 0.0
      %614 = vmatpush.msra.mxu0 0.0
      %615 = vmatpush.msra.mxu0 0.0
      %616 = vmatpush.msra.mxu0 0.0
      %617 = vmatpush.msra.mxu0 0.0
      %618 = vmatpush.msra.mxu0 0.0
      %619 = vmatpush.msra.mxu0 %v532
      %620 = vmatpush.msra.mxu0 %v524
      %621 = vmatmul.f32.gmra.mxu0 %v554
      %v622 = vpop.f32.mrf.mxu0
      %v623 = vadd.f32 %v545, %v622
      %624 = vmatmul.f32.gmra.mxu0 %v557
      %v625 = vpop.f32.mrf.mxu0
      %v626 = vadd.f32 %v550, %v625
      %627 = vdwg.mxu0
      %628 = vmatpush.msra.mxu0 0.0
      %629 = vmatpush.msra.mxu0 0.0
      %630 = vmatpush.msra.mxu0 0.0
      %631 = vmatpush.msra.mxu0 0.0
      %632 = vmatpush.msra.mxu0 0.0
      %633 = vmatpush.msra.mxu0 0.0
      %634 = vmatpush.msra.mxu0 0.0
      %635 = vmatpush.msra.mxu0 0.0
      %636 = vmatpush.msra.mxu0 0.0
      %637 = vmatpush.msra.mxu0 0.0
      %638 = vmatpush.msra.mxu0 0.0
      %639 = vmatpush.msra.mxu0 0.0
      %640 = vmatpush.msra.mxu0 0.0
      %641 = vmatpush.msra.mxu0 0.0
      %642 = vmatpush.msra.mxu0 %v533
      %643 = vmatpush.msra.mxu0 %v525
      %644 = vmatmul.f32.gmra.mxu0 %v554
      %v645 = vpop.f32.mrf.mxu0
      %v646 = vadd.f32 %v545, %v645
      %647 = vmatmul.f32.gmra.mxu0 %v557
      %v648 = vpop.f32.mrf.mxu0
      %v649 = vadd.f32 %v550, %v648
      %650 = vdwg.mxu0
      %651 = vmatpush.msra.mxu0 0.0
      %652 = vmatpush.msra.mxu0 0.0
      %653 = vmatpush.msra.mxu0 0.0
      %654 = vmatpush.msra.mxu0 0.0
      %655 = vmatpush.msra.mxu0 0.0
      %656 = vmatpush.msra.mxu0 0.0
      %657 = vmatpush.msra.mxu0 0.0
      %658 = vmatpush.msra.mxu0 0.0
      %659 = vmatpush.msra.mxu0 0.0
      %660 = vmatpush.msra.mxu0 0.0
      %661 = vmatpush.msra.mxu0 0.0
      %662 = vmatpush.msra.mxu0 0.0
      %663 = vmatpush.msra.mxu0 0.0
      %664 = vmatpush.msra.mxu0 0.0
      %665 = vmatpush.msra.mxu0 %v534
      %666 = vmatpush.msra.mxu0 %v526
      %667 = vmatmul.f32.gmra.mxu0 %v554
      %v668 = vpop.f32.mrf.mxu0
      %v669 = vadd.f32 %v545, %v668
      %670 = vmatmul.f32.gmra.mxu0 %v557
      %v671 = vpop.f32.mrf.mxu0
      %v672 = vadd.f32 %v550, %v671
      %673 = vdwg.mxu0
      %674 = vmatpush.msra.mxu0 0.0
      %675 = vmatpush.msra.mxu0 0.0
      %676 = vmatpush.msra.mxu0 0.0
      %677 = vmatpush.msra.mxu0 0.0
      %678 = vmatpush.msra.mxu0 0.0
      %679 = vmatpush.msra.mxu0 0.0
      %680 = vmatpush.msra.mxu0 0.0
      %681 = vmatpush.msra.mxu0 0.0
      %682 = vmatpush.msra.mxu0 0.0
      %683 = vmatpush.msra.mxu0 0.0
      %684 = vmatpush.msra.mxu0 0.0
      %685 = vmatpush.msra.mxu0 0.0
      %686 = vmatpush.msra.mxu0 0.0
      %687 = vmatpush.msra.mxu0 0.0
      %688 = vmatpush.msra.mxu0 %v535
      %689 = vmatpush.msra.mxu0 %v527
      %690 = vmatmul.f32.gmra.mxu0 %v554
      %v691 = vpop.f32.mrf.mxu0
      %v692 = vadd.f32 %v545, %v691
      %693 = vmatmul.f32.gmra.mxu0 %v557
      %v694 = vpop.f32.mrf.mxu0
      %v695 = vadd.f32 %v550, %v694
      %696 = vdwg.mxu0
      %697 = vmatpush.msra.mxu0 0.0
      %698 = vmatpush.msra.mxu0 0.0
      %699 = vmatpush.msra.mxu0 0.0
      %700 = vmatpush.msra.mxu0 0.0
      %701 = vmatpush.msra.mxu0 0.0
      %702 = vmatpush.msra.mxu0 0.0
      %703 = vmatpush.msra.mxu0 0.0
      %704 = vmatpush.msra.mxu0 0.0
      %705 = vmatpush.msra.mxu0 0.0
      %706 = vmatpush.msra.mxu0 0.0
      %707 = vmatpush.msra.mxu0 0.0
      %708 = vmatpush.msra.mxu0 0.0
      %709 = vmatpush.msra.mxu0 0.0
      %710 = vmatpush.msra.mxu0 0.0
      %711 = vmatpush.msra.mxu0 %v536
      %712 = vmatpush.msra.mxu0 %v528
      %713 = vmatmul.f32.gmra.mxu0 %v554
      %v714 = vpop.f32.mrf.mxu0
      %v715 = vadd.f32 %v545, %v714
      %716 = vmatmul.f32.gmra.mxu0 %v557
      %v717 = vpop.f32.mrf.mxu0
      %v718 = vadd.f32 %v550, %v717
      %719 = vdwg.mxu0
      %720 = vmatpush.msra.mxu0 0.0
      %721 = vmatpush.msra.mxu0 0.0
      %722 = vmatpush.msra.mxu0 0.0
      %723 = vmatpush.msra.mxu0 0.0
      %724 = vmatpush.msra.mxu0 0.0
      %725 = vmatpush.msra.mxu0 0.0
      %726 = vmatpush.msra.mxu0 0.0
      %727 = vmatpush.msra.mxu0 0.0
      %728 = vmatpush.msra.mxu0 0.0
      %729 = vmatpush.msra.mxu0 0.0
      %730 = vmatpush.msra.mxu0 0.0
      %731 = vmatpush.msra.mxu0 0.0
      %732 = vmatpush.msra.mxu0 0.0
      %733 = vmatpush.msra.mxu0 0.0
      %734 = vmatpush.msra.mxu0 %v537
      %735 = vmatpush.msra.mxu0 %v529
      %736 = vmatmul.f32.gmra.mxu0 %v554
      %v737 = vpop.f32.mrf.mxu0
      %v738 = vadd.f32 %v545, %v737
      %739 = vmatmul.f32.gmra.mxu0 %v557
      %v740 = vpop.f32.mrf.mxu0
      %v741 = vadd.f32 %v550, %v740
      %742 = vdwg.mxu0
      %v743 = vadd.f32 %v623, %v669
      %v744 = vadd.f32 %v646, %v692
      %v745 = vadd.f32 %v626, %v672
      %v746 = vadd.f32 %v649, %v695
      %v747 = vadd.f32 %v743, %v715
      %v748 = vadd.f32 %v744, %v738
      %v749 = vadd.f32 %v745, %v718
      %v750 = vadd.f32 %v746, %v741
      %v751 = vld [vmem:[%s3] sm:$0xff]
      %v752 = vld [vmem:[%s3 + $0x8] sm:$0xff]
      %v753 = vld [vmem:[%s4] sm:$0xff]
      %v754 = vld [vmem:[%s4 + $0x8] sm:$0xff]
      %756 = vset.pattern.permute.xlu0 0
      %757 = vperm.xlu0 %756, %v753
      %v758 = vpop.permute.xlu0 %757
      %761 = vset.pattern.permute.xlu0 0
      %762 = vperm.xlu0 %761, %v754
      %v763 = vpop.permute.xlu0 %762
      %v766 = vsel %vm552, %v751, 0
      %v769 = vsel %vm552, %v752, 0
      %771 = vmatpush.msra.mxu0 0.0
      %772 = vmatpush.msra.mxu0 0.0
      %773 = vmatpush.msra.mxu0 0.0
      %774 = vmatpush.msra.mxu0 0.0
      %775 = vmatpush.msra.mxu0 0.0
      %776 = vmatpush.msra.mxu0 0.0
      %777 = vmatpush.msra.mxu0 0.0
      %778 = vmatpush.msra.mxu0 0.0
      %779 = vmatpush.msra.mxu0 0.0
      %780 = vmatpush.msra.mxu0 0.0
      %781 = vmatpush.msra.mxu0 0.0
      %782 = vmatpush.msra.mxu0 0.0
      %783 = vmatpush.msra.mxu0 0.0
      %784 = vmatpush.msra.mxu0 0.0
      %785 = vmatpush.msra.mxu0 %v580
      %786 = vmatpush.msra.mxu0 %v577
      %787 = vmatmul.f32.gmra.mxu0 %v766
      %v788 = vpop.f32.mrf.mxu0
      %v789 = vadd.f32 %v758, %v788
      %790 = vmatmul.f32.gmra.mxu0 %v769
      %v791 = vpop.f32.mrf.mxu0
      %v792 = vadd.f32 %v763, %v791
      %793 = vdwg.mxu0
      %794 = vmatpush.msra.mxu0 0.0
      %795 = vmatpush.msra.mxu0 0.0
      %796 = vmatpush.msra.mxu0 0.0
      %797 = vmatpush.msra.mxu0 0.0
      %798 = vmatpush.msra.mxu0 0.0
      %799 = vmatpush.msra.mxu0 0.0
      %800 = vmatpush.msra.mxu0 0.0
      %801 = vmatpush.msra.mxu0 0.0
      %802 = vmatpush.msra.mxu0 0.0
      %803 = vmatpush.msra.mxu0 0.0
      %804 = vmatpush.msra.mxu0 0.0
      %805 = vmatpush.msra.mxu0 0.0
      %806 = vmatpush.msra.mxu0 0.0
      %807 = vmatpush.msra.mxu0 0.0
      %808 = vmatpush.msra.mxu0 %v603
      %809 = vmatpush.msra.mxu0 %v600
      %810 = vmatmul.f32.gmra.mxu0 %v766
      %v811 = vpop.f32.mrf.mxu0
      %v812 = vadd.f32 %v758, %v811
      %813 = vmatmul.f32.gmra.mxu0 %v769
      %v814 = vpop.f32.mrf.mxu0
      %v815 = vadd.f32 %v763, %v814
      %816 = vdwg.mxu0
      %v817 = vld [vmem:[%s5] sm:$0xff]
      %v818 = vld [vmem:[%s5 + $0x8] sm:$0xff]
      %v819 = vld [vmem:[%s6] sm:$0xff]
      %v820 = vld [vmem:[%s6 + $0x8] sm:$0xff]
      %822 = vset.pattern.permute.xlu0 0
      %823 = vperm.xlu0 %822, %v819
      %v824 = vpop.permute.xlu0 %823
      %827 = vset.pattern.permute.xlu0 0
      %828 = vperm.xlu0 %827, %v820
      %v829 = vpop.permute.xlu0 %828
      %v832 = vsel %vm552, %v817, 0
      %v835 = vsel %vm552, %v818, 0
      %837 = vmatpush.msra.mxu0 0.0
      %838 = vmatpush.msra.mxu0 0.0
      %839 = vmatpush.msra.mxu0 0.0
      %840 = vmatpush.msra.mxu0 0.0
      %841 = vmatpush.msra.mxu0 0.0
      %842 = vmatpush.msra.mxu0 0.0
      %843 = vmatpush.msra.mxu0 0.0
      %844 = vmatpush.msra.mxu0 0.0
      %845 = vmatpush.msra.mxu0 0.0
      %846 = vmatpush.msra.mxu0 0.0
      %847 = vmatpush.msra.mxu0 0.0
      %848 = vmatpush.msra.mxu0 0.0
      %849 = vmatpush.msra.mxu0 0.0
      %850 = vmatpush.msra.mxu0 0.0
      %851 = vmatpush.msra.mxu0 %v580
      %852 = vmatpush.msra.mxu0 %v577
      %853 = vmatmul.f32.gmra.mxu0 %v832
      %v854 = vpop.f32.mrf.mxu0
      %v855 = vadd.f32 %v824, %v854
      %856 = vmatmul.f32.gmra.mxu0 %v835
      %v857 = vpop.f32.mrf.mxu0
      %v858 = vadd.f32 %v829, %v857
      %859 = vdwg.mxu0
      %860 = vmatpush.msra.mxu0 0.0
      %861 = vmatpush.msra.mxu0 0.0
      %862 = vmatpush.msra.mxu0 0.0
      %863 = vmatpush.msra.mxu0 0.0
      %864 = vmatpush.msra.mxu0 0.0
      %865 = vmatpush.msra.mxu0 0.0
      %866 = vmatpush.msra.mxu0 0.0
      %867 = vmatpush.msra.mxu0 0.0
      %868 = vmatpush.msra.mxu0 0.0
      %869 = vmatpush.msra.mxu0 0.0
      %870 = vmatpush.msra.mxu0 0.0
      %871 = vmatpush.msra.mxu0 0.0
      %872 = vmatpush.msra.mxu0 0.0
      %873 = vmatpush.msra.mxu0 0.0
      %874 = vmatpush.msra.mxu0 %v603
      %875 = vmatpush.msra.mxu0 %v600
      %876 = vmatmul.f32.gmra.mxu0 %v832
      %v877 = vpop.f32.mrf.mxu0
      %v878 = vadd.f32 %v824, %v877
      %879 = vmatmul.f32.gmra.mxu0 %v835
      %v880 = vpop.f32.mrf.mxu0
      %v881 = vadd.f32 %v829, %v880
      %882 = vdwg.mxu0
      %v883 = vld [vmem:[%s7] sm:$0xff]
      %v884 = vld [vmem:[%s7 + $0x8] sm:$0xff]
      %v885 = vld [vmem:[%s8] sm:$0xff]
      %v886 = vld [vmem:[%s8 + $0x8] sm:$0xff]
      %888 = vset.pattern.permute.xlu0 0
      %889 = vperm.xlu0 %888, %v885
      %v890 = vpop.permute.xlu0 %889
      %893 = vset.pattern.permute.xlu0 0
      %894 = vperm.xlu0 %893, %v886
      %v895 = vpop.permute.xlu0 %894
      %v898 = vsel %vm552, %v883, 0
      %v901 = vsel %vm552, %v884, 0
      %903 = vmatpush.msra.mxu0 0.0
      %904 = vmatpush.msra.mxu0 0.0
      %905 = vmatpush.msra.mxu0 0.0
      %906 = vmatpush.msra.mxu0 0.0
      %907 = vmatpush.msra.mxu0 0.0
      %908 = vmatpush.msra.mxu0 0.0
      %909 = vmatpush.msra.mxu0 0.0
      %910 = vmatpush.msra.mxu0 0.0
      %911 = vmatpush.msra.mxu0 0.0
      %912 = vmatpush.msra.mxu0 0.0
      %913 = vmatpush.msra.mxu0 0.0
      %914 = vmatpush.msra.mxu0 0.0
      %915 = vmatpush.msra.mxu0 0.0
      %916 = vmatpush.msra.mxu0 0.0
      %917 = vmatpush.msra.mxu0 %v580
      %918 = vmatpush.msra.mxu0 %v577
      %919 = vmatmul.f32.gmra.mxu0 %v898
      %v920 = vpop.f32.mrf.mxu0
      %v921 = vadd.f32 %v890, %v920
      %922 = vmatmul.f32.gmra.mxu0 %v901
      %v923 = vpop.f32.mrf.mxu0
      %v924 = vadd.f32 %v895, %v923
      %925 = vdwg.mxu0
      %926 = vmatpush.msra.mxu0 0.0
      %927 = vmatpush.msra.mxu0 0.0
      %928 = vmatpush.msra.mxu0 0.0
      %929 = vmatpush.msra.mxu0 0.0
      %930 = vmatpush.msra.mxu0 0.0
      %931 = vmatpush.msra.mxu0 0.0
      %932 = vmatpush.msra.mxu0 0.0
      %933 = vmatpush.msra.mxu0 0.0
      %934 = vmatpush.msra.mxu0 0.0
      %935 = vmatpush.msra.mxu0 0.0
      %936 = vmatpush.msra.mxu0 0.0
      %937 = vmatpush.msra.mxu0 0.0
      %938 = vmatpush.msra.mxu0 0.0
      %939 = vmatpush.msra.mxu0 0.0
      %940 = vmatpush.msra.mxu0 %v603
      %941 = vmatpush.msra.mxu0 %v600
      %942 = vmatmul.f32.gmra.mxu0 %v898
      %v943 = vpop.f32.mrf.mxu0
      %v944 = vadd.f32 %v890, %v943
      %945 = vmatmul.f32.gmra.mxu0 %v901
      %v946 = vpop.f32.mrf.mxu0
      %v947 = vadd.f32 %v895, %v946
      %948 = vdwg.mxu0
      %949 = vxpose.xlu0.b32.start [1/16] %v789, 128
      %950 = vxpose.xlu0.b32.cont [2/16] 0.0, 128
      %951 = vxpose.xlu0.b32.cont [3/16] 0.0, 128
      %952 = vxpose.xlu0.b32.cont [4/16] 0.0, 128
      %953 = vxpose.xlu0.b32.cont [5/16] 0.0, 128
      %954 = vxpose.xlu0.b32.cont [6/16] 0.0, 128
      %955 = vxpose.xlu0.b32.cont [7/16] 0.0, 128
      %956 = vxpose.xlu0.b32.cont [8/16] 0.0, 128
      %957 = vxpose.xlu0.b32.cont [9/16] 0.0, 128
      %958 = vxpose.xlu0.b32.cont [10/16] 0.0, 128
      %959 = vxpose.xlu0.b32.cont [11/16] 0.0, 128
      %960 = vxpose.xlu0.b32.cont [12/16] 0.0, 128
      %961 = vxpose.xlu0.b32.cont [13/16] 0.0, 128
      %962 = vxpose.xlu0.b32.cont [14/16] 0.0, 128
      %963 = vxpose.xlu0.b32.cont [15/16] 0.0, 128
      %964 = vxpose.xlu0.b32.end [16/16] 0.0, 128
      %v965 = vpop.trf.xlu0
      %v966 = vpop.trf.xlu0
      %v967 = vpop.trf.xlu0
      %v968 = vpop.trf.xlu0
      %v969 = vpop.trf.xlu0
      %v970 = vpop.trf.xlu0
      %v971 = vpop.trf.xlu0
      %v972 = vpop.trf.xlu0
      %v973 = vpop.trf.xlu0
      %v974 = vpop.trf.xlu0
      %v975 = vpop.trf.xlu0
      %v976 = vpop.trf.xlu0
      %v977 = vpop.trf.xlu0
      %v978 = vpop.trf.xlu0
      %v979 = vpop.trf.xlu0
      %v980 = vpop.trf.xlu0
      %981 = vxpose.xlu0.b32.start [1/16] %v812, 128
      %982 = vxpose.xlu0.b32.cont [2/16] 0.0, 128
      %983 = vxpose.xlu0.b32.cont [3/16] 0.0, 128
      %984 = vxpose.xlu0.b32.cont [4/16] 0.0, 128
      %985 = vxpose.xlu0.b32.cont [5/16] 0.0, 128
      %986 = vxpose.xlu0.b32.cont [6/16] 0.0, 128
      %987 = vxpose.xlu0.b32.cont [7/16] 0.0, 128
      %988 = vxpose.xlu0.b32.cont [8/16] 0.0, 128
      %989 = vxpose.xlu0.b32.cont [9/16] 0.0, 128
      %990 = vxpose.xlu0.b32.cont [10/16] 0.0, 128
      %991 = vxpose.xlu0.b32.cont [11/16] 0.0, 128
      %992 = vxpose.xlu0.b32.cont [12/16] 0.0, 128
      %993 = vxpose.xlu0.b32.cont [13/16] 0.0, 128
      %994 = vxpose.xlu0.b32.cont [14/16] 0.0, 128
      %995 = vxpose.xlu0.b32.cont [15/16] 0.0, 128
      %996 = vxpose.xlu0.b32.end [16/16] 0.0, 128
      %v997 = vpop.trf.xlu0
      %v998 = vpop.trf.xlu0
      %v999 = vpop.trf.xlu0
      %v1000 = vpop.trf.xlu0
      %v1001 = vpop.trf.xlu0
      %v1002 = vpop.trf.xlu0
      %v1003 = vpop.trf.xlu0
      %v1004 = vpop.trf.xlu0
      %v1005 = vpop.trf.xlu0
      %v1006 = vpop.trf.xlu0
      %v1007 = vpop.trf.xlu0
      %v1008 = vpop.trf.xlu0
      %v1009 = vpop.trf.xlu0
      %v1010 = vpop.trf.xlu0
      %v1011 = vpop.trf.xlu0
      %v1012 = vpop.trf.xlu0
      %vm1013 = vcmask 15360
      %v1015 = vsel %vm1013, %v965, 0
      %v1018 = vsel %vm1013, %v966, 0
      %v1021 = vsel %vm1013, %v967, 0
      %v1024 = vsel %vm1013, %v968, 0
      %v1027 = vsel %vm1013, %v969, 0
      %v1030 = vsel %vm1013, %v970, 0
      %v1033 = vsel %vm1013, %v971, 0
      %v1036 = vsel %vm1013, %v972, 0
      %v1039 = vsel %vm1013, %v973, 0
      %v1042 = vsel %vm1013, %v974, 0
      %v1045 = vsel %vm1013, %v975, 0
      %v1048 = vsel %vm1013, %v976, 0
      %v1051 = vsel %vm1013, %v977, 0
      %v1054 = vsel %vm1013, %v978, 0
      %v1057 = vsel %vm1013, %v979, 0
      %v1060 = vsel %vm1013, %v980, 0
      %v1063 = vsel %vm1013, %v997, 0
      %v1066 = vsel %vm1013, %v998, 0
      %v1069 = vsel %vm1013, %v999, 0
      %v1072 = vsel %vm1013, %v1000, 0
      %v1075 = vsel %vm1013, %v1001, 0
      %v1078 = vsel %vm1013, %v1002, 0
      %v1081 = vsel %vm1013, %v1003, 0
      %v1084 = vsel %vm1013, %v1004, 0
      %v1087 = vsel %vm1013, %v1005, 0
      %v1090 = vsel %vm1013, %v1006, 0
      %v1093 = vsel %vm1013, %v1007, 0
      %v1096 = vsel %vm1013, %v1008, 0
      %v1099 = vsel %vm1013, %v1009, 0
      %v1102 = vsel %vm1013, %v1010, 0
      %v1105 = vsel %vm1013, %v1011, 0
      %v1108 = vsel %vm1013, %v1012, 0
      %vm1110 = vcmask 1041408
      %v1112 = vsel %vm1110, %v855, 0
      %v1115 = vsel %vm1110, %v878, 0
      %1117 = vmatpush.msra.mxu0 0.0
      %1118 = vmatpush.msra.mxu0 0.0
      %1119 = vmatpush.msra.mxu0 0.0
      %1120 = vmatpush.msra.mxu0 0.0
      %1121 = vmatpush.msra.mxu0 0.0
      %1122 = vmatpush.msra.mxu0 0.0
      %1123 = vmatpush.msra.mxu0 0.0
      %1124 = vmatpush.msra.mxu0 0.0
      %1125 = vmatpush.msra.mxu0 0.0
      %1126 = vmatpush.msra.mxu0 0.0
      %1127 = vmatpush.msra.mxu0 0.0
      %1128 = vmatpush.msra.mxu0 0.0
      %1129 = vmatpush.msra.mxu0 0.0
      %1130 = vmatpush.msra.mxu0 0.0
      %1131 = vmatpush.msra.mxu0 0.0
      %1132 = vmatpush.msra.mxu0 %v1112
      %1133 = vmatmul.f32.gmra.mxu0 %v1015
      %v1134 = vpop.f32.mrf.mxu0
      %v1135 = vadd.f32 0.0, %v1134
      %1136 = vmatmul.f32.gmra.mxu0 %v1018
      %v1137 = vpop.f32.mrf.mxu0
      %v1138 = vadd.f32 0.0, %v1137
      %1139 = vmatmul.f32.gmra.mxu0 %v1021
      %v1140 = vpop.f32.mrf.mxu0
      %v1141 = vadd.f32 0.0, %v1140
      %1142 = vmatmul.f32.gmra.mxu0 %v1024
      %v1143 = vpop.f32.mrf.mxu0
      %v1144 = vadd.f32 0.0, %v1143
      %1145 = vmatmul.f32.gmra.mxu0 %v1027
      %v1146 = vpop.f32.mrf.mxu0
      %v1147 = vadd.f32 0.0, %v1146
      %1148 = vmatmul.f32.gmra.mxu0 %v1030
      %v1149 = vpop.f32.mrf.mxu0
      %v1150 = vadd.f32 0.0, %v1149
      %1151 = vmatmul.f32.gmra.mxu0 %v1033
      %v1152 = vpop.f32.mrf.mxu0
      %v1153 = vadd.f32 0.0, %v1152
      %1154 = vmatmul.f32.gmra.mxu0 %v1036
      %v1155 = vpop.f32.mrf.mxu0
      %v1156 = vadd.f32 0.0, %v1155
      %1157 = vmatmul.f32.gmra.mxu0 %v1039
      %v1158 = vpop.f32.mrf.mxu0
      %v1159 = vadd.f32 0.0, %v1158
      %1160 = vmatmul.f32.gmra.mxu0 %v1042
      %v1161 = vpop.f32.mrf.mxu0
      %v1162 = vadd.f32 0.0, %v1161
      %1163 = vmatmul.f32.gmra.mxu0 %v1045
      %v1164 = vpop.f32.mrf.mxu0
      %v1165 = vadd.f32 0.0, %v1164
      %1166 = vmatmul.f32.gmra.mxu0 %v1048
      %v1167 = vpop.f32.mrf.mxu0
      %v1168 = vadd.f32 0.0, %v1167
      %1169 = vmatmul.f32.gmra.mxu0 %v1051
      %v1170 = vpop.f32.mrf.mxu0
      %v1171 = vadd.f32 0.0, %v1170
      %1172 = vmatmul.f32.gmra.mxu0 %v1054
      %v1173 = vpop.f32.mrf.mxu0
      %v1174 = vadd.f32 0.0, %v1173
      %1175 = vmatmul.f32.gmra.mxu0 %v1057
      %v1176 = vpop.f32.mrf.mxu0
      %v1177 = vadd.f32 0.0, %v1176
      %1178 = vmatmul.f32.gmra.mxu0 %v1060
      %v1179 = vpop.f32.mrf.mxu0
      %v1180 = vadd.f32 0.0, %v1179
      %1181 = vmatmul.f32.gmra.mxu0 %v1063
      %v1182 = vpop.f32.mrf.mxu0
      %v1183 = vadd.f32 0.0, %v1182
      %1184 = vmatmul.f32.gmra.mxu0 %v1066
      %v1185 = vpop.f32.mrf.mxu0
      %v1186 = vadd.f32 0.0, %v1185
      %1187 = vmatmul.f32.gmra.mxu0 %v1069
      %v1188 = vpop.f32.mrf.mxu0
      %v1189 = vadd.f32 0.0, %v1188
      %1190 = vmatmul.f32.gmra.mxu0 %v1072
      %v1191 = vpop.f32.mrf.mxu0
      %v1192 = vadd.f32 0.0, %v1191
      %1193 = vmatmul.f32.gmra.mxu0 %v1075
      %v1194 = vpop.f32.mrf.mxu0
      %v1195 = vadd.f32 0.0, %v1194
      %1196 = vmatmul.f32.gmra.mxu0 %v1078
      %v1197 = vpop.f32.mrf.mxu0
      %v1198 = vadd.f32 0.0, %v1197
      %1199 = vmatmul.f32.gmra.mxu0 %v1081
      %v1200 = vpop.f32.mrf.mxu0
      %v1201 = vadd.f32 0.0, %v1200
      %1202 = vmatmul.f32.gmra.mxu0 %v1084
      %v1203 = vpop.f32.mrf.mxu0
      %v1204 = vadd.f32 0.0, %v1203
      %1205 = vmatmul.f32.gmra.mxu0 %v1087
      %v1206 = vpop.f32.mrf.mxu0
      %v1207 = vadd.f32 0.0, %v1206
      %1208 = vmatmul.f32.gmra.mxu0 %v1090
      %v1209 = vpop.f32.mrf.mxu0
      %v1210 = vadd.f32 0.0, %v1209
      %1211 = vmatmul.f32.gmra.mxu0 %v1093
      %v1212 = vpop.f32.mrf.mxu0
      %v1213 = vadd.f32 0.0, %v1212
      %1214 = vmatmul.f32.gmra.mxu0 %v1096
      %v1215 = vpop.f32.mrf.mxu0
      %v1216 = vadd.f32 0.0, %v1215
      %1217 = vmatmul.f32.gmra.mxu0 %v1099
      %v1218 = vpop.f32.mrf.mxu0
      %v1219 = vadd.f32 0.0, %v1218
      %1220 = vmatmul.f32.gmra.mxu0 %v1102
      %v1221 = vpop.f32.mrf.mxu0
      %v1222 = vadd.f32 0.0, %v1221
      %1223 = vmatmul.f32.gmra.mxu0 %v1105
      %v1224 = vpop.f32.mrf.mxu0
      %v1225 = vadd.f32 0.0, %v1224
      %1226 = vmatmul.f32.gmra.mxu0 %v1108
      %v1227 = vpop.f32.mrf.mxu0
      %v1228 = vadd.f32 0.0, %v1227
      %1229 = vdwg.mxu0
      %1230 = vmatpush.msra.mxu0 0.0
      %1231 = vmatpush.msra.mxu0 0.0
      %1232 = vmatpush.msra.mxu0 0.0
      %1233 = vmatpush.msra.mxu0 0.0
      %1234 = vmatpush.msra.mxu0 0.0
      %1235 = vmatpush.msra.mxu0 0.0
      %1236 = vmatpush.msra.mxu0 0.0
      %1237 = vmatpush.msra.mxu0 0.0
      %1238 = vmatpush.msra.mxu0 0.0
      %1239 = vmatpush.msra.mxu0 0.0
      %1240 = vmatpush.msra.mxu0 0.0
      %1241 = vmatpush.msra.mxu0 0.0
      %1242 = vmatpush.msra.mxu0 0.0
      %1243 = vmatpush.msra.mxu0 0.0
      %1244 = vmatpush.msra.mxu0 0.0
      %1245 = vmatpush.msra.mxu0 %v1115
      %1246 = vmatmul.f32.gmra.mxu0 %v1015
      %v1247 = vpop.f32.mrf.mxu0
      %v1248 = vadd.f32 0.0, %v1247
      %1249 = vmatmul.f32.gmra.mxu0 %v1018
      %v1250 = vpop.f32.mrf.mxu0
      %v1251 = vadd.f32 0.0, %v1250
      %1252 = vmatmul.f32.gmra.mxu0 %v1021
      %v1253 = vpop.f32.mrf.mxu0
      %v1254 = vadd.f32 0.0, %v1253
      %1255 = vmatmul.f32.gmra.mxu0 %v1024
      %v1256 = vpop.f32.mrf.mxu0
      %v1257 = vadd.f32 0.0, %v1256
      %1258 = vmatmul.f32.gmra.mxu0 %v1027
      %v1259 = vpop.f32.mrf.mxu0
      %v1260 = vadd.f32 0.0, %v1259
      %1261 = vmatmul.f32.gmra.mxu0 %v1030
      %v1262 = vpop.f32.mrf.mxu0
      %v1263 = vadd.f32 0.0, %v1262
      %1264 = vmatmul.f32.gmra.mxu0 %v1033
      %v1265 = vpop.f32.mrf.mxu0
      %v1266 = vadd.f32 0.0, %v1265
      %1267 = vmatmul.f32.gmra.mxu0 %v1036
      %v1268 = vpop.f32.mrf.mxu0
      %v1269 = vadd.f32 0.0, %v1268
      %1270 = vmatmul.f32.gmra.mxu0 %v1039
      %v1271 = vpop.f32.mrf.mxu0
      %v1272 = vadd.f32 0.0, %v1271
      %1273 = vmatmul.f32.gmra.mxu0 %v1042
      %v1274 = vpop.f32.mrf.mxu0
      %v1275 = vadd.f32 0.0, %v1274
      %1276 = vmatmul.f32.gmra.mxu0 %v1045
      %v1277 = vpop.f32.mrf.mxu0
      %v1278 = vadd.f32 0.0, %v1277
      %1279 = vmatmul.f32.gmra.mxu0 %v1048
      %v1280 = vpop.f32.mrf.mxu0
      %v1281 = vadd.f32 0.0, %v1280
      %1282 = vmatmul.f32.gmra.mxu0 %v1051
      %v1283 = vpop.f32.mrf.mxu0
      %v1284 = vadd.f32 0.0, %v1283
      %1285 = vmatmul.f32.gmra.mxu0 %v1054
      %v1286 = vpop.f32.mrf.mxu0
      %v1287 = vadd.f32 0.0, %v1286
      %1288 = vmatmul.f32.gmra.mxu0 %v1057
      %v1289 = vpop.f32.mrf.mxu0
      %v1290 = vadd.f32 0.0, %v1289
      %1291 = vmatmul.f32.gmra.mxu0 %v1060
      %v1292 = vpop.f32.mrf.mxu0
      %v1293 = vadd.f32 0.0, %v1292
      %1294 = vmatmul.f32.gmra.mxu0 %v1063
      %v1295 = vpop.f32.mrf.mxu0
      %v1296 = vadd.f32 0.0, %v1295
      %1297 = vmatmul.f32.gmra.mxu0 %v1066
      %v1298 = vpop.f32.mrf.mxu0
      %v1299 = vadd.f32 0.0, %v1298
      %1300 = vmatmul.f32.gmra.mxu0 %v1069
      %v1301 = vpop.f32.mrf.mxu0
      %v1302 = vadd.f32 0.0, %v1301
      %1303 = vmatmul.f32.gmra.mxu0 %v1072
      %v1304 = vpop.f32.mrf.mxu0
      %v1305 = vadd.f32 0.0, %v1304
      %1306 = vmatmul.f32.gmra.mxu0 %v1075
      %v1307 = vpop.f32.mrf.mxu0
      %v1308 = vadd.f32 0.0, %v1307
      %1309 = vmatmul.f32.gmra.mxu0 %v1078
      %v1310 = vpop.f32.mrf.mxu0
      %v1311 = vadd.f32 0.0, %v1310
      %1312 = vmatmul.f32.gmra.mxu0 %v1081
      %v1313 = vpop.f32.mrf.mxu0
      %v1314 = vadd.f32 0.0, %v1313
      %1315 = vmatmul.f32.gmra.mxu0 %v1084
      %v1316 = vpop.f32.mrf.mxu0
      %v1317 = vadd.f32 0.0, %v1316
      %1318 = vmatmul.f32.gmra.mxu0 %v1087
      %v1319 = vpop.f32.mrf.mxu0
      %v1320 = vadd.f32 0.0, %v1319
      %1321 = vmatmul.f32.gmra.mxu0 %v1090
      %v1322 = vpop.f32.mrf.mxu0
      %v1323 = vadd.f32 0.0, %v1322
      %1324 = vmatmul.f32.gmra.mxu0 %v1093
      %v1325 = vpop.f32.mrf.mxu0
      %v1326 = vadd.f32 0.0, %v1325
      %1327 = vmatmul.f32.gmra.mxu0 %v1096
      %v1328 = vpop.f32.mrf.mxu0
      %v1329 = vadd.f32 0.0, %v1328
      %1330 = vmatmul.f32.gmra.mxu0 %v1099
      %v1331 = vpop.f32.mrf.mxu0
      %v1332 = vadd.f32 0.0, %v1331
      %1333 = vmatmul.f32.gmra.mxu0 %v1102
      %v1334 = vpop.f32.mrf.mxu0
      %v1335 = vadd.f32 0.0, %v1334
      %1336 = vmatmul.f32.gmra.mxu0 %v1105
      %v1337 = vpop.f32.mrf.mxu0
      %v1338 = vadd.f32 0.0, %v1337
      %1339 = vmatmul.f32.gmra.mxu0 %v1108
      %v1340 = vpop.f32.mrf.mxu0
      %v1341 = vadd.f32 0.0, %v1340
      %1342 = vdwg.mxu0
      %v1343 = vmax.f32 %v1135, %v1248
      %1344 = vmax.xlane.f32.xlu0 %v1343
      %v1345 = vpop.xlane.xlu0 %1344
      %v1346 = vmax.f32 %v1138, %v1251
      %1347 = vmax.xlane.f32.xlu0 %v1346
      %v1348 = vpop.xlane.xlu0 %1347
      %v1349 = vmax.f32 %v1141, %v1254
      %1350 = vmax.xlane.f32.xlu0 %v1349
      %v1351 = vpop.xlane.xlu0 %1350
      %v1352 = vmax.f32 %v1144, %v1257
      %1353 = vmax.xlane.f32.xlu0 %v1352
      %v1354 = vpop.xlane.xlu0 %1353
      %v1355 = vmax.f32 %v1147, %v1260
      %1356 = vmax.xlane.f32.xlu0 %v1355
      %v1357 = vpop.xlane.xlu0 %1356
      %v1358 = vmax.f32 %v1150, %v1263
      %1359 = vmax.xlane.f32.xlu0 %v1358
      %v1360 = vpop.xlane.xlu0 %1359
      %v1361 = vmax.f32 %v1153, %v1266
      %1362 = vmax.xlane.f32.xlu0 %v1361
      %v1363 = vpop.xlane.xlu0 %1362
      %v1364 = vmax.f32 %v1156, %v1269
      %1365 = vmax.xlane.f32.xlu0 %v1364
      %v1366 = vpop.xlane.xlu0 %1365
      %v1367 = vmax.f32 %v1159, %v1272
      %1368 = vmax.xlane.f32.xlu0 %v1367
      %v1369 = vpop.xlane.xlu0 %1368
      %v1370 = vmax.f32 %v1162, %v1275
      %1371 = vmax.xlane.f32.xlu0 %v1370
      %v1372 = vpop.xlane.xlu0 %1371
      %v1373 = vmax.f32 %v1165, %v1278
      %1374 = vmax.xlane.f32.xlu0 %v1373
      %v1375 = vpop.xlane.xlu0 %1374
      %v1376 = vmax.f32 %v1168, %v1281
      %1377 = vmax.xlane.f32.xlu0 %v1376
      %v1378 = vpop.xlane.xlu0 %1377
      %v1379 = vmax.f32 %v1171, %v1284
      %1380 = vmax.xlane.f32.xlu0 %v1379
      %v1381 = vpop.xlane.xlu0 %1380
      %v1382 = vmax.f32 %v1174, %v1287
      %1383 = vmax.xlane.f32.xlu0 %v1382
      %v1384 = vpop.xlane.xlu0 %1383
      %v1385 = vmax.f32 %v1177, %v1290
      %1386 = vmax.xlane.f32.xlu0 %v1385
      %v1387 = vpop.xlane.xlu0 %1386
      %v1388 = vmax.f32 %v1180, %v1293
      %1389 = vmax.xlane.f32.xlu0 %v1388
      %v1390 = vpop.xlane.xlu0 %1389
      %v1391 = vmax.f32 %v1183, %v1296
      %1392 = vmax.xlane.f32.xlu0 %v1391
      %v1393 = vpop.xlane.xlu0 %1392
      %v1394 = vmax.f32 %v1186, %v1299
      %1395 = vmax.xlane.f32.xlu0 %v1394
      %v1396 = vpop.xlane.xlu0 %1395
      %v1397 = vmax.f32 %v1189, %v1302
      %1398 = vmax.xlane.f32.xlu0 %v1397
      %v1399 = vpop.xlane.xlu0 %1398
      %v1400 = vmax.f32 %v1192, %v1305
      %1401 = vmax.xlane.f32.xlu0 %v1400
      %v1402 = vpop.xlane.xlu0 %1401
      %v1403 = vmax.f32 %v1195, %v1308
      %1404 = vmax.xlane.f32.xlu0 %v1403
      %v1405 = vpop.xlane.xlu0 %1404
      %v1406 = vmax.f32 %v1198, %v1311
      %1407 = vmax.xlane.f32.xlu0 %v1406
      %v1408 = vpop.xlane.xlu0 %1407
      %v1409 = vmax.f32 %v1201, %v1314
      %1410 = vmax.xlane.f32.xlu0 %v1409
      %v1411 = vpop.xlane.xlu0 %1410
      %v1412 = vmax.f32 %v1204, %v1317
      %1413 = vmax.xlane.f32.xlu0 %v1412
      %v1414 = vpop.xlane.xlu0 %1413
      %v1415 = vmax.f32 %v1207, %v1320
      %1416 = vmax.xlane.f32.xlu0 %v1415
      %v1417 = vpop.xlane.xlu0 %1416
      %v1418 = vmax.f32 %v1210, %v1323
      %1419 = vmax.xlane.f32.xlu0 %v1418
      %v1420 = vpop.xlane.xlu0 %1419
      %v1421 = vmax.f32 %v1213, %v1326
      %1422 = vmax.xlane.f32.xlu0 %v1421
      %v1423 = vpop.xlane.xlu0 %1422
      %v1424 = vmax.f32 %v1216, %v1329
      %1425 = vmax.xlane.f32.xlu0 %v1424
      %v1426 = vpop.xlane.xlu0 %1425
      %v1427 = vmax.f32 %v1219, %v1332
      %1428 = vmax.xlane.f32.xlu0 %v1427
      %v1429 = vpop.xlane.xlu0 %1428
      %v1430 = vmax.f32 %v1222, %v1335
      %1431 = vmax.xlane.f32.xlu0 %v1430
      %v1432 = vpop.xlane.xlu0 %1431
      %v1433 = vmax.f32 %v1225, %v1338
      %1434 = vmax.xlane.f32.xlu0 %v1433
      %v1435 = vpop.xlane.xlu0 %1434
      %v1436 = vmax.f32 %v1228, %v1341
      %1437 = vmax.xlane.f32.xlu0 %v1436
      %v1438 = vpop.xlane.xlu0 %1437
      %v1439 = vsub.f32 %v1135, %v1345
      %v1440 = vsub.f32 %v1248, %v1345
      %v1441 = vsub.f32 %v1138, %v1348
      %v1442 = vsub.f32 %v1251, %v1348
      %v1443 = vsub.f32 %v1141, %v1351
      %v1444 = vsub.f32 %v1254, %v1351
      %v1445 = vsub.f32 %v1144, %v1354
      %v1446 = vsub.f32 %v1257, %v1354
      %v1447 = vsub.f32 %v1147, %v1357
      %v1448 = vsub.f32 %v1260, %v1357
      %v1449 = vsub.f32 %v1150, %v1360
      %v1450 = vsub.f32 %v1263, %v1360
      %v1451 = vsub.f32 %v1153, %v1363
      %v1452 = vsub.f32 %v1266, %v1363
      %v1453 = vsub.f32 %v1156, %v1366
      %v1454 = vsub.f32 %v1269, %v1366
      %v1455 = vsub.f32 %v1159, %v1369
      %v1456 = vsub.f32 %v1272, %v1369
      %v1457 = vsub.f32 %v1162, %v1372
      %v1458 = vsub.f32 %v1275, %v1372
      %v1459 = vsub.f32 %v1165, %v1375
      %v1460 = vsub.f32 %v1278, %v1375
      %v1461 = vsub.f32 %v1168, %v1378
      %v1462 = vsub.f32 %v1281, %v1378
      %v1463 = vsub.f32 %v1171, %v1381
      %v1464 = vsub.f32 %v1284, %v1381
      %v1465 = vsub.f32 %v1174, %v1384
      %v1466 = vsub.f32 %v1287, %v1384
      %v1467 = vsub.f32 %v1177, %v1387
      %v1468 = vsub.f32 %v1290, %v1387
      %v1469 = vsub.f32 %v1180, %v1390
      %v1470 = vsub.f32 %v1293, %v1390
      %v1471 = vsub.f32 %v1183, %v1393
      %v1472 = vsub.f32 %v1296, %v1393
      %v1473 = vsub.f32 %v1186, %v1396
      %v1474 = vsub.f32 %v1299, %v1396
      %v1475 = vsub.f32 %v1189, %v1399
      %v1476 = vsub.f32 %v1302, %v1399
      %v1477 = vsub.f32 %v1192, %v1402
      %v1478 = vsub.f32 %v1305, %v1402
      %v1479 = vsub.f32 %v1195, %v1405
      %v1480 = vsub.f32 %v1308, %v1405
      %v1481 = vsub.f32 %v1198, %v1408
      %v1482 = vsub.f32 %v1311, %v1408
      %v1483 = vsub.f32 %v1201, %v1411
      %v1484 = vsub.f32 %v1314, %v1411
      %v1485 = vsub.f32 %v1204, %v1414
      %v1486 = vsub.f32 %v1317, %v1414
      %v1487 = vsub.f32 %v1207, %v1417
      %v1488 = vsub.f32 %v1320, %v1417
      %v1489 = vsub.f32 %v1210, %v1420
      %v1490 = vsub.f32 %v1323, %v1420
      %v1491 = vsub.f32 %v1213, %v1423
      %v1492 = vsub.f32 %v1326, %v1423
      %v1493 = vsub.f32 %v1216, %v1426
      %v1494 = vsub.f32 %v1329, %v1426
      %v1495 = vsub.f32 %v1219, %v1429
      %v1496 = vsub.f32 %v1332, %v1429
      %v1497 = vsub.f32 %v1222, %v1432
      %v1498 = vsub.f32 %v1335, %v1432
      %v1499 = vsub.f32 %v1225, %v1435
      %v1500 = vsub.f32 %v1338, %v1435
      %v1501 = vsub.f32 %v1228, %v1438
      %v1502 = vsub.f32 %v1341, %v1438
      %v1503 = vmul.f32 %v1439, 1.442695
      %v1504 = vpow.pop %v1503
      %v1505 = vmul.f32 %v1440, 1.442695
      %v1506 = vpow.pop %v1505
      %v1507 = vmul.f32 %v1441, 1.442695
      %v1508 = vpow.pop %v1507
      %v1509 = vmul.f32 %v1442, 1.442695
      %v1510 = vpow.pop %v1509
      %v1511 = vmul.f32 %v1443, 1.442695
      %v1512 = vpow.pop %v1511
      %v1513 = vmul.f32 %v1444, 1.442695
      %v1514 = vpow.pop %v1513
      %v1515 = vmul.f32 %v1445, 1.442695
      %v1516 = vpow.pop %v1515
      %v1517 = vmul.f32 %v1446, 1.442695
      %v1518 = vpow.pop %v1517
      %v1519 = vmul.f32 %v1447, 1.442695
      %v1520 = vpow.pop %v1519
      %v1521 = vmul.f32 %v1448, 1.442695
      %v1522 = vpow.pop %v1521
      %v1523 = vmul.f32 %v1449, 1.442695
      %v1524 = vpow.pop %v1523
      %v1525 = vmul.f32 %v1450, 1.442695
      %v1526 = vpow.pop %v1525
      %v1527 = vmul.f32 %v1451, 1.442695
      %v1528 = vpow.pop %v1527
      %v1529 = vmul.f32 %v1452, 1.442695
      %v1530 = vpow.pop %v1529
      %v1531 = vmul.f32 %v1453, 1.442695
      %v1532 = vpow.pop %v1531
      %v1533 = vmul.f32 %v1454, 1.442695
      %v1534 = vpow.pop %v1533
      %v1535 = vmul.f32 %v1455, 1.442695
      %v1536 = vpow.pop %v1535
      %v1537 = vmul.f32 %v1456, 1.442695
      %v1538 = vpow.pop %v1537
      %v1539 = vmul.f32 %v1457, 1.442695
      %v1540 = vpow.pop %v1539
      %v1541 = vmul.f32 %v1458, 1.442695
      %v1542 = vpow.pop %v1541
      %v1543 = vmul.f32 %v1459, 1.442695
      %v1544 = vpow.pop %v1543
      %v1545 = vmul.f32 %v1460, 1.442695
      %v1546 = vpow.pop %v1545
      %v1547 = vmul.f32 %v1461, 1.442695
      %v1548 = vpow.pop %v1547
      %v1549 = vmul.f32 %v1462, 1.442695
      %v1550 = vpow.pop %v1549
      %v1551 = vmul.f32 %v1463, 1.442695
      %v1552 = vpow.pop %v1551
      %v1553 = vmul.f32 %v1464, 1.442695
      %v1554 = vpow.pop %v1553
      %v1555 = vmul.f32 %v1465, 1.442695
      %v1556 = vpow.pop %v1555
      %v1557 = vmul.f32 %v1466, 1.442695
      %v1558 = vpow.pop %v1557
      %v1559 = vmul.f32 %v1467, 1.442695
      %v1560 = vpow.pop %v1559
      %v1561 = vmul.f32 %v1468, 1.442695
      %v1562 = vpow.pop %v1561
      %v1563 = vmul.f32 %v1469, 1.442695
      %v1564 = vpow.pop %v1563
      %v1565 = vmul.f32 %v1470, 1.442695
      %v1566 = vpow.pop %v1565
      %v1567 = vmul.f32 %v1471, 1.442695
      %v1568 = vpow.pop %v1567
      %v1569 = vmul.f32 %v1472, 1.442695
      %v1570 = vpow.pop %v1569
      %v1571 = vmul.f32 %v1473, 1.442695
      %v1572 = vpow.pop %v1571
      %v1573 = vmul.f32 %v1474, 1.442695
      %v1574 = vpow.pop %v1573
      %v1575 = vmul.f32 %v1475, 1.442695
      %v1576 = vpow.pop %v1575
      %v1577 = vmul.f32 %v1476, 1.442695
      %v1578 = vpow.pop %v1577
      %v1579 = vmul.f32 %v1477, 1.442695
      %v1580 = vpow.pop %v1579
      %v1581 = vmul.f32 %v1478, 1.442695
      %v1582 = vpow.pop %v1581
      %v1583 = vmul.f32 %v1479, 1.442695
      %v1584 = vpow.pop %v1583
      %v1585 = vmul.f32 %v1480, 1.442695
      %v1586 = vpow.pop %v1585
      %v1587 = vmul.f32 %v1481, 1.442695
      %v1588 = vpow.pop %v1587
      %v1589 = vmul.f32 %v1482, 1.442695
      %v1590 = vpow.pop %v1589
      %v1591 = vmul.f32 %v1483, 1.442695
      %v1592 = vpow.pop %v1591
      %v1593 = vmul.f32 %v1484, 1.442695
      %v1594 = vpow.pop %v1593
      %v1595 = vmul.f32 %v1485, 1.442695
      %v1596 = vpow.pop %v1595
      %v1597 = vmul.f32 %v1486, 1.442695
      %v1598 = vpow.pop %v1597
      %v1599 = vmul.f32 %v1487, 1.442695
      %v1600 = vpow.pop %v1599
      %v1601 = vmul.f32 %v1488, 1.442695
      %v1602 = vpow.pop %v1601
      %v1603 = vmul.f32 %v1489, 1.442695
      %v1604 = vpow.pop %v1603
      %v1605 = vmul.f32 %v1490, 1.442695
      %v1606 = vpow.pop %v1605
      %v1607 = vmul.f32 %v1491, 1.442695
      %v1608 = vpow.pop %v1607
      %v1609 = vmul.f32 %v1492, 1.442695
      %v1610 = vpow.pop %v1609
      %v1611 = vmul.f32 %v1493, 1.442695
      %v1612 = vpow.pop %v1611
      %v1613 = vmul.f32 %v1494, 1.442695
      %v1614 = vpow.pop %v1613
      %v1615 = vmul.f32 %v1495, 1.442695
      %v1616 = vpow.pop %v1615
      %v1617 = vmul.f32 %v1496, 1.442695
      %v1618 = vpow.pop %v1617
      %v1619 = vmul.f32 %v1497, 1.442695
      %v1620 = vpow.pop %v1619
      %v1621 = vmul.f32 %v1498, 1.442695
      %v1622 = vpow.pop %v1621
      %v1623 = vmul.f32 %v1499, 1.442695
      %v1624 = vpow.pop %v1623
      %v1625 = vmul.f32 %v1500, 1.442695
      %v1626 = vpow.pop %v1625
      %v1627 = vmul.f32 %v1501, 1.442695
      %v1628 = vpow.pop %v1627
      %v1629 = vmul.f32 %v1502, 1.442695
      %v1630 = vpow.pop %v1629
      %v1631 = vadd.f32 %v1504, %v1506
      %1632 = vadd.xlane.f32.xlu0 %v1631
      %v1633 = vpop.xlane.xlu0 %1632
      %v1634 = vadd.f32 %v1508, %v1510
      %1635 = vadd.xlane.f32.xlu0 %v1634
      %v1636 = vpop.xlane.xlu0 %1635
      %v1637 = vadd.f32 %v1512, %v1514
      %1638 = vadd.xlane.f32.xlu0 %v1637
      %v1639 = vpop.xlane.xlu0 %1638
      %v1640 = vadd.f32 %v1516, %v1518
      %1641 = vadd.xlane.f32.xlu0 %v1640
      %v1642 = vpop.xlane.xlu0 %1641
      %v1643 = vadd.f32 %v1520, %v1522
      %1644 = vadd.xlane.f32.xlu0 %v1643
      %v1645 = vpop.xlane.xlu0 %1644
      %v1646 = vadd.f32 %v1524, %v1526
      %1647 = vadd.xlane.f32.xlu0 %v1646
      %v1648 = vpop.xlane.xlu0 %1647
      %v1649 = vadd.f32 %v1528, %v1530
      %1650 = vadd.xlane.f32.xlu0 %v1649
      %v1651 = vpop.xlane.xlu0 %1650
      %v1652 = vadd.f32 %v1532, %v1534
      %1653 = vadd.xlane.f32.xlu0 %v1652
      %v1654 = vpop.xlane.xlu0 %1653
      %v1655 = vadd.f32 %v1536, %v1538
      %1656 = vadd.xlane.f32.xlu0 %v1655
      %v1657 = vpop.xlane.xlu0 %1656
      %v1658 = vadd.f32 %v1540, %v1542
      %1659 = vadd.xlane.f32.xlu0 %v1658
      %v1660 = vpop.xlane.xlu0 %1659
      %v1661 = vadd.f32 %v1544, %v1546
      %1662 = vadd.xlane.f32.xlu0 %v1661
      %v1663 = vpop.xlane.xlu0 %1662
      %v1664 = vadd.f32 %v1548, %v1550
      %1665 = vadd.xlane.f32.xlu0 %v1664
      %v1666 = vpop.xlane.xlu0 %1665
      %v1667 = vadd.f32 %v1552, %v1554
      %1668 = vadd.xlane.f32.xlu0 %v1667
      %v1669 = vpop.xlane.xlu0 %1668
      %v1670 = vadd.f32 %v1556, %v1558
      %1671 = vadd.xlane.f32.xlu0 %v1670
      %v1672 = vpop.xlane.xlu0 %1671
      %v1673 = vadd.f32 %v1560, %v1562
      %1674 = vadd.xlane.f32.xlu0 %v1673
      %v1675 = vpop.xlane.xlu0 %1674
      %v1676 = vadd.f32 %v1564, %v1566
      %1677 = vadd.xlane.f32.xlu0 %v1676
      %v1678 = vpop.xlane.xlu0 %1677
      %v1679 = vadd.f32 %v1568, %v1570
      %1680 = vadd.xlane.f32.xlu0 %v1679
      %v1681 = vpop.xlane.xlu0 %1680
      %v1682 = vadd.f32 %v1572, %v1574
      %1683 = vadd.xlane.f32.xlu0 %v1682
      %v1684 = vpop.xlane.xlu0 %1683
      %v1685 = vadd.f32 %v1576, %v1578
      %1686 = vadd.xlane.f32.xlu0 %v1685
      %v1687 = vpop.xlane.xlu0 %1686
      %v1688 = vadd.f32 %v1580, %v1582
      %1689 = vadd.xlane.f32.xlu0 %v1688
      %v1690 = vpop.xlane.xlu0 %1689
      %v1691 = vadd.f32 %v1584, %v1586
      %1692 = vadd.xlane.f32.xlu0 %v1691
      %v1693 = vpop.xlane.xlu0 %1692
      %v1694 = vadd.f32 %v1588, %v1590
      %1695 = vadd.xlane.f32.xlu0 %v1694
      %v1696 = vpop.xlane.xlu0 %1695
      %v1697 = vadd.f32 %v1592, %v1594
      %1698 = vadd.xlane.f32.xlu0 %v1697
      %v1699 = vpop.xlane.xlu0 %1698
      %v1700 = vadd.f32 %v1596, %v1598
      %1701 = vadd.xlane.f32.xlu0 %v1700
      %v1702 = vpop.xlane.xlu0 %1701
      %v1703 = vadd.f32 %v1600, %v1602
      %1704 = vadd.xlane.f32.xlu0 %v1703
      %v1705 = vpop.xlane.xlu0 %1704
      %v1706 = vadd.f32 %v1604, %v1606
      %1707 = vadd.xlane.f32.xlu0 %v1706
      %v1708 = vpop.xlane.xlu0 %1707
      %v1709 = vadd.f32 %v1608, %v1610
      %1710 = vadd.xlane.f32.xlu0 %v1709
      %v1711 = vpop.xlane.xlu0 %1710
      %v1712 = vadd.f32 %v1612, %v1614
      %1713 = vadd.xlane.f32.xlu0 %v1712
      %v1714 = vpop.xlane.xlu0 %1713
      %v1715 = vadd.f32 %v1616, %v1618
      %1716 = vadd.xlane.f32.xlu0 %v1715
      %v1717 = vpop.xlane.xlu0 %1716
      %v1718 = vadd.f32 %v1620, %v1622
      %1719 = vadd.xlane.f32.xlu0 %v1718
      %v1720 = vpop.xlane.xlu0 %1719
      %v1721 = vadd.f32 %v1624, %v1626
      %1722 = vadd.xlane.f32.xlu0 %v1721
      %v1723 = vpop.xlane.xlu0 %1722
      %v1724 = vadd.f32 %v1628, %v1630
      %1725 = vadd.xlane.f32.xlu0 %v1724
      %v1726 = vpop.xlane.xlu0 %1725
      %v1727 = vrcp.pop %v1633
      %v1728 = vrcp.pop %v1636
      %v1729 = vrcp.pop %v1639
      %v1730 = vrcp.pop %v1642
      %v1731 = vrcp.pop %v1645
      %v1732 = vrcp.pop %v1648
      %v1733 = vrcp.pop %v1651
      %v1734 = vrcp.pop %v1654
      %v1735 = vrcp.pop %v1657
      %v1736 = vrcp.pop %v1660
      %v1737 = vrcp.pop %v1663
      %v1738 = vrcp.pop %v1666
      %v1739 = vrcp.pop %v1669
      %v1740 = vrcp.pop %v1672
      %v1741 = vrcp.pop %v1675
      %v1742 = vrcp.pop %v1678
      %v1743 = vrcp.pop %v1681
      %v1744 = vrcp.pop %v1684
      %v1745 = vrcp.pop %v1687
      %v1746 = vrcp.pop %v1690
      %v1747 = vrcp.pop %v1693
      %v1748 = vrcp.pop %v1696
      %v1749 = vrcp.pop %v1699
      %v1750 = vrcp.pop %v1702
      %v1751 = vrcp.pop %v1705
      %v1752 = vrcp.pop %v1708
      %v1753 = vrcp.pop %v1711
      %v1754 = vrcp.pop %v1714
      %v1755 = vrcp.pop %v1717
      %v1756 = vrcp.pop %v1720
      %v1757 = vrcp.pop %v1723
      %v1758 = vrcp.pop %v1726
      %v1759 = vmul.f32 %v1504, %v1727
      %v1760 = vmul.f32 %v1506, %v1727
      %v1761 = vmul.f32 %v1508, %v1728
      %v1762 = vmul.f32 %v1510, %v1728
      %v1763 = vmul.f32 %v1512, %v1729
      %v1764 = vmul.f32 %v1514, %v1729
      %v1765 = vmul.f32 %v1516, %v1730
      %v1766 = vmul.f32 %v1518, %v1730
      %v1767 = vmul.f32 %v1520, %v1731
      %v1768 = vmul.f32 %v1522, %v1731
      %v1769 = vmul.f32 %v1524, %v1732
      %v1770 = vmul.f32 %v1526, %v1732
      %v1771 = vmul.f32 %v1528, %v1733
      %v1772 = vmul.f32 %v1530, %v1733
      %v1773 = vmul.f32 %v1532, %v1734
      %v1774 = vmul.f32 %v1534, %v1734
      %v1775 = vmul.f32 %v1536, %v1735
      %v1776 = vmul.f32 %v1538, %v1735
      %v1777 = vmul.f32 %v1540, %v1736
      %v1778 = vmul.f32 %v1542, %v1736
      %v1779 = vmul.f32 %v1544, %v1737
      %v1780 = vmul.f32 %v1546, %v1737
      %v1781 = vmul.f32 %v1548, %v1738
      %v1782 = vmul.f32 %v1550, %v1738
      %v1783 = vmul.f32 %v1552, %v1739
      %v1784 = vmul.f32 %v1554, %v1739
      %v1785 = vmul.f32 %v1556, %v1740
      %v1786 = vmul.f32 %v1558, %v1740
      %v1787 = vmul.f32 %v1560, %v1741
      %v1788 = vmul.f32 %v1562, %v1741
      %v1789 = vmul.f32 %v1564, %v1742
      %v1790 = vmul.f32 %v1566, %v1742
      %v1791 = vmul.f32 %v1568, %v1743
      %v1792 = vmul.f32 %v1570, %v1743
      %v1793 = vmul.f32 %v1572, %v1744
      %v1794 = vmul.f32 %v1574, %v1744
      %v1795 = vmul.f32 %v1576, %v1745
      %v1796 = vmul.f32 %v1578, %v1745
      %v1797 = vmul.f32 %v1580, %v1746
      %v1798 = vmul.f32 %v1582, %v1746
      %v1799 = vmul.f32 %v1584, %v1747
      %v1800 = vmul.f32 %v1586, %v1747
      %v1801 = vmul.f32 %v1588, %v1748
      %v1802 = vmul.f32 %v1590, %v1748
      %v1803 = vmul.f32 %v1592, %v1749
      %v1804 = vmul.f32 %v1594, %v1749
      %v1805 = vmul.f32 %v1596, %v1750
      %v1806 = vmul.f32 %v1598, %v1750
      %v1807 = vmul.f32 %v1600, %v1751
      %v1808 = vmul.f32 %v1602, %v1751
      %v1809 = vmul.f32 %v1604, %v1752
      %v1810 = vmul.f32 %v1606, %v1752
      %v1811 = vmul.f32 %v1608, %v1753
      %v1812 = vmul.f32 %v1610, %v1753
      %v1813 = vmul.f32 %v1612, %v1754
      %v1814 = vmul.f32 %v1614, %v1754
      %v1815 = vmul.f32 %v1616, %v1755
      %v1816 = vmul.f32 %v1618, %v1755
      %v1817 = vmul.f32 %v1620, %v1756
      %v1818 = vmul.f32 %v1622, %v1756
      %v1819 = vmul.f32 %v1624, %v1757
      %v1820 = vmul.f32 %v1626, %v1757
      %v1821 = vmul.f32 %v1628, %v1758
      %v1822 = vmul.f32 %v1630, %v1758
      %1823 = vmatpush.xpose.msra.mxu0 %v1789
      %1824 = vmatpush.xpose.msra.mxu0 %v1787
      %1825 = vmatpush.xpose.msra.mxu0 %v1785
      %1826 = vmatpush.xpose.msra.mxu0 %v1783
      %1827 = vmatpush.xpose.msra.mxu0 %v1781
      %1828 = vmatpush.xpose.msra.mxu0 %v1779
      %1829 = vmatpush.xpose.msra.mxu0 %v1777
      %1830 = vmatpush.xpose.msra.mxu0 %v1775
      %1831 = vmatpush.xpose.msra.mxu0 %v1773
      %1832 = vmatpush.xpose.msra.mxu0 %v1771
      %1833 = vmatpush.xpose.msra.mxu0 %v1769
      %1834 = vmatpush.xpose.msra.mxu0 %v1767
      %1835 = vmatpush.xpose.msra.mxu0 %v1765
      %1836 = vmatpush.xpose.msra.mxu0 %v1763
      %1837 = vmatpush.xpose.msra.mxu0 %v1761
      %1838 = vmatpush.xpose.msra.mxu0 %v1759
      %1839 = vmatmul.f32.gmra.mxu0 %v921
      %v1840 = vpop.f32.mrf.mxu0
      %v1841 = vadd.f32 0.0, %v1840
      %1842 = vdwg.mxu0
      %1843 = vmatpush.xpose.msra.mxu0 %v1790
      %1844 = vmatpush.xpose.msra.mxu0 %v1788
      %1845 = vmatpush.xpose.msra.mxu0 %v1786
      %1846 = vmatpush.xpose.msra.mxu0 %v1784
      %1847 = vmatpush.xpose.msra.mxu0 %v1782
      %1848 = vmatpush.xpose.msra.mxu0 %v1780
      %1849 = vmatpush.xpose.msra.mxu0 %v1778
      %1850 = vmatpush.xpose.msra.mxu0 %v1776
      %1851 = vmatpush.xpose.msra.mxu0 %v1774
      %1852 = vmatpush.xpose.msra.mxu0 %v1772
      %1853 = vmatpush.xpose.msra.mxu0 %v1770
      %1854 = vmatpush.xpose.msra.mxu0 %v1768
      %1855 = vmatpush.xpose.msra.mxu0 %v1766
      %1856 = vmatpush.xpose.msra.mxu0 %v1764
      %1857 = vmatpush.xpose.msra.mxu0 %v1762
      %1858 = vmatpush.xpose.msra.mxu0 %v1760
      %1859 = vmatmul.f32.gmra.mxu0 %v944
      %v1860 = vpop.f32.mrf.mxu0
      %v1861 = vadd.f32 %v1841, %v1860
      %1862 = vdwg.mxu0
      %1863 = vmatpush.xpose.msra.mxu0 %v1821
      %1864 = vmatpush.xpose.msra.mxu0 %v1819
      %1865 = vmatpush.xpose.msra.mxu0 %v1817
      %1866 = vmatpush.xpose.msra.mxu0 %v1815
      %1867 = vmatpush.xpose.msra.mxu0 %v1813
      %1868 = vmatpush.xpose.msra.mxu0 %v1811
      %1869 = vmatpush.xpose.msra.mxu0 %v1809
      %1870 = vmatpush.xpose.msra.mxu0 %v1807
      %1871 = vmatpush.xpose.msra.mxu0 %v1805
      %1872 = vmatpush.xpose.msra.mxu0 %v1803
      %1873 = vmatpush.xpose.msra.mxu0 %v1801
      %1874 = vmatpush.xpose.msra.mxu0 %v1799
      %1875 = vmatpush.xpose.msra.mxu0 %v1797
      %1876 = vmatpush.xpose.msra.mxu0 %v1795
      %1877 = vmatpush.xpose.msra.mxu0 %v1793
      %1878 = vmatpush.xpose.msra.mxu0 %v1791
      %1879 = vmatmul.f32.gmra.mxu0 %v921
      %v1880 = vpop.f32.mrf.mxu0
      %v1881 = vadd.f32 0.0, %v1880
      %1882 = vdwg.mxu0
      %1883 = vmatpush.xpose.msra.mxu0 %v1822
      %1884 = vmatpush.xpose.msra.mxu0 %v1820
      %1885 = vmatpush.xpose.msra.mxu0 %v1818
      %1886 = vmatpush.xpose.msra.mxu0 %v1816
      %1887 = vmatpush.xpose.msra.mxu0 %v1814
      %1888 = vmatpush.xpose.msra.mxu0 %v1812
      %1889 = vmatpush.xpose.msra.mxu0 %v1810
      %1890 = vmatpush.xpose.msra.mxu0 %v1808
      %1891 = vmatpush.xpose.msra.mxu0 %v1806
      %1892 = vmatpush.xpose.msra.mxu0 %v1804
      %1893 = vmatpush.xpose.msra.mxu0 %v1802
      %1894 = vmatpush.xpose.msra.mxu0 %v1800
      %1895 = vmatpush.xpose.msra.mxu0 %v1798
      %1896 = vmatpush.xpose.msra.mxu0 %v1796
      %1897 = vmatpush.xpose.msra.mxu0 %v1794
      %1898 = vmatpush.xpose.msra.mxu0 %v1792
      %1899 = vmatmul.f32.gmra.mxu0 %v944
      %v1900 = vpop.f32.mrf.mxu0
      %v1901 = vadd.f32 %v1881, %v1900
      %1902 = vdwg.mxu0
      %1903 = vst [vmem:[#allocation2] sm:$0x3] %v1861
      %1904 = vst [vmem:[#allocation2 + $0x8] sm:$0x3] %v1901
      %v1907 = vrot.slane %v789, 2
      %v1908 = vrot.slane %v812, 2
      %1911 = vxpose.xlu0.b32.start [1/16] %v1907, 128
      %1912 = vxpose.xlu0.b32.cont [2/16] 0.0, 128
      %1913 = vxpose.xlu0.b32.cont [3/16] 0.0, 128
      %1914 = vxpose.xlu0.b32.cont [4/16] 0.0, 128
      %1915 = vxpose.xlu0.b32.cont [5/16] 0.0, 128
      %1916 = vxpose.xlu0.b32.cont [6/16] 0.0, 128
      %1917 = vxpose.xlu0.b32.cont [7/16] 0.0, 128
      %1918 = vxpose.xlu0.b32.cont [8/16] 0.0, 128
      %1919 = vxpose.xlu0.b32.cont [9/16] 0.0, 128
      %1920 = vxpose.xlu0.b32.cont [10/16] 0.0, 128
      %1921 = vxpose.xlu0.b32.cont [11/16] 0.0, 128
      %1922 = vxpose.xlu0.b32.cont [12/16] 0.0, 128
      %1923 = vxpose.xlu0.b32.cont [13/16] 0.0, 128
      %1924 = vxpose.xlu0.b32.cont [14/16] 0.0, 128
      %1925 = vxpose.xlu0.b32.cont [15/16] 0.0, 128
      %1926 = vxpose.xlu0.b32.end [16/16] 0.0, 128
      %v1927 = vpop.trf.xlu0
      %v1928 = vpop.trf.xlu0
      %v1929 = vpop.trf.xlu0
      %v1930 = vpop.trf.xlu0
      %v1931 = vpop.trf.xlu0
      %v1932 = vpop.trf.xlu0
      %v1933 = vpop.trf.xlu0
      %v1934 = vpop.trf.xlu0
      %v1935 = vpop.trf.xlu0
      %v1936 = vpop.trf.xlu0
      %v1937 = vpop.trf.xlu0
      %v1938 = vpop.trf.xlu0
      %v1939 = vpop.trf.xlu0
      %v1940 = vpop.trf.xlu0
      %v1941 = vpop.trf.xlu0
      %v1942 = vpop.trf.xlu0
      %1943 = vxpose.xlu0.b32.start [1/16] %v1908, 128
      %1944 = vxpose.xlu0.b32.cont [2/16] 0.0, 128
      %1945 = vxpose.xlu0.b32.cont [3/16] 0.0, 128
      %1946 = vxpose.xlu0.b32.cont [4/16] 0.0, 128
      %1947 = vxpose.xlu0.b32.cont [5/16] 0.0, 128
      %1948 = vxpose.xlu0.b32.cont [6/16] 0.0, 128
      %1949 = vxpose.xlu0.b32.cont [7/16] 0.0, 128
      %1950 = vxpose.xlu0.b32.cont [8/16] 0.0, 128
      %1951 = vxpose.xlu0.b32.cont [9/16] 0.0, 128
      %1952 = vxpose.xlu0.b32.cont [10/16] 0.0, 128
      %1953 = vxpose.xlu0.b32.cont [11/16] 0.0, 128
      %1954 = vxpose.xlu0.b32.cont [12/16] 0.0, 128
      %1955 = vxpose.xlu0.b32.cont [13/16] 0.0, 128
      %1956 = vxpose.xlu0.b32.cont [14/16] 0.0, 128
      %1957 = vxpose.xlu0.b32.cont [15/16] 0.0, 128
      %1958 = vxpose.xlu0.b32.end [16/16] 0.0, 128
      %v1959 = vpop.trf.xlu0
      %v1960 = vpop.trf.xlu0
      %v1961 = vpop.trf.xlu0
      %v1962 = vpop.trf.xlu0
      %v1963 = vpop.trf.xlu0
      %v1964 = vpop.trf.xlu0
      %v1965 = vpop.trf.xlu0
      %v1966 = vpop.trf.xlu0
      %v1967 = vpop.trf.xlu0
      %v1968 = vpop.trf.xlu0
      %v1969 = vpop.trf.xlu0
      %v1970 = vpop.trf.xlu0
      %v1971 = vpop.trf.xlu0
      %v1972 = vpop.trf.xlu0
      %v1973 = vpop.trf.xlu0
      %v1974 = vpop.trf.xlu0
      %v1975 = vrot.slane %v855, 2
      %v1976 = vrot.slane %v878, 2
      %v1978 = vsel %vm1013, %v1927, 0
      %v1981 = vsel %vm1013, %v1928, 0
      %v1984 = vsel %vm1013, %v1929, 0
      %v1987 = vsel %vm1013, %v1930, 0
      %v1990 = vsel %vm1013, %v1931, 0
      %v1993 = vsel %vm1013, %v1932, 0
      %v1996 = vsel %vm1013, %v1933, 0
      %v1999 = vsel %vm1013, %v1934, 0
      %v2002 = vsel %vm1013, %v1935, 0
      %v2005 = vsel %vm1013, %v1936, 0
      %v2008 = vsel %vm1013, %v1937, 0
      %v2011 = vsel %vm1013, %v1938, 0
      %v2014 = vsel %vm1013, %v1939, 0
      %v2017 = vsel %vm1013, %v1940, 0
      %v2020 = vsel %vm1013, %v1941, 0
      %v2023 = vsel %vm1013, %v1942, 0
      %v2026 = vsel %vm1013, %v1959, 0
      %v2029 = vsel %vm1013, %v1960, 0
      %v2032 = vsel %vm1013, %v1961, 0
      %v2035 = vsel %vm1013, %v1962, 0
      %v2038 = vsel %vm1013, %v1963, 0
      %v2041 = vsel %vm1013, %v1964, 0
      %v2044 = vsel %vm1013, %v1965, 0
      %v2047 = vsel %vm1013, %v1966, 0
      %v2050 = vsel %vm1013, %v1967, 0
      %v2053 = vsel %vm1013, %v1968, 0
      %v2056 = vsel %vm1013, %v1969, 0
      %v2059 = vsel %vm1013, %v1970, 0
      %v2062 = vsel %vm1013, %v1971, 0
      %v2065 = vsel %vm1013, %v1972, 0
      %v2068 = vsel %vm1013, %v1973, 0
      %v2071 = vsel %vm1013, %v1974, 0
      %v2073 = vsel %vm1110, %v1975, 0
      %v2075 = vsel %vm1110, %v1976, 0
      %2077 = vmatpush.msra.mxu0 0.0
      %2078 = vmatpush.msra.mxu0 0.0
      %2079 = vmatpush.msra.mxu0 0.0
      %2080 = vmatpush.msra.mxu0 0.0
      %2081 = vmatpush.msra.mxu0 0.0
      %2082 = vmatpush.msra.mxu0 0.0
      %2083 = vmatpush.msra.mxu0 0.0
      %2084 = vmatpush.msra.mxu0 0.0
      %2085 = vmatpush.msra.mxu0 0.0
      %2086 = vmatpush.msra.mxu0 0.0
      %2087 = vmatpush.msra.mxu0 0.0
      %2088 = vmatpush.msra.mxu0 0.0
      %2089 = vmatpush.msra.mxu0 0.0
      %2090 = vmatpush.msra.mxu0 0.0
      %2091 = vmatpush.msra.mxu0 0.0
      %2092 = vmatpush.msra.mxu0 %v2073
      %2093 = vmatmul.f32.gmra.mxu0 %v1978
      %v2094 = vpop.f32.mrf.mxu0
      %v2095 = vadd.f32 0.0, %v2094
      %2096 = vmatmul.f32.gmra.mxu0 %v1981
      %v2097 = vpop.f32.mrf.mxu0
      %v2098 = vadd.f32 0.0, %v2097
      %2099 = vmatmul.f32.gmra.mxu0 %v1984
      %v2100 = vpop.f32.mrf.mxu0
      %v2101 = vadd.f32 0.0, %v2100
      %2102 = vmatmul.f32.gmra.mxu0 %v1987
      %v2103 = vpop.f32.mrf.mxu0
      %v2104 = vadd.f32 0.0, %v2103
      %2105 = vmatmul.f32.gmra.mxu0 %v1990
      %v2106 = vpop.f32.mrf.mxu0
      %v2107 = vadd.f32 0.0, %v2106
      %2108 = vmatmul.f32.gmra.mxu0 %v1993
      %v2109 = vpop.f32.mrf.mxu0
      %v2110 = vadd.f32 0.0, %v2109
      %2111 = vmatmul.f32.gmra.mxu0 %v1996
      %v2112 = vpop.f32.mrf.mxu0
      %v2113 = vadd.f32 0.0, %v2112
      %2114 = vmatmul.f32.gmra.mxu0 %v1999
      %v2115 = vpop.f32.mrf.mxu0
      %v2116 = vadd.f32 0.0, %v2115
      %2117 = vmatmul.f32.gmra.mxu0 %v2002
      %v2118 = vpop.f32.mrf.mxu0
      %v2119 = vadd.f32 0.0, %v2118
      %2120 = vmatmul.f32.gmra.mxu0 %v2005
      %v2121 = vpop.f32.mrf.mxu0
      %v2122 = vadd.f32 0.0, %v2121
      %2123 = vmatmul.f32.gmra.mxu0 %v2008
      %v2124 = vpop.f32.mrf.mxu0
      %v2125 = vadd.f32 0.0, %v2124
      %2126 = vmatmul.f32.gmra.mxu0 %v2011
      %v2127 = vpop.f32.mrf.mxu0
      %v2128 = vadd.f32 0.0, %v2127
      %2129 = vmatmul.f32.gmra.mxu0 %v2014
      %v2130 = vpop.f32.mrf.mxu0
      %v2131 = vadd.f32 0.0, %v2130
      %2132 = vmatmul.f32.gmra.mxu0 %v2017
      %v2133 = vpop.f32.mrf.mxu0
      %v2134 = vadd.f32 0.0, %v2133
      %2135 = vmatmul.f32.gmra.mxu0 %v2020
      %v2136 = vpop.f32.mrf.mxu0
      %v2137 = vadd.f32 0.0, %v2136
      %2138 = vmatmul.f32.gmra.mxu0 %v2023
      %v2139 = vpop.f32.mrf.mxu0
      %v2140 = vadd.f32 0.0, %v2139
      %2141 = vmatmul.f32.gmra.mxu0 %v2026
      %v2142 = vpop.f32.mrf.mxu0
      %v2143 = vadd.f32 0.0, %v2142
      %2144 = vmatmul.f32.gmra.mxu0 %v2029
      %v2145 = vpop.f32.mrf.mxu0
      %v2146 = vadd.f32 0.0, %v2145
      %2147 = vmatmul.f32.gmra.mxu0 %v2032
      %v2148 = vpop.f32.mrf.mxu0
      %v2149 = vadd.f32 0.0, %v2148
      %2150 = vmatmul.f32.gmra.mxu0 %v2035
      %v2151 = vpop.f32.mrf.mxu0
      %v2152 = vadd.f32 0.0, %v2151
      %2153 = vmatmul.f32.gmra.mxu0 %v2038
      %v2154 = vpop.f32.mrf.mxu0
      %v2155 = vadd.f32 0.0, %v2154
      %2156 = vmatmul.f32.gmra.mxu0 %v2041
      %v2157 = vpop.f32.mrf.mxu0
      %v2158 = vadd.f32 0.0, %v2157
      %2159 = vmatmul.f32.gmra.mxu0 %v2044
      %v2160 = vpop.f32.mrf.mxu0
      %v2161 = vadd.f32 0.0, %v2160
      %2162 = vmatmul.f32.gmra.mxu0 %v2047
      %v2163 = vpop.f32.mrf.mxu0
      %v2164 = vadd.f32 0.0, %v2163
      %2165 = vmatmul.f32.gmra.mxu0 %v2050
      %v2166 = vpop.f32.mrf.mxu0
      %v2167 = vadd.f32 0.0, %v2166
      %2168 = vmatmul.f32.gmra.mxu0 %v2053
      %v2169 = vpop.f32.mrf.mxu0
      %v2170 = vadd.f32 0.0, %v2169
      %2171 = vmatmul.f32.gmra.mxu0 %v2056
      %v2172 = vpop.f32.mrf.mxu0
      %v2173 = vadd.f32 0.0, %v2172
      %2174 = vmatmul.f32.gmra.mxu0 %v2059
      %v2175 = vpop.f32.mrf.mxu0
      %v2176 = vadd.f32 0.0, %v2175
      %2177 = vmatmul.f32.gmra.mxu0 %v2062
      %v2178 = vpop.f32.mrf.mxu0
      %v2179 = vadd.f32 0.0, %v2178
      %2180 = vmatmul.f32.gmra.mxu0 %v2065
      %v2181 = vpop.f32.mrf.mxu0
      %v2182 = vadd.f32 0.0, %v2181
      %2183 = vmatmul.f32.gmra.mxu0 %v2068
      %v2184 = vpop.f32.mrf.mxu0
      %v2185 = vadd.f32 0.0, %v2184
      %2186 = vmatmul.f32.gmra.mxu0 %v2071
      %v2187 = vpop.f32.mrf.mxu0
      %v2188 = vadd.f32 0.0, %v2187
      %2189 = vdwg.mxu0
      %2190 = vmatpush.msra.mxu0 0.0
      %2191 = vmatpush.msra.mxu0 0.0
      %2192 = vmatpush.msra.mxu0 0.0
      %2193 = vmatpush.msra.mxu0 0.0
      %2194 = vmatpush.msra.mxu0 0.0
      %2195 = vmatpush.msra.mxu0 0.0
      %2196 = vmatpush.msra.mxu0 0.0
      %2197 = vmatpush.msra.mxu0 0.0
      %2198 = vmatpush.msra.mxu0 0.0
      %2199 = vmatpush.msra.mxu0 0.0
      %2200 = vmatpush.msra.mxu0 0.0
      %2201 = vmatpush.msra.mxu0 0.0
      %2202 = vmatpush.msra.mxu0 0.0
      %2203 = vmatpush.msra.mxu0 0.0
      %2204 = vmatpush.msra.mxu0 0.0
      %2205 = vmatpush.msra.mxu0 %v2075
      %2206 = vmatmul.f32.gmra.mxu0 %v1978
      %v2207 = vpop.f32.mrf.mxu0
      %v2208 = vadd.f32 0.0, %v2207
      %2209 = vmatmul.f32.gmra.mxu0 %v1981
      %v2210 = vpop.f32.mrf.mxu0
      %v2211 = vadd.f32 0.0, %v2210
      %2212 = vmatmul.f32.gmra.mxu0 %v1984
      %v2213 = vpop.f32.mrf.mxu0
      %v2214 = vadd.f32 0.0, %v2213
      %2215 = vmatmul.f32.gmra.mxu0 %v1987
      %v2216 = vpop.f32.mrf.mxu0
      %v2217 = vadd.f32 0.0, %v2216
      %2218 = vmatmul.f32.gmra.mxu0 %v1990
      %v2219 = vpop.f32.mrf.mxu0
      %v2220 = vadd.f32 0.0, %v2219
      %2221 = vmatmul.f32.gmra.mxu0 %v1993
      %v2222 = vpop.f32.mrf.mxu0
      %v2223 = vadd.f32 0.0, %v2222
      %2224 = vmatmul.f32.gmra.mxu0 %v1996
      %v2225 = vpop.f32.mrf.mxu0
      %v2226 = vadd.f32 0.0, %v2225
      %2227 = vmatmul.f32.gmra.mxu0 %v1999
      %v2228 = vpop.f32.mrf.mxu0
      %v2229 = vadd.f32 0.0, %v2228
      %2230 = vmatmul.f32.gmra.mxu0 %v2002
      %v2231 = vpop.f32.mrf.mxu0
      %v2232 = vadd.f32 0.0, %v2231
      %2233 = vmatmul.f32.gmra.mxu0 %v2005
      %v2234 = vpop.f32.mrf.mxu0
      %v2235 = vadd.f32 0.0, %v2234
      %2236 = vmatmul.f32.gmra.mxu0 %v2008
      %v2237 = vpop.f32.mrf.mxu0
      %v2238 = vadd.f32 0.0, %v2237
      %2239 = vmatmul.f32.gmra.mxu0 %v2011
      %v2240 = vpop.f32.mrf.mxu0
      %v2241 = vadd.f32 0.0, %v2240
      %2242 = vmatmul.f32.gmra.mxu0 %v2014
      %v2243 = vpop.f32.mrf.mxu0
      %v2244 = vadd.f32 0.0, %v2243
      %2245 = vmatmul.f32.gmra.mxu0 %v2017
      %v2246 = vpop.f32.mrf.mxu0
      %v2247 = vadd.f32 0.0, %v2246
      %2248 = vmatmul.f32.gmra.mxu0 %v2020
      %v2249 = vpop.f32.mrf.mxu0
      %v2250 = vadd.f32 0.0, %v2249
      %2251 = vmatmul.f32.gmra.mxu0 %v2023
      %v2252 = vpop.f32.mrf.mxu0
      %v2253 = vadd.f32 0.0, %v2252
      %2254 = vmatmul.f32.gmra.mxu0 %v2026
      %v2255 = vpop.f32.mrf.mxu0
      %v2256 = vadd.f32 0.0, %v2255
      %2257 = vmatmul.f32.gmra.mxu0 %v2029
      %v2258 = vpop.f32.mrf.mxu0
      %v2259 = vadd.f32 0.0, %v2258
      %2260 = vmatmul.f32.gmra.mxu0 %v2032
      %v2261 = vpop.f32.mrf.mxu0
      %v2262 = vadd.f32 0.0, %v2261
      %2263 = vmatmul.f32.gmra.mxu0 %v2035
      %v2264 = vpop.f32.mrf.mxu0
      %v2265 = vadd.f32 0.0, %v2264
      %2266 = vmatmul.f32.gmra.mxu0 %v2038
      %v2267 = vpop.f32.mrf.mxu0
      %v2268 = vadd.f32 0.0, %v2267
      %2269 = vmatmul.f32.gmra.mxu0 %v2041
      %v2270 = vpop.f32.mrf.mxu0
      %v2271 = vadd.f32 0.0, %v2270
      %2272 = vmatmul.f32.gmra.mxu0 %v2044
      %v2273 = vpop.f32.mrf.mxu0
      %v2274 = vadd.f32 0.0, %v2273
      %2275 = vmatmul.f32.gmra.mxu0 %v2047
      %v2276 = vpop.f32.mrf.mxu0
      %v2277 = vadd.f32 0.0, %v2276
      %2278 = vmatmul.f32.gmra.mxu0 %v2050
      %v2279 = vpop.f32.mrf.mxu0
      %v2280 = vadd.f32 0.0, %v2279
      %2281 = vmatmul.f32.gmra.mxu0 %v2053
      %v2282 = vpop.f32.mrf.mxu0
      %v2283 = vadd.f32 0.0, %v2282
      %2284 = vmatmul.f32.gmra.mxu0 %v2056
      %v2285 = vpop.f32.mrf.mxu0
      %v2286 = vadd.f32 0.0, %v2285
      %2287 = vmatmul.f32.gmra.mxu0 %v2059
      %v2288 = vpop.f32.mrf.mxu0
      %v2289 = vadd.f32 0.0, %v2288
      %2290 = vmatmul.f32.gmra.mxu0 %v2062
      %v2291 = vpop.f32.mrf.mxu0
      %v2292 = vadd.f32 0.0, %v2291
      %2293 = vmatmul.f32.gmra.mxu0 %v2065
      %v2294 = vpop.f32.mrf.mxu0
      %v2295 = vadd.f32 0.0, %v2294
      %2296 = vmatmul.f32.gmra.mxu0 %v2068
      %v2297 = vpop.f32.mrf.mxu0
      %v2298 = vadd.f32 0.0, %v2297
      %2299 = vmatmul.f32.gmra.mxu0 %v2071
      %v2300 = vpop.f32.mrf.mxu0
      %v2301 = vadd.f32 0.0, %v2300
      %2302 = vdwg.mxu0
      %v2303 = vmax.f32 %v2095, %v2208
      %2304 = vmax.xlane.f32.xlu0 %v2303
      %v2305 = vpop.xlane.xlu0 %2304
      %v2306 = vmax.f32 %v2098, %v2211
      %2307 = vmax.xlane.f32.xlu0 %v2306
      %v2308 = vpop.xlane.xlu0 %2307
      %v2309 = vmax.f32 %v2101, %v2214
      %2310 = vmax.xlane.f32.xlu0 %v2309
      %v2311 = vpop.xlane.xlu0 %2310
      %v2312 = vmax.f32 %v2104, %v2217
      %2313 = vmax.xlane.f32.xlu0 %v2312
      %v2314 = vpop.xlane.xlu0 %2313
      %v2315 = vmax.f32 %v2107, %v2220
      %2316 = vmax.xlane.f32.xlu0 %v2315
      %v2317 = vpop.xlane.xlu0 %2316
      %v2318 = vmax.f32 %v2110, %v2223
      %2319 = vmax.xlane.f32.xlu0 %v2318
      %v2320 = vpop.xlane.xlu0 %2319
      %v2321 = vmax.f32 %v2113, %v2226
      %2322 = vmax.xlane.f32.xlu0 %v2321
      %v2323 = vpop.xlane.xlu0 %2322
      %v2324 = vmax.f32 %v2116, %v2229
      %2325 = vmax.xlane.f32.xlu0 %v2324
      %v2326 = vpop.xlane.xlu0 %2325
      %v2327 = vmax.f32 %v2119, %v2232
      %2328 = vmax.xlane.f32.xlu0 %v2327
      %v2329 = vpop.xlane.xlu0 %2328
      %v2330 = vmax.f32 %v2122, %v2235
      %2331 = vmax.xlane.f32.xlu0 %v2330
      %v2332 = vpop.xlane.xlu0 %2331
      %v2333 = vmax.f32 %v2125, %v2238
      %2334 = vmax.xlane.f32.xlu0 %v2333
      %v2335 = vpop.xlane.xlu0 %2334
      %v2336 = vmax.f32 %v2128, %v2241
      %2337 = vmax.xlane.f32.xlu0 %v2336
      %v2338 = vpop.xlane.xlu0 %2337
      %v2339 = vmax.f32 %v2131, %v2244
      %2340 = vmax.xlane.f32.xlu0 %v2339
      %v2341 = vpop.xlane.xlu0 %2340
      %v2342 = vmax.f32 %v2134, %v2247
      %2343 = vmax.xlane.f32.xlu0 %v2342
      %v2344 = vpop.xlane.xlu0 %2343
      %v2345 = vmax.f32 %v2137, %v2250
      %2346 = vmax.xlane.f32.xlu0 %v2345
      %v2347 = vpop.xlane.xlu0 %2346
      %v2348 = vmax.f32 %v2140, %v2253
      %2349 = vmax.xlane.f32.xlu0 %v2348
      %v2350 = vpop.xlane.xlu0 %2349
      %v2351 = vmax.f32 %v2143, %v2256
      %2352 = vmax.xlane.f32.xlu0 %v2351
      %v2353 = vpop.xlane.xlu0 %2352
      %v2354 = vmax.f32 %v2146, %v2259
      %2355 = vmax.xlane.f32.xlu0 %v2354
      %v2356 = vpop.xlane.xlu0 %2355
      %v2357 = vmax.f32 %v2149, %v2262
      %2358 = vmax.xlane.f32.xlu0 %v2357
      %v2359 = vpop.xlane.xlu0 %2358
      %v2360 = vmax.f32 %v2152, %v2265
      %2361 = vmax.xlane.f32.xlu0 %v2360
      %v2362 = vpop.xlane.xlu0 %2361
      %v2363 = vmax.f32 %v2155, %v2268
      %2364 = vmax.xlane.f32.xlu0 %v2363
      %v2365 = vpop.xlane.xlu0 %2364
      %v2366 = vmax.f32 %v2158, %v2271
      %2367 = vmax.xlane.f32.xlu0 %v2366
      %v2368 = vpop.xlane.xlu0 %2367
      %v2369 = vmax.f32 %v2161, %v2274
      %2370 = vmax.xlane.f32.xlu0 %v2369
      %v2371 = vpop.xlane.xlu0 %2370
      %v2372 = vmax.f32 %v2164, %v2277
      %2373 = vmax.xlane.f32.xlu0 %v2372
      %v2374 = vpop.xlane.xlu0 %2373
      %v2375 = vmax.f32 %v2167, %v2280
      %2376 = vmax.xlane.f32.xlu0 %v2375
      %v2377 = vpop.xlane.xlu0 %2376
      %v2378 = vmax.f32 %v2170, %v2283
      %2379 = vmax.xlane.f32.xlu0 %v2378
      %v2380 = vpop.xlane.xlu0 %2379
      %v2381 = vmax.f32 %v2173, %v2286
      %2382 = vmax.xlane.f32.xlu0 %v2381
      %v2383 = vpop.xlane.xlu0 %2382
      %v2384 = vmax.f32 %v2176, %v2289
      %2385 = vmax.xlane.f32.xlu0 %v2384
      %v2386 = vpop.xlane.xlu0 %2385
      %v2387 = vmax.f32 %v2179, %v2292
      %2388 = vmax.xlane.f32.xlu0 %v2387
      %v2389 = vpop.xlane.xlu0 %2388
      %v2390 = vmax.f32 %v2182, %v2295
      %2391 = vmax.xlane.f32.xlu0 %v2390
      %v2392 = vpop.xlane.xlu0 %2391
      %v2393 = vmax.f32 %v2185, %v2298
      %2394 = vmax.xlane.f32.xlu0 %v2393
      %v2395 = vpop.xlane.xlu0 %2394
      %v2396 = vmax.f32 %v2188, %v2301
      %2397 = vmax.xlane.f32.xlu0 %v2396
      %v2398 = vpop.xlane.xlu0 %2397
      %v2399 = vsub.f32 %v2095, %v2305
      %v2400 = vsub.f32 %v2208, %v2305
      %v2401 = vsub.f32 %v2098, %v2308
      %v2402 = vsub.f32 %v2211, %v2308
      %v2403 = vsub.f32 %v2101, %v2311
      %v2404 = vsub.f32 %v2214, %v2311
      %v2405 = vsub.f32 %v2104, %v2314
      %v2406 = vsub.f32 %v2217, %v2314
      %v2407 = vsub.f32 %v2107, %v2317
      %v2408 = vsub.f32 %v2220, %v2317
      %v2409 = vsub.f32 %v2110, %v2320
      %v2410 = vsub.f32 %v2223, %v2320
      %v2411 = vsub.f32 %v2113, %v2323
      %v2412 = vsub.f32 %v2226, %v2323
      %v2413 = vsub.f32 %v2116, %v2326
      %v2414 = vsub.f32 %v2229, %v2326
      %v2415 = vsub.f32 %v2119, %v2329
      %v2416 = vsub.f32 %v2232, %v2329
      %v2417 = vsub.f32 %v2122, %v2332
      %v2418 = vsub.f32 %v2235, %v2332
      %v2419 = vsub.f32 %v2125, %v2335
      %v2420 = vsub.f32 %v2238, %v2335
      %v2421 = vsub.f32 %v2128, %v2338
      %v2422 = vsub.f32 %v2241, %v2338
      %v2423 = vsub.f32 %v2131, %v2341
      %v2424 = vsub.f32 %v2244, %v2341
      %v2425 = vsub.f32 %v2134, %v2344
      %v2426 = vsub.f32 %v2247, %v2344
      %v2427 = vsub.f32 %v2137, %v2347
      %v2428 = vsub.f32 %v2250, %v2347
      %v2429 = vsub.f32 %v2140, %v2350
      %v2430 = vsub.f32 %v2253, %v2350
      %v2431 = vsub.f32 %v2143, %v2353
      %v2432 = vsub.f32 %v2256, %v2353
      %v2433 = vsub.f32 %v2146, %v2356
      %v2434 = vsub.f32 %v2259, %v2356
      %v2435 = vsub.f32 %v2149, %v2359
      %v2436 = vsub.f32 %v2262, %v2359
      %v2437 = vsub.f32 %v2152, %v2362
      %v2438 = vsub.f32 %v2265, %v2362
      %v2439 = vsub.f32 %v2155, %v2365
      %v2440 = vsub.f32 %v2268, %v2365
      %v2441 = vsub.f32 %v2158, %v2368
      %v2442 = vsub.f32 %v2271, %v2368
      %v2443 = vsub.f32 %v2161, %v2371
      %v2444 = vsub.f32 %v2274, %v2371
      %v2445 = vsub.f32 %v2164, %v2374
      %v2446 = vsub.f32 %v2277, %v2374
      %v2447 = vsub.f32 %v2167, %v2377
      %v2448 = vsub.f32 %v2280, %v2377
      %v2449 = vsub.f32 %v2170, %v2380
      %v2450 = vsub.f32 %v2283, %v2380
      %v2451 = vsub.f32 %v2173, %v2383
      %v2452 = vsub.f32 %v2286, %v2383
      %v2453 = vsub.f32 %v2176, %v2386
      %v2454 = vsub.f32 %v2289, %v2386
      %v2455 = vsub.f32 %v2179, %v2389
      %v2456 = vsub.f32 %v2292, %v2389
      %v2457 = vsub.f32 %v2182, %v2392
      %v2458 = vsub.f32 %v2295, %v2392
      %v2459 = vsub.f32 %v2185, %v2395
      %v2460 = vsub.f32 %v2298, %v2395
      %v2461 = vsub.f32 %v2188, %v2398
      %v2462 = vsub.f32 %v2301, %v2398
      %v2463 = vmul.f32 %v2399, 1.442695
      %v2464 = vpow.pop %v2463
      %v2465 = vmul.f32 %v2400, 1.442695
      %v2466 = vpow.pop %v2465
      %v2467 = vmul.f32 %v2401, 1.442695
      %v2468 = vpow.pop %v2467
      %v2469 = vmul.f32 %v2402, 1.442695
      %v2470 = vpow.pop %v2469
      %v2471 = vmul.f32 %v2403, 1.442695
      %v2472 = vpow.pop %v2471
      %v2473 = vmul.f32 %v2404, 1.442695
      %v2474 = vpow.pop %v2473
      %v2475 = vmul.f32 %v2405, 1.442695
      %v2476 = vpow.pop %v2475
      %v2477 = vmul.f32 %v2406, 1.442695
      %v2478 = vpow.pop %v2477
      %v2479 = vmul.f32 %v2407, 1.442695
      %v2480 = vpow.pop %v2479
      %v2481 = vmul.f32 %v2408, 1.442695
      %v2482 = vpow.pop %v2481
      %v2483 = vmul.f32 %v2409, 1.442695
      %v2484 = vpow.pop %v2483
      %v2485 = vmul.f32 %v2410, 1.442695
      %v2486 = vpow.pop %v2485
      %v2487 = vmul.f32 %v2411, 1.442695
      %v2488 = vpow.pop %v2487
      %v2489 = vmul.f32 %v2412, 1.442695
      %v2490 = vpow.pop %v2489
      %v2491 = vmul.f32 %v2413, 1.442695
      %v2492 = vpow.pop %v2491
      %v2493 = vmul.f32 %v2414, 1.442695
      %v2494 = vpow.pop %v2493
      %v2495 = vmul.f32 %v2415, 1.442695
      %v2496 = vpow.pop %v2495
      %v2497 = vmul.f32 %v2416, 1.442695
      %v2498 = vpow.pop %v2497
      %v2499 = vmul.f32 %v2417, 1.442695
      %v2500 = vpow.pop %v2499
      %v2501 = vmul.f32 %v2418, 1.442695
      %v2502 = vpow.pop %v2501
      %v2503 = vmul.f32 %v2419, 1.442695
      %v2504 = vpow.pop %v2503
      %v2505 = vmul.f32 %v2420, 1.442695
      %v2506 = vpow.pop %v2505
      %v2507 = vmul.f32 %v2421, 1.442695
      %v2508 = vpow.pop %v2507
      %v2509 = vmul.f32 %v2422, 1.442695
      %v2510 = vpow.pop %v2509
      %v2511 = vmul.f32 %v2423, 1.442695
      %v2512 = vpow.pop %v2511
      %v2513 = vmul.f32 %v2424, 1.442695
      %v2514 = vpow.pop %v2513
      %v2515 = vmul.f32 %v2425, 1.442695
      %v2516 = vpow.pop %v2515
      %v2517 = vmul.f32 %v2426, 1.442695
      %v2518 = vpow.pop %v2517
      %v2519 = vmul.f32 %v2427, 1.442695
      %v2520 = vpow.pop %v2519
      %v2521 = vmul.f32 %v2428, 1.442695
      %v2522 = vpow.pop %v2521
      %v2523 = vmul.f32 %v2429, 1.442695
      %v2524 = vpow.pop %v2523
      %v2525 = vmul.f32 %v2430, 1.442695
      %v2526 = vpow.pop %v2525
      %v2527 = vmul.f32 %v2431, 1.442695
      %v2528 = vpow.pop %v2527
      %v2529 = vmul.f32 %v2432, 1.442695
      %v2530 = vpow.pop %v2529
      %v2531 = vmul.f32 %v2433, 1.442695
      %v2532 = vpow.pop %v2531
      %v2533 = vmul.f32 %v2434, 1.442695
      %v2534 = vpow.pop %v2533
      %v2535 = vmul.f32 %v2435, 1.442695
      %v2536 = vpow.pop %v2535
      %v2537 = vmul.f32 %v2436, 1.442695
      %v2538 = vpow.pop %v2537
      %v2539 = vmul.f32 %v2437, 1.442695
      %v2540 = vpow.pop %v2539
      %v2541 = vmul.f32 %v2438, 1.442695
      %v2542 = vpow.pop %v2541
      %v2543 = vmul.f32 %v2439, 1.442695
      %v2544 = vpow.pop %v2543
      %v2545 = vmul.f32 %v2440, 1.442695
      %v2546 = vpow.pop %v2545
      %v2547 = vmul.f32 %v2441, 1.442695
      %v2548 = vpow.pop %v2547
      %v2549 = vmul.f32 %v2442, 1.442695
      %v2550 = vpow.pop %v2549
      %v2551 = vmul.f32 %v2443, 1.442695
      %v2552 = vpow.pop %v2551
      %v2553 = vmul.f32 %v2444, 1.442695
      %v2554 = vpow.pop %v2553
      %v2555 = vmul.f32 %v2445, 1.442695
      %v2556 = vpow.pop %v2555
      %v2557 = vmul.f32 %v2446, 1.442695
      %v2558 = vpow.pop %v2557
      %v2559 = vmul.f32 %v2447, 1.442695
      %v2560 = vpow.pop %v2559
      %v2561 = vmul.f32 %v2448, 1.442695
      %v2562 = vpow.pop %v2561
      %v2563 = vmul.f32 %v2449, 1.442695
      %v2564 = vpow.pop %v2563
      %v2565 = vmul.f32 %v2450, 1.442695
      %v2566 = vpow.pop %v2565
      %v2567 = vmul.f32 %v2451, 1.442695
      %v2568 = vpow.pop %v2567
      %v2569 = vmul.f32 %v2452, 1.442695
      %v2570 = vpow.pop %v2569
      %v2571 = vmul.f32 %v2453, 1.442695
      %v2572 = vpow.pop %v2571
      %v2573 = vmul.f32 %v2454, 1.442695
      %v2574 = vpow.pop %v2573
      %v2575 = vmul.f32 %v2455, 1.442695
      %v2576 = vpow.pop %v2575
      %v2577 = vmul.f32 %v2456, 1.442695
      %v2578 = vpow.pop %v2577
      %v2579 = vmul.f32 %v2457, 1.442695
      %v2580 = vpow.pop %v2579
      %v2581 = vmul.f32 %v2458, 1.442695
      %v2582 = vpow.pop %v2581
      %v2583 = vmul.f32 %v2459, 1.442695
      %v2584 = vpow.pop %v2583
      %v2585 = vmul.f32 %v2460, 1.442695
      %v2586 = vpow.pop %v2585
      %v2587 = vmul.f32 %v2461, 1.442695
      %v2588 = vpow.pop %v2587
      %v2589 = vmul.f32 %v2462, 1.442695
      %v2590 = vpow.pop %v2589
      %v2591 = vadd.f32 %v2464, %v2466
      %2592 = vadd.xlane.f32.xlu0 %v2591
      %v2593 = vpop.xlane.xlu0 %2592
      %v2594 = vadd.f32 %v2468, %v2470
      %2595 = vadd.xlane.f32.xlu0 %v2594
      %v2596 = vpop.xlane.xlu0 %2595
      %v2597 = vadd.f32 %v2472, %v2474
      %2598 = vadd.xlane.f32.xlu0 %v2597
      %v2599 = vpop.xlane.xlu0 %2598
      %v2600 = vadd.f32 %v2476, %v2478
      %2601 = vadd.xlane.f32.xlu0 %v2600
      %v2602 = vpop.xlane.xlu0 %2601
      %v2603 = vadd.f32 %v2480, %v2482
      %2604 = vadd.xlane.f32.xlu0 %v2603
      %v2605 = vpop.xlane.xlu0 %2604
      %v2606 = vadd.f32 %v2484, %v2486
      %2607 = vadd.xlane.f32.xlu0 %v2606
      %v2608 = vpop.xlane.xlu0 %2607
      %v2609 = vadd.f32 %v2488, %v2490
      %2610 = vadd.xlane.f32.xlu0 %v2609
      %v2611 = vpop.xlane.xlu0 %2610
      %v2612 = vadd.f32 %v2492, %v2494
      %2613 = vadd.xlane.f32.xlu0 %v2612
      %v2614 = vpop.xlane.xlu0 %2613
      %v2615 = vadd.f32 %v2496, %v2498
      %2616 = vadd.xlane.f32.xlu0 %v2615
      %v2617 = vpop.xlane.xlu0 %2616
      %v2618 = vadd.f32 %v2500, %v2502
      %2619 = vadd.xlane.f32.xlu0 %v2618
      %v2620 = vpop.xlane.xlu0 %2619
      %v2621 = vadd.f32 %v2504, %v2506
      %2622 = vadd.xlane.f32.xlu0 %v2621
      %v2623 = vpop.xlane.xlu0 %2622
      %v2624 = vadd.f32 %v2508, %v2510
      %2625 = vadd.xlane.f32.xlu0 %v2624
      %v2626 = vpop.xlane.xlu0 %2625
      %v2627 = vadd.f32 %v2512, %v2514
      %2628 = vadd.xlane.f32.xlu0 %v2627
      %v2629 = vpop.xlane.xlu0 %2628
      %v2630 = vadd.f32 %v2516, %v2518
      %2631 = vadd.xlane.f32.xlu0 %v2630
      %v2632 = vpop.xlane.xlu0 %2631
      %v2633 = vadd.f32 %v2520, %v2522
      %2634 = vadd.xlane.f32.xlu0 %v2633
      %v2635 = vpop.xlane.xlu0 %2634
      %v2636 = vadd.f32 %v2524, %v2526
      %2637 = vadd.xlane.f32.xlu0 %v2636
      %v2638 = vpop.xlane.xlu0 %2637
      %v2639 = vadd.f32 %v2528, %v2530
      %2640 = vadd.xlane.f32.xlu0 %v2639
      %v2641 = vpop.xlane.xlu0 %2640
      %v2642 = vadd.f32 %v2532, %v2534
      %2643 = vadd.xlane.f32.xlu0 %v2642
      %v2644 = vpop.xlane.xlu0 %2643
      %v2645 = vadd.f32 %v2536, %v2538
      %2646 = vadd.xlane.f32.xlu0 %v2645
      %v2647 = vpop.xlane.xlu0 %2646
      %v2648 = vadd.f32 %v2540, %v2542
      %2649 = vadd.xlane.f32.xlu0 %v2648
      %v2650 = vpop.xlane.xlu0 %2649
      %v2651 = vadd.f32 %v2544, %v2546
      %2652 = vadd.xlane.f32.xlu0 %v2651
      %v2653 = vpop.xlane.xlu0 %2652
      %v2654 = vadd.f32 %v2548, %v2550
      %2655 = vadd.xlane.f32.xlu0 %v2654
      %v2656 = vpop.xlane.xlu0 %2655
      %v2657 = vadd.f32 %v2552, %v2554
      %2658 = vadd.xlane.f32.xlu0 %v2657
      %v2659 = vpop.xlane.xlu0 %2658
      %v2660 = vadd.f32 %v2556, %v2558
      %2661 = vadd.xlane.f32.xlu0 %v2660
      %v2662 = vpop.xlane.xlu0 %2661
      %v2663 = vadd.f32 %v2560, %v2562
      %2664 = vadd.xlane.f32.xlu0 %v2663
      %v2665 = vpop.xlane.xlu0 %2664
      %v2666 = vadd.f32 %v2564, %v2566
      %2667 = vadd.xlane.f32.xlu0 %v2666
      %v2668 = vpop.xlane.xlu0 %2667
      %v2669 = vadd.f32 %v2568, %v2570
      %2670 = vadd.xlane.f32.xlu0 %v2669
      %v2671 = vpop.xlane.xlu0 %2670
      %v2672 = vadd.f32 %v2572, %v2574
      %2673 = vadd.xlane.f32.xlu0 %v2672
      %v2674 = vpop.xlane.xlu0 %2673
      %v2675 = vadd.f32 %v2576, %v2578
      %2676 = vadd.xlane.f32.xlu0 %v2675
      %v2677 = vpop.xlane.xlu0 %2676
      %v2678 = vadd.f32 %v2580, %v2582
      %2679 = vadd.xlane.f32.xlu0 %v2678
      %v2680 = vpop.xlane.xlu0 %2679
      %v2681 = vadd.f32 %v2584, %v2586
      %2682 = vadd.xlane.f32.xlu0 %v2681
      %v2683 = vpop.xlane.xlu0 %2682
      %v2684 = vadd.f32 %v2588, %v2590
      %2685 = vadd.xlane.f32.xlu0 %v2684
      %v2686 = vpop.xlane.xlu0 %2685
      %v2687 = vrcp.pop %v2593
      %v2688 = vrcp.pop %v2596
      %v2689 = vrcp.pop %v2599
      %v2690 = vrcp.pop %v2602
      %v2691 = vrcp.pop %v2605
      %v2692 = vrcp.pop %v2608
      %v2693 = vrcp.pop %v2611
      %v2694 = vrcp.pop %v2614
      %v2695 = vrcp.pop %v2617
      %v2696 = vrcp.pop %v2620
      %v2697 = vrcp.pop %v2623
      %v2698 = vrcp.pop %v2626
      %v2699 = vrcp.pop %v2629
      %v2700 = vrcp.pop %v2632
      %v2701 = vrcp.pop %v2635
      %v2702 = vrcp.pop %v2638
      %v2703 = vrcp.pop %v2641
      %v2704 = vrcp.pop %v2644
      %v2705 = vrcp.pop %v2647
      %v2706 = vrcp.pop %v2650
      %v2707 = vrcp.pop %v2653
      %v2708 = vrcp.pop %v2656
      %v2709 = vrcp.pop %v2659
      %v2710 = vrcp.pop %v2662
      %v2711 = vrcp.pop %v2665
      %v2712 = vrcp.pop %v2668
      %v2713 = vrcp.pop %v2671
      %v2714 = vrcp.pop %v2674
      %v2715 = vrcp.pop %v2677
      %v2716 = vrcp.pop %v2680
      %v2717 = vrcp.pop %v2683
      %v2718 = vrcp.pop %v2686
      %v2719 = vmul.f32 %v2464, %v2687
      %v2720 = vmul.f32 %v2466, %v2687
      %v2721 = vmul.f32 %v2468, %v2688
      %v2722 = vmul.f32 %v2470, %v2688
      %v2723 = vmul.f32 %v2472, %v2689
      %v2724 = vmul.f32 %v2474, %v2689
      %v2725 = vmul.f32 %v2476, %v2690
      %v2726 = vmul.f32 %v2478, %v2690
      %v2727 = vmul.f32 %v2480, %v2691
      %v2728 = vmul.f32 %v2482, %v2691
      %v2729 = vmul.f32 %v2484, %v2692
      %v2730 = vmul.f32 %v2486, %v2692
      %v2731 = vmul.f32 %v2488, %v2693
      %v2732 = vmul.f32 %v2490, %v2693
      %v2733 = vmul.f32 %v2492, %v2694
      %v2734 = vmul.f32 %v2494, %v2694
      %v2735 = vmul.f32 %v2496, %v2695
      %v2736 = vmul.f32 %v2498, %v2695
      %v2737 = vmul.f32 %v2500, %v2696
      %v2738 = vmul.f32 %v2502, %v2696
      %v2739 = vmul.f32 %v2504, %v2697
      %v2740 = vmul.f32 %v2506, %v2697
      %v2741 = vmul.f32 %v2508, %v2698
      %v2742 = vmul.f32 %v2510, %v2698
      %v2743 = vmul.f32 %v2512, %v2699
      %v2744 = vmul.f32 %v2514, %v2699
      %v2745 = vmul.f32 %v2516, %v2700
      %v2746 = vmul.f32 %v2518, %v2700
      %v2747 = vmul.f32 %v2520, %v2701
      %v2748 = vmul.f32 %v2522, %v2701
      %v2749 = vmul.f32 %v2524, %v2702
      %v2750 = vmul.f32 %v2526, %v2702
      %v2751 = vmul.f32 %v2528, %v2703
      %v2752 = vmul.f32 %v2530, %v2703
      %v2753 = vmul.f32 %v2532, %v2704
      %v2754 = vmul.f32 %v2534, %v2704
      %v2755 = vmul.f32 %v2536, %v2705
      %v2756 = vmul.f32 %v2538, %v2705
      %v2757 = vmul.f32 %v2540, %v2706
      %v2758 = vmul.f32 %v2542, %v2706
      %v2759 = vmul.f32 %v2544, %v2707
      %v2760 = vmul.f32 %v2546, %v2707
      %v2761 = vmul.f32 %v2548, %v2708
      %v2762 = vmul.f32 %v2550, %v2708
      %v2763 = vmul.f32 %v2552, %v2709
      %v2764 = vmul.f32 %v2554, %v2709
      %v2765 = vmul.f32 %v2556, %v2710
      %v2766 = vmul.f32 %v2558, %v2710
      %v2767 = vmul.f32 %v2560, %v2711
      %v2768 = vmul.f32 %v2562, %v2711
      %v2769 = vmul.f32 %v2564, %v2712
      %v2770 = vmul.f32 %v2566, %v2712
      %v2771 = vmul.f32 %v2568, %v2713
      %v2772 = vmul.f32 %v2570, %v2713
      %v2773 = vmul.f32 %v2572, %v2714
      %v2774 = vmul.f32 %v2574, %v2714
      %v2775 = vmul.f32 %v2576, %v2715
      %v2776 = vmul.f32 %v2578, %v2715
      %v2777 = vmul.f32 %v2580, %v2716
      %v2778 = vmul.f32 %v2582, %v2716
      %v2779 = vmul.f32 %v2584, %v2717
      %v2780 = vmul.f32 %v2586, %v2717
      %v2781 = vmul.f32 %v2588, %v2718
      %v2782 = vmul.f32 %v2590, %v2718
      %v2785 = vrot.slane %v921, 2
      %v2786 = vrot.slane %v944, 2
      %2789 = vmatpush.xpose.msra.mxu0 %v2749
      %2790 = vmatpush.xpose.msra.mxu0 %v2747
      %2791 = vmatpush.xpose.msra.mxu0 %v2745
      %2792 = vmatpush.xpose.msra.mxu0 %v2743
      %2793 = vmatpush.xpose.msra.mxu0 %v2741
      %2794 = vmatpush.xpose.msra.mxu0 %v2739
      %2795 = vmatpush.xpose.msra.mxu0 %v2737
      %2796 = vmatpush.xpose.msra.mxu0 %v2735
      %2797 = vmatpush.xpose.msra.mxu0 %v2733
      %2798 = vmatpush.xpose.msra.mxu0 %v2731
      %2799 = vmatpush.xpose.msra.mxu0 %v2729
      %2800 = vmatpush.xpose.msra.mxu0 %v2727
      %2801 = vmatpush.xpose.msra.mxu0 %v2725
      %2802 = vmatpush.xpose.msra.mxu0 %v2723
      %2803 = vmatpush.xpose.msra.mxu0 %v2721
      %2804 = vmatpush.xpose.msra.mxu0 %v2719
      %2805 = vmatmul.f32.gmra.mxu0 %v2785
      %v2806 = vpop.f32.mrf.mxu0
      %v2807 = vadd.f32 0.0, %v2806
      %2808 = vdwg.mxu0
      %2809 = vmatpush.xpose.msra.mxu0 %v2750
      %2810 = vmatpush.xpose.msra.mxu0 %v2748
      %2811 = vmatpush.xpose.msra.mxu0 %v2746
      %2812 = vmatpush.xpose.msra.mxu0 %v2744
      %2813 = vmatpush.xpose.msra.mxu0 %v2742
      %2814 = vmatpush.xpose.msra.mxu0 %v2740
      %2815 = vmatpush.xpose.msra.mxu0 %v2738
      %2816 = vmatpush.xpose.msra.mxu0 %v2736
      %2817 = vmatpush.xpose.msra.mxu0 %v2734
      %2818 = vmatpush.xpose.msra.mxu0 %v2732
      %2819 = vmatpush.xpose.msra.mxu0 %v2730
      %2820 = vmatpush.xpose.msra.mxu0 %v2728
      %2821 = vmatpush.xpose.msra.mxu0 %v2726
      %2822 = vmatpush.xpose.msra.mxu0 %v2724
      %2823 = vmatpush.xpose.msra.mxu0 %v2722
      %2824 = vmatpush.xpose.msra.mxu0 %v2720
      %2825 = vmatmul.f32.gmra.mxu0 %v2786
      %v2826 = vpop.f32.mrf.mxu0
      %v2827 = vadd.f32 %v2807, %v2826
      %2828 = vdwg.mxu0
      %2829 = vmatpush.xpose.msra.mxu0 %v2781
      %2830 = vmatpush.xpose.msra.mxu0 %v2779
      %2831 = vmatpush.xpose.msra.mxu0 %v2777
      %2832 = vmatpush.xpose.msra.mxu0 %v2775
      %2833 = vmatpush.xpose.msra.mxu0 %v2773
      %2834 = vmatpush.xpose.msra.mxu0 %v2771
      %2835 = vmatpush.xpose.msra.mxu0 %v2769
      %2836 = vmatpush.xpose.msra.mxu0 %v2767
      %2837 = vmatpush.xpose.msra.mxu0 %v2765
      %2838 = vmatpush.xpose.msra.mxu0 %v2763
      %2839 = vmatpush.xpose.msra.mxu0 %v2761
      %2840 = vmatpush.xpose.msra.mxu0 %v2759
      %2841 = vmatpush.xpose.msra.mxu0 %v2757
      %2842 = vmatpush.xpose.msra.mxu0 %v2755
      %2843 = vmatpush.xpose.msra.mxu0 %v2753
      %2844 = vmatpush.xpose.msra.mxu0 %v2751
      %2845 = vmatmul.f32.gmra.mxu0 %v2785
      %v2846 = vpop.f32.mrf.mxu0
      %v2847 = vadd.f32 0.0, %v2846
      %2848 = vdwg.mxu0
      %2849 = vmatpush.xpose.msra.mxu0 %v2782
      %2850 = vmatpush.xpose.msra.mxu0 %v2780
      %2851 = vmatpush.xpose.msra.mxu0 %v2778
      %2852 = vmatpush.xpose.msra.mxu0 %v2776
      %2853 = vmatpush.xpose.msra.mxu0 %v2774
      %2854 = vmatpush.xpose.msra.mxu0 %v2772
      %2855 = vmatpush.xpose.msra.mxu0 %v2770
      %2856 = vmatpush.xpose.msra.mxu0 %v2768
      %2857 = vmatpush.xpose.msra.mxu0 %v2766
      %2858 = vmatpush.xpose.msra.mxu0 %v2764
      %2859 = vmatpush.xpose.msra.mxu0 %v2762
      %2860 = vmatpush.xpose.msra.mxu0 %v2760
      %2861 = vmatpush.xpose.msra.mxu0 %v2758
      %2862 = vmatpush.xpose.msra.mxu0 %v2756
      %2863 = vmatpush.xpose.msra.mxu0 %v2754
      %2864 = vmatpush.xpose.msra.mxu0 %v2752
      %2865 = vmatmul.f32.gmra.mxu0 %v2786
      %v2866 = vpop.f32.mrf.mxu0
      %v2867 = vadd.f32 %v2847, %v2866
      %2868 = vdwg.mxu0
      %v2871 = vrot.slane %v2827, 6
      %v2872 = vrot.slane %v2867, 6
      %2875 = vst [vmem:[#allocation2] sm:$0xc] %v2871
      %2876 = vst [vmem:[#allocation2 + $0x8] sm:$0xc] %v2872
      %v2877 = vrot.slane %v789, 4
      %v2878 = vrot.slane %v812, 4
      %2881 = vxpose.xlu0.b32.start [1/16] %v2877, 128
      %2882 = vxpose.xlu0.b32.cont [2/16] 0.0, 128
      %2883 = vxpose.xlu0.b32.cont [3/16] 0.0, 128
      %2884 = vxpose.xlu0.b32.cont [4/16] 0.0, 128
      %2885 = vxpose.xlu0.b32.cont [5/16] 0.0, 128
      %2886 = vxpose.xlu0.b32.cont [6/16] 0.0, 128
      %2887 = vxpose.xlu0.b32.cont [7/16] 0.0, 128
      %2888 = vxpose.xlu0.b32.cont [8/16] 0.0, 128
      %2889 = vxpose.xlu0.b32.cont [9/16] 0.0, 128
      %2890 = vxpose.xlu0.b32.cont [10/16] 0.0, 128
      %2891 = vxpose.xlu0.b32.cont [11/16] 0.0, 128
      %2892 = vxpose.xlu0.b32.cont [12/16] 0.0, 128
      %2893 = vxpose.xlu0.b32.cont [13/16] 0.0, 128
      %2894 = vxpose.xlu0.b32.cont [14/16] 0.0, 128
      %2895 = vxpose.xlu0.b32.cont [15/16] 0.0, 128
      %2896 = vxpose.xlu0.b32.end [16/16] 0.0, 128
      %v2897 = vpop.trf.xlu0
      %v2898 = vpop.trf.xlu0
      %v2899 = vpop.trf.xlu0
      %v2900 = vpop.trf.xlu0
      %v2901 = vpop.trf.xlu0
      %v2902 = vpop.trf.xlu0
      %v2903 = vpop.trf.xlu0
      %v2904 = vpop.trf.xlu0
      %v2905 = vpop.trf.xlu0
      %v2906 = vpop.trf.xlu0
      %v2907 = vpop.trf.xlu0
      %v2908 = vpop.trf.xlu0
      %v2909 = vpop.trf.xlu0
      %v2910 = vpop.trf.xlu0
      %v2911 = vpop.trf.xlu0
      %v2912 = vpop.trf.xlu0
      %2913 = vxpose.xlu0.b32.start [1/16] %v2878, 128
      %2914 = vxpose.xlu0.b32.cont [2/16] 0.0, 128
      %2915 = vxpose.xlu0.b32.cont [3/16] 0.0, 128
      %2916 = vxpose.xlu0.b32.cont [4/16] 0.0, 128
      %2917 = vxpose.xlu0.b32.cont [5/16] 0.0, 128
      %2918 = vxpose.xlu0.b32.cont [6/16] 0.0, 128
      %2919 = vxpose.xlu0.b32.cont [7/16] 0.0, 128
      %2920 = vxpose.xlu0.b32.cont [8/16] 0.0, 128
      %2921 = vxpose.xlu0.b32.cont [9/16] 0.0, 128
      %2922 = vxpose.xlu0.b32.cont [10/16] 0.0, 128
      %2923 = vxpose.xlu0.b32.cont [11/16] 0.0, 128
      %2924 = vxpose.xlu0.b32.cont [12/16] 0.0, 128
      %2925 = vxpose.xlu0.b32.cont [13/16] 0.0, 128
      %2926 = vxpose.xlu0.b32.cont [14/16] 0.0, 128
      %2927 = vxpose.xlu0.b32.cont [15/16] 0.0, 128
      %2928 = vxpose.xlu0.b32.end [16/16] 0.0, 128
      %v2929 = vpop.trf.xlu0
      %v2930 = vpop.trf.xlu0
      %v2931 = vpop.trf.xlu0
      %v2932 = vpop.trf.xlu0
      %v2933 = vpop.trf.xlu0
      %v2934 = vpop.trf.xlu0
      %v2935 = vpop.trf.xlu0
      %v2936 = vpop.trf.xlu0
      %v2937 = vpop.trf.xlu0
      %v2938 = vpop.trf.xlu0
      %v2939 = vpop.trf.xlu0
      %v2940 = vpop.trf.xlu0
      %v2941 = vpop.trf.xlu0
      %v2942 = vpop.trf.xlu0
      %v2943 = vpop.trf.xlu0
      %v2944 = vpop.trf.xlu0
      %v2945 = vrot.slane %v855, 4
      %v2946 = vrot.slane %v878, 4
      %v2948 = vsel %vm1013, %v2897, 0
      %v2951 = vsel %vm1013, %v2898, 0
      %v2954 = vsel %vm1013, %v2899, 0
      %v2957 = vsel %vm1013, %v2900, 0
      %v2960 = vsel %vm1013, %v2901, 0
      %v2963 = vsel %vm1013, %v2902, 0
      %v2966 = vsel %vm1013, %v2903, 0
      %v2969 = vsel %vm1013, %v2904, 0
      %v2972 = vsel %vm1013, %v2905, 0
      %v2975 = vsel %vm1013, %v2906, 0
      %v2978 = vsel %vm1013, %v2907, 0
      %v2981 = vsel %vm1013, %v2908, 0
      %v2984 = vsel %vm1013, %v2909, 0
      %v2987 = vsel %vm1013, %v2910, 0
      %v2990 = vsel %vm1013, %v2911, 0
      %v2993 = vsel %vm1013, %v2912, 0
      %v2996 = vsel %vm1013, %v2929, 0
      %v2999 = vsel %vm1013, %v2930, 0
      %v3002 = vsel %vm1013, %v2931, 0
      %v3005 = vsel %vm1013, %v2932, 0
      %v3008 = vsel %vm1013, %v2933, 0
      %v3011 = vsel %vm1013, %v2934, 0
      %v3014 = vsel %vm1013, %v2935, 0
      %v3017 = vsel %vm1013, %v2936, 0
      %v3020 = vsel %vm1013, %v2937, 0
      %v3023 = vsel %vm1013, %v2938, 0
      %v3026 = vsel %vm1013, %v2939, 0
      %v3029 = vsel %vm1013, %v2940, 0
      %v3032 = vsel %vm1013, %v2941, 0
      %v3035 = vsel %vm1013, %v2942, 0
      %v3038 = vsel %vm1013, %v2943, 0
      %v3041 = vsel %vm1013, %v2944, 0
      %v3043 = vsel %vm1110, %v2945, 0
      %v3045 = vsel %vm1110, %v2946, 0
      %3047 = vmatpush.msra.mxu0 0.0
      %3048 = vmatpush.msra.mxu0 0.0
      %3049 = vmatpush.msra.mxu0 0.0
      %3050 = vmatpush.msra.mxu0 0.0
      %3051 = vmatpush.msra.mxu0 0.0
      %3052 = vmatpush.msra.mxu0 0.0
      %3053 = vmatpush.msra.mxu0 0.0
      %3054 = vmatpush.msra.mxu0 0.0
      %3055 = vmatpush.msra.mxu0 0.0
      %3056 = vmatpush.msra.mxu0 0.0
      %3057 = vmatpush.msra.mxu0 0.0
      %3058 = vmatpush.msra.mxu0 0.0
      %3059 = vmatpush.msra.mxu0 0.0
      %3060 = vmatpush.msra.mxu0 0.0
      %3061 = vmatpush.msra.mxu0 0.0
      %3062 = vmatpush.msra.mxu0 %v3043
      %3063 = vmatmul.f32.gmra.mxu0 %v2948
      %v3064 = vpop.f32.mrf.mxu0
      %v3065 = vadd.f32 0.0, %v3064
      %3066 = vmatmul.f32.gmra.mxu0 %v2951
      %v3067 = vpop.f32.mrf.mxu0
      %v3068 = vadd.f32 0.0, %v3067
      %3069 = vmatmul.f32.gmra.mxu0 %v2954
      %v3070 = vpop.f32.mrf.mxu0
      %v3071 = vadd.f32 0.0, %v3070
      %3072 = vmatmul.f32.gmra.mxu0 %v2957
      %v3073 = vpop.f32.mrf.mxu0
      %v3074 = vadd.f32 0.0, %v3073
      %3075 = vmatmul.f32.gmra.mxu0 %v2960
      %v3076 = vpop.f32.mrf.mxu0
      %v3077 = vadd.f32 0.0, %v3076
      %3078 = vmatmul.f32.gmra.mxu0 %v2963
      %v3079 = vpop.f32.mrf.mxu0
      %v3080 = vadd.f32 0.0, %v3079
      %3081 = vmatmul.f32.gmra.mxu0 %v2966
      %v3082 = vpop.f32.mrf.mxu0
      %v3083 = vadd.f32 0.0, %v3082
      %3084 = vmatmul.f32.gmra.mxu0 %v2969
      %v3085 = vpop.f32.mrf.mxu0
      %v3086 = vadd.f32 0.0, %v3085
      %3087 = vmatmul.f32.gmra.mxu0 %v2972
      %v3088 = vpop.f32.mrf.mxu0
      %v3089 = vadd.f32 0.0, %v3088
      %3090 = vmatmul.f32.gmra.mxu0 %v2975
      %v3091 = vpop.f32.mrf.mxu0
      %v3092 = vadd.f32 0.0, %v3091
      %3093 = vmatmul.f32.gmra.mxu0 %v2978
      %v3094 = vpop.f32.mrf.mxu0
      %v3095 = vadd.f32 0.0, %v3094
      %3096 = vmatmul.f32.gmra.mxu0 %v2981
      %v3097 = vpop.f32.mrf.mxu0
      %v3098 = vadd.f32 0.0, %v3097
      %3099 = vmatmul.f32.gmra.mxu0 %v2984
      %v3100 = vpop.f32.mrf.mxu0
      %v3101 = vadd.f32 0.0, %v3100
      %3102 = vmatmul.f32.gmra.mxu0 %v2987
      %v3103 = vpop.f32.mrf.mxu0
      %v3104 = vadd.f32 0.0, %v3103
      %3105 = vmatmul.f32.gmra.mxu0 %v2990
      %v3106 = vpop.f32.mrf.mxu0
      %v3107 = vadd.f32 0.0, %v3106
      %3108 = vmatmul.f32.gmra.mxu0 %v2993
      %v3109 = vpop.f32.mrf.mxu0
      %v3110 = vadd.f32 0.0, %v3109
      %3111 = vmatmul.f32.gmra.mxu0 %v2996
      %v3112 = vpop.f32.mrf.mxu0
      %v3113 = vadd.f32 0.0, %v3112
      %3114 = vmatmul.f32.gmra.mxu0 %v2999
      %v3115 = vpop.f32.mrf.mxu0
      %v3116 = vadd.f32 0.0, %v3115
      %3117 = vmatmul.f32.gmra.mxu0 %v3002
      %v3118 = vpop.f32.mrf.mxu0
      %v3119 = vadd.f32 0.0, %v3118
      %3120 = vmatmul.f32.gmra.mxu0 %v3005
      %v3121 = vpop.f32.mrf.mxu0
      %v3122 = vadd.f32 0.0, %v3121
      %3123 = vmatmul.f32.gmra.mxu0 %v3008
      %v3124 = vpop.f32.mrf.mxu0
      %v3125 = vadd.f32 0.0, %v3124
      %3126 = vmatmul.f32.gmra.mxu0 %v3011
      %v3127 = vpop.f32.mrf.mxu0
      %v3128 = vadd.f32 0.0, %v3127
      %3129 = vmatmul.f32.gmra.mxu0 %v3014
      %v3130 = vpop.f32.mrf.mxu0
      %v3131 = vadd.f32 0.0, %v3130
      %3132 = vmatmul.f32.gmra.mxu0 %v3017
      %v3133 = vpop.f32.mrf.mxu0
      %v3134 = vadd.f32 0.0, %v3133
      %3135 = vmatmul.f32.gmra.mxu0 %v3020
      %v3136 = vpop.f32.mrf.mxu0
      %v3137 = vadd.f32 0.0, %v3136
      %3138 = vmatmul.f32.gmra.mxu0 %v3023
      %v3139 = vpop.f32.mrf.mxu0
      %v3140 = vadd.f32 0.0, %v3139
      %3141 = vmatmul.f32.gmra.mxu0 %v3026
      %v3142 = vpop.f32.mrf.mxu0
      %v3143 = vadd.f32 0.0, %v3142
      %3144 = vmatmul.f32.gmra.mxu0 %v3029
      %v3145 = vpop.f32.mrf.mxu0
      %v3146 = vadd.f32 0.0, %v3145
      %3147 = vmatmul.f32.gmra.mxu0 %v3032
      %v3148 = vpop.f32.mrf.mxu0
      %v3149 = vadd.f32 0.0, %v3148
      %3150 = vmatmul.f32.gmra.mxu0 %v3035
      %v3151 = vpop.f32.mrf.mxu0
      %v3152 = vadd.f32 0.0, %v3151
      %3153 = vmatmul.f32.gmra.mxu0 %v3038
      %v3154 = vpop.f32.mrf.mxu0
      %v3155 = vadd.f32 0.0, %v3154
      %3156 = vmatmul.f32.gmra.mxu0 %v3041
      %v3157 = vpop.f32.mrf.mxu0
      %v3158 = vadd.f32 0.0, %v3157
      %3159 = vdwg.mxu0
      %3160 = vmatpush.msra.mxu0 0.0
      %3161 = vmatpush.msra.mxu0 0.0
      %3162 = vmatpush.msra.mxu0 0.0
      %3163 = vmatpush.msra.mxu0 0.0
      %3164 = vmatpush.msra.mxu0 0.0
      %3165 = vmatpush.msra.mxu0 0.0
      %3166 = vmatpush.msra.mxu0 0.0
      %3167 = vmatpush.msra.mxu0 0.0
      %3168 = vmatpush.msra.mxu0 0.0
      %3169 = vmatpush.msra.mxu0 0.0
      %3170 = vmatpush.msra.mxu0 0.0
      %3171 = vmatpush.msra.mxu0 0.0
      %3172 = vmatpush.msra.mxu0 0.0
      %3173 = vmatpush.msra.mxu0 0.0
      %3174 = vmatpush.msra.mxu0 0.0
      %3175 = vmatpush.msra.mxu0 %v3045
      %3176 = vmatmul.f32.gmra.mxu0 %v2948
      %v3177 = vpop.f32.mrf.mxu0
      %v3178 = vadd.f32 0.0, %v3177
      %3179 = vmatmul.f32.gmra.mxu0 %v2951
      %v3180 = vpop.f32.mrf.mxu0
      %v3181 = vadd.f32 0.0, %v3180
      %3182 = vmatmul.f32.gmra.mxu0 %v2954
      %v3183 = vpop.f32.mrf.mxu0
      %v3184 = vadd.f32 0.0, %v3183
      %3185 = vmatmul.f32.gmra.mxu0 %v2957
      %v3186 = vpop.f32.mrf.mxu0
      %v3187 = vadd.f32 0.0, %v3186
      %3188 = vmatmul.f32.gmra.mxu0 %v2960
      %v3189 = vpop.f32.mrf.mxu0
      %v3190 = vadd.f32 0.0, %v3189
      %3191 = vmatmul.f32.gmra.mxu0 %v2963
      %v3192 = vpop.f32.mrf.mxu0
      %v3193 = vadd.f32 0.0, %v3192
      %3194 = vmatmul.f32.gmra.mxu0 %v2966
      %v3195 = vpop.f32.mrf.mxu0
      %v3196 = vadd.f32 0.0, %v3195
      %3197 = vmatmul.f32.gmra.mxu0 %v2969
      %v3198 = vpop.f32.mrf.mxu0
      %v3199 = vadd.f32 0.0, %v3198
      %3200 = vmatmul.f32.gmra.mxu0 %v2972
      %v3201 = vpop.f32.mrf.mxu0
      %v3202 = vadd.f32 0.0, %v3201
      %3203 = vmatmul.f32.gmra.mxu0 %v2975
      %v3204 = vpop.f32.mrf.mxu0
      %v3205 = vadd.f32 0.0, %v3204
      %3206 = vmatmul.f32.gmra.mxu0 %v2978
      %v3207 = vpop.f32.mrf.mxu0
      %v3208 = vadd.f32 0.0, %v3207
      %3209 = vmatmul.f32.gmra.mxu0 %v2981
      %v3210 = vpop.f32.mrf.mxu0
      %v3211 = vadd.f32 0.0, %v3210
      %3212 = vmatmul.f32.gmra.mxu0 %v2984
      %v3213 = vpop.f32.mrf.mxu0
      %v3214 = vadd.f32 0.0, %v3213
      %3215 = vmatmul.f32.gmra.mxu0 %v2987
      %v3216 = vpop.f32.mrf.mxu0
      %v3217 = vadd.f32 0.0, %v3216
      %3218 = vmatmul.f32.gmra.mxu0 %v2990
      %v3219 = vpop.f32.mrf.mxu0
      %v3220 = vadd.f32 0.0, %v3219
      %3221 = vmatmul.f32.gmra.mxu0 %v2993
      %v3222 = vpop.f32.mrf.mxu0
      %v3223 = vadd.f32 0.0, %v3222
      %3224 = vmatmul.f32.gmra.mxu0 %v2996
      %v3225 = vpop.f32.mrf.mxu0
      %v3226 = vadd.f32 0.0, %v3225
      %3227 = vmatmul.f32.gmra.mxu0 %v2999
      %v3228 = vpop.f32.mrf.mxu0
      %v3229 = vadd.f32 0.0, %v3228
      %3230 = vmatmul.f32.gmra.mxu0 %v3002
      %v3231 = vpop.f32.mrf.mxu0
      %v3232 = vadd.f32 0.0, %v3231
      %3233 = vmatmul.f32.gmra.mxu0 %v3005
      %v3234 = vpop.f32.mrf.mxu0
      %v3235 = vadd.f32 0.0, %v3234
      %3236 = vmatmul.f32.gmra.mxu0 %v3008
      %v3237 = vpop.f32.mrf.mxu0
      %v3238 = vadd.f32 0.0, %v3237
      %3239 = vmatmul.f32.gmra.mxu0 %v3011
      %v3240 = vpop.f32.mrf.mxu0
      %v3241 = vadd.f32 0.0, %v3240
      %3242 = vmatmul.f32.gmra.mxu0 %v3014
      %v3243 = vpop.f32.mrf.mxu0
      %v3244 = vadd.f32 0.0, %v3243
      %3245 = vmatmul.f32.gmra.mxu0 %v3017
      %v3246 = vpop.f32.mrf.mxu0
      %v3247 = vadd.f32 0.0, %v3246
      %3248 = vmatmul.f32.gmra.mxu0 %v3020
      %v3249 = vpop.f32.mrf.mxu0
      %v3250 = vadd.f32 0.0, %v3249
      %3251 = vmatmul.f32.gmra.mxu0 %v3023
      %v3252 = vpop.f32.mrf.mxu0
      %v3253 = vadd.f32 0.0, %v3252
      %3254 = vmatmul.f32.gmra.mxu0 %v3026
      %v3255 = vpop.f32.mrf.mxu0
      %v3256 = vadd.f32 0.0, %v3255
      %3257 = vmatmul.f32.gmra.mxu0 %v3029
      %v3258 = vpop.f32.mrf.mxu0
      %v3259 = vadd.f32 0.0, %v3258
      %3260 = vmatmul.f32.gmra.mxu0 %v3032
      %v3261 = vpop.f32.mrf.mxu0
      %v3262 = vadd.f32 0.0, %v3261
      %3263 = vmatmul.f32.gmra.mxu0 %v3035
      %v3264 = vpop.f32.mrf.mxu0
      %v3265 = vadd.f32 0.0, %v3264
      %3266 = vmatmul.f32.gmra.mxu0 %v3038
      %v3267 = vpop.f32.mrf.mxu0
      %v3268 = vadd.f32 0.0, %v3267
      %3269 = vmatmul.f32.gmra.mxu0 %v3041
      %v3270 = vpop.f32.mrf.mxu0
      %v3271 = vadd.f32 0.0, %v3270
      %3272 = vdwg.mxu0
      %v3273 = vmax.f32 %v3065, %v3178
      %3274 = vmax.xlane.f32.xlu0 %v3273
      %v3275 = vpop.xlane.xlu0 %3274
      %v3276 = vmax.f32 %v3068, %v3181
      %3277 = vmax.xlane.f32.xlu0 %v3276
      %v3278 = vpop.xlane.xlu0 %3277
      %v3279 = vmax.f32 %v3071, %v3184
      %3280 = vmax.xlane.f32.xlu0 %v3279
      %v3281 = vpop.xlane.xlu0 %3280
      %v3282 = vmax.f32 %v3074, %v3187
      %3283 = vmax.xlane.f32.xlu0 %v3282
      %v3284 = vpop.xlane.xlu0 %3283
      %v3285 = vmax.f32 %v3077, %v3190
      %3286 = vmax.xlane.f32.xlu0 %v3285
      %v3287 = vpop.xlane.xlu0 %3286
      %v3288 = vmax.f32 %v3080, %v3193
      %3289 = vmax.xlane.f32.xlu0 %v3288
      %v3290 = vpop.xlane.xlu0 %3289
      %v3291 = vmax.f32 %v3083, %v3196
      %3292 = vmax.xlane.f32.xlu0 %v3291
      %v3293 = vpop.xlane.xlu0 %3292
      %v3294 = vmax.f32 %v3086, %v3199
      %3295 = vmax.xlane.f32.xlu0 %v3294
      %v3296 = vpop.xlane.xlu0 %3295
      %v3297 = vmax.f32 %v3089, %v3202
      %3298 = vmax.xlane.f32.xlu0 %v3297
      %v3299 = vpop.xlane.xlu0 %3298
      %v3300 = vmax.f32 %v3092, %v3205
      %3301 = vmax.xlane.f32.xlu0 %v3300
      %v3302 = vpop.xlane.xlu0 %3301
      %v3303 = vmax.f32 %v3095, %v3208
      %3304 = vmax.xlane.f32.xlu0 %v3303
      %v3305 = vpop.xlane.xlu0 %3304
      %v3306 = vmax.f32 %v3098, %v3211
      %3307 = vmax.xlane.f32.xlu0 %v3306
      %v3308 = vpop.xlane.xlu0 %3307
      %v3309 = vmax.f32 %v3101, %v3214
      %3310 = vmax.xlane.f32.xlu0 %v3309
      %v3311 = vpop.xlane.xlu0 %3310
      %v3312 = vmax.f32 %v3104, %v3217
      %3313 = vmax.xlane.f32.xlu0 %v3312
      %v3314 = vpop.xlane.xlu0 %3313
      %v3315 = vmax.f32 %v3107, %v3220
      %3316 = vmax.xlane.f32.xlu0 %v3315
      %v3317 = vpop.xlane.xlu0 %3316
      %v3318 = vmax.f32 %v3110, %v3223
      %3319 = vmax.xlane.f32.xlu0 %v3318
      %v3320 = vpop.xlane.xlu0 %3319
      %v3321 = vmax.f32 %v3113, %v3226
      %3322 = vmax.xlane.f32.xlu0 %v3321
      %v3323 = vpop.xlane.xlu0 %3322
      %v3324 = vmax.f32 %v3116, %v3229
      %3325 = vmax.xlane.f32.xlu0 %v3324
      %v3326 = vpop.xlane.xlu0 %3325
      %v3327 = vmax.f32 %v3119, %v3232
      %3328 = vmax.xlane.f32.xlu0 %v3327
      %v3329 = vpop.xlane.xlu0 %3328
      %v3330 = vmax.f32 %v3122, %v3235
      %3331 = vmax.xlane.f32.xlu0 %v3330
      %v3332 = vpop.xlane.xlu0 %3331
      %v3333 = vmax.f32 %v3125, %v3238
      %3334 = vmax.xlane.f32.xlu0 %v3333
      %v3335 = vpop.xlane.xlu0 %3334
      %v3336 = vmax.f32 %v3128, %v3241
      %3337 = vmax.xlane.f32.xlu0 %v3336
      %v3338 = vpop.xlane.xlu0 %3337
      %v3339 = vmax.f32 %v3131, %v3244
      %3340 = vmax.xlane.f32.xlu0 %v3339
      %v3341 = vpop.xlane.xlu0 %3340
      %v3342 = vmax.f32 %v3134, %v3247
      %3343 = vmax.xlane.f32.xlu0 %v3342
      %v3344 = vpop.xlane.xlu0 %3343
      %v3345 = vmax.f32 %v3137, %v3250
      %3346 = vmax.xlane.f32.xlu0 %v3345
      %v3347 = vpop.xlane.xlu0 %3346
      %v3348 = vmax.f32 %v3140, %v3253
      %3349 = vmax.xlane.f32.xlu0 %v3348
      %v3350 = vpop.xlane.xlu0 %3349
      %v3351 = vmax.f32 %v3143, %v3256
      %3352 = vmax.xlane.f32.xlu0 %v3351
      %v3353 = vpop.xlane.xlu0 %3352
      %v3354 = vmax.f32 %v3146, %v3259
      %3355 = vmax.xlane.f32.xlu0 %v3354
      %v3356 = vpop.xlane.xlu0 %3355
      %v3357 = vmax.f32 %v3149, %v3262
      %3358 = vmax.xlane.f32.xlu0 %v3357
      %v3359 = vpop.xlane.xlu0 %3358
      %v3360 = vmax.f32 %v3152, %v3265
      %3361 = vmax.xlane.f32.xlu0 %v3360
      %v3362 = vpop.xlane.xlu0 %3361
      %v3363 = vmax.f32 %v3155, %v3268
      %3364 = vmax.xlane.f32.xlu0 %v3363
      %v3365 = vpop.xlane.xlu0 %3364
      %v3366 = vmax.f32 %v3158, %v3271
      %3367 = vmax.xlane.f32.xlu0 %v3366
      %v3368 = vpop.xlane.xlu0 %3367
      %v3369 = vsub.f32 %v3065, %v3275
      %v3370 = vsub.f32 %v3178, %v3275
      %v3371 = vsub.f32 %v3068, %v3278
      %v3372 = vsub.f32 %v3181, %v3278
      %v3373 = vsub.f32 %v3071, %v3281
      %v3374 = vsub.f32 %v3184, %v3281
      %v3375 = vsub.f32 %v3074, %v3284
      %v3376 = vsub.f32 %v3187, %v3284
      %v3377 = vsub.f32 %v3077, %v3287
      %v3378 = vsub.f32 %v3190, %v3287
      %v3379 = vsub.f32 %v3080, %v3290
      %v3380 = vsub.f32 %v3193, %v3290
      %v3381 = vsub.f32 %v3083, %v3293
      %v3382 = vsub.f32 %v3196, %v3293
      %v3383 = vsub.f32 %v3086, %v3296
      %v3384 = vsub.f32 %v3199, %v3296
      %v3385 = vsub.f32 %v3089, %v3299
      %v3386 = vsub.f32 %v3202, %v3299
      %v3387 = vsub.f32 %v3092, %v3302
      %v3388 = vsub.f32 %v3205, %v3302
      %v3389 = vsub.f32 %v3095, %v3305
      %v3390 = vsub.f32 %v3208, %v3305
      %v3391 = vsub.f32 %v3098, %v3308
      %v3392 = vsub.f32 %v3211, %v3308
      %v3393 = vsub.f32 %v3101, %v3311
      %v3394 = vsub.f32 %v3214, %v3311
      %v3395 = vsub.f32 %v3104, %v3314
      %v3396 = vsub.f32 %v3217, %v3314
      %v3397 = vsub.f32 %v3107, %v3317
      %v3398 = vsub.f32 %v3220, %v3317
      %v3399 = vsub.f32 %v3110, %v3320
      %v3400 = vsub.f32 %v3223, %v3320
      %v3401 = vsub.f32 %v3113, %v3323
      %v3402 = vsub.f32 %v3226, %v3323
      %v3403 = vsub.f32 %v3116, %v3326
      %v3404 = vsub.f32 %v3229, %v3326
      %v3405 = vsub.f32 %v3119, %v3329
      %v3406 = vsub.f32 %v3232, %v3329
      %v3407 = vsub.f32 %v3122, %v3332
      %v3408 = vsub.f32 %v3235, %v3332
      %v3409 = vsub.f32 %v3125, %v3335
      %v3410 = vsub.f32 %v3238, %v3335
      %v3411 = vsub.f32 %v3128, %v3338
      %v3412 = vsub.f32 %v3241, %v3338
      %v3413 = vsub.f32 %v3131, %v3341
      %v3414 = vsub.f32 %v3244, %v3341
      %v3415 = vsub.f32 %v3134, %v3344
      %v3416 = vsub.f32 %v3247, %v3344
      %v3417 = vsub.f32 %v3137, %v3347
      %v3418 = vsub.f32 %v3250, %v3347
      %v3419 = vsub.f32 %v3140, %v3350
      %v3420 = vsub.f32 %v3253, %v3350
      %v3421 = vsub.f32 %v3143, %v3353
      %v3422 = vsub.f32 %v3256, %v3353
      %v3423 = vsub.f32 %v3146, %v3356
      %v3424 = vsub.f32 %v3259, %v3356
      %v3425 = vsub.f32 %v3149, %v3359
      %v3426 = vsub.f32 %v3262, %v3359
      %v3427 = vsub.f32 %v3152, %v3362
      %v3428 = vsub.f32 %v3265, %v3362
      %v3429 = vsub.f32 %v3155, %v3365
      %v3430 = vsub.f32 %v3268, %v3365
      %v3431 = vsub.f32 %v3158, %v3368
      %v3432 = vsub.f32 %v3271, %v3368
      %v3433 = vmul.f32 %v3369, 1.442695
      %v3434 = vpow.pop %v3433
      %v3435 = vmul.f32 %v3370, 1.442695
      %v3436 = vpow.pop %v3435
      %v3437 = vmul.f32 %v3371, 1.442695
      %v3438 = vpow.pop %v3437
      %v3439 = vmul.f32 %v3372, 1.442695
      %v3440 = vpow.pop %v3439
      %v3441 = vmul.f32 %v3373, 1.442695
      %v3442 = vpow.pop %v3441
      %v3443 = vmul.f32 %v3374, 1.442695
      %v3444 = vpow.pop %v3443
      %v3445 = vmul.f32 %v3375, 1.442695
      %v3446 = vpow.pop %v3445
      %v3447 = vmul.f32 %v3376, 1.442695
      %v3448 = vpow.pop %v3447
      %v3449 = vmul.f32 %v3377, 1.442695
      %v3450 = vpow.pop %v3449
      %v3451 = vmul.f32 %v3378, 1.442695
      %v3452 = vpow.pop %v3451
      %v3453 = vmul.f32 %v3379, 1.442695
      %v3454 = vpow.pop %v3453
      %v3455 = vmul.f32 %v3380, 1.442695
      %v3456 = vpow.pop %v3455
      %v3457 = vmul.f32 %v3381, 1.442695
      %v3458 = vpow.pop %v3457
      %v3459 = vmul.f32 %v3382, 1.442695
      %v3460 = vpow.pop %v3459
      %v3461 = vmul.f32 %v3383, 1.442695
      %v3462 = vpow.pop %v3461
      %v3463 = vmul.f32 %v3384, 1.442695
      %v3464 = vpow.pop %v3463
      %v3465 = vmul.f32 %v3385, 1.442695
      %v3466 = vpow.pop %v3465
      %v3467 = vmul.f32 %v3386, 1.442695
      %v3468 = vpow.pop %v3467
      %v3469 = vmul.f32 %v3387, 1.442695
      %v3470 = vpow.pop %v3469
      %v3471 = vmul.f32 %v3388, 1.442695
      %v3472 = vpow.pop %v3471
      %v3473 = vmul.f32 %v3389, 1.442695
      %v3474 = vpow.pop %v3473
      %v3475 = vmul.f32 %v3390, 1.442695
      %v3476 = vpow.pop %v3475
      %v3477 = vmul.f32 %v3391, 1.442695
      %v3478 = vpow.pop %v3477
      %v3479 = vmul.f32 %v3392, 1.442695
      %v3480 = vpow.pop %v3479
      %v3481 = vmul.f32 %v3393, 1.442695
      %v3482 = vpow.pop %v3481
      %v3483 = vmul.f32 %v3394, 1.442695
      %v3484 = vpow.pop %v3483
      %v3485 = vmul.f32 %v3395, 1.442695
      %v3486 = vpow.pop %v3485
      %v3487 = vmul.f32 %v3396, 1.442695
      %v3488 = vpow.pop %v3487
      %v3489 = vmul.f32 %v3397, 1.442695
      %v3490 = vpow.pop %v3489
      %v3491 = vmul.f32 %v3398, 1.442695
      %v3492 = vpow.pop %v3491
      %v3493 = vmul.f32 %v3399, 1.442695
      %v3494 = vpow.pop %v3493
      %v3495 = vmul.f32 %v3400, 1.442695
      %v3496 = vpow.pop %v3495
      %v3497 = vmul.f32 %v3401, 1.442695
      %v3498 = vpow.pop %v3497
      %v3499 = vmul.f32 %v3402, 1.442695
      %v3500 = vpow.pop %v3499
      %v3501 = vmul.f32 %v3403, 1.442695
      %v3502 = vpow.pop %v3501
      %v3503 = vmul.f32 %v3404, 1.442695
      %v3504 = vpow.pop %v3503
      %v3505 = vmul.f32 %v3405, 1.442695
      %v3506 = vpow.pop %v3505
      %v3507 = vmul.f32 %v3406, 1.442695
      %v3508 = vpow.pop %v3507
      %v3509 = vmul.f32 %v3407, 1.442695
      %v3510 = vpow.pop %v3509
      %v3511 = vmul.f32 %v3408, 1.442695
      %v3512 = vpow.pop %v3511
      %v3513 = vmul.f32 %v3409, 1.442695
      %v3514 = vpow.pop %v3513
      %v3515 = vmul.f32 %v3410, 1.442695
      %v3516 = vpow.pop %v3515
      %v3517 = vmul.f32 %v3411, 1.442695
      %v3518 = vpow.pop %v3517
      %v3519 = vmul.f32 %v3412, 1.442695
      %v3520 = vpow.pop %v3519
      %v3521 = vmul.f32 %v3413, 1.442695
      %v3522 = vpow.pop %v3521
      %v3523 = vmul.f32 %v3414, 1.442695
      %v3524 = vpow.pop %v3523
      %v3525 = vmul.f32 %v3415, 1.442695
      %v3526 = vpow.pop %v3525
      %v3527 = vmul.f32 %v3416, 1.442695
      %v3528 = vpow.pop %v3527
      %v3529 = vmul.f32 %v3417, 1.442695
      %v3530 = vpow.pop %v3529
      %v3531 = vmul.f32 %v3418, 1.442695
      %v3532 = vpow.pop %v3531
      %v3533 = vmul.f32 %v3419, 1.442695
      %v3534 = vpow.pop %v3533
      %v3535 = vmul.f32 %v3420, 1.442695
      %v3536 = vpow.pop %v3535
      %v3537 = vmul.f32 %v3421, 1.442695
      %v3538 = vpow.pop %v3537
      %v3539 = vmul.f32 %v3422, 1.442695
      %v3540 = vpow.pop %v3539
      %v3541 = vmul.f32 %v3423, 1.442695
      %v3542 = vpow.pop %v3541
      %v3543 = vmul.f32 %v3424, 1.442695
      %v3544 = vpow.pop %v3543
      %v3545 = vmul.f32 %v3425, 1.442695
      %v3546 = vpow.pop %v3545
      %v3547 = vmul.f32 %v3426, 1.442695
      %v3548 = vpow.pop %v3547
      %v3549 = vmul.f32 %v3427, 1.442695
      %v3550 = vpow.pop %v3549
      %v3551 = vmul.f32 %v3428, 1.442695
      %v3552 = vpow.pop %v3551
      %v3553 = vmul.f32 %v3429, 1.442695
      %v3554 = vpow.pop %v3553
      %v3555 = vmul.f32 %v3430, 1.442695
      %v3556 = vpow.pop %v3555
      %v3557 = vmul.f32 %v3431, 1.442695
      %v3558 = vpow.pop %v3557
      %v3559 = vmul.f32 %v3432, 1.442695
      %v3560 = vpow.pop %v3559
      %v3561 = vadd.f32 %v3434, %v3436
      %3562 = vadd.xlane.f32.xlu0 %v3561
      %v3563 = vpop.xlane.xlu0 %3562
      %v3564 = vadd.f32 %v3438, %v3440
      %3565 = vadd.xlane.f32.xlu0 %v3564
      %v3566 = vpop.xlane.xlu0 %3565
      %v3567 = vadd.f32 %v3442, %v3444
      %3568 = vadd.xlane.f32.xlu0 %v3567
      %v3569 = vpop.xlane.xlu0 %3568
      %v3570 = vadd.f32 %v3446, %v3448
      %3571 = vadd.xlane.f32.xlu0 %v3570
      %v3572 = vpop.xlane.xlu0 %3571
      %v3573 = vadd.f32 %v3450, %v3452
      %3574 = vadd.xlane.f32.xlu0 %v3573
      %v3575 = vpop.xlane.xlu0 %3574
      %v3576 = vadd.f32 %v3454, %v3456
      %3577 = vadd.xlane.f32.xlu0 %v3576
      %v3578 = vpop.xlane.xlu0 %3577
      %v3579 = vadd.f32 %v3458, %v3460
      %3580 = vadd.xlane.f32.xlu0 %v3579
      %v3581 = vpop.xlane.xlu0 %3580
      %v3582 = vadd.f32 %v3462, %v3464
      %3583 = vadd.xlane.f32.xlu0 %v3582
      %v3584 = vpop.xlane.xlu0 %3583
      %v3585 = vadd.f32 %v3466, %v3468
      %3586 = vadd.xlane.f32.xlu0 %v3585
      %v3587 = vpop.xlane.xlu0 %3586
      %v3588 = vadd.f32 %v3470, %v3472
      %3589 = vadd.xlane.f32.xlu0 %v3588
      %v3590 = vpop.xlane.xlu0 %3589
      %v3591 = vadd.f32 %v3474, %v3476
      %3592 = vadd.xlane.f32.xlu0 %v3591
      %v3593 = vpop.xlane.xlu0 %3592
      %v3594 = vadd.f32 %v3478, %v3480
      %3595 = vadd.xlane.f32.xlu0 %v3594
      %v3596 = vpop.xlane.xlu0 %3595
      %v3597 = vadd.f32 %v3482, %v3484
      %3598 = vadd.xlane.f32.xlu0 %v3597
      %v3599 = vpop.xlane.xlu0 %3598
      %v3600 = vadd.f32 %v3486, %v3488
      %3601 = vadd.xlane.f32.xlu0 %v3600
      %v3602 = vpop.xlane.xlu0 %3601
      %v3603 = vadd.f32 %v3490, %v3492
      %3604 = vadd.xlane.f32.xlu0 %v3603
      %v3605 = vpop.xlane.xlu0 %3604
      %v3606 = vadd.f32 %v3494, %v3496
      %3607 = vadd.xlane.f32.xlu0 %v3606
      %v3608 = vpop.xlane.xlu0 %3607
      %v3609 = vadd.f32 %v3498, %v3500
      %3610 = vadd.xlane.f32.xlu0 %v3609
      %v3611 = vpop.xlane.xlu0 %3610
      %v3612 = vadd.f32 %v3502, %v3504
      %3613 = vadd.xlane.f32.xlu0 %v3612
      %v3614 = vpop.xlane.xlu0 %3613
      %v3615 = vadd.f32 %v3506, %v3508
      %3616 = vadd.xlane.f32.xlu0 %v3615
      %v3617 = vpop.xlane.xlu0 %3616
      %v3618 = vadd.f32 %v3510, %v3512
      %3619 = vadd.xlane.f32.xlu0 %v3618
      %v3620 = vpop.xlane.xlu0 %3619
      %v3621 = vadd.f32 %v3514, %v3516
      %3622 = vadd.xlane.f32.xlu0 %v3621
      %v3623 = vpop.xlane.xlu0 %3622
      %v3624 = vadd.f32 %v3518, %v3520
      %3625 = vadd.xlane.f32.xlu0 %v3624
      %v3626 = vpop.xlane.xlu0 %3625
      %v3627 = vadd.f32 %v3522, %v3524
      %3628 = vadd.xlane.f32.xlu0 %v3627
      %v3629 = vpop.xlane.xlu0 %3628
      %v3630 = vadd.f32 %v3526, %v3528
      %3631 = vadd.xlane.f32.xlu0 %v3630
      %v3632 = vpop.xlane.xlu0 %3631
      %v3633 = vadd.f32 %v3530, %v3532
      %3634 = vadd.xlane.f32.xlu0 %v3633
      %v3635 = vpop.xlane.xlu0 %3634
      %v3636 = vadd.f32 %v3534, %v3536
      %3637 = vadd.xlane.f32.xlu0 %v3636
      %v3638 = vpop.xlane.xlu0 %3637
      %v3639 = vadd.f32 %v3538, %v3540
      %3640 = vadd.xlane.f32.xlu0 %v3639
      %v3641 = vpop.xlane.xlu0 %3640
      %v3642 = vadd.f32 %v3542, %v3544
      %3643 = vadd.xlane.f32.xlu0 %v3642
      %v3644 = vpop.xlane.xlu0 %3643
      %v3645 = vadd.f32 %v3546, %v3548
      %3646 = vadd.xlane.f32.xlu0 %v3645
      %v3647 = vpop.xlane.xlu0 %3646
      %v3648 = vadd.f32 %v3550, %v3552
      %3649 = vadd.xlane.f32.xlu0 %v3648
      %v3650 = vpop.xlane.xlu0 %3649
      %v3651 = vadd.f32 %v3554, %v3556
      %3652 = vadd.xlane.f32.xlu0 %v3651
      %v3653 = vpop.xlane.xlu0 %3652
      %v3654 = vadd.f32 %v3558, %v3560
      %3655 = vadd.xlane.f32.xlu0 %v3654
      %v3656 = vpop.xlane.xlu0 %3655
      %v3657 = vrcp.pop %v3563
      %v3658 = vrcp.pop %v3566
      %v3659 = vrcp.pop %v3569
      %v3660 = vrcp.pop %v3572
      %v3661 = vrcp.pop %v3575
      %v3662 = vrcp.pop %v3578
      %v3663 = vrcp.pop %v3581
      %v3664 = vrcp.pop %v3584
      %v3665 = vrcp.pop %v3587
      %v3666 = vrcp.pop %v3590
      %v3667 = vrcp.pop %v3593
      %v3668 = vrcp.pop %v3596
      %v3669 = vrcp.pop %v3599
      %v3670 = vrcp.pop %v3602
      %v3671 = vrcp.pop %v3605
      %v3672 = vrcp.pop %v3608
      %v3673 = vrcp.pop %v3611
      %v3674 = vrcp.pop %v3614
      %v3675 = vrcp.pop %v3617
      %v3676 = vrcp.pop %v3620
      %v3677 = vrcp.pop %v3623
      %v3678 = vrcp.pop %v3626
      %v3679 = vrcp.pop %v3629
      %v3680 = vrcp.pop %v3632
      %v3681 = vrcp.pop %v3635
      %v3682 = vrcp.pop %v3638
      %v3683 = vrcp.pop %v3641
      %v3684 = vrcp.pop %v3644
      %v3685 = vrcp.pop %v3647
      %v3686 = vrcp.pop %v3650
      %v3687 = vrcp.pop %v3653
      %v3688 = vrcp.pop %v3656
      %v3689 = vmul.f32 %v3434, %v3657
      %v3690 = vmul.f32 %v3436, %v3657
      %v3691 = vmul.f32 %v3438, %v3658
      %v3692 = vmul.f32 %v3440, %v3658
      %v3693 = vmul.f32 %v3442, %v3659
      %v3694 = vmul.f32 %v3444, %v3659
      %v3695 = vmul.f32 %v3446, %v3660
      %v3696 = vmul.f32 %v3448, %v3660
      %v3697 = vmul.f32 %v3450, %v3661
      %v3698 = vmul.f32 %v3452, %v3661
      %v3699 = vmul.f32 %v3454, %v3662
      %v3700 = vmul.f32 %v3456, %v3662
      %v3701 = vmul.f32 %v3458, %v3663
      %v3702 = vmul.f32 %v3460, %v3663
      %v3703 = vmul.f32 %v3462, %v3664
      %v3704 = vmul.f32 %v3464, %v3664
      %v3705 = vmul.f32 %v3466, %v3665
      %v3706 = vmul.f32 %v3468, %v3665
      %v3707 = vmul.f32 %v3470, %v3666
      %v3708 = vmul.f32 %v3472, %v3666
      %v3709 = vmul.f32 %v3474, %v3667
      %v3710 = vmul.f32 %v3476, %v3667
      %v3711 = vmul.f32 %v3478, %v3668
      %v3712 = vmul.f32 %v3480, %v3668
      %v3713 = vmul.f32 %v3482, %v3669
      %v3714 = vmul.f32 %v3484, %v3669
      %v3715 = vmul.f32 %v3486, %v3670
      %v3716 = vmul.f32 %v3488, %v3670
      %v3717 = vmul.f32 %v3490, %v3671
      %v3718 = vmul.f32 %v3492, %v3671
      %v3719 = vmul.f32 %v3494, %v3672
      %v3720 = vmul.f32 %v3496, %v3672
      %v3721 = vmul.f32 %v3498, %v3673
      %v3722 = vmul.f32 %v3500, %v3673
      %v3723 = vmul.f32 %v3502, %v3674
      %v3724 = vmul.f32 %v3504, %v3674
      %v3725 = vmul.f32 %v3506, %v3675
      %v3726 = vmul.f32 %v3508, %v3675
      %v3727 = vmul.f32 %v3510, %v3676
      %v3728 = vmul.f32 %v3512, %v3676
      %v3729 = vmul.f32 %v3514, %v3677
      %v3730 = vmul.f32 %v3516, %v3677
      %v3731 = vmul.f32 %v3518, %v3678
      %v3732 = vmul.f32 %v3520, %v3678
      %v3733 = vmul.f32 %v3522, %v3679
      %v3734 = vmul.f32 %v3524, %v3679
      %v3735 = vmul.f32 %v3526, %v3680
      %v3736 = vmul.f32 %v3528, %v3680
      %v3737 = vmul.f32 %v3530, %v3681
      %v3738 = vmul.f32 %v3532, %v3681
      %v3739 = vmul.f32 %v3534, %v3682
      %v3740 = vmul.f32 %v3536, %v3682
      %v3741 = vmul.f32 %v3538, %v3683
      %v3742 = vmul.f32 %v3540, %v3683
      %v3743 = vmul.f32 %v3542, %v3684
      %v3744 = vmul.f32 %v3544, %v3684
      %v3745 = vmul.f32 %v3546, %v3685
      %v3746 = vmul.f32 %v3548, %v3685
      %v3747 = vmul.f32 %v3550, %v3686
      %v3748 = vmul.f32 %v3552, %v3686
      %v3749 = vmul.f32 %v3554, %v3687
      %v3750 = vmul.f32 %v3556, %v3687
      %v3751 = vmul.f32 %v3558, %v3688
      %v3752 = vmul.f32 %v3560, %v3688
      %v3753 = vrot.slane %v921, 4
      %v3754 = vrot.slane %v944, 4
      %3757 = vmatpush.xpose.msra.mxu0 %v3719
      %3758 = vmatpush.xpose.msra.mxu0 %v3717
      %3759 = vmatpush.xpose.msra.mxu0 %v3715
      %3760 = vmatpush.xpose.msra.mxu0 %v3713
      %3761 = vmatpush.xpose.msra.mxu0 %v3711
      %3762 = vmatpush.xpose.msra.mxu0 %v3709
      %3763 = vmatpush.xpose.msra.mxu0 %v3707
      %3764 = vmatpush.xpose.msra.mxu0 %v3705
      %3765 = vmatpush.xpose.msra.mxu0 %v3703
      %3766 = vmatpush.xpose.msra.mxu0 %v3701
      %3767 = vmatpush.xpose.msra.mxu0 %v3699
      %3768 = vmatpush.xpose.msra.mxu0 %v3697
      %3769 = vmatpush.xpose.msra.mxu0 %v3695
      %3770 = vmatpush.xpose.msra.mxu0 %v3693
      %3771 = vmatpush.xpose.msra.mxu0 %v3691
      %3772 = vmatpush.xpose.msra.mxu0 %v3689
      %3773 = vmatmul.f32.gmra.mxu0 %v3753
      %v3774 = vpop.f32.mrf.mxu0
      %v3775 = vadd.f32 0.0, %v3774
      %3776 = vdwg.mxu0
      %3777 = vmatpush.xpose.msra.mxu0 %v3720
      %3778 = vmatpush.xpose.msra.mxu0 %v3718
      %3779 = vmatpush.xpose.msra.mxu0 %v3716
      %3780 = vmatpush.xpose.msra.mxu0 %v3714
      %3781 = vmatpush.xpose.msra.mxu0 %v3712
      %3782 = vmatpush.xpose.msra.mxu0 %v3710
      %3783 = vmatpush.xpose.msra.mxu0 %v3708
      %3784 = vmatpush.xpose.msra.mxu0 %v3706
      %3785 = vmatpush.xpose.msra.mxu0 %v3704
      %3786 = vmatpush.xpose.msra.mxu0 %v3702
      %3787 = vmatpush.xpose.msra.mxu0 %v3700
      %3788 = vmatpush.xpose.msra.mxu0 %v3698
      %3789 = vmatpush.xpose.msra.mxu0 %v3696
      %3790 = vmatpush.xpose.msra.mxu0 %v3694
      %3791 = vmatpush.xpose.msra.mxu0 %v3692
      %3792 = vmatpush.xpose.msra.mxu0 %v3690
      %3793 = vmatmul.f32.gmra.mxu0 %v3754
      %v3794 = vpop.f32.mrf.mxu0
      %v3795 = vadd.f32 %v3775, %v3794
      %3796 = vdwg.mxu0
      %3797 = vmatpush.xpose.msra.mxu0 %v3751
      %3798 = vmatpush.xpose.msra.mxu0 %v3749
      %3799 = vmatpush.xpose.msra.mxu0 %v3747
      %3800 = vmatpush.xpose.msra.mxu0 %v3745
      %3801 = vmatpush.xpose.msra.mxu0 %v3743
      %3802 = vmatpush.xpose.msra.mxu0 %v3741
      %3803 = vmatpush.xpose.msra.mxu0 %v3739
      %3804 = vmatpush.xpose.msra.mxu0 %v3737
      %3805 = vmatpush.xpose.msra.mxu0 %v3735
      %3806 = vmatpush.xpose.msra.mxu0 %v3733
      %3807 = vmatpush.xpose.msra.mxu0 %v3731
      %3808 = vmatpush.xpose.msra.mxu0 %v3729
      %3809 = vmatpush.xpose.msra.mxu0 %v3727
      %3810 = vmatpush.xpose.msra.mxu0 %v3725
      %3811 = vmatpush.xpose.msra.mxu0 %v3723
      %3812 = vmatpush.xpose.msra.mxu0 %v3721
      %3813 = vmatmul.f32.gmra.mxu0 %v3753
      %v3814 = vpop.f32.mrf.mxu0
      %v3815 = vadd.f32 0.0, %v3814
      %3816 = vdwg.mxu0
      %3817 = vmatpush.xpose.msra.mxu0 %v3752
      %3818 = vmatpush.xpose.msra.mxu0 %v3750
      %3819 = vmatpush.xpose.msra.mxu0 %v3748
      %3820 = vmatpush.xpose.msra.mxu0 %v3746
      %3821 = vmatpush.xpose.msra.mxu0 %v3744
      %3822 = vmatpush.xpose.msra.mxu0 %v3742
      %3823 = vmatpush.xpose.msra.mxu0 %v3740
      %3824 = vmatpush.xpose.msra.mxu0 %v3738
      %3825 = vmatpush.xpose.msra.mxu0 %v3736
      %3826 = vmatpush.xpose.msra.mxu0 %v3734
      %3827 = vmatpush.xpose.msra.mxu0 %v3732
      %3828 = vmatpush.xpose.msra.mxu0 %v3730
      %3829 = vmatpush.xpose.msra.mxu0 %v3728
      %3830 = vmatpush.xpose.msra.mxu0 %v3726
      %3831 = vmatpush.xpose.msra.mxu0 %v3724
      %3832 = vmatpush.xpose.msra.mxu0 %v3722
      %3833 = vmatmul.f32.gmra.mxu0 %v3754
      %v3834 = vpop.f32.mrf.mxu0
      %v3835 = vadd.f32 %v3815, %v3834
      %3836 = vdwg.mxu0
      %v3839 = vrot.slane %v3795, 4
      %v3840 = vrot.slane %v3835, 4
      %3843 = vst [vmem:[#allocation2] sm:$0x30] %v3839
      %3844 = vst [vmem:[#allocation2 + $0x8] sm:$0x30] %v3840
      %v3845 = vrot.slane %v789, 6
      %v3846 = vrot.slane %v812, 6
      %3849 = vxpose.xlu0.b32.start [1/16] %v3845, 128
      %3850 = vxpose.xlu0.b32.cont [2/16] 0.0, 128
      %3851 = vxpose.xlu0.b32.cont [3/16] 0.0, 128
      %3852 = vxpose.xlu0.b32.cont [4/16] 0.0, 128
      %3853 = vxpose.xlu0.b32.cont [5/16] 0.0, 128
      %3854 = vxpose.xlu0.b32.cont [6/16] 0.0, 128
      %3855 = vxpose.xlu0.b32.cont [7/16] 0.0, 128
      %3856 = vxpose.xlu0.b32.cont [8/16] 0.0, 128
      %3857 = vxpose.xlu0.b32.cont [9/16] 0.0, 128
      %3858 = vxpose.xlu0.b32.cont [10/16] 0.0, 128
      %3859 = vxpose.xlu0.b32.cont [11/16] 0.0, 128
      %3860 = vxpose.xlu0.b32.cont [12/16] 0.0, 128
      %3861 = vxpose.xlu0.b32.cont [13/16] 0.0, 128
      %3862 = vxpose.xlu0.b32.cont [14/16] 0.0, 128
      %3863 = vxpose.xlu0.b32.cont [15/16] 0.0, 128
      %3864 = vxpose.xlu0.b32.end [16/16] 0.0, 128
      %v3865 = vpop.trf.xlu0
      %v3866 = vpop.trf.xlu0
      %v3867 = vpop.trf.xlu0
      %v3868 = vpop.trf.xlu0
      %v3869 = vpop.trf.xlu0
      %v3870 = vpop.trf.xlu0
      %v3871 = vpop.trf.xlu0
      %v3872 = vpop.trf.xlu0
      %v3873 = vpop.trf.xlu0
      %v3874 = vpop.trf.xlu0
      %v3875 = vpop.trf.xlu0
      %v3876 = vpop.trf.xlu0
      %v3877 = vpop.trf.xlu0
      %v3878 = vpop.trf.xlu0
      %v3879 = vpop.trf.xlu0
      %v3880 = vpop.trf.xlu0
      %3881 = vxpose.xlu0.b32.start [1/16] %v3846, 128
      %3882 = vxpose.xlu0.b32.cont [2/16] 0.0, 128
      %3883 = vxpose.xlu0.b32.cont [3/16] 0.0, 128
      %3884 = vxpose.xlu0.b32.cont [4/16] 0.0, 128
      %3885 = vxpose.xlu0.b32.cont [5/16] 0.0, 128
      %3886 = vxpose.xlu0.b32.cont [6/16] 0.0, 128
      %3887 = vxpose.xlu0.b32.cont [7/16] 0.0, 128
      %3888 = vxpose.xlu0.b32.cont [8/16] 0.0, 128
      %3889 = vxpose.xlu0.b32.cont [9/16] 0.0, 128
      %3890 = vxpose.xlu0.b32.cont [10/16] 0.0, 128
      %3891 = vxpose.xlu0.b32.cont [11/16] 0.0, 128
      %3892 = vxpose.xlu0.b32.cont [12/16] 0.0, 128
      %3893 = vxpose.xlu0.b32.cont [13/16] 0.0, 128
      %3894 = vxpose.xlu0.b32.cont [14/16] 0.0, 128
      %3895 = vxpose.xlu0.b32.cont [15/16] 0.0, 128
      %3896 = vxpose.xlu0.b32.end [16/16] 0.0, 128
      %v3897 = vpop.trf.xlu0
      %v3898 = vpop.trf.xlu0
      %v3899 = vpop.trf.xlu0
      %v3900 = vpop.trf.xlu0
      %v3901 = vpop.trf.xlu0
      %v3902 = vpop.trf.xlu0
      %v3903 = vpop.trf.xlu0
      %v3904 = vpop.trf.xlu0
      %v3905 = vpop.trf.xlu0
      %v3906 = vpop.trf.xlu0
      %v3907 = vpop.trf.xlu0
      %v3908 = vpop.trf.xlu0
      %v3909 = vpop.trf.xlu0
      %v3910 = vpop.trf.xlu0
      %v3911 = vpop.trf.xlu0
      %v3912 = vpop.trf.xlu0
      %v3913 = vrot.slane %v855, 6
      %v3914 = vrot.slane %v878, 6
      %v3916 = vsel %vm1013, %v3865, 0
      %v3919 = vsel %vm1013, %v3866, 0
      %v3922 = vsel %vm1013, %v3867, 0
      %v3925 = vsel %vm1013, %v3868, 0
      %v3928 = vsel %vm1013, %v3869, 0
      %v3931 = vsel %vm1013, %v3870, 0
      %v3934 = vsel %vm1013, %v3871, 0
      %v3937 = vsel %vm1013, %v3872, 0
      %v3940 = vsel %vm1013, %v3873, 0
      %v3943 = vsel %vm1013, %v3874, 0
      %v3946 = vsel %vm1013, %v3875, 0
      %v3949 = vsel %vm1013, %v3876, 0
      %v3952 = vsel %vm1013, %v3877, 0
      %v3955 = vsel %vm1013, %v3878, 0
      %v3958 = vsel %vm1013, %v3879, 0
      %v3961 = vsel %vm1013, %v3880, 0
      %v3964 = vsel %vm1013, %v3897, 0
      %v3967 = vsel %vm1013, %v3898, 0
      %v3970 = vsel %vm1013, %v3899, 0
      %v3973 = vsel %vm1013, %v3900, 0
      %v3976 = vsel %vm1013, %v3901, 0
      %v3979 = vsel %vm1013, %v3902, 0
      %v3982 = vsel %vm1013, %v3903, 0
      %v3985 = vsel %vm1013, %v3904, 0
      %v3988 = vsel %vm1013, %v3905, 0
      %v3991 = vsel %vm1013, %v3906, 0
      %v3994 = vsel %vm1013, %v3907, 0
      %v3997 = vsel %vm1013, %v3908, 0
      %v4000 = vsel %vm1013, %v3909, 0
      %v4003 = vsel %vm1013, %v3910, 0
      %v4006 = vsel %vm1013, %v3911, 0
      %v4009 = vsel %vm1013, %v3912, 0
      %v4011 = vsel %vm1110, %v3913, 0
      %v4013 = vsel %vm1110, %v3914, 0
      %4015 = vmatpush.msra.mxu0 0.0
      %4016 = vmatpush.msra.mxu0 0.0
      %4017 = vmatpush.msra.mxu0 0.0
      %4018 = vmatpush.msra.mxu0 0.0
      %4019 = vmatpush.msra.mxu0 0.0
      %4020 = vmatpush.msra.mxu0 0.0
      %4021 = vmatpush.msra.mxu0 0.0
      %4022 = vmatpush.msra.mxu0 0.0
      %4023 = vmatpush.msra.mxu0 0.0
      %4024 = vmatpush.msra.mxu0 0.0
      %4025 = vmatpush.msra.mxu0 0.0
      %4026 = vmatpush.msra.mxu0 0.0
      %4027 = vmatpush.msra.mxu0 0.0
      %4028 = vmatpush.msra.mxu0 0.0
      %4029 = vmatpush.msra.mxu0 0.0
      %4030 = vmatpush.msra.mxu0 %v4011
      %4031 = vmatmul.f32.gmra.mxu0 %v3916
      %v4032 = vpop.f32.mrf.mxu0
      %v4033 = vadd.f32 0.0, %v4032
      %4034 = vmatmul.f32.gmra.mxu0 %v3919
      %v4035 = vpop.f32.mrf.mxu0
      %v4036 = vadd.f32 0.0, %v4035
      %4037 = vmatmul.f32.gmra.mxu0 %v3922
      %v4038 = vpop.f32.mrf.mxu0
      %v4039 = vadd.f32 0.0, %v4038
      %4040 = vmatmul.f32.gmra.mxu0 %v3925
      %v4041 = vpop.f32.mrf.mxu0
      %v4042 = vadd.f32 0.0, %v4041
      %4043 = vmatmul.f32.gmra.mxu0 %v3928
      %v4044 = vpop.f32.mrf.mxu0
      %v4045 = vadd.f32 0.0, %v4044
      %4046 = vmatmul.f32.gmra.mxu0 %v3931
      %v4047 = vpop.f32.mrf.mxu0
      %v4048 = vadd.f32 0.0, %v4047
      %4049 = vmatmul.f32.gmra.mxu0 %v3934
      %v4050 = vpop.f32.mrf.mxu0
      %v4051 = vadd.f32 0.0, %v4050
      %4052 = vmatmul.f32.gmra.mxu0 %v3937
      %v4053 = vpop.f32.mrf.mxu0
      %v4054 = vadd.f32 0.0, %v4053
      %4055 = vmatmul.f32.gmra.mxu0 %v3940
      %v4056 = vpop.f32.mrf.mxu0
      %v4057 = vadd.f32 0.0, %v4056
      %4058 = vmatmul.f32.gmra.mxu0 %v3943
      %v4059 = vpop.f32.mrf.mxu0
      %v4060 = vadd.f32 0.0, %v4059
      %4061 = vmatmul.f32.gmra.mxu0 %v3946
      %v4062 = vpop.f32.mrf.mxu0
      %v4063 = vadd.f32 0.0, %v4062
      %4064 = vmatmul.f32.gmra.mxu0 %v3949
      %v4065 = vpop.f32.mrf.mxu0
      %v4066 = vadd.f32 0.0, %v4065
      %4067 = vmatmul.f32.gmra.mxu0 %v3952
      %v4068 = vpop.f32.mrf.mxu0
      %v4069 = vadd.f32 0.0, %v4068
      %4070 = vmatmul.f32.gmra.mxu0 %v3955
      %v4071 = vpop.f32.mrf.mxu0
      %v4072 = vadd.f32 0.0, %v4071
      %4073 = vmatmul.f32.gmra.mxu0 %v3958
      %v4074 = vpop.f32.mrf.mxu0
      %v4075 = vadd.f32 0.0, %v4074
      %4076 = vmatmul.f32.gmra.mxu0 %v3961
      %v4077 = vpop.f32.mrf.mxu0
      %v4078 = vadd.f32 0.0, %v4077
      %4079 = vmatmul.f32.gmra.mxu0 %v3964
      %v4080 = vpop.f32.mrf.mxu0
      %v4081 = vadd.f32 0.0, %v4080
      %4082 = vmatmul.f32.gmra.mxu0 %v3967
      %v4083 = vpop.f32.mrf.mxu0
      %v4084 = vadd.f32 0.0, %v4083
      %4085 = vmatmul.f32.gmra.mxu0 %v3970
      %v4086 = vpop.f32.mrf.mxu0
      %v4087 = vadd.f32 0.0, %v4086
      %4088 = vmatmul.f32.gmra.mxu0 %v3973
      %v4089 = vpop.f32.mrf.mxu0
      %v4090 = vadd.f32 0.0, %v4089
      %4091 = vmatmul.f32.gmra.mxu0 %v3976
      %v4092 = vpop.f32.mrf.mxu0
      %v4093 = vadd.f32 0.0, %v4092
      %4094 = vmatmul.f32.gmra.mxu0 %v3979
      %v4095 = vpop.f32.mrf.mxu0
      %v4096 = vadd.f32 0.0, %v4095
      %4097 = vmatmul.f32.gmra.mxu0 %v3982
      %v4098 = vpop.f32.mrf.mxu0
      %v4099 = vadd.f32 0.0, %v4098
      %4100 = vmatmul.f32.gmra.mxu0 %v3985
      %v4101 = vpop.f32.mrf.mxu0
      %v4102 = vadd.f32 0.0, %v4101
      %4103 = vmatmul.f32.gmra.mxu0 %v3988
      %v4104 = vpop.f32.mrf.mxu0
      %v4105 = vadd.f32 0.0, %v4104
      %4106 = vmatmul.f32.gmra.mxu0 %v3991
      %v4107 = vpop.f32.mrf.mxu0
      %v4108 = vadd.f32 0.0, %v4107
      %4109 = vmatmul.f32.gmra.mxu0 %v3994
      %v4110 = vpop.f32.mrf.mxu0
      %v4111 = vadd.f32 0.0, %v4110
      %4112 = vmatmul.f32.gmra.mxu0 %v3997
      %v4113 = vpop.f32.mrf.mxu0
      %v4114 = vadd.f32 0.0, %v4113
      %4115 = vmatmul.f32.gmra.mxu0 %v4000
      %v4116 = vpop.f32.mrf.mxu0
      %v4117 = vadd.f32 0.0, %v4116
      %4118 = vmatmul.f32.gmra.mxu0 %v4003
      %v4119 = vpop.f32.mrf.mxu0
      %v4120 = vadd.f32 0.0, %v4119
      %4121 = vmatmul.f32.gmra.mxu0 %v4006
      %v4122 = vpop.f32.mrf.mxu0
      %v4123 = vadd.f32 0.0, %v4122
      %4124 = vmatmul.f32.gmra.mxu0 %v4009
      %v4125 = vpop.f32.mrf.mxu0
      %v4126 = vadd.f32 0.0, %v4125
      %4127 = vdwg.mxu0
      %4128 = vmatpush.msra.mxu0 0.0
      %4129 = vmatpush.msra.mxu0 0.0
      %4130 = vmatpush.msra.mxu0 0.0
      %4131 = vmatpush.msra.mxu0 0.0
      %4132 = vmatpush.msra.mxu0 0.0
      %4133 = vmatpush.msra.mxu0 0.0
      %4134 = vmatpush.msra.mxu0 0.0
      %4135 = vmatpush.msra.mxu0 0.0
      %4136 = vmatpush.msra.mxu0 0.0
      %4137 = vmatpush.msra.mxu0 0.0
      %4138 = vmatpush.msra.mxu0 0.0
      %4139 = vmatpush.msra.mxu0 0.0
      %4140 = vmatpush.msra.mxu0 0.0
      %4141 = vmatpush.msra.mxu0 0.0
      %4142 = vmatpush.msra.mxu0 0.0
      %4143 = vmatpush.msra.mxu0 %v4013
      %4144 = vmatmul.f32.gmra.mxu0 %v3916
      %v4145 = vpop.f32.mrf.mxu0
      %v4146 = vadd.f32 0.0, %v4145
      %4147 = vmatmul.f32.gmra.mxu0 %v3919
      %v4148 = vpop.f32.mrf.mxu0
      %v4149 = vadd.f32 0.0, %v4148
      %4150 = vmatmul.f32.gmra.mxu0 %v3922
      %v4151 = vpop.f32.mrf.mxu0
      %v4152 = vadd.f32 0.0, %v4151
      %4153 = vmatmul.f32.gmra.mxu0 %v3925
      %v4154 = vpop.f32.mrf.mxu0
      %v4155 = vadd.f32 0.0, %v4154
      %4156 = vmatmul.f32.gmra.mxu0 %v3928
      %v4157 = vpop.f32.mrf.mxu0
      %v4158 = vadd.f32 0.0, %v4157
      %4159 = vmatmul.f32.gmra.mxu0 %v3931
      %v4160 = vpop.f32.mrf.mxu0
      %v4161 = vadd.f32 0.0, %v4160
      %4162 = vmatmul.f32.gmra.mxu0 %v3934
      %v4163 = vpop.f32.mrf.mxu0
      %v4164 = vadd.f32 0.0, %v4163
      %4165 = vmatmul.f32.gmra.mxu0 %v3937
      %v4166 = vpop.f32.mrf.mxu0
      %v4167 = vadd.f32 0.0, %v4166
      %4168 = vmatmul.f32.gmra.mxu0 %v3940
      %v4169 = vpop.f32.mrf.mxu0
      %v4170 = vadd.f32 0.0, %v4169
      %4171 = vmatmul.f32.gmra.mxu0 %v3943
      %v4172 = vpop.f32.mrf.mxu0
      %v4173 = vadd.f32 0.0, %v4172
      %4174 = vmatmul.f32.gmra.mxu0 %v3946
      %v4175 = vpop.f32.mrf.mxu0
      %v4176 = vadd.f32 0.0, %v4175
      %4177 = vmatmul.f32.gmra.mxu0 %v3949
      %v4178 = vpop.f32.mrf.mxu0
      %v4179 = vadd.f32 0.0, %v4178
      %4180 = vmatmul.f32.gmra.mxu0 %v3952
      %v4181 = vpop.f32.mrf.mxu0
      %v4182 = vadd.f32 0.0, %v4181
      %4183 = vmatmul.f32.gmra.mxu0 %v3955
      %v4184 = vpop.f32.mrf.mxu0
      %v4185 = vadd.f32 0.0, %v4184
      %4186 = vmatmul.f32.gmra.mxu0 %v3958
      %v4187 = vpop.f32.mrf.mxu0
      %v4188 = vadd.f32 0.0, %v4187
      %4189 = vmatmul.f32.gmra.mxu0 %v3961
      %v4190 = vpop.f32.mrf.mxu0
      %v4191 = vadd.f32 0.0, %v4190
      %4192 = vmatmul.f32.gmra.mxu0 %v3964
      %v4193 = vpop.f32.mrf.mxu0
      %v4194 = vadd.f32 0.0, %v4193
      %4195 = vmatmul.f32.gmra.mxu0 %v3967
      %v4196 = vpop.f32.mrf.mxu0
      %v4197 = vadd.f32 0.0, %v4196
      %4198 = vmatmul.f32.gmra.mxu0 %v3970
      %v4199 = vpop.f32.mrf.mxu0
      %v4200 = vadd.f32 0.0, %v4199
      %4201 = vmatmul.f32.gmra.mxu0 %v3973
      %v4202 = vpop.f32.mrf.mxu0
      %v4203 = vadd.f32 0.0, %v4202
      %4204 = vmatmul.f32.gmra.mxu0 %v3976
      %v4205 = vpop.f32.mrf.mxu0
      %v4206 = vadd.f32 0.0, %v4205
      %4207 = vmatmul.f32.gmra.mxu0 %v3979
      %v4208 = vpop.f32.mrf.mxu0
      %v4209 = vadd.f32 0.0, %v4208
      %4210 = vmatmul.f32.gmra.mxu0 %v3982
      %v4211 = vpop.f32.mrf.mxu0
      %v4212 = vadd.f32 0.0, %v4211
      %4213 = vmatmul.f32.gmra.mxu0 %v3985
      %v4214 = vpop.f32.mrf.mxu0
      %v4215 = vadd.f32 0.0, %v4214
      %4216 = vmatmul.f32.gmra.mxu0 %v3988
      %v4217 = vpop.f32.mrf.mxu0
      %v4218 = vadd.f32 0.0, %v4217
      %4219 = vmatmul.f32.gmra.mxu0 %v3991
      %v4220 = vpop.f32.mrf.mxu0
      %v4221 = vadd.f32 0.0, %v4220
      %4222 = vmatmul.f32.gmra.mxu0 %v3994
      %v4223 = vpop.f32.mrf.mxu0
      %v4224 = vadd.f32 0.0, %v4223
      %4225 = vmatmul.f32.gmra.mxu0 %v3997
      %v4226 = vpop.f32.mrf.mxu0
      %v4227 = vadd.f32 0.0, %v4226
      %4228 = vmatmul.f32.gmra.mxu0 %v4000
      %v4229 = vpop.f32.mrf.mxu0
      %v4230 = vadd.f32 0.0, %v4229
      %4231 = vmatmul.f32.gmra.mxu0 %v4003
      %v4232 = vpop.f32.mrf.mxu0
      %v4233 = vadd.f32 0.0, %v4232
      %4234 = vmatmul.f32.gmra.mxu0 %v4006
      %v4235 = vpop.f32.mrf.mxu0
      %v4236 = vadd.f32 0.0, %v4235
      %4237 = vmatmul.f32.gmra.mxu0 %v4009
      %v4238 = vpop.f32.mrf.mxu0
      %v4239 = vadd.f32 0.0, %v4238
      %4240 = vdwg.mxu0
      %v4241 = vmax.f32 %v4033, %v4146
      %4242 = vmax.xlane.f32.xlu0 %v4241
      %v4243 = vpop.xlane.xlu0 %4242
      %v4244 = vmax.f32 %v4036, %v4149
      %4245 = vmax.xlane.f32.xlu0 %v4244
      %v4246 = vpop.xlane.xlu0 %4245
      %v4247 = vmax.f32 %v4039, %v4152
      %4248 = vmax.xlane.f32.xlu0 %v4247
      %v4249 = vpop.xlane.xlu0 %4248
      %v4250 = vmax.f32 %v4042, %v4155
      %4251 = vmax.xlane.f32.xlu0 %v4250
      %v4252 = vpop.xlane.xlu0 %4251
      %v4253 = vmax.f32 %v4045, %v4158
      %4254 = vmax.xlane.f32.xlu0 %v4253
      %v4255 = vpop.xlane.xlu0 %4254
      %v4256 = vmax.f32 %v4048, %v4161
      %4257 = vmax.xlane.f32.xlu0 %v4256
      %v4258 = vpop.xlane.xlu0 %4257
      %v4259 = vmax.f32 %v4051, %v4164
      %4260 = vmax.xlane.f32.xlu0 %v4259
      %v4261 = vpop.xlane.xlu0 %4260
      %v4262 = vmax.f32 %v4054, %v4167
      %4263 = vmax.xlane.f32.xlu0 %v4262
      %v4264 = vpop.xlane.xlu0 %4263
      %v4265 = vmax.f32 %v4057, %v4170
      %4266 = vmax.xlane.f32.xlu0 %v4265
      %v4267 = vpop.xlane.xlu0 %4266
      %v4268 = vmax.f32 %v4060, %v4173
      %4269 = vmax.xlane.f32.xlu0 %v4268
      %v4270 = vpop.xlane.xlu0 %4269
      %v4271 = vmax.f32 %v4063, %v4176
      %4272 = vmax.xlane.f32.xlu0 %v4271
      %v4273 = vpop.xlane.xlu0 %4272
      %v4274 = vmax.f32 %v4066, %v4179
      %4275 = vmax.xlane.f32.xlu0 %v4274
      %v4276 = vpop.xlane.xlu0 %4275
      %v4277 = vmax.f32 %v4069, %v4182
      %4278 = vmax.xlane.f32.xlu0 %v4277
      %v4279 = vpop.xlane.xlu0 %4278
      %v4280 = vmax.f32 %v4072, %v4185
      %4281 = vmax.xlane.f32.xlu0 %v4280
      %v4282 = vpop.xlane.xlu0 %4281
      %v4283 = vmax.f32 %v4075, %v4188
      %4284 = vmax.xlane.f32.xlu0 %v4283
      %v4285 = vpop.xlane.xlu0 %4284
      %v4286 = vmax.f32 %v4078, %v4191
      %4287 = vmax.xlane.f32.xlu0 %v4286
      %v4288 = vpop.xlane.xlu0 %4287
      %v4289 = vmax.f32 %v4081, %v4194
      %4290 = vmax.xlane.f32.xlu0 %v4289
      %v4291 = vpop.xlane.xlu0 %4290
      %v4292 = vmax.f32 %v4084, %v4197
      %4293 = vmax.xlane.f32.xlu0 %v4292
      %v4294 = vpop.xlane.xlu0 %4293
      %v4295 = vmax.f32 %v4087, %v4200
      %4296 = vmax.xlane.f32.xlu0 %v4295
      %v4297 = vpop.xlane.xlu0 %4296
      %v4298 = vmax.f32 %v4090, %v4203
      %4299 = vmax.xlane.f32.xlu0 %v4298
      %v4300 = vpop.xlane.xlu0 %4299
      %v4301 = vmax.f32 %v4093, %v4206
      %4302 = vmax.xlane.f32.xlu0 %v4301
      %v4303 = vpop.xlane.xlu0 %4302
      %v4304 = vmax.f32 %v4096, %v4209
      %4305 = vmax.xlane.f32.xlu0 %v4304
      %v4306 = vpop.xlane.xlu0 %4305
      %v4307 = vmax.f32 %v4099, %v4212
      %4308 = vmax.xlane.f32.xlu0 %v4307
      %v4309 = vpop.xlane.xlu0 %4308
      %v4310 = vmax.f32 %v4102, %v4215
      %4311 = vmax.xlane.f32.xlu0 %v4310
      %v4312 = vpop.xlane.xlu0 %4311
      %v4313 = vmax.f32 %v4105, %v4218
      %4314 = vmax.xlane.f32.xlu0 %v4313
      %v4315 = vpop.xlane.xlu0 %4314
      %v4316 = vmax.f32 %v4108, %v4221
      %4317 = vmax.xlane.f32.xlu0 %v4316
      %v4318 = vpop.xlane.xlu0 %4317
      %v4319 = vmax.f32 %v4111, %v4224
      %4320 = vmax.xlane.f32.xlu0 %v4319
      %v4321 = vpop.xlane.xlu0 %4320
      %v4322 = vmax.f32 %v4114, %v4227
      %4323 = vmax.xlane.f32.xlu0 %v4322
      %v4324 = vpop.xlane.xlu0 %4323
      %v4325 = vmax.f32 %v4117, %v4230
      %4326 = vmax.xlane.f32.xlu0 %v4325
      %v4327 = vpop.xlane.xlu0 %4326
      %v4328 = vmax.f32 %v4120, %v4233
      %4329 = vmax.xlane.f32.xlu0 %v4328
      %v4330 = vpop.xlane.xlu0 %4329
      %v4331 = vmax.f32 %v4123, %v4236
      %4332 = vmax.xlane.f32.xlu0 %v4331
      %v4333 = vpop.xlane.xlu0 %4332
      %v4334 = vmax.f32 %v4126, %v4239
      %4335 = vmax.xlane.f32.xlu0 %v4334
      %v4336 = vpop.xlane.xlu0 %4335
      %v4337 = vsub.f32 %v4033, %v4243
      %v4338 = vsub.f32 %v4146, %v4243
      %v4339 = vsub.f32 %v4036, %v4246
      %v4340 = vsub.f32 %v4149, %v4246
      %v4341 = vsub.f32 %v4039, %v4249
      %v4342 = vsub.f32 %v4152, %v4249
      %v4343 = vsub.f32 %v4042, %v4252
      %v4344 = vsub.f32 %v4155, %v4252
      %v4345 = vsub.f32 %v4045, %v4255
      %v4346 = vsub.f32 %v4158, %v4255
      %v4347 = vsub.f32 %v4048, %v4258
      %v4348 = vsub.f32 %v4161, %v4258
      %v4349 = vsub.f32 %v4051, %v4261
      %v4350 = vsub.f32 %v4164, %v4261
      %v4351 = vsub.f32 %v4054, %v4264
      %v4352 = vsub.f32 %v4167, %v4264
      %v4353 = vsub.f32 %v4057, %v4267
      %v4354 = vsub.f32 %v4170, %v4267
      %v4355 = vsub.f32 %v4060, %v4270
      %v4356 = vsub.f32 %v4173, %v4270
      %v4357 = vsub.f32 %v4063, %v4273
      %v4358 = vsub.f32 %v4176, %v4273
      %v4359 = vsub.f32 %v4066, %v4276
      %v4360 = vsub.f32 %v4179, %v4276
      %v4361 = vsub.f32 %v4069, %v4279
      %v4362 = vsub.f32 %v4182, %v4279
      %v4363 = vsub.f32 %v4072, %v4282
      %v4364 = vsub.f32 %v4185, %v4282
      %v4365 = vsub.f32 %v4075, %v4285
      %v4366 = vsub.f32 %v4188, %v4285
      %v4367 = vsub.f32 %v4078, %v4288
      %v4368 = vsub.f32 %v4191, %v4288
      %v4369 = vsub.f32 %v4081, %v4291
      %v4370 = vsub.f32 %v4194, %v4291
      %v4371 = vsub.f32 %v4084, %v4294
      %v4372 = vsub.f32 %v4197, %v4294
      %v4373 = vsub.f32 %v4087, %v4297
      %v4374 = vsub.f32 %v4200, %v4297
      %v4375 = vsub.f32 %v4090, %v4300
      %v4376 = vsub.f32 %v4203, %v4300
      %v4377 = vsub.f32 %v4093, %v4303
      %v4378 = vsub.f32 %v4206, %v4303
      %v4379 = vsub.f32 %v4096, %v4306
      %v4380 = vsub.f32 %v4209, %v4306
      %v4381 = vsub.f32 %v4099, %v4309
      %v4382 = vsub.f32 %v4212, %v4309
      %v4383 = vsub.f32 %v4102, %v4312
      %v4384 = vsub.f32 %v4215, %v4312
      %v4385 = vsub.f32 %v4105, %v4315
      %v4386 = vsub.f32 %v4218, %v4315
      %v4387 = vsub.f32 %v4108, %v4318
      %v4388 = vsub.f32 %v4221, %v4318
      %v4389 = vsub.f32 %v4111, %v4321
      %v4390 = vsub.f32 %v4224, %v4321
      %v4391 = vsub.f32 %v4114, %v4324
      %v4392 = vsub.f32 %v4227, %v4324
      %v4393 = vsub.f32 %v4117, %v4327
      %v4394 = vsub.f32 %v4230, %v4327
      %v4395 = vsub.f32 %v4120, %v4330
      %v4396 = vsub.f32 %v4233, %v4330
      %v4397 = vsub.f32 %v4123, %v4333
      %v4398 = vsub.f32 %v4236, %v4333
      %v4399 = vsub.f32 %v4126, %v4336
      %v4400 = vsub.f32 %v4239, %v4336
      %v4401 = vmul.f32 %v4337, 1.442695
      %v4402 = vpow.pop %v4401
      %v4403 = vmul.f32 %v4338, 1.442695
      %v4404 = vpow.pop %v4403
      %v4405 = vmul.f32 %v4339, 1.442695
      %v4406 = vpow.pop %v4405
      %v4407 = vmul.f32 %v4340, 1.442695
      %v4408 = vpow.pop %v4407
      %v4409 = vmul.f32 %v4341, 1.442695
      %v4410 = vpow.pop %v4409
      %v4411 = vmul.f32 %v4342, 1.442695
      %v4412 = vpow.pop %v4411
      %v4413 = vmul.f32 %v4343, 1.442695
      %v4414 = vpow.pop %v4413
      %v4415 = vmul.f32 %v4344, 1.442695
      %v4416 = vpow.pop %v4415
      %v4417 = vmul.f32 %v4345, 1.442695
      %v4418 = vpow.pop %v4417
      %v4419 = vmul.f32 %v4346, 1.442695
      %v4420 = vpow.pop %v4419
      %v4421 = vmul.f32 %v4347, 1.442695
      %v4422 = vpow.pop %v4421
      %v4423 = vmul.f32 %v4348, 1.442695
      %v4424 = vpow.pop %v4423
      %v4425 = vmul.f32 %v4349, 1.442695
      %v4426 = vpow.pop %v4425
      %v4427 = vmul.f32 %v4350, 1.442695
      %v4428 = vpow.pop %v4427
      %v4429 = vmul.f32 %v4351, 1.442695
      %v4430 = vpow.pop %v4429
      %v4431 = vmul.f32 %v4352, 1.442695
      %v4432 = vpow.pop %v4431
      %v4433 = vmul.f32 %v4353, 1.442695
      %v4434 = vpow.pop %v4433
      %v4435 = vmul.f32 %v4354, 1.442695
      %v4436 = vpow.pop %v4435
      %v4437 = vmul.f32 %v4355, 1.442695
      %v4438 = vpow.pop %v4437
      %v4439 = vmul.f32 %v4356, 1.442695
      %v4440 = vpow.pop %v4439
      %v4441 = vmul.f32 %v4357, 1.442695
      %v4442 = vpow.pop %v4441
      %v4443 = vmul.f32 %v4358, 1.442695
      %v4444 = vpow.pop %v4443
      %v4445 = vmul.f32 %v4359, 1.442695
      %v4446 = vpow.pop %v4445
      %v4447 = vmul.f32 %v4360, 1.442695
      %v4448 = vpow.pop %v4447
      %v4449 = vmul.f32 %v4361, 1.442695
      %v4450 = vpow.pop %v4449
      %v4451 = vmul.f32 %v4362, 1.442695
      %v4452 = vpow.pop %v4451
      %v4453 = vmul.f32 %v4363, 1.442695
      %v4454 = vpow.pop %v4453
      %v4455 = vmul.f32 %v4364, 1.442695
      %v4456 = vpow.pop %v4455
      %v4457 = vmul.f32 %v4365, 1.442695
      %v4458 = vpow.pop %v4457
      %v4459 = vmul.f32 %v4366, 1.442695
      %v4460 = vpow.pop %v4459
      %v4461 = vmul.f32 %v4367, 1.442695
      %v4462 = vpow.pop %v4461
      %v4463 = vmul.f32 %v4368, 1.442695
      %v4464 = vpow.pop %v4463
      %v4465 = vmul.f32 %v4369, 1.442695
      %v4466 = vpow.pop %v4465
      %v4467 = vmul.f32 %v4370, 1.442695
      %v4468 = vpow.pop %v4467
      %v4469 = vmul.f32 %v4371, 1.442695
      %v4470 = vpow.pop %v4469
      %v4471 = vmul.f32 %v4372, 1.442695
      %v4472 = vpow.pop %v4471
      %v4473 = vmul.f32 %v4373, 1.442695
      %v4474 = vpow.pop %v4473
      %v4475 = vmul.f32 %v4374, 1.442695
      %v4476 = vpow.pop %v4475
      %v4477 = vmul.f32 %v4375, 1.442695
      %v4478 = vpow.pop %v4477
      %v4479 = vmul.f32 %v4376, 1.442695
      %v4480 = vpow.pop %v4479
      %v4481 = vmul.f32 %v4377, 1.442695
      %v4482 = vpow.pop %v4481
      %v4483 = vmul.f32 %v4378, 1.442695
      %v4484 = vpow.pop %v4483
      %v4485 = vmul.f32 %v4379, 1.442695
      %v4486 = vpow.pop %v4485
      %v4487 = vmul.f32 %v4380, 1.442695
      %v4488 = vpow.pop %v4487
      %v4489 = vmul.f32 %v4381, 1.442695
      %v4490 = vpow.pop %v4489
      %v4491 = vmul.f32 %v4382, 1.442695
      %v4492 = vpow.pop %v4491
      %v4493 = vmul.f32 %v4383, 1.442695
      %v4494 = vpow.pop %v4493
      %v4495 = vmul.f32 %v4384, 1.442695
      %v4496 = vpow.pop %v4495
      %v4497 = vmul.f32 %v4385, 1.442695
      %v4498 = vpow.pop %v4497
      %v4499 = vmul.f32 %v4386, 1.442695
      %v4500 = vpow.pop %v4499
      %v4501 = vmul.f32 %v4387, 1.442695
      %v4502 = vpow.pop %v4501
      %v4503 = vmul.f32 %v4388, 1.442695
      %v4504 = vpow.pop %v4503
      %v4505 = vmul.f32 %v4389, 1.442695
      %v4506 = vpow.pop %v4505
      %v4507 = vmul.f32 %v4390, 1.442695
      %v4508 = vpow.pop %v4507
      %v4509 = vmul.f32 %v4391, 1.442695
      %v4510 = vpow.pop %v4509
      %v4511 = vmul.f32 %v4392, 1.442695
      %v4512 = vpow.pop %v4511
      %v4513 = vmul.f32 %v4393, 1.442695
      %v4514 = vpow.pop %v4513
      %v4515 = vmul.f32 %v4394, 1.442695
      %v4516 = vpow.pop %v4515
      %v4517 = vmul.f32 %v4395, 1.442695
      %v4518 = vpow.pop %v4517
      %v4519 = vmul.f32 %v4396, 1.442695
      %v4520 = vpow.pop %v4519
      %v4521 = vmul.f32 %v4397, 1.442695
      %v4522 = vpow.pop %v4521
      %v4523 = vmul.f32 %v4398, 1.442695
      %v4524 = vpow.pop %v4523
      %v4525 = vmul.f32 %v4399, 1.442695
      %v4526 = vpow.pop %v4525
      %v4527 = vmul.f32 %v4400, 1.442695
      %v4528 = vpow.pop %v4527
      %v4529 = vadd.f32 %v4402, %v4404
      %4530 = vadd.xlane.f32.xlu0 %v4529
      %v4531 = vpop.xlane.xlu0 %4530
      %v4532 = vadd.f32 %v4406, %v4408
      %4533 = vadd.xlane.f32.xlu0 %v4532
      %v4534 = vpop.xlane.xlu0 %4533
      %v4535 = vadd.f32 %v4410, %v4412
      %4536 = vadd.xlane.f32.xlu0 %v4535
      %v4537 = vpop.xlane.xlu0 %4536
      %v4538 = vadd.f32 %v4414, %v4416
      %4539 = vadd.xlane.f32.xlu0 %v4538
      %v4540 = vpop.xlane.xlu0 %4539
      %v4541 = vadd.f32 %v4418, %v4420
      %4542 = vadd.xlane.f32.xlu0 %v4541
      %v4543 = vpop.xlane.xlu0 %4542
      %v4544 = vadd.f32 %v4422, %v4424
      %4545 = vadd.xlane.f32.xlu0 %v4544
      %v4546 = vpop.xlane.xlu0 %4545
      %v4547 = vadd.f32 %v4426, %v4428
      %4548 = vadd.xlane.f32.xlu0 %v4547
      %v4549 = vpop.xlane.xlu0 %4548
      %v4550 = vadd.f32 %v4430, %v4432
      %4551 = vadd.xlane.f32.xlu0 %v4550
      %v4552 = vpop.xlane.xlu0 %4551
      %v4553 = vadd.f32 %v4434, %v4436
      %4554 = vadd.xlane.f32.xlu0 %v4553
      %v4555 = vpop.xlane.xlu0 %4554
      %v4556 = vadd.f32 %v4438, %v4440
      %4557 = vadd.xlane.f32.xlu0 %v4556
      %v4558 = vpop.xlane.xlu0 %4557
      %v4559 = vadd.f32 %v4442, %v4444
      %4560 = vadd.xlane.f32.xlu0 %v4559
      %v4561 = vpop.xlane.xlu0 %4560
      %v4562 = vadd.f32 %v4446, %v4448
      %4563 = vadd.xlane.f32.xlu0 %v4562
      %v4564 = vpop.xlane.xlu0 %4563
      %v4565 = vadd.f32 %v4450, %v4452
      %4566 = vadd.xlane.f32.xlu0 %v4565
      %v4567 = vpop.xlane.xlu0 %4566
      %v4568 = vadd.f32 %v4454, %v4456
      %4569 = vadd.xlane.f32.xlu0 %v4568
      %v4570 = vpop.xlane.xlu0 %4569
      %v4571 = vadd.f32 %v4458, %v4460
      %4572 = vadd.xlane.f32.xlu0 %v4571
      %v4573 = vpop.xlane.xlu0 %4572
      %v4574 = vadd.f32 %v4462, %v4464
      %4575 = vadd.xlane.f32.xlu0 %v4574
      %v4576 = vpop.xlane.xlu0 %4575
      %v4577 = vadd.f32 %v4466, %v4468
      %4578 = vadd.xlane.f32.xlu0 %v4577
      %v4579 = vpop.xlane.xlu0 %4578
      %v4580 = vadd.f32 %v4470, %v4472
      %4581 = vadd.xlane.f32.xlu0 %v4580
      %v4582 = vpop.xlane.xlu0 %4581
      %v4583 = vadd.f32 %v4474, %v4476
      %4584 = vadd.xlane.f32.xlu0 %v4583
      %v4585 = vpop.xlane.xlu0 %4584
      %v4586 = vadd.f32 %v4478, %v4480
      %4587 = vadd.xlane.f32.xlu0 %v4586
      %v4588 = vpop.xlane.xlu0 %4587
      %v4589 = vadd.f32 %v4482, %v4484
      %4590 = vadd.xlane.f32.xlu0 %v4589
      %v4591 = vpop.xlane.xlu0 %4590
      %v4592 = vadd.f32 %v4486, %v4488
      %4593 = vadd.xlane.f32.xlu0 %v4592
      %v4594 = vpop.xlane.xlu0 %4593
      %v4595 = vadd.f32 %v4490, %v4492
      %4596 = vadd.xlane.f32.xlu0 %v4595
      %v4597 = vpop.xlane.xlu0 %4596
      %v4598 = vadd.f32 %v4494, %v4496
      %4599 = vadd.xlane.f32.xlu0 %v4598
      %v4600 = vpop.xlane.xlu0 %4599
      %v4601 = vadd.f32 %v4498, %v4500
      %4602 = vadd.xlane.f32.xlu0 %v4601
      %v4603 = vpop.xlane.xlu0 %4602
      %v4604 = vadd.f32 %v4502, %v4504
      %4605 = vadd.xlane.f32.xlu0 %v4604
      %v4606 = vpop.xlane.xlu0 %4605
      %v4607 = vadd.f32 %v4506, %v4508
      %4608 = vadd.xlane.f32.xlu0 %v4607
      %v4609 = vpop.xlane.xlu0 %4608
      %v4610 = vadd.f32 %v4510, %v4512
      %4611 = vadd.xlane.f32.xlu0 %v4610
      %v4612 = vpop.xlane.xlu0 %4611
      %v4613 = vadd.f32 %v4514, %v4516
      %4614 = vadd.xlane.f32.xlu0 %v4613
      %v4615 = vpop.xlane.xlu0 %4614
      %v4616 = vadd.f32 %v4518, %v4520
      %4617 = vadd.xlane.f32.xlu0 %v4616
      %v4618 = vpop.xlane.xlu0 %4617
      %v4619 = vadd.f32 %v4522, %v4524
      %4620 = vadd.xlane.f32.xlu0 %v4619
      %v4621 = vpop.xlane.xlu0 %4620
      %v4622 = vadd.f32 %v4526, %v4528
      %4623 = vadd.xlane.f32.xlu0 %v4622
      %v4624 = vpop.xlane.xlu0 %4623
      %v4625 = vrcp.pop %v4531
      %v4626 = vrcp.pop %v4534
      %v4627 = vrcp.pop %v4537
      %v4628 = vrcp.pop %v4540
      %v4629 = vrcp.pop %v4543
      %v4630 = vrcp.pop %v4546
      %v4631 = vrcp.pop %v4549
      %v4632 = vrcp.pop %v4552
      %v4633 = vrcp.pop %v4555
      %v4634 = vrcp.pop %v4558
      %v4635 = vrcp.pop %v4561
      %v4636 = vrcp.pop %v4564
      %v4637 = vrcp.pop %v4567
      %v4638 = vrcp.pop %v4570
      %v4639 = vrcp.pop %v4573
      %v4640 = vrcp.pop %v4576
      %v4641 = vrcp.pop %v4579
      %v4642 = vrcp.pop %v4582
      %v4643 = vrcp.pop %v4585
      %v4644 = vrcp.pop %v4588
      %v4645 = vrcp.pop %v4591
      %v4646 = vrcp.pop %v4594
      %v4647 = vrcp.pop %v4597
      %v4648 = vrcp.pop %v4600
      %v4649 = vrcp.pop %v4603
      %v4650 = vrcp.pop %v4606
      %v4651 = vrcp.pop %v4609
      %v4652 = vrcp.pop %v4612
      %v4653 = vrcp.pop %v4615
      %v4654 = vrcp.pop %v4618
      %v4655 = vrcp.pop %v4621
      %v4656 = vrcp.pop %v4624
      %v4657 = vmul.f32 %v4402, %v4625
      %v4658 = vmul.f32 %v4404, %v4625
      %v4659 = vmul.f32 %v4406, %v4626
      %v4660 = vmul.f32 %v4408, %v4626
      %v4661 = vmul.f32 %v4410, %v4627
      %v4662 = vmul.f32 %v4412, %v4627
      %v4663 = vmul.f32 %v4414, %v4628
      %v4664 = vmul.f32 %v4416, %v4628
      %v4665 = vmul.f32 %v4418, %v4629
      %v4666 = vmul.f32 %v4420, %v4629
      %v4667 = vmul.f32 %v4422, %v4630
      %v4668 = vmul.f32 %v4424, %v4630
      %v4669 = vmul.f32 %v4426, %v4631
      %v4670 = vmul.f32 %v4428, %v4631
      %v4671 = vmul.f32 %v4430, %v4632
      %v4672 = vmul.f32 %v4432, %v4632
      %v4673 = vmul.f32 %v4434, %v4633
      %v4674 = vmul.f32 %v4436, %v4633
      %v4675 = vmul.f32 %v4438, %v4634
      %v4676 = vmul.f32 %v4440, %v4634
      %v4677 = vmul.f32 %v4442, %v4635
      %v4678 = vmul.f32 %v4444, %v4635
      %v4679 = vmul.f32 %v4446, %v4636
      %v4680 = vmul.f32 %v4448, %v4636
      %v4681 = vmul.f32 %v4450, %v4637
      %v4682 = vmul.f32 %v4452, %v4637
      %v4683 = vmul.f32 %v4454, %v4638
      %v4684 = vmul.f32 %v4456, %v4638
      %v4685 = vmul.f32 %v4458, %v4639
      %v4686 = vmul.f32 %v4460, %v4639
      %v4687 = vmul.f32 %v4462, %v4640
      %v4688 = vmul.f32 %v4464, %v4640
      %v4689 = vmul.f32 %v4466, %v4641
      %v4690 = vmul.f32 %v4468, %v4641
      %v4691 = vmul.f32 %v4470, %v4642
      %v4692 = vmul.f32 %v4472, %v4642
      %v4693 = vmul.f32 %v4474, %v4643
      %v4694 = vmul.f32 %v4476, %v4643
      %v4695 = vmul.f32 %v4478, %v4644
      %v4696 = vmul.f32 %v4480, %v4644
      %v4697 = vmul.f32 %v4482, %v4645
      %v4698 = vmul.f32 %v4484, %v4645
      %v4699 = vmul.f32 %v4486, %v4646
      %v4700 = vmul.f32 %v4488, %v4646
      %v4701 = vmul.f32 %v4490, %v4647
      %v4702 = vmul.f32 %v4492, %v4647
      %v4703 = vmul.f32 %v4494, %v4648
      %v4704 = vmul.f32 %v4496, %v4648
      %v4705 = vmul.f32 %v4498, %v4649
      %v4706 = vmul.f32 %v4500, %v4649
      %v4707 = vmul.f32 %v4502, %v4650
      %v4708 = vmul.f32 %v4504, %v4650
      %v4709 = vmul.f32 %v4506, %v4651
      %v4710 = vmul.f32 %v4508, %v4651
      %v4711 = vmul.f32 %v4510, %v4652
      %v4712 = vmul.f32 %v4512, %v4652
      %v4713 = vmul.f32 %v4514, %v4653
      %v4714 = vmul.f32 %v4516, %v4653
      %v4715 = vmul.f32 %v4518, %v4654
      %v4716 = vmul.f32 %v4520, %v4654
      %v4717 = vmul.f32 %v4522, %v4655
      %v4718 = vmul.f32 %v4524, %v4655
      %v4719 = vmul.f32 %v4526, %v4656
      %v4720 = vmul.f32 %v4528, %v4656
      %v4721 = vrot.slane %v921, 6
      %v4722 = vrot.slane %v944, 6
      %4725 = vmatpush.xpose.msra.mxu0 %v4687
      %4726 = vmatpush.xpose.msra.mxu0 %v4685
      %4727 = vmatpush.xpose.msra.mxu0 %v4683
      %4728 = vmatpush.xpose.msra.mxu0 %v4681
      %4729 = vmatpush.xpose.msra.mxu0 %v4679
      %4730 = vmatpush.xpose.msra.mxu0 %v4677
      %4731 = vmatpush.xpose.msra.mxu0 %v4675
      %4732 = vmatpush.xpose.msra.mxu0 %v4673
      %4733 = vmatpush.xpose.msra.mxu0 %v4671
      %4734 = vmatpush.xpose.msra.mxu0 %v4669
      %4735 = vmatpush.xpose.msra.mxu0 %v4667
      %4736 = vmatpush.xpose.msra.mxu0 %v4665
      %4737 = vmatpush.xpose.msra.mxu0 %v4663
      %4738 = vmatpush.xpose.msra.mxu0 %v4661
      %4739 = vmatpush.xpose.msra.mxu0 %v4659
      %4740 = vmatpush.xpose.msra.mxu0 %v4657
      %4741 = vmatmul.f32.gmra.mxu0 %v4721
      %v4742 = vpop.f32.mrf.mxu0
      %v4743 = vadd.f32 0.0, %v4742
      %4744 = vdwg.mxu0
      %4745 = vmatpush.xpose.msra.mxu0 %v4688
      %4746 = vmatpush.xpose.msra.mxu0 %v4686
      %4747 = vmatpush.xpose.msra.mxu0 %v4684
      %4748 = vmatpush.xpose.msra.mxu0 %v4682
      %4749 = vmatpush.xpose.msra.mxu0 %v4680
      %4750 = vmatpush.xpose.msra.mxu0 %v4678
      %4751 = vmatpush.xpose.msra.mxu0 %v4676
      %4752 = vmatpush.xpose.msra.mxu0 %v4674
      %4753 = vmatpush.xpose.msra.mxu0 %v4672
      %4754 = vmatpush.xpose.msra.mxu0 %v4670
      %4755 = vmatpush.xpose.msra.mxu0 %v4668
      %4756 = vmatpush.xpose.msra.mxu0 %v4666
      %4757 = vmatpush.xpose.msra.mxu0 %v4664
      %4758 = vmatpush.xpose.msra.mxu0 %v4662
      %4759 = vmatpush.xpose.msra.mxu0 %v4660
      %4760 = vmatpush.xpose.msra.mxu0 %v4658
      %4761 = vmatmul.f32.gmra.mxu0 %v4722
      %v4762 = vpop.f32.mrf.mxu0
      %v4763 = vadd.f32 %v4743, %v4762
      %4764 = vdwg.mxu0
      %4765 = vmatpush.xpose.msra.mxu0 %v4719
      %4766 = vmatpush.xpose.msra.mxu0 %v4717
      %4767 = vmatpush.xpose.msra.mxu0 %v4715
      %4768 = vmatpush.xpose.msra.mxu0 %v4713
      %4769 = vmatpush.xpose.msra.mxu0 %v4711
      %4770 = vmatpush.xpose.msra.mxu0 %v4709
      %4771 = vmatpush.xpose.msra.mxu0 %v4707
      %4772 = vmatpush.xpose.msra.mxu0 %v4705
      %4773 = vmatpush.xpose.msra.mxu0 %v4703
      %4774 = vmatpush.xpose.msra.mxu0 %v4701
      %4775 = vmatpush.xpose.msra.mxu0 %v4699
      %4776 = vmatpush.xpose.msra.mxu0 %v4697
      %4777 = vmatpush.xpose.msra.mxu0 %v4695
      %4778 = vmatpush.xpose.msra.mxu0 %v4693
      %4779 = vmatpush.xpose.msra.mxu0 %v4691
      %4780 = vmatpush.xpose.msra.mxu0 %v4689
      %4781 = vmatmul.f32.gmra.mxu0 %v4721
      %v4782 = vpop.f32.mrf.mxu0
      %v4783 = vadd.f32 0.0, %v4782
      %4784 = vdwg.mxu0
      %4785 = vmatpush.xpose.msra.mxu0 %v4720
      %4786 = vmatpush.xpose.msra.mxu0 %v4718
      %4787 = vmatpush.xpose.msra.mxu0 %v4716
      %4788 = vmatpush.xpose.msra.mxu0 %v4714
      %4789 = vmatpush.xpose.msra.mxu0 %v4712
      %4790 = vmatpush.xpose.msra.mxu0 %v4710
      %4791 = vmatpush.xpose.msra.mxu0 %v4708
      %4792 = vmatpush.xpose.msra.mxu0 %v4706
      %4793 = vmatpush.xpose.msra.mxu0 %v4704
      %4794 = vmatpush.xpose.msra.mxu0 %v4702
      %4795 = vmatpush.xpose.msra.mxu0 %v4700
      %4796 = vmatpush.xpose.msra.mxu0 %v4698
      %4797 = vmatpush.xpose.msra.mxu0 %v4696
      %4798 = vmatpush.xpose.msra.mxu0 %v4694
      %4799 = vmatpush.xpose.msra.mxu0 %v4692
      %4800 = vmatpush.xpose.msra.mxu0 %v4690
      %4801 = vmatmul.f32.gmra.mxu0 %v4722
      %v4802 = vpop.f32.mrf.mxu0
      %v4803 = vadd.f32 %v4783, %v4802
      %4804 = vdwg.mxu0
      %v4807 = vrot.slane %v4763, 2
      %v4808 = vrot.slane %v4803, 2
      %4811 = vst [vmem:[#allocation2] sm:$0xc0] %v4807
      %4812 = vst [vmem:[#allocation2 + $0x8] sm:$0xc0] %v4808
      %4813 = vxpose.xlu0.b32.start [1/16] %v792, 128
      %4814 = vxpose.xlu0.b32.cont [2/16] 0.0, 128
      %4815 = vxpose.xlu0.b32.cont [3/16] 0.0, 128
      %4816 = vxpose.xlu0.b32.cont [4/16] 0.0, 128
      %4817 = vxpose.xlu0.b32.cont [5/16] 0.0, 128
      %4818 = vxpose.xlu0.b32.cont [6/16] 0.0, 128
      %4819 = vxpose.xlu0.b32.cont [7/16] 0.0, 128
      %4820 = vxpose.xlu0.b32.cont [8/16] 0.0, 128
      %4821 = vxpose.xlu0.b32.cont [9/16] 0.0, 128
      %4822 = vxpose.xlu0.b32.cont [10/16] 0.0, 128
      %4823 = vxpose.xlu0.b32.cont [11/16] 0.0, 128
      %4824 = vxpose.xlu0.b32.cont [12/16] 0.0, 128
      %4825 = vxpose.xlu0.b32.cont [13/16] 0.0, 128
      %4826 = vxpose.xlu0.b32.cont [14/16] 0.0, 128
      %4827 = vxpose.xlu0.b32.cont [15/16] 0.0, 128
      %4828 = vxpose.xlu0.b32.end [16/16] 0.0, 128
      %v4829 = vpop.trf.xlu0
      %v4830 = vpop.trf.xlu0
      %v4831 = vpop.trf.xlu0
      %v4832 = vpop.trf.xlu0
      %v4833 = vpop.trf.xlu0
      %v4834 = vpop.trf.xlu0
      %v4835 = vpop.trf.xlu0
      %v4836 = vpop.trf.xlu0
      %v4837 = vpop.trf.xlu0
      %v4838 = vpop.trf.xlu0
      %v4839 = vpop.trf.xlu0
      %v4840 = vpop.trf.xlu0
      %v4841 = vpop.trf.xlu0
      %v4842 = vpop.trf.xlu0
      %v4843 = vpop.trf.xlu0
      %v4844 = vpop.trf.xlu0
      %4845 = vxpose.xlu0.b32.start [1/16] %v815, 128
      %4846 = vxpose.xlu0.b32.cont [2/16] 0.0, 128
      %4847 = vxpose.xlu0.b32.cont [3/16] 0.0, 128
      %4848 = vxpose.xlu0.b32.cont [4/16] 0.0, 128
      %4849 = vxpose.xlu0.b32.cont [5/16] 0.0, 128
      %4850 = vxpose.xlu0.b32.cont [6/16] 0.0, 128
      %4851 = vxpose.xlu0.b32.cont [7/16] 0.0, 128
      %4852 = vxpose.xlu0.b32.cont [8/16] 0.0, 128
      %4853 = vxpose.xlu0.b32.cont [9/16] 0.0, 128
      %4854 = vxpose.xlu0.b32.cont [10/16] 0.0, 128
      %4855 = vxpose.xlu0.b32.cont [11/16] 0.0, 128
      %4856 = vxpose.xlu0.b32.cont [12/16] 0.0, 128
      %4857 = vxpose.xlu0.b32.cont [13/16] 0.0, 128
      %4858 = vxpose.xlu0.b32.cont [14/16] 0.0, 128
      %4859 = vxpose.xlu0.b32.cont [15/16] 0.0, 128
      %4860 = vxpose.xlu0.b32.end [16/16] 0.0, 128
      %v4861 = vpop.trf.xlu0
      %v4862 = vpop.trf.xlu0
      %v4863 = vpop.trf.xlu0
      %v4864 = vpop.trf.xlu0
      %v4865 = vpop.trf.xlu0
      %v4866 = vpop.trf.xlu0
      %v4867 = vpop.trf.xlu0
      %v4868 = vpop.trf.xlu0
      %v4869 = vpop.trf.xlu0
      %v4870 = vpop.trf.xlu0
      %v4871 = vpop.trf.xlu0
      %v4872 = vpop.trf.xlu0
      %v4873 = vpop.trf.xlu0
      %v4874 = vpop.trf.xlu0
      %v4875 = vpop.trf.xlu0
      %v4876 = vpop.trf.xlu0
      %v4878 = vsel %vm1013, %v4829, 0
      %v4881 = vsel %vm1013, %v4830, 0
      %v4884 = vsel %vm1013, %v4831, 0
      %v4887 = vsel %vm1013, %v4832, 0
      %v4890 = vsel %vm1013, %v4833, 0
      %v4893 = vsel %vm1013, %v4834, 0
      %v4896 = vsel %vm1013, %v4835, 0
      %v4899 = vsel %vm1013, %v4836, 0
      %v4902 = vsel %vm1013, %v4837, 0
      %v4905 = vsel %vm1013, %v4838, 0
      %v4908 = vsel %vm1013, %v4839, 0
      %v4911 = vsel %vm1013, %v4840, 0
      %v4914 = vsel %vm1013, %v4841, 0
      %v4917 = vsel %vm1013, %v4842, 0
      %v4920 = vsel %vm1013, %v4843, 0
      %v4923 = vsel %vm1013, %v4844, 0
      %v4926 = vsel %vm1013, %v4861, 0
      %v4929 = vsel %vm1013, %v4862, 0
      %v4932 = vsel %vm1013, %v4863, 0
      %v4935 = vsel %vm1013, %v4864, 0
      %v4938 = vsel %vm1013, %v4865, 0
      %v4941 = vsel %vm1013, %v4866, 0
      %v4944 = vsel %vm1013, %v4867, 0
      %v4947 = vsel %vm1013, %v4868, 0
      %v4950 = vsel %vm1013, %v4869, 0
      %v4953 = vsel %vm1013, %v4870, 0
      %v4956 = vsel %vm1013, %v4871, 0
      %v4959 = vsel %vm1013, %v4872, 0
      %v4962 = vsel %vm1013, %v4873, 0
      %v4965 = vsel %vm1013, %v4874, 0
      %v4968 = vsel %vm1013, %v4875, 0
      %v4971 = vsel %vm1013, %v4876, 0
      %v4974 = vsel %vm1110, %v858, 0
      %v4977 = vsel %vm1110, %v881, 0
      %4979 = vmatpush.msra.mxu0 0.0
      %4980 = vmatpush.msra.mxu0 0.0
      %4981 = vmatpush.msra.mxu0 0.0
      %4982 = vmatpush.msra.mxu0 0.0
      %4983 = vmatpush.msra.mxu0 0.0
      %4984 = vmatpush.msra.mxu0 0.0
      %4985 = vmatpush.msra.mxu0 0.0
      %4986 = vmatpush.msra.mxu0 0.0
      %4987 = vmatpush.msra.mxu0 0.0
      %4988 = vmatpush.msra.mxu0 0.0
      %4989 = vmatpush.msra.mxu0 0.0
      %4990 = vmatpush.msra.mxu0 0.0
      %4991 = vmatpush.msra.mxu0 0.0
      %4992 = vmatpush.msra.mxu0 0.0
      %4993 = vmatpush.msra.mxu0 0.0
      %4994 = vmatpush.msra.mxu0 %v4974
      %4995 = vmatmul.f32.gmra.mxu0 %v4878
      %v4996 = vpop.f32.mrf.mxu0
      %v4997 = vadd.f32 0.0, %v4996
      %4998 = vmatmul.f32.gmra.mxu0 %v4881
      %v4999 = vpop.f32.mrf.mxu0
      %v5000 = vadd.f32 0.0, %v4999
      %5001 = vmatmul.f32.gmra.mxu0 %v4884
      %v5002 = vpop.f32.mrf.mxu0
      %v5003 = vadd.f32 0.0, %v5002
      %5004 = vmatmul.f32.gmra.mxu0 %v4887
      %v5005 = vpop.f32.mrf.mxu0
      %v5006 = vadd.f32 0.0, %v5005
      %5007 = vmatmul.f32.gmra.mxu0 %v4890
      %v5008 = vpop.f32.mrf.mxu0
      %v5009 = vadd.f32 0.0, %v5008
      %5010 = vmatmul.f32.gmra.mxu0 %v4893
      %v5011 = vpop.f32.mrf.mxu0
      %v5012 = vadd.f32 0.0, %v5011
      %5013 = vmatmul.f32.gmra.mxu0 %v4896
      %v5014 = vpop.f32.mrf.mxu0
      %v5015 = vadd.f32 0.0, %v5014
      %5016 = vmatmul.f32.gmra.mxu0 %v4899
      %v5017 = vpop.f32.mrf.mxu0
      %v5018 = vadd.f32 0.0, %v5017
      %5019 = vmatmul.f32.gmra.mxu0 %v4902
      %v5020 = vpop.f32.mrf.mxu0
      %v5021 = vadd.f32 0.0, %v5020
      %5022 = vmatmul.f32.gmra.mxu0 %v4905
      %v5023 = vpop.f32.mrf.mxu0
      %v5024 = vadd.f32 0.0, %v5023
      %5025 = vmatmul.f32.gmra.mxu0 %v4908
      %v5026 = vpop.f32.mrf.mxu0
      %v5027 = vadd.f32 0.0, %v5026
      %5028 = vmatmul.f32.gmra.mxu0 %v4911
      %v5029 = vpop.f32.mrf.mxu0
      %v5030 = vadd.f32 0.0, %v5029
      %5031 = vmatmul.f32.gmra.mxu0 %v4914
      %v5032 = vpop.f32.mrf.mxu0
      %v5033 = vadd.f32 0.0, %v5032
      %5034 = vmatmul.f32.gmra.mxu0 %v4917
      %v5035 = vpop.f32.mrf.mxu0
      %v5036 = vadd.f32 0.0, %v5035
      %5037 = vmatmul.f32.gmra.mxu0 %v4920
      %v5038 = vpop.f32.mrf.mxu0
      %v5039 = vadd.f32 0.0, %v5038
      %5040 = vmatmul.f32.gmra.mxu0 %v4923
      %v5041 = vpop.f32.mrf.mxu0
      %v5042 = vadd.f32 0.0, %v5041
      %5043 = vmatmul.f32.gmra.mxu0 %v4926
      %v5044 = vpop.f32.mrf.mxu0
      %v5045 = vadd.f32 0.0, %v5044
      %5046 = vmatmul.f32.gmra.mxu0 %v4929
      %v5047 = vpop.f32.mrf.mxu0
      %v5048 = vadd.f32 0.0, %v5047
      %5049 = vmatmul.f32.gmra.mxu0 %v4932
      %v5050 = vpop.f32.mrf.mxu0
      %v5051 = vadd.f32 0.0, %v5050
      %5052 = vmatmul.f32.gmra.mxu0 %v4935
      %v5053 = vpop.f32.mrf.mxu0
      %v5054 = vadd.f32 0.0, %v5053
      %5055 = vmatmul.f32.gmra.mxu0 %v4938
      %v5056 = vpop.f32.mrf.mxu0
      %v5057 = vadd.f32 0.0, %v5056
      %5058 = vmatmul.f32.gmra.mxu0 %v4941
      %v5059 = vpop.f32.mrf.mxu0
      %v5060 = vadd.f32 0.0, %v5059
      %5061 = vmatmul.f32.gmra.mxu0 %v4944
      %v5062 = vpop.f32.mrf.mxu0
      %v5063 = vadd.f32 0.0, %v5062
      %5064 = vmatmul.f32.gmra.mxu0 %v4947
      %v5065 = vpop.f32.mrf.mxu0
      %v5066 = vadd.f32 0.0, %v5065
      %5067 = vmatmul.f32.gmra.mxu0 %v4950
      %v5068 = vpop.f32.mrf.mxu0
      %v5069 = vadd.f32 0.0, %v5068
      %5070 = vmatmul.f32.gmra.mxu0 %v4953
      %v5071 = vpop.f32.mrf.mxu0
      %v5072 = vadd.f32 0.0, %v5071
      %5073 = vmatmul.f32.gmra.mxu0 %v4956
      %v5074 = vpop.f32.mrf.mxu0
      %v5075 = vadd.f32 0.0, %v5074
      %5076 = vmatmul.f32.gmra.mxu0 %v4959
      %v5077 = vpop.f32.mrf.mxu0
      %v5078 = vadd.f32 0.0, %v5077
      %5079 = vmatmul.f32.gmra.mxu0 %v4962
      %v5080 = vpop.f32.mrf.mxu0
      %v5081 = vadd.f32 0.0, %v5080
      %5082 = vmatmul.f32.gmra.mxu0 %v4965
      %v5083 = vpop.f32.mrf.mxu0
      %v5084 = vadd.f32 0.0, %v5083
      %5085 = vmatmul.f32.gmra.mxu0 %v4968
      %v5086 = vpop.f32.mrf.mxu0
      %v5087 = vadd.f32 0.0, %v5086
      %5088 = vmatmul.f32.gmra.mxu0 %v4971
      %v5089 = vpop.f32.mrf.mxu0
      %v5090 = vadd.f32 0.0, %v5089
      %5091 = vdwg.mxu0
      %5092 = vmatpush.msra.mxu0 0.0
      %5093 = vmatpush.msra.mxu0 0.0
      %5094 = vmatpush.msra.mxu0 0.0
      %5095 = vmatpush.msra.mxu0 0.0
      %5096 = vmatpush.msra.mxu0 0.0
      %5097 = vmatpush.msra.mxu0 0.0
      %5098 = vmatpush.msra.mxu0 0.0
      %5099 = vmatpush.msra.mxu0 0.0
      %5100 = vmatpush.msra.mxu0 0.0
      %5101 = vmatpush.msra.mxu0 0.0
      %5102 = vmatpush.msra.mxu0 0.0
      %5103 = vmatpush.msra.mxu0 0.0
      %5104 = vmatpush.msra.mxu0 0.0
      %5105 = vmatpush.msra.mxu0 0.0
      %5106 = vmatpush.msra.mxu0 0.0
      %5107 = vmatpush.msra.mxu0 %v4977
      %5108 = vmatmul.f32.gmra.mxu0 %v4878
      %v5109 = vpop.f32.mrf.mxu0
      %v5110 = vadd.f32 0.0, %v5109
      %5111 = vmatmul.f32.gmra.mxu0 %v4881
      %v5112 = vpop.f32.mrf.mxu0
      %v5113 = vadd.f32 0.0, %v5112
      %5114 = vmatmul.f32.gmra.mxu0 %v4884
      %v5115 = vpop.f32.mrf.mxu0
      %v5116 = vadd.f32 0.0, %v5115
      %5117 = vmatmul.f32.gmra.mxu0 %v4887
      %v5118 = vpop.f32.mrf.mxu0
      %v5119 = vadd.f32 0.0, %v5118
      %5120 = vmatmul.f32.gmra.mxu0 %v4890
      %v5121 = vpop.f32.mrf.mxu0
      %v5122 = vadd.f32 0.0, %v5121
      %5123 = vmatmul.f32.gmra.mxu0 %v4893
      %v5124 = vpop.f32.mrf.mxu0
      %v5125 = vadd.f32 0.0, %v5124
      %5126 = vmatmul.f32.gmra.mxu0 %v4896
      %v5127 = vpop.f32.mrf.mxu0
      %v5128 = vadd.f32 0.0, %v5127
      %5129 = vmatmul.f32.gmra.mxu0 %v4899
      %v5130 = vpop.f32.mrf.mxu0
      %v5131 = vadd.f32 0.0, %v5130
      %5132 = vmatmul.f32.gmra.mxu0 %v4902
      %v5133 = vpop.f32.mrf.mxu0
      %v5134 = vadd.f32 0.0, %v5133
      %5135 = vmatmul.f32.gmra.mxu0 %v4905
      %v5136 = vpop.f32.mrf.mxu0
      %v5137 = vadd.f32 0.0, %v5136
      %5138 = vmatmul.f32.gmra.mxu0 %v4908
      %v5139 = vpop.f32.mrf.mxu0
      %v5140 = vadd.f32 0.0, %v5139
      %5141 = vmatmul.f32.gmra.mxu0 %v4911
      %v5142 = vpop.f32.mrf.mxu0
      %v5143 = vadd.f32 0.0, %v5142
      %5144 = vmatmul.f32.gmra.mxu0 %v4914
      %v5145 = vpop.f32.mrf.mxu0
      %v5146 = vadd.f32 0.0, %v5145
      %5147 = vmatmul.f32.gmra.mxu0 %v4917
      %v5148 = vpop.f32.mrf.mxu0
      %v5149 = vadd.f32 0.0, %v5148
      %5150 = vmatmul.f32.gmra.mxu0 %v4920
      %v5151 = vpop.f32.mrf.mxu0
      %v5152 = vadd.f32 0.0, %v5151
      %5153 = vmatmul.f32.gmra.mxu0 %v4923
      %v5154 = vpop.f32.mrf.mxu0
      %v5155 = vadd.f32 0.0, %v5154
      %5156 = vmatmul.f32.gmra.mxu0 %v4926
      %v5157 = vpop.f32.mrf.mxu0
      %v5158 = vadd.f32 0.0, %v5157
      %5159 = vmatmul.f32.gmra.mxu0 %v4929
      %v5160 = vpop.f32.mrf.mxu0
      %v5161 = vadd.f32 0.0, %v5160
      %5162 = vmatmul.f32.gmra.mxu0 %v4932
      %v5163 = vpop.f32.mrf.mxu0
      %v5164 = vadd.f32 0.0, %v5163
      %5165 = vmatmul.f32.gmra.mxu0 %v4935
      %v5166 = vpop.f32.mrf.mxu0
      %v5167 = vadd.f32 0.0, %v5166
      %5168 = vmatmul.f32.gmra.mxu0 %v4938
      %v5169 = vpop.f32.mrf.mxu0
      %v5170 = vadd.f32 0.0, %v5169
      %5171 = vmatmul.f32.gmra.mxu0 %v4941
      %v5172 = vpop.f32.mrf.mxu0
      %v5173 = vadd.f32 0.0, %v5172
      %5174 = vmatmul.f32.gmra.mxu0 %v4944
      %v5175 = vpop.f32.mrf.mxu0
      %v5176 = vadd.f32 0.0, %v5175
      %5177 = vmatmul.f32.gmra.mxu0 %v4947
      %v5178 = vpop.f32.mrf.mxu0
      %v5179 = vadd.f32 0.0, %v5178
      %5180 = vmatmul.f32.gmra.mxu0 %v4950
      %v5181 = vpop.f32.mrf.mxu0
      %v5182 = vadd.f32 0.0, %v5181
      %5183 = vmatmul.f32.gmra.mxu0 %v4953
      %v5184 = vpop.f32.mrf.mxu0
      %v5185 = vadd.f32 0.0, %v5184
      %5186 = vmatmul.f32.gmra.mxu0 %v4956
      %v5187 = vpop.f32.mrf.mxu0
      %v5188 = vadd.f32 0.0, %v5187
      %5189 = vmatmul.f32.gmra.mxu0 %v4959
      %v5190 = vpop.f32.mrf.mxu0
      %v5191 = vadd.f32 0.0, %v5190
      %5192 = vmatmul.f32.gmra.mxu0 %v4962
      %v5193 = vpop.f32.mrf.mxu0
      %v5194 = vadd.f32 0.0, %v5193
      %5195 = vmatmul.f32.gmra.mxu0 %v4965
      %v5196 = vpop.f32.mrf.mxu0
      %v5197 = vadd.f32 0.0, %v5196
      %5198 = vmatmul.f32.gmra.mxu0 %v4968
      %v5199 = vpop.f32.mrf.mxu0
      %v5200 = vadd.f32 0.0, %v5199
      %5201 = vmatmul.f32.gmra.mxu0 %v4971
      %v5202 = vpop.f32.mrf.mxu0
      %v5203 = vadd.f32 0.0, %v5202
      %5204 = vdwg.mxu0
      %v5205 = vmax.f32 %v4997, %v5110
      %5206 = vmax.xlane.f32.xlu0 %v5205
      %v5207 = vpop.xlane.xlu0 %5206
      %v5208 = vmax.f32 %v5000, %v5113
      %5209 = vmax.xlane.f32.xlu0 %v5208
      %v5210 = vpop.xlane.xlu0 %5209
      %v5211 = vmax.f32 %v5003, %v5116
      %5212 = vmax.xlane.f32.xlu0 %v5211
      %v5213 = vpop.xlane.xlu0 %5212
      %v5214 = vmax.f32 %v5006, %v5119
      %5215 = vmax.xlane.f32.xlu0 %v5214
      %v5216 = vpop.xlane.xlu0 %5215
      %v5217 = vmax.f32 %v5009, %v5122
      %5218 = vmax.xlane.f32.xlu0 %v5217
      %v5219 = vpop.xlane.xlu0 %5218
      %v5220 = vmax.f32 %v5012, %v5125
      %5221 = vmax.xlane.f32.xlu0 %v5220
      %v5222 = vpop.xlane.xlu0 %5221
      %v5223 = vmax.f32 %v5015, %v5128
      %5224 = vmax.xlane.f32.xlu0 %v5223
      %v5225 = vpop.xlane.xlu0 %5224
      %v5226 = vmax.f32 %v5018, %v5131
      %5227 = vmax.xlane.f32.xlu0 %v5226
      %v5228 = vpop.xlane.xlu0 %5227
      %v5229 = vmax.f32 %v5021, %v5134
      %5230 = vmax.xlane.f32.xlu0 %v5229
      %v5231 = vpop.xlane.xlu0 %5230
      %v5232 = vmax.f32 %v5024, %v5137
      %5233 = vmax.xlane.f32.xlu0 %v5232
      %v5234 = vpop.xlane.xlu0 %5233
      %v5235 = vmax.f32 %v5027, %v5140
      %5236 = vmax.xlane.f32.xlu0 %v5235
      %v5237 = vpop.xlane.xlu0 %5236
      %v5238 = vmax.f32 %v5030, %v5143
      %5239 = vmax.xlane.f32.xlu0 %v5238
      %v5240 = vpop.xlane.xlu0 %5239
      %v5241 = vmax.f32 %v5033, %v5146
      %5242 = vmax.xlane.f32.xlu0 %v5241
      %v5243 = vpop.xlane.xlu0 %5242
      %v5244 = vmax.f32 %v5036, %v5149
      %5245 = vmax.xlane.f32.xlu0 %v5244
      %v5246 = vpop.xlane.xlu0 %5245
      %v5247 = vmax.f32 %v5039, %v5152
      %5248 = vmax.xlane.f32.xlu0 %v5247
      %v5249 = vpop.xlane.xlu0 %5248
      %v5250 = vmax.f32 %v5042, %v5155
      %5251 = vmax.xlane.f32.xlu0 %v5250
      %v5252 = vpop.xlane.xlu0 %5251
      %v5253 = vmax.f32 %v5045, %v5158
      %5254 = vmax.xlane.f32.xlu0 %v5253
      %v5255 = vpop.xlane.xlu0 %5254
      %v5256 = vmax.f32 %v5048, %v5161
      %5257 = vmax.xlane.f32.xlu0 %v5256
      %v5258 = vpop.xlane.xlu0 %5257
      %v5259 = vmax.f32 %v5051, %v5164
      %5260 = vmax.xlane.f32.xlu0 %v5259
      %v5261 = vpop.xlane.xlu0 %5260
      %v5262 = vmax.f32 %v5054, %v5167
      %5263 = vmax.xlane.f32.xlu0 %v5262
      %v5264 = vpop.xlane.xlu0 %5263
      %v5265 = vmax.f32 %v5057, %v5170
      %5266 = vmax.xlane.f32.xlu0 %v5265
      %v5267 = vpop.xlane.xlu0 %5266
      %v5268 = vmax.f32 %v5060, %v5173
      %5269 = vmax.xlane.f32.xlu0 %v5268
      %v5270 = vpop.xlane.xlu0 %5269
      %v5271 = vmax.f32 %v5063, %v5176
      %5272 = vmax.xlane.f32.xlu0 %v5271
      %v5273 = vpop.xlane.xlu0 %5272
      %v5274 = vmax.f32 %v5066, %v5179
      %5275 = vmax.xlane.f32.xlu0 %v5274
      %v5276 = vpop.xlane.xlu0 %5275
      %v5277 = vmax.f32 %v5069, %v5182
      %5278 = vmax.xlane.f32.xlu0 %v5277
      %v5279 = vpop.xlane.xlu0 %5278
      %v5280 = vmax.f32 %v5072, %v5185
      %5281 = vmax.xlane.f32.xlu0 %v5280
      %v5282 = vpop.xlane.xlu0 %5281
      %v5283 = vmax.f32 %v5075, %v5188
      %5284 = vmax.xlane.f32.xlu0 %v5283
      %v5285 = vpop.xlane.xlu0 %5284
      %v5286 = vmax.f32 %v5078, %v5191
      %5287 = vmax.xlane.f32.xlu0 %v5286
      %v5288 = vpop.xlane.xlu0 %5287
      %v5289 = vmax.f32 %v5081, %v5194
      %5290 = vmax.xlane.f32.xlu0 %v5289
      %v5291 = vpop.xlane.xlu0 %5290
      %v5292 = vmax.f32 %v5084, %v5197
      %5293 = vmax.xlane.f32.xlu0 %v5292
      %v5294 = vpop.xlane.xlu0 %5293
      %v5295 = vmax.f32 %v5087, %v5200
      %5296 = vmax.xlane.f32.xlu0 %v5295
      %v5297 = vpop.xlane.xlu0 %5296
      %v5298 = vmax.f32 %v5090, %v5203
      %5299 = vmax.xlane.f32.xlu0 %v5298
      %v5300 = vpop.xlane.xlu0 %5299
      %v5301 = vsub.f32 %v4997, %v5207
      %v5302 = vsub.f32 %v5110, %v5207
      %v5303 = vsub.f32 %v5000, %v5210
      %v5304 = vsub.f32 %v5113, %v5210
      %v5305 = vsub.f32 %v5003, %v5213
      %v5306 = vsub.f32 %v5116, %v5213
      %v5307 = vsub.f32 %v5006, %v5216
      %v5308 = vsub.f32 %v5119, %v5216
      %v5309 = vsub.f32 %v5009, %v5219
      %v5310 = vsub.f32 %v5122, %v5219
      %v5311 = vsub.f32 %v5012, %v5222
      %v5312 = vsub.f32 %v5125, %v5222
      %v5313 = vsub.f32 %v5015, %v5225
      %v5314 = vsub.f32 %v5128, %v5225
      %v5315 = vsub.f32 %v5018, %v5228
      %v5316 = vsub.f32 %v5131, %v5228
      %v5317 = vsub.f32 %v5021, %v5231
      %v5318 = vsub.f32 %v5134, %v5231
      %v5319 = vsub.f32 %v5024, %v5234
      %v5320 = vsub.f32 %v5137, %v5234
      %v5321 = vsub.f32 %v5027, %v5237
      %v5322 = vsub.f32 %v5140, %v5237
      %v5323 = vsub.f32 %v5030, %v5240
      %v5324 = vsub.f32 %v5143, %v5240
      %v5325 = vsub.f32 %v5033, %v5243
      %v5326 = vsub.f32 %v5146, %v5243
      %v5327 = vsub.f32 %v5036, %v5246
      %v5328 = vsub.f32 %v5149, %v5246
      %v5329 = vsub.f32 %v5039, %v5249
      %v5330 = vsub.f32 %v5152, %v5249
      %v5331 = vsub.f32 %v5042, %v5252
      %v5332 = vsub.f32 %v5155, %v5252
      %v5333 = vsub.f32 %v5045, %v5255
      %v5334 = vsub.f32 %v5158, %v5255
      %v5335 = vsub.f32 %v5048, %v5258
      %v5336 = vsub.f32 %v5161, %v5258
      %v5337 = vsub.f32 %v5051, %v5261
      %v5338 = vsub.f32 %v5164, %v5261
      %v5339 = vsub.f32 %v5054, %v5264
      %v5340 = vsub.f32 %v5167, %v5264
      %v5341 = vsub.f32 %v5057, %v5267
      %v5342 = vsub.f32 %v5170, %v5267
      %v5343 = vsub.f32 %v5060, %v5270
      %v5344 = vsub.f32 %v5173, %v5270
      %v5345 = vsub.f32 %v5063, %v5273
      %v5346 = vsub.f32 %v5176, %v5273
      %v5347 = vsub.f32 %v5066, %v5276
      %v5348 = vsub.f32 %v5179, %v5276
      %v5349 = vsub.f32 %v5069, %v5279
      %v5350 = vsub.f32 %v5182, %v5279
      %v5351 = vsub.f32 %v5072, %v5282
      %v5352 = vsub.f32 %v5185, %v5282
      %v5353 = vsub.f32 %v5075, %v5285
      %v5354 = vsub.f32 %v5188, %v5285
      %v5355 = vsub.f32 %v5078, %v5288
      %v5356 = vsub.f32 %v5191, %v5288
      %v5357 = vsub.f32 %v5081, %v5291
      %v5358 = vsub.f32 %v5194, %v5291
      %v5359 = vsub.f32 %v5084, %v5294
      %v5360 = vsub.f32 %v5197, %v5294
      %v5361 = vsub.f32 %v5087, %v5297
      %v5362 = vsub.f32 %v5200, %v5297
      %v5363 = vsub.f32 %v5090, %v5300
      %v5364 = vsub.f32 %v5203, %v5300
      %v5365 = vmul.f32 %v5301, 1.442695
      %v5366 = vpow.pop %v5365
      %v5367 = vmul.f32 %v5302, 1.442695
      %v5368 = vpow.pop %v5367
      %v5369 = vmul.f32 %v5303, 1.442695
      %v5370 = vpow.pop %v5369
      %v5371 = vmul.f32 %v5304, 1.442695
      %v5372 = vpow.pop %v5371
      %v5373 = vmul.f32 %v5305, 1.442695
      %v5374 = vpow.pop %v5373
      %v5375 = vmul.f32 %v5306, 1.442695
      %v5376 = vpow.pop %v5375
      %v5377 = vmul.f32 %v5307, 1.442695
      %v5378 = vpow.pop %v5377
      %v5379 = vmul.f32 %v5308, 1.442695
      %v5380 = vpow.pop %v5379
      %v5381 = vmul.f32 %v5309, 1.442695
      %v5382 = vpow.pop %v5381
      %v5383 = vmul.f32 %v5310, 1.442695
      %v5384 = vpow.pop %v5383
      %v5385 = vmul.f32 %v5311, 1.442695
      %v5386 = vpow.pop %v5385
      %v5387 = vmul.f32 %v5312, 1.442695
      %v5388 = vpow.pop %v5387
      %v5389 = vmul.f32 %v5313, 1.442695
      %v5390 = vpow.pop %v5389
      %v5391 = vmul.f32 %v5314, 1.442695
      %v5392 = vpow.pop %v5391
      %v5393 = vmul.f32 %v5315, 1.442695
      %v5394 = vpow.pop %v5393
      %v5395 = vmul.f32 %v5316, 1.442695
      %v5396 = vpow.pop %v5395
      %v5397 = vmul.f32 %v5317, 1.442695
      %v5398 = vpow.pop %v5397
      %v5399 = vmul.f32 %v5318, 1.442695
      %v5400 = vpow.pop %v5399
      %v5401 = vmul.f32 %v5319, 1.442695
      %v5402 = vpow.pop %v5401
      %v5403 = vmul.f32 %v5320, 1.442695
      %v5404 = vpow.pop %v5403
      %v5405 = vmul.f32 %v5321, 1.442695
      %v5406 = vpow.pop %v5405
      %v5407 = vmul.f32 %v5322, 1.442695
      %v5408 = vpow.pop %v5407
      %v5409 = vmul.f32 %v5323, 1.442695
      %v5410 = vpow.pop %v5409
      %v5411 = vmul.f32 %v5324, 1.442695
      %v5412 = vpow.pop %v5411
      %v5413 = vmul.f32 %v5325, 1.442695
      %v5414 = vpow.pop %v5413
      %v5415 = vmul.f32 %v5326, 1.442695
      %v5416 = vpow.pop %v5415
      %v5417 = vmul.f32 %v5327, 1.442695
      %v5418 = vpow.pop %v5417
      %v5419 = vmul.f32 %v5328, 1.442695
      %v5420 = vpow.pop %v5419
      %v5421 = vmul.f32 %v5329, 1.442695
      %v5422 = vpow.pop %v5421
      %v5423 = vmul.f32 %v5330, 1.442695
      %v5424 = vpow.pop %v5423
      %v5425 = vmul.f32 %v5331, 1.442695
      %v5426 = vpow.pop %v5425
      %v5427 = vmul.f32 %v5332, 1.442695
      %v5428 = vpow.pop %v5427
      %v5429 = vmul.f32 %v5333, 1.442695
      %v5430 = vpow.pop %v5429
      %v5431 = vmul.f32 %v5334, 1.442695
      %v5432 = vpow.pop %v5431
      %v5433 = vmul.f32 %v5335, 1.442695
      %v5434 = vpow.pop %v5433
      %v5435 = vmul.f32 %v5336, 1.442695
      %v5436 = vpow.pop %v5435
      %v5437 = vmul.f32 %v5337, 1.442695
      %v5438 = vpow.pop %v5437
      %v5439 = vmul.f32 %v5338, 1.442695
      %v5440 = vpow.pop %v5439
      %v5441 = vmul.f32 %v5339, 1.442695
      %v5442 = vpow.pop %v5441
      %v5443 = vmul.f32 %v5340, 1.442695
      %v5444 = vpow.pop %v5443
      %v5445 = vmul.f32 %v5341, 1.442695
      %v5446 = vpow.pop %v5445
      %v5447 = vmul.f32 %v5342, 1.442695
      %v5448 = vpow.pop %v5447
      %v5449 = vmul.f32 %v5343, 1.442695
      %v5450 = vpow.pop %v5449
      %v5451 = vmul.f32 %v5344, 1.442695
      %v5452 = vpow.pop %v5451
      %v5453 = vmul.f32 %v5345, 1.442695
      %v5454 = vpow.pop %v5453
      %v5455 = vmul.f32 %v5346, 1.442695
      %v5456 = vpow.pop %v5455
      %v5457 = vmul.f32 %v5347, 1.442695
      %v5458 = vpow.pop %v5457
      %v5459 = vmul.f32 %v5348, 1.442695
      %v5460 = vpow.pop %v5459
      %v5461 = vmul.f32 %v5349, 1.442695
      %v5462 = vpow.pop %v5461
      %v5463 = vmul.f32 %v5350, 1.442695
      %v5464 = vpow.pop %v5463
      %v5465 = vmul.f32 %v5351, 1.442695
      %v5466 = vpow.pop %v5465
      %v5467 = vmul.f32 %v5352, 1.442695
      %v5468 = vpow.pop %v5467
      %v5469 = vmul.f32 %v5353, 1.442695
      %v5470 = vpow.pop %v5469
      %v5471 = vmul.f32 %v5354, 1.442695
      %v5472 = vpow.pop %v5471
      %v5473 = vmul.f32 %v5355, 1.442695
      %v5474 = vpow.pop %v5473
      %v5475 = vmul.f32 %v5356, 1.442695
      %v5476 = vpow.pop %v5475
      %v5477 = vmul.f32 %v5357, 1.442695
      %v5478 = vpow.pop %v5477
      %v5479 = vmul.f32 %v5358, 1.442695
      %v5480 = vpow.pop %v5479
      %v5481 = vmul.f32 %v5359, 1.442695
      %v5482 = vpow.pop %v5481
      %v5483 = vmul.f32 %v5360, 1.442695
      %v5484 = vpow.pop %v5483
      %v5485 = vmul.f32 %v5361, 1.442695
      %v5486 = vpow.pop %v5485
      %v5487 = vmul.f32 %v5362, 1.442695
      %v5488 = vpow.pop %v5487
      %v5489 = vmul.f32 %v5363, 1.442695
      %v5490 = vpow.pop %v5489
      %v5491 = vmul.f32 %v5364, 1.442695
      %v5492 = vpow.pop %v5491
      %v5493 = vadd.f32 %v5366, %v5368
      %5494 = vadd.xlane.f32.xlu0 %v5493
      %v5495 = vpop.xlane.xlu0 %5494
      %v5496 = vadd.f32 %v5370, %v5372
      %5497 = vadd.xlane.f32.xlu0 %v5496
      %v5498 = vpop.xlane.xlu0 %5497
      %v5499 = vadd.f32 %v5374, %v5376
      %5500 = vadd.xlane.f32.xlu0 %v5499
      %v5501 = vpop.xlane.xlu0 %5500
      %v5502 = vadd.f32 %v5378, %v5380
      %5503 = vadd.xlane.f32.xlu0 %v5502
      %v5504 = vpop.xlane.xlu0 %5503
      %v5505 = vadd.f32 %v5382, %v5384
      %5506 = vadd.xlane.f32.xlu0 %v5505
      %v5507 = vpop.xlane.xlu0 %5506
      %v5508 = vadd.f32 %v5386, %v5388
      %5509 = vadd.xlane.f32.xlu0 %v5508
      %v5510 = vpop.xlane.xlu0 %5509
      %v5511 = vadd.f32 %v5390, %v5392
      %5512 = vadd.xlane.f32.xlu0 %v5511
      %v5513 = vpop.xlane.xlu0 %5512
      %v5514 = vadd.f32 %v5394, %v5396
      %5515 = vadd.xlane.f32.xlu0 %v5514
      %v5516 = vpop.xlane.xlu0 %5515
      %v5517 = vadd.f32 %v5398, %v5400
      %5518 = vadd.xlane.f32.xlu0 %v5517
      %v5519 = vpop.xlane.xlu0 %5518
      %v5520 = vadd.f32 %v5402, %v5404
      %5521 = vadd.xlane.f32.xlu0 %v5520
      %v5522 = vpop.xlane.xlu0 %5521
      %v5523 = vadd.f32 %v5406, %v5408
      %5524 = vadd.xlane.f32.xlu0 %v5523
      %v5525 = vpop.xlane.xlu0 %5524
      %v5526 = vadd.f32 %v5410, %v5412
      %5527 = vadd.xlane.f32.xlu0 %v5526
      %v5528 = vpop.xlane.xlu0 %5527
      %v5529 = vadd.f32 %v5414, %v5416
      %5530 = vadd.xlane.f32.xlu0 %v5529
      %v5531 = vpop.xlane.xlu0 %5530
      %v5532 = vadd.f32 %v5418, %v5420
      %5533 = vadd.xlane.f32.xlu0 %v5532
      %v5534 = vpop.xlane.xlu0 %5533
      %v5535 = vadd.f32 %v5422, %v5424
      %5536 = vadd.xlane.f32.xlu0 %v5535
      %v5537 = vpop.xlane.xlu0 %5536
      %v5538 = vadd.f32 %v5426, %v5428
      %5539 = vadd.xlane.f32.xlu0 %v5538
      %v5540 = vpop.xlane.xlu0 %5539
      %v5541 = vadd.f32 %v5430, %v5432
      %5542 = vadd.xlane.f32.xlu0 %v5541
      %v5543 = vpop.xlane.xlu0 %5542
      %v5544 = vadd.f32 %v5434, %v5436
      %5545 = vadd.xlane.f32.xlu0 %v5544
      %v5546 = vpop.xlane.xlu0 %5545
      %v5547 = vadd.f32 %v5438, %v5440
      %5548 = vadd.xlane.f32.xlu0 %v5547
      %v5549 = vpop.xlane.xlu0 %5548
      %v5550 = vadd.f32 %v5442, %v5444
      %5551 = vadd.xlane.f32.xlu0 %v5550
      %v5552 = vpop.xlane.xlu0 %5551
      %v5553 = vadd.f32 %v5446, %v5448
      %5554 = vadd.xlane.f32.xlu0 %v5553
      %v5555 = vpop.xlane.xlu0 %5554
      %v5556 = vadd.f32 %v5450, %v5452
      %5557 = vadd.xlane.f32.xlu0 %v5556
      %v5558 = vpop.xlane.xlu0 %5557
      %v5559 = vadd.f32 %v5454, %v5456
      %5560 = vadd.xlane.f32.xlu0 %v5559
      %v5561 = vpop.xlane.xlu0 %5560
      %v5562 = vadd.f32 %v5458, %v5460
      %5563 = vadd.xlane.f32.xlu0 %v5562
      %v5564 = vpop.xlane.xlu0 %5563
      %v5565 = vadd.f32 %v5462, %v5464
      %5566 = vadd.xlane.f32.xlu0 %v5565
      %v5567 = vpop.xlane.xlu0 %5566
      %v5568 = vadd.f32 %v5466, %v5468
      %5569 = vadd.xlane.f32.xlu0 %v5568
      %v5570 = vpop.xlane.xlu0 %5569
      %v5571 = vadd.f32 %v5470, %v5472
      %5572 = vadd.xlane.f32.xlu0 %v5571
      %v5573 = vpop.xlane.xlu0 %5572
      %v5574 = vadd.f32 %v5474, %v5476
      %5575 = vadd.xlane.f32.xlu0 %v5574
      %v5576 = vpop.xlane.xlu0 %5575
      %v5577 = vadd.f32 %v5478, %v5480
      %5578 = vadd.xlane.f32.xlu0 %v5577
      %v5579 = vpop.xlane.xlu0 %5578
      %v5580 = vadd.f32 %v5482, %v5484
      %5581 = vadd.xlane.f32.xlu0 %v5580
      %v5582 = vpop.xlane.xlu0 %5581
      %v5583 = vadd.f32 %v5486, %v5488
      %5584 = vadd.xlane.f32.xlu0 %v5583
      %v5585 = vpop.xlane.xlu0 %5584
      %v5586 = vadd.f32 %v5490, %v5492
      %5587 = vadd.xlane.f32.xlu0 %v5586
      %v5588 = vpop.xlane.xlu0 %5587
      %v5589 = vrcp.pop %v5495
      %v5590 = vrcp.pop %v5498
      %v5591 = vrcp.pop %v5501
      %v5592 = vrcp.pop %v5504
      %v5593 = vrcp.pop %v5507
      %v5594 = vrcp.pop %v5510
      %v5595 = vrcp.pop %v5513
      %v5596 = vrcp.pop %v5516
      %v5597 = vrcp.pop %v5519
      %v5598 = vrcp.pop %v5522
      %v5599 = vrcp.pop %v5525
      %v5600 = vrcp.pop %v5528
      %v5601 = vrcp.pop %v5531
      %v5602 = vrcp.pop %v5534
      %v5603 = vrcp.pop %v5537
      %v5604 = vrcp.pop %v5540
      %v5605 = vrcp.pop %v5543
      %v5606 = vrcp.pop %v5546
      %v5607 = vrcp.pop %v5549
      %v5608 = vrcp.pop %v5552
      %v5609 = vrcp.pop %v5555
      %v5610 = vrcp.pop %v5558
      %v5611 = vrcp.pop %v5561
      %v5612 = vrcp.pop %v5564
      %v5613 = vrcp.pop %v5567
      %v5614 = vrcp.pop %v5570
      %v5615 = vrcp.pop %v5573
      %v5616 = vrcp.pop %v5576
      %v5617 = vrcp.pop %v5579
      %v5618 = vrcp.pop %v5582
      %v5619 = vrcp.pop %v5585
      %v5620 = vrcp.pop %v5588
      %v5621 = vmul.f32 %v5366, %v5589
      %v5622 = vmul.f32 %v5368, %v5589
      %v5623 = vmul.f32 %v5370, %v5590
      %v5624 = vmul.f32 %v5372, %v5590
      %v5625 = vmul.f32 %v5374, %v5591
      %v5626 = vmul.f32 %v5376, %v5591
      %v5627 = vmul.f32 %v5378, %v5592
      %v5628 = vmul.f32 %v5380, %v5592
      %v5629 = vmul.f32 %v5382, %v5593
      %v5630 = vmul.f32 %v5384, %v5593
      %v5631 = vmul.f32 %v5386, %v5594
      %v5632 = vmul.f32 %v5388, %v5594
      %v5633 = vmul.f32 %v5390, %v5595
      %v5634 = vmul.f32 %v5392, %v5595
      %v5635 = vmul.f32 %v5394, %v5596
      %v5636 = vmul.f32 %v5396, %v5596
      %v5637 = vmul.f32 %v5398, %v5597
      %v5638 = vmul.f32 %v5400, %v5597
      %v5639 = vmul.f32 %v5402, %v5598
      %v5640 = vmul.f32 %v5404, %v5598
      %v5641 = vmul.f32 %v5406, %v5599
      %v5642 = vmul.f32 %v5408, %v5599
      %v5643 = vmul.f32 %v5410, %v5600
      %v5644 = vmul.f32 %v5412, %v5600
      %v5645 = vmul.f32 %v5414, %v5601
      %v5646 = vmul.f32 %v5416, %v5601
      %v5647 = vmul.f32 %v5418, %v5602
      %v5648 = vmul.f32 %v5420, %v5602
      %v5649 = vmul.f32 %v5422, %v5603
      %v5650 = vmul.f32 %v5424, %v5603
      %v5651 = vmul.f32 %v5426, %v5604
      %v5652 = vmul.f32 %v5428, %v5604
      %v5653 = vmul.f32 %v5430, %v5605
      %v5654 = vmul.f32 %v5432, %v5605
      %v5655 = vmul.f32 %v5434, %v5606
      %v5656 = vmul.f32 %v5436, %v5606
      %v5657 = vmul.f32 %v5438, %v5607
      %v5658 = vmul.f32 %v5440, %v5607
      %v5659 = vmul.f32 %v5442, %v5608
      %v5660 = vmul.f32 %v5444, %v5608
      %v5661 = vmul.f32 %v5446, %v5609
      %v5662 = vmul.f32 %v5448, %v5609
      %v5663 = vmul.f32 %v5450, %v5610
      %v5664 = vmul.f32 %v5452, %v5610
      %v5665 = vmul.f32 %v5454, %v5611
      %v5666 = vmul.f32 %v5456, %v5611
      %v5667 = vmul.f32 %v5458, %v5612
      %v5668 = vmul.f32 %v5460, %v5612
      %v5669 = vmul.f32 %v5462, %v5613
      %v5670 = vmul.f32 %v5464, %v5613
      %v5671 = vmul.f32 %v5466, %v5614
      %v5672 = vmul.f32 %v5468, %v5614
      %v5673 = vmul.f32 %v5470, %v5615
      %v5674 = vmul.f32 %v5472, %v5615
      %v5675 = vmul.f32 %v5474, %v5616
      %v5676 = vmul.f32 %v5476, %v5616
      %v5677 = vmul.f32 %v5478, %v5617
      %v5678 = vmul.f32 %v5480, %v5617
      %v5679 = vmul.f32 %v5482, %v5618
      %v5680 = vmul.f32 %v5484, %v5618
      %v5681 = vmul.f32 %v5486, %v5619
      %v5682 = vmul.f32 %v5488, %v5619
      %v5683 = vmul.f32 %v5490, %v5620
      %v5684 = vmul.f32 %v5492, %v5620
      %5685 = vmatpush.xpose.msra.mxu0 %v5651
      %5686 = vmatpush.xpose.msra.mxu0 %v5649
      %5687 = vmatpush.xpose.msra.mxu0 %v5647
      %5688 = vmatpush.xpose.msra.mxu0 %v5645
      %5689 = vmatpush.xpose.msra.mxu0 %v5643
      %5690 = vmatpush.xpose.msra.mxu0 %v5641
      %5691 = vmatpush.xpose.msra.mxu0 %v5639
      %5692 = vmatpush.xpose.msra.mxu0 %v5637
      %5693 = vmatpush.xpose.msra.mxu0 %v5635
      %5694 = vmatpush.xpose.msra.mxu0 %v5633
      %5695 = vmatpush.xpose.msra.mxu0 %v5631
      %5696 = vmatpush.xpose.msra.mxu0 %v5629
      %5697 = vmatpush.xpose.msra.mxu0 %v5627
      %5698 = vmatpush.xpose.msra.mxu0 %v5625
      %5699 = vmatpush.xpose.msra.mxu0 %v5623
      %5700 = vmatpush.xpose.msra.mxu0 %v5621
      %5701 = vmatmul.f32.gmra.mxu0 %v924
      %v5702 = vpop.f32.mrf.mxu0
      %v5703 = vadd.f32 0.0, %v5702
      %5704 = vdwg.mxu0
      %5705 = vmatpush.xpose.msra.mxu0 %v5652
      %5706 = vmatpush.xpose.msra.mxu0 %v5650
      %5707 = vmatpush.xpose.msra.mxu0 %v5648
      %5708 = vmatpush.xpose.msra.mxu0 %v5646
      %5709 = vmatpush.xpose.msra.mxu0 %v5644
      %5710 = vmatpush.xpose.msra.mxu0 %v5642
      %5711 = vmatpush.xpose.msra.mxu0 %v5640
      %5712 = vmatpush.xpose.msra.mxu0 %v5638
      %5713 = vmatpush.xpose.msra.mxu0 %v5636
      %5714 = vmatpush.xpose.msra.mxu0 %v5634
      %5715 = vmatpush.xpose.msra.mxu0 %v5632
      %5716 = vmatpush.xpose.msra.mxu0 %v5630
      %5717 = vmatpush.xpose.msra.mxu0 %v5628
      %5718 = vmatpush.xpose.msra.mxu0 %v5626
      %5719 = vmatpush.xpose.msra.mxu0 %v5624
      %5720 = vmatpush.xpose.msra.mxu0 %v5622
      %5721 = vmatmul.f32.gmra.mxu0 %v947
      %v5722 = vpop.f32.mrf.mxu0
      %v5723 = vadd.f32 %v5703, %v5722
      %5724 = vdwg.mxu0
      %5725 = vmatpush.xpose.msra.mxu0 %v5683
      %5726 = vmatpush.xpose.msra.mxu0 %v5681
      %5727 = vmatpush.xpose.msra.mxu0 %v5679
      %5728 = vmatpush.xpose.msra.mxu0 %v5677
      %5729 = vmatpush.xpose.msra.mxu0 %v5675
      %5730 = vmatpush.xpose.msra.mxu0 %v5673
      %5731 = vmatpush.xpose.msra.mxu0 %v5671
      %5732 = vmatpush.xpose.msra.mxu0 %v5669
      %5733 = vmatpush.xpose.msra.mxu0 %v5667
      %5734 = vmatpush.xpose.msra.mxu0 %v5665
      %5735 = vmatpush.xpose.msra.mxu0 %v5663
      %5736 = vmatpush.xpose.msra.mxu0 %v5661
      %5737 = vmatpush.xpose.msra.mxu0 %v5659
      %5738 = vmatpush.xpose.msra.mxu0 %v5657
      %5739 = vmatpush.xpose.msra.mxu0 %v5655
      %5740 = vmatpush.xpose.msra.mxu0 %v5653
      %5741 = vmatmul.f32.gmra.mxu0 %v924
      %v5742 = vpop.f32.mrf.mxu0
      %v5743 = vadd.f32 0.0, %v5742
      %5744 = vdwg.mxu0
      %5745 = vmatpush.xpose.msra.mxu0 %v5684
      %5746 = vmatpush.xpose.msra.mxu0 %v5682
      %5747 = vmatpush.xpose.msra.mxu0 %v5680
      %5748 = vmatpush.xpose.msra.mxu0 %v5678
      %5749 = vmatpush.xpose.msra.mxu0 %v5676
      %5750 = vmatpush.xpose.msra.mxu0 %v5674
      %5751 = vmatpush.xpose.msra.mxu0 %v5672
      %5752 = vmatpush.xpose.msra.mxu0 %v5670
      %5753 = vmatpush.xpose.msra.mxu0 %v5668
      %5754 = vmatpush.xpose.msra.mxu0 %v5666
      %5755 = vmatpush.xpose.msra.mxu0 %v5664
      %5756 = vmatpush.xpose.msra.mxu0 %v5662
      %5757 = vmatpush.xpose.msra.mxu0 %v5660
      %5758 = vmatpush.xpose.msra.mxu0 %v5658
      %5759 = vmatpush.xpose.msra.mxu0 %v5656
      %5760 = vmatpush.xpose.msra.mxu0 %v5654
      %5761 = vmatmul.f32.gmra.mxu0 %v947
      %v5762 = vpop.f32.mrf.mxu0
      %v5763 = vadd.f32 %v5743, %v5762
      %5764 = vdwg.mxu0
      %5765 = vst [vmem:[#allocation2 + $0x10] sm:$0x3] %v5723
      %5766 = vst [vmem:[#allocation2 + $0x18] sm:$0x3] %v5763
      %v5769 = vrot.slane %v792, 2
      %v5770 = vrot.slane %v815, 2
      %5773 = vxpose.xlu0.b32.start [1/16] %v5769, 128
      %5774 = vxpose.xlu0.b32.cont [2/16] 0.0, 128
      %5775 = vxpose.xlu0.b32.cont [3/16] 0.0, 128
      %5776 = vxpose.xlu0.b32.cont [4/16] 0.0, 128
      %5777 = vxpose.xlu0.b32.cont [5/16] 0.0, 128
      %5778 = vxpose.xlu0.b32.cont [6/16] 0.0, 128
      %5779 = vxpose.xlu0.b32.cont [7/16] 0.0, 128
      %5780 = vxpose.xlu0.b32.cont [8/16] 0.0, 128
      %5781 = vxpose.xlu0.b32.cont [9/16] 0.0, 128
      %5782 = vxpose.xlu0.b32.cont [10/16] 0.0, 128
      %5783 = vxpose.xlu0.b32.cont [11/16] 0.0, 128
      %5784 = vxpose.xlu0.b32.cont [12/16] 0.0, 128
      %5785 = vxpose.xlu0.b32.cont [13/16] 0.0, 128
      %5786 = vxpose.xlu0.b32.cont [14/16] 0.0, 128
      %5787 = vxpose.xlu0.b32.cont [15/16] 0.0, 128
      %5788 = vxpose.xlu0.b32.end [16/16] 0.0, 128
      %v5789 = vpop.trf.xlu0
      %v5790 = vpop.trf.xlu0
      %v5791 = vpop.trf.xlu0
      %v5792 = vpop.trf.xlu0
      %v5793 = vpop.trf.xlu0
      %v5794 = vpop.trf.xlu0
      %v5795 = vpop.trf.xlu0
      %v5796 = vpop.trf.xlu0
      %v5797 = vpop.trf.xlu0
      %v5798 = vpop.trf.xlu0
      %v5799 = vpop.trf.xlu0
      %v5800 = vpop.trf.xlu0
      %v5801 = vpop.trf.xlu0
      %v5802 = vpop.trf.xlu0
      %v5803 = vpop.trf.xlu0
      %v5804 = vpop.trf.xlu0
      %5805 = vxpose.xlu0.b32.start [1/16] %v5770, 128
      %5806 = vxpose.xlu0.b32.cont [2/16] 0.0, 128
      %5807 = vxpose.xlu0.b32.cont [3/16] 0.0, 128
      %5808 = vxpose.xlu0.b32.cont [4/16] 0.0, 128
      %5809 = vxpose.xlu0.b32.cont [5/16] 0.0, 128
      %5810 = vxpose.xlu0.b32.cont [6/16] 0.0, 128
      %5811 = vxpose.xlu0.b32.cont [7/16] 0.0, 128
      %5812 = vxpose.xlu0.b32.cont [8/16] 0.0, 128
      %5813 = vxpose.xlu0.b32.cont [9/16] 0.0, 128
      %5814 = vxpose.xlu0.b32.cont [10/16] 0.0, 128
      %5815 = vxpose.xlu0.b32.cont [11/16] 0.0, 128
      %5816 = vxpose.xlu0.b32.cont [12/16] 0.0, 128
      %5817 = vxpose.xlu0.b32.cont [13/16] 0.0, 128
      %5818 = vxpose.xlu0.b32.cont [14/16] 0.0, 128
      %5819 = vxpose.xlu0.b32.cont [15/16] 0.0, 128
      %5820 = vxpose.xlu0.b32.end [16/16] 0.0, 128
      %v5821 = vpop.trf.xlu0
      %v5822 = vpop.trf.xlu0
      %v5823 = vpop.trf.xlu0
      %v5824 = vpop.trf.xlu0
      %v5825 = vpop.trf.xlu0
      %v5826 = vpop.trf.xlu0
      %v5827 = vpop.trf.xlu0
      %v5828 = vpop.trf.xlu0
      %v5829 = vpop.trf.xlu0
      %v5830 = vpop.trf.xlu0
      %v5831 = vpop.trf.xlu0
      %v5832 = vpop.trf.xlu0
      %v5833 = vpop.trf.xlu0
      %v5834 = vpop.trf.xlu0
      %v5835 = vpop.trf.xlu0
      %v5836 = vpop.trf.xlu0
      %v5837 = vrot.slane %v858, 2
      %v5838 = vrot.slane %v881, 2
      %v5840 = vsel %vm1013, %v5789, 0
      %v5843 = vsel %vm1013, %v5790, 0
      %v5846 = vsel %vm1013, %v5791, 0
      %v5849 = vsel %vm1013, %v5792, 0
      %v5852 = vsel %vm1013, %v5793, 0
      %v5855 = vsel %vm1013, %v5794, 0
      %v5858 = vsel %vm1013, %v5795, 0
      %v5861 = vsel %vm1013, %v5796, 0
      %v5864 = vsel %vm1013, %v5797, 0
      %v5867 = vsel %vm1013, %v5798, 0
      %v5870 = vsel %vm1013, %v5799, 0
      %v5873 = vsel %vm1013, %v5800, 0
      %v5876 = vsel %vm1013, %v5801, 0
      %v5879 = vsel %vm1013, %v5802, 0
      %v5882 = vsel %vm1013, %v5803, 0
      %v5885 = vsel %vm1013, %v5804, 0
      %v5888 = vsel %vm1013, %v5821, 0
      %v5891 = vsel %vm1013, %v5822, 0
      %v5894 = vsel %vm1013, %v5823, 0
      %v5897 = vsel %vm1013, %v5824, 0
      %v5900 = vsel %vm1013, %v5825, 0
      %v5903 = vsel %vm1013, %v5826, 0
      %v5906 = vsel %vm1013, %v5827, 0
      %v5909 = vsel %vm1013, %v5828, 0
      %v5912 = vsel %vm1013, %v5829, 0
      %v5915 = vsel %vm1013, %v5830, 0
      %v5918 = vsel %vm1013, %v5831, 0
      %v5921 = vsel %vm1013, %v5832, 0
      %v5924 = vsel %vm1013, %v5833, 0
      %v5927 = vsel %vm1013, %v5834, 0
      %v5930 = vsel %vm1013, %v5835, 0
      %v5933 = vsel %vm1013, %v5836, 0
      %v5935 = vsel %vm1110, %v5837, 0
      %v5937 = vsel %vm1110, %v5838, 0
      %5939 = vmatpush.msra.mxu0 0.0
      %5940 = vmatpush.msra.mxu0 0.0
      %5941 = vmatpush.msra.mxu0 0.0
      %5942 = vmatpush.msra.mxu0 0.0
      %5943 = vmatpush.msra.mxu0 0.0
      %5944 = vmatpush.msra.mxu0 0.0
      %5945 = vmatpush.msra.mxu0 0.0
      %5946 = vmatpush.msra.mxu0 0.0
      %5947 = vmatpush.msra.mxu0 0.0
      %5948 = vmatpush.msra.mxu0 0.0
      %5949 = vmatpush.msra.mxu0 0.0
      %5950 = vmatpush.msra.mxu0 0.0
      %5951 = vmatpush.msra.mxu0 0.0
      %5952 = vmatpush.msra.mxu0 0.0
      %5953 = vmatpush.msra.mxu0 0.0
      %5954 = vmatpush.msra.mxu0 %v5935
      %5955 = vmatmul.f32.gmra.mxu0 %v5840
      %v5956 = vpop.f32.mrf.mxu0
      %v5957 = vadd.f32 0.0, %v5956
      %5958 = vmatmul.f32.gmra.mxu0 %v5843
      %v5959 = vpop.f32.mrf.mxu0
      %v5960 = vadd.f32 0.0, %v5959
      %5961 = vmatmul.f32.gmra.mxu0 %v5846
      %v5962 = vpop.f32.mrf.mxu0
      %v5963 = vadd.f32 0.0, %v5962
      %5964 = vmatmul.f32.gmra.mxu0 %v5849
      %v5965 = vpop.f32.mrf.mxu0
      %v5966 = vadd.f32 0.0, %v5965
      %5967 = vmatmul.f32.gmra.mxu0 %v5852
      %v5968 = vpop.f32.mrf.mxu0
      %v5969 = vadd.f32 0.0, %v5968
      %5970 = vmatmul.f32.gmra.mxu0 %v5855
      %v5971 = vpop.f32.mrf.mxu0
      %v5972 = vadd.f32 0.0, %v5971
      %5973 = vmatmul.f32.gmra.mxu0 %v5858
      %v5974 = vpop.f32.mrf.mxu0
      %v5975 = vadd.f32 0.0, %v5974
      %5976 = vmatmul.f32.gmra.mxu0 %v5861
      %v5977 = vpop.f32.mrf.mxu0
      %v5978 = vadd.f32 0.0, %v5977
      %5979 = vmatmul.f32.gmra.mxu0 %v5864
      %v5980 = vpop.f32.mrf.mxu0
      %v5981 = vadd.f32 0.0, %v5980
      %5982 = vmatmul.f32.gmra.mxu0 %v5867
      %v5983 = vpop.f32.mrf.mxu0
      %v5984 = vadd.f32 0.0, %v5983
      %5985 = vmatmul.f32.gmra.mxu0 %v5870
      %v5986 = vpop.f32.mrf.mxu0
      %v5987 = vadd.f32 0.0, %v5986
      %5988 = vmatmul.f32.gmra.mxu0 %v5873
      %v5989 = vpop.f32.mrf.mxu0
      %v5990 = vadd.f32 0.0, %v5989
      %5991 = vmatmul.f32.gmra.mxu0 %v5876
      %v5992 = vpop.f32.mrf.mxu0
      %v5993 = vadd.f32 0.0, %v5992
      %5994 = vmatmul.f32.gmra.mxu0 %v5879
      %v5995 = vpop.f32.mrf.mxu0
      %v5996 = vadd.f32 0.0, %v5995
      %5997 = vmatmul.f32.gmra.mxu0 %v5882
      %v5998 = vpop.f32.mrf.mxu0
      %v5999 = vadd.f32 0.0, %v5998
      %6000 = vmatmul.f32.gmra.mxu0 %v5885
      %v6001 = vpop.f32.mrf.mxu0
      %v6002 = vadd.f32 0.0, %v6001
      %6003 = vmatmul.f32.gmra.mxu0 %v5888
      %v6004 = vpop.f32.mrf.mxu0
      %v6005 = vadd.f32 0.0, %v6004
      %6006 = vmatmul.f32.gmra.mxu0 %v5891
      %v6007 = vpop.f32.mrf.mxu0
      %v6008 = vadd.f32 0.0, %v6007
      %6009 = vmatmul.f32.gmra.mxu0 %v5894
      %v6010 = vpop.f32.mrf.mxu0
      %v6011 = vadd.f32 0.0, %v6010
      %6012 = vmatmul.f32.gmra.mxu0 %v5897
      %v6013 = vpop.f32.mrf.mxu0
      %v6014 = vadd.f32 0.0, %v6013
      %6015 = vmatmul.f32.gmra.mxu0 %v5900
      %v6016 = vpop.f32.mrf.mxu0
      %v6017 = vadd.f32 0.0, %v6016
      %6018 = vmatmul.f32.gmra.mxu0 %v5903
      %v6019 = vpop.f32.mrf.mxu0
      %v6020 = vadd.f32 0.0, %v6019
      %6021 = vmatmul.f32.gmra.mxu0 %v5906
      %v6022 = vpop.f32.mrf.mxu0
      %v6023 = vadd.f32 0.0, %v6022
      %6024 = vmatmul.f32.gmra.mxu0 %v5909
      %v6025 = vpop.f32.mrf.mxu0
      %v6026 = vadd.f32 0.0, %v6025
      %6027 = vmatmul.f32.gmra.mxu0 %v5912
      %v6028 = vpop.f32.mrf.mxu0
      %v6029 = vadd.f32 0.0, %v6028
      %6030 = vmatmul.f32.gmra.mxu0 %v5915
      %v6031 = vpop.f32.mrf.mxu0
      %v6032 = vadd.f32 0.0, %v6031
      %6033 = vmatmul.f32.gmra.mxu0 %v5918
      %v6034 = vpop.f32.mrf.mxu0
      %v6035 = vadd.f32 0.0, %v6034
      %6036 = vmatmul.f32.gmra.mxu0 %v5921
      %v6037 = vpop.f32.mrf.mxu0
      %v6038 = vadd.f32 0.0, %v6037
      %6039 = vmatmul.f32.gmra.mxu0 %v5924
      %v6040 = vpop.f32.mrf.mxu0
      %v6041 = vadd.f32 0.0, %v6040
      %6042 = vmatmul.f32.gmra.mxu0 %v5927
      %v6043 = vpop.f32.mrf.mxu0
      %v6044 = vadd.f32 0.0, %v6043
      %6045 = vmatmul.f32.gmra.mxu0 %v5930
      %v6046 = vpop.f32.mrf.mxu0
      %v6047 = vadd.f32 0.0, %v6046
      %6048 = vmatmul.f32.gmra.mxu0 %v5933
      %v6049 = vpop.f32.mrf.mxu0
      %v6050 = vadd.f32 0.0, %v6049
      %6051 = vdwg.mxu0
      %6052 = vmatpush.msra.mxu0 0.0
      %6053 = vmatpush.msra.mxu0 0.0
      %6054 = vmatpush.msra.mxu0 0.0
      %6055 = vmatpush.msra.mxu0 0.0
      %6056 = vmatpush.msra.mxu0 0.0
      %6057 = vmatpush.msra.mxu0 0.0
      %6058 = vmatpush.msra.mxu0 0.0
      %6059 = vmatpush.msra.mxu0 0.0
      %6060 = vmatpush.msra.mxu0 0.0
      %6061 = vmatpush.msra.mxu0 0.0
      %6062 = vmatpush.msra.mxu0 0.0
      %6063 = vmatpush.msra.mxu0 0.0
      %6064 = vmatpush.msra.mxu0 0.0
      %6065 = vmatpush.msra.mxu0 0.0
      %6066 = vmatpush.msra.mxu0 0.0
      %6067 = vmatpush.msra.mxu0 %v5937
      %6068 = vmatmul.f32.gmra.mxu0 %v5840
      %v6069 = vpop.f32.mrf.mxu0
      %v6070 = vadd.f32 0.0, %v6069
      %6071 = vmatmul.f32.gmra.mxu0 %v5843
      %v6072 = vpop.f32.mrf.mxu0
      %v6073 = vadd.f32 0.0, %v6072
      %6074 = vmatmul.f32.gmra.mxu0 %v5846
      %v6075 = vpop.f32.mrf.mxu0
      %v6076 = vadd.f32 0.0, %v6075
      %6077 = vmatmul.f32.gmra.mxu0 %v5849
      %v6078 = vpop.f32.mrf.mxu0
      %v6079 = vadd.f32 0.0, %v6078
      %6080 = vmatmul.f32.gmra.mxu0 %v5852
      %v6081 = vpop.f32.mrf.mxu0
      %v6082 = vadd.f32 0.0, %v6081
      %6083 = vmatmul.f32.gmra.mxu0 %v5855
      %v6084 = vpop.f32.mrf.mxu0
      %v6085 = vadd.f32 0.0, %v6084
      %6086 = vmatmul.f32.gmra.mxu0 %v5858
      %v6087 = vpop.f32.mrf.mxu0
      %v6088 = vadd.f32 0.0, %v6087
      %6089 = vmatmul.f32.gmra.mxu0 %v5861
      %v6090 = vpop.f32.mrf.mxu0
      %v6091 = vadd.f32 0.0, %v6090
      %6092 = vmatmul.f32.gmra.mxu0 %v5864
      %v6093 = vpop.f32.mrf.mxu0
      %v6094 = vadd.f32 0.0, %v6093
      %6095 = vmatmul.f32.gmra.mxu0 %v5867
      %v6096 = vpop.f32.mrf.mxu0
      %v6097 = vadd.f32 0.0, %v6096
      %6098 = vmatmul.f32.gmra.mxu0 %v5870
      %v6099 = vpop.f32.mrf.mxu0
      %v6100 = vadd.f32 0.0, %v6099
      %6101 = vmatmul.f32.gmra.mxu0 %v5873
      %v6102 = vpop.f32.mrf.mxu0
      %v6103 = vadd.f32 0.0, %v6102
      %6104 = vmatmul.f32.gmra.mxu0 %v5876
      %v6105 = vpop.f32.mrf.mxu0
      %v6106 = vadd.f32 0.0, %v6105
      %6107 = vmatmul.f32.gmra.mxu0 %v5879
      %v6108 = vpop.f32.mrf.mxu0
      %v6109 = vadd.f32 0.0, %v6108
      %6110 = vmatmul.f32.gmra.mxu0 %v5882
      %v6111 = vpop.f32.mrf.mxu0
      %v6112 = vadd.f32 0.0, %v6111
      %6113 = vmatmul.f32.gmra.mxu0 %v5885
      %v6114 = vpop.f32.mrf.mxu0
      %v6115 = vadd.f32 0.0, %v6114
      %6116 = vmatmul.f32.gmra.mxu0 %v5888
      %v6117 = vpop.f32.mrf.mxu0
      %v6118 = vadd.f32 0.0, %v6117
      %6119 = vmatmul.f32.gmra.mxu0 %v5891
      %v6120 = vpop.f32.mrf.mxu0
      %v6121 = vadd.f32 0.0, %v6120
      %6122 = vmatmul.f32.gmra.mxu0 %v5894
      %v6123 = vpop.f32.mrf.mxu0
      %v6124 = vadd.f32 0.0, %v6123
      %6125 = vmatmul.f32.gmra.mxu0 %v5897
      %v6126 = vpop.f32.mrf.mxu0
      %v6127 = vadd.f32 0.0, %v6126
      %6128 = vmatmul.f32.gmra.mxu0 %v5900
      %v6129 = vpop.f32.mrf.mxu0
      %v6130 = vadd.f32 0.0, %v6129
      %6131 = vmatmul.f32.gmra.mxu0 %v5903
      %v6132 = vpop.f32.mrf.mxu0
      %v6133 = vadd.f32 0.0, %v6132
      %6134 = vmatmul.f32.gmra.mxu0 %v5906
      %v6135 = vpop.f32.mrf.mxu0
      %v6136 = vadd.f32 0.0, %v6135
      %6137 = vmatmul.f32.gmra.mxu0 %v5909
      %v6138 = vpop.f32.mrf.mxu0
      %v6139 = vadd.f32 0.0, %v6138
      %6140 = vmatmul.f32.gmra.mxu0 %v5912
      %v6141 = vpop.f32.mrf.mxu0
      %v6142 = vadd.f32 0.0, %v6141
      %6143 = vmatmul.f32.gmra.mxu0 %v5915
      %v6144 = vpop.f32.mrf.mxu0
      %v6145 = vadd.f32 0.0, %v6144
      %6146 = vmatmul.f32.gmra.mxu0 %v5918
      %v6147 = vpop.f32.mrf.mxu0
      %v6148 = vadd.f32 0.0, %v6147
      %6149 = vmatmul.f32.gmra.mxu0 %v5921
      %v6150 = vpop.f32.mrf.mxu0
      %v6151 = vadd.f32 0.0, %v6150
      %6152 = vmatmul.f32.gmra.mxu0 %v5924
      %v6153 = vpop.f32.mrf.mxu0
      %v6154 = vadd.f32 0.0, %v6153
      %6155 = vmatmul.f32.gmra.mxu0 %v5927
      %v6156 = vpop.f32.mrf.mxu0
      %v6157 = vadd.f32 0.0, %v6156
      %6158 = vmatmul.f32.gmra.mxu0 %v5930
      %v6159 = vpop.f32.mrf.mxu0
      %v6160 = vadd.f32 0.0, %v6159
      %6161 = vmatmul.f32.gmra.mxu0 %v5933
      %v6162 = vpop.f32.mrf.mxu0
      %v6163 = vadd.f32 0.0, %v6162
      %6164 = vdwg.mxu0
      %v6165 = vmax.f32 %v5957, %v6070
      %6166 = vmax.xlane.f32.xlu0 %v6165
      %v6167 = vpop.xlane.xlu0 %6166
      %v6168 = vmax.f32 %v5960, %v6073
      %6169 = vmax.xlane.f32.xlu0 %v6168
      %v6170 = vpop.xlane.xlu0 %6169
      %v6171 = vmax.f32 %v5963, %v6076
      %6172 = vmax.xlane.f32.xlu0 %v6171
      %v6173 = vpop.xlane.xlu0 %6172
      %v6174 = vmax.f32 %v5966, %v6079
      %6175 = vmax.xlane.f32.xlu0 %v6174
      %v6176 = vpop.xlane.xlu0 %6175
      %v6177 = vmax.f32 %v5969, %v6082
      %6178 = vmax.xlane.f32.xlu0 %v6177
      %v6179 = vpop.xlane.xlu0 %6178
      %v6180 = vmax.f32 %v5972, %v6085
      %6181 = vmax.xlane.f32.xlu0 %v6180
      %v6182 = vpop.xlane.xlu0 %6181
      %v6183 = vmax.f32 %v5975, %v6088
      %6184 = vmax.xlane.f32.xlu0 %v6183
      %v6185 = vpop.xlane.xlu0 %6184
      %v6186 = vmax.f32 %v5978, %v6091
      %6187 = vmax.xlane.f32.xlu0 %v6186
      %v6188 = vpop.xlane.xlu0 %6187
      %v6189 = vmax.f32 %v5981, %v6094
      %6190 = vmax.xlane.f32.xlu0 %v6189
      %v6191 = vpop.xlane.xlu0 %6190
      %v6192 = vmax.f32 %v5984, %v6097
      %6193 = vmax.xlane.f32.xlu0 %v6192
      %v6194 = vpop.xlane.xlu0 %6193
      %v6195 = vmax.f32 %v5987, %v6100
      %6196 = vmax.xlane.f32.xlu0 %v6195
      %v6197 = vpop.xlane.xlu0 %6196
      %v6198 = vmax.f32 %v5990, %v6103
      %6199 = vmax.xlane.f32.xlu0 %v6198
      %v6200 = vpop.xlane.xlu0 %6199
      %v6201 = vmax.f32 %v5993, %v6106
      %6202 = vmax.xlane.f32.xlu0 %v6201
      %v6203 = vpop.xlane.xlu0 %6202
      %v6204 = vmax.f32 %v5996, %v6109
      %6205 = vmax.xlane.f32.xlu0 %v6204
      %v6206 = vpop.xlane.xlu0 %6205
      %v6207 = vmax.f32 %v5999, %v6112
      %6208 = vmax.xlane.f32.xlu0 %v6207
      %v6209 = vpop.xlane.xlu0 %6208
      %v6210 = vmax.f32 %v6002, %v6115
      %6211 = vmax.xlane.f32.xlu0 %v6210
      %v6212 = vpop.xlane.xlu0 %6211
      %v6213 = vmax.f32 %v6005, %v6118
      %6214 = vmax.xlane.f32.xlu0 %v6213
      %v6215 = vpop.xlane.xlu0 %6214
      %v6216 = vmax.f32 %v6008, %v6121
      %6217 = vmax.xlane.f32.xlu0 %v6216
      %v6218 = vpop.xlane.xlu0 %6217
      %v6219 = vmax.f32 %v6011, %v6124
      %6220 = vmax.xlane.f32.xlu0 %v6219
      %v6221 = vpop.xlane.xlu0 %6220
      %v6222 = vmax.f32 %v6014, %v6127
      %6223 = vmax.xlane.f32.xlu0 %v6222
      %v6224 = vpop.xlane.xlu0 %6223
      %v6225 = vmax.f32 %v6017, %v6130
      %6226 = vmax.xlane.f32.xlu0 %v6225
      %v6227 = vpop.xlane.xlu0 %6226
      %v6228 = vmax.f32 %v6020, %v6133
      %6229 = vmax.xlane.f32.xlu0 %v6228
      %v6230 = vpop.xlane.xlu0 %6229
      %v6231 = vmax.f32 %v6023, %v6136
      %6232 = vmax.xlane.f32.xlu0 %v6231
      %v6233 = vpop.xlane.xlu0 %6232
      %v6234 = vmax.f32 %v6026, %v6139
      %6235 = vmax.xlane.f32.xlu0 %v6234
      %v6236 = vpop.xlane.xlu0 %6235
      %v6237 = vmax.f32 %v6029, %v6142
      %6238 = vmax.xlane.f32.xlu0 %v6237
      %v6239 = vpop.xlane.xlu0 %6238
      %v6240 = vmax.f32 %v6032, %v6145
      %6241 = vmax.xlane.f32.xlu0 %v6240
      %v6242 = vpop.xlane.xlu0 %6241
      %v6243 = vmax.f32 %v6035, %v6148
      %6244 = vmax.xlane.f32.xlu0 %v6243
      %v6245 = vpop.xlane.xlu0 %6244
      %v6246 = vmax.f32 %v6038, %v6151
      %6247 = vmax.xlane.f32.xlu0 %v6246
      %v6248 = vpop.xlane.xlu0 %6247
      %v6249 = vmax.f32 %v6041, %v6154
      %6250 = vmax.xlane.f32.xlu0 %v6249
      %v6251 = vpop.xlane.xlu0 %6250
      %v6252 = vmax.f32 %v6044, %v6157
      %6253 = vmax.xlane.f32.xlu0 %v6252
      %v6254 = vpop.xlane.xlu0 %6253
      %v6255 = vmax.f32 %v6047, %v6160
      %6256 = vmax.xlane.f32.xlu0 %v6255
      %v6257 = vpop.xlane.xlu0 %6256
      %v6258 = vmax.f32 %v6050, %v6163
      %6259 = vmax.xlane.f32.xlu0 %v6258
      %v6260 = vpop.xlane.xlu0 %6259
      %v6261 = vsub.f32 %v5957, %v6167
      %v6262 = vsub.f32 %v6070, %v6167
      %v6263 = vsub.f32 %v5960, %v6170
      %v6264 = vsub.f32 %v6073, %v6170
      %v6265 = vsub.f32 %v5963, %v6173
      %v6266 = vsub.f32 %v6076, %v6173
      %v6267 = vsub.f32 %v5966, %v6176
      %v6268 = vsub.f32 %v6079, %v6176
      %v6269 = vsub.f32 %v5969, %v6179
      %v6270 = vsub.f32 %v6082, %v6179
      %v6271 = vsub.f32 %v5972, %v6182
      %v6272 = vsub.f32 %v6085, %v6182
      %v6273 = vsub.f32 %v5975, %v6185
      %v6274 = vsub.f32 %v6088, %v6185
      %v6275 = vsub.f32 %v5978, %v6188
      %v6276 = vsub.f32 %v6091, %v6188
      %v6277 = vsub.f32 %v5981, %v6191
      %v6278 = vsub.f32 %v6094, %v6191
      %v6279 = vsub.f32 %v5984, %v6194
      %v6280 = vsub.f32 %v6097, %v6194
      %v6281 = vsub.f32 %v5987, %v6197
      %v6282 = vsub.f32 %v6100, %v6197
      %v6283 = vsub.f32 %v5990, %v6200
      %v6284 = vsub.f32 %v6103, %v6200
      %v6285 = vsub.f32 %v5993, %v6203
      %v6286 = vsub.f32 %v6106, %v6203
      %v6287 = vsub.f32 %v5996, %v6206
      %v6288 = vsub.f32 %v6109, %v6206
      %v6289 = vsub.f32 %v5999, %v6209
      %v6290 = vsub.f32 %v6112, %v6209
      %v6291 = vsub.f32 %v6002, %v6212
      %v6292 = vsub.f32 %v6115, %v6212
      %v6293 = vsub.f32 %v6005, %v6215
      %v6294 = vsub.f32 %v6118, %v6215
      %v6295 = vsub.f32 %v6008, %v6218
      %v6296 = vsub.f32 %v6121, %v6218
      %v6297 = vsub.f32 %v6011, %v6221
      %v6298 = vsub.f32 %v6124, %v6221
      %v6299 = vsub.f32 %v6014, %v6224
      %v6300 = vsub.f32 %v6127, %v6224
      %v6301 = vsub.f32 %v6017, %v6227
      %v6302 = vsub.f32 %v6130, %v6227
      %v6303 = vsub.f32 %v6020, %v6230
      %v6304 = vsub.f32 %v6133, %v6230
      %v6305 = vsub.f32 %v6023, %v6233
      %v6306 = vsub.f32 %v6136, %v6233
      %v6307 = vsub.f32 %v6026, %v6236
      %v6308 = vsub.f32 %v6139, %v6236
      %v6309 = vsub.f32 %v6029, %v6239
      %v6310 = vsub.f32 %v6142, %v6239
      %v6311 = vsub.f32 %v6032, %v6242
      %v6312 = vsub.f32 %v6145, %v6242
      %v6313 = vsub.f32 %v6035, %v6245
      %v6314 = vsub.f32 %v6148, %v6245
      %v6315 = vsub.f32 %v6038, %v6248
      %v6316 = vsub.f32 %v6151, %v6248
      %v6317 = vsub.f32 %v6041, %v6251
      %v6318 = vsub.f32 %v6154, %v6251
      %v6319 = vsub.f32 %v6044, %v6254
      %v6320 = vsub.f32 %v6157, %v6254
      %v6321 = vsub.f32 %v6047, %v6257
      %v6322 = vsub.f32 %v6160, %v6257
      %v6323 = vsub.f32 %v6050, %v6260
      %v6324 = vsub.f32 %v6163, %v6260
      %v6325 = vmul.f32 %v6261, 1.442695
      %v6326 = vpow.pop %v6325
      %v6327 = vmul.f32 %v6262, 1.442695
      %v6328 = vpow.pop %v6327
      %v6329 = vmul.f32 %v6263, 1.442695
      %v6330 = vpow.pop %v6329
      %v6331 = vmul.f32 %v6264, 1.442695
      %v6332 = vpow.pop %v6331
      %v6333 = vmul.f32 %v6265, 1.442695
      %v6334 = vpow.pop %v6333
      %v6335 = vmul.f32 %v6266, 1.442695
      %v6336 = vpow.pop %v6335
      %v6337 = vmul.f32 %v6267, 1.442695
      %v6338 = vpow.pop %v6337
      %v6339 = vmul.f32 %v6268, 1.442695
      %v6340 = vpow.pop %v6339
      %v6341 = vmul.f32 %v6269, 1.442695
      %v6342 = vpow.pop %v6341
      %v6343 = vmul.f32 %v6270, 1.442695
      %v6344 = vpow.pop %v6343
      %v6345 = vmul.f32 %v6271, 1.442695
      %v6346 = vpow.pop %v6345
      %v6347 = vmul.f32 %v6272, 1.442695
      %v6348 = vpow.pop %v6347
      %v6349 = vmul.f32 %v6273, 1.442695
      %v6350 = vpow.pop %v6349
      %v6351 = vmul.f32 %v6274, 1.442695
      %v6352 = vpow.pop %v6351
      %v6353 = vmul.f32 %v6275, 1.442695
      %v6354 = vpow.pop %v6353
      %v6355 = vmul.f32 %v6276, 1.442695
      %v6356 = vpow.pop %v6355
      %v6357 = vmul.f32 %v6277, 1.442695
      %v6358 = vpow.pop %v6357
      %v6359 = vmul.f32 %v6278, 1.442695
      %v6360 = vpow.pop %v6359
      %v6361 = vmul.f32 %v6279, 1.442695
      %v6362 = vpow.pop %v6361
      %v6363 = vmul.f32 %v6280, 1.442695
      %v6364 = vpow.pop %v6363
      %v6365 = vmul.f32 %v6281, 1.442695
      %v6366 = vpow.pop %v6365
      %v6367 = vmul.f32 %v6282, 1.442695
      %v6368 = vpow.pop %v6367
      %v6369 = vmul.f32 %v6283, 1.442695
      %v6370 = vpow.pop %v6369
      %v6371 = vmul.f32 %v6284, 1.442695
      %v6372 = vpow.pop %v6371
      %v6373 = vmul.f32 %v6285, 1.442695
      %v6374 = vpow.pop %v6373
      %v6375 = vmul.f32 %v6286, 1.442695
      %v6376 = vpow.pop %v6375
      %v6377 = vmul.f32 %v6287, 1.442695
      %v6378 = vpow.pop %v6377
      %v6379 = vmul.f32 %v6288, 1.442695
      %v6380 = vpow.pop %v6379
      %v6381 = vmul.f32 %v6289, 1.442695
      %v6382 = vpow.pop %v6381
      %v6383 = vmul.f32 %v6290, 1.442695
      %v6384 = vpow.pop %v6383
      %v6385 = vmul.f32 %v6291, 1.442695
      %v6386 = vpow.pop %v6385
      %v6387 = vmul.f32 %v6292, 1.442695
      %v6388 = vpow.pop %v6387
      %v6389 = vmul.f32 %v6293, 1.442695
      %v6390 = vpow.pop %v6389
      %v6391 = vmul.f32 %v6294, 1.442695
      %v6392 = vpow.pop %v6391
      %v6393 = vmul.f32 %v6295, 1.442695
      %v6394 = vpow.pop %v6393
      %v6395 = vmul.f32 %v6296, 1.442695
      %v6396 = vpow.pop %v6395
      %v6397 = vmul.f32 %v6297, 1.442695
      %v6398 = vpow.pop %v6397
      %v6399 = vmul.f32 %v6298, 1.442695
      %v6400 = vpow.pop %v6399
      %v6401 = vmul.f32 %v6299, 1.442695
      %v6402 = vpow.pop %v6401
      %v6403 = vmul.f32 %v6300, 1.442695
      %v6404 = vpow.pop %v6403
      %v6405 = vmul.f32 %v6301, 1.442695
      %v6406 = vpow.pop %v6405
      %v6407 = vmul.f32 %v6302, 1.442695
      %v6408 = vpow.pop %v6407
      %v6409 = vmul.f32 %v6303, 1.442695
      %v6410 = vpow.pop %v6409
      %v6411 = vmul.f32 %v6304, 1.442695
      %v6412 = vpow.pop %v6411
      %v6413 = vmul.f32 %v6305, 1.442695
      %v6414 = vpow.pop %v6413
      %v6415 = vmul.f32 %v6306, 1.442695
      %v6416 = vpow.pop %v6415
      %v6417 = vmul.f32 %v6307, 1.442695
      %v6418 = vpow.pop %v6417
      %v6419 = vmul.f32 %v6308, 1.442695
      %v6420 = vpow.pop %v6419
      %v6421 = vmul.f32 %v6309, 1.442695
      %v6422 = vpow.pop %v6421
      %v6423 = vmul.f32 %v6310, 1.442695
      %v6424 = vpow.pop %v6423
      %v6425 = vmul.f32 %v6311, 1.442695
      %v6426 = vpow.pop %v6425
      %v6427 = vmul.f32 %v6312, 1.442695
      %v6428 = vpow.pop %v6427
      %v6429 = vmul.f32 %v6313, 1.442695
      %v6430 = vpow.pop %v6429
      %v6431 = vmul.f32 %v6314, 1.442695
      %v6432 = vpow.pop %v6431
      %v6433 = vmul.f32 %v6315, 1.442695
      %v6434 = vpow.pop %v6433
      %v6435 = vmul.f32 %v6316, 1.442695
      %v6436 = vpow.pop %v6435
      %v6437 = vmul.f32 %v6317, 1.442695
      %v6438 = vpow.pop %v6437
      %v6439 = vmul.f32 %v6318, 1.442695
      %v6440 = vpow.pop %v6439
      %v6441 = vmul.f32 %v6319, 1.442695
      %v6442 = vpow.pop %v6441
      %v6443 = vmul.f32 %v6320, 1.442695
      %v6444 = vpow.pop %v6443
      %v6445 = vmul.f32 %v6321, 1.442695
      %v6446 = vpow.pop %v6445
      %v6447 = vmul.f32 %v6322, 1.442695
      %v6448 = vpow.pop %v6447
      %v6449 = vmul.f32 %v6323, 1.442695
      %v6450 = vpow.pop %v6449
      %v6451 = vmul.f32 %v6324, 1.442695
      %v6452 = vpow.pop %v6451
      %v6453 = vadd.f32 %v6326, %v6328
      %6454 = vadd.xlane.f32.xlu0 %v6453
      %v6455 = vpop.xlane.xlu0 %6454
      %v6456 = vadd.f32 %v6330, %v6332
      %6457 = vadd.xlane.f32.xlu0 %v6456
      %v6458 = vpop.xlane.xlu0 %6457
      %v6459 = vadd.f32 %v6334, %v6336
      %6460 = vadd.xlane.f32.xlu0 %v6459
      %v6461 = vpop.xlane.xlu0 %6460
      %v6462 = vadd.f32 %v6338, %v6340
      %6463 = vadd.xlane.f32.xlu0 %v6462
      %v6464 = vpop.xlane.xlu0 %6463
      %v6465 = vadd.f32 %v6342, %v6344
      %6466 = vadd.xlane.f32.xlu0 %v6465
      %v6467 = vpop.xlane.xlu0 %6466
      %v6468 = vadd.f32 %v6346, %v6348
      %6469 = vadd.xlane.f32.xlu0 %v6468
      %v6470 = vpop.xlane.xlu0 %6469
      %v6471 = vadd.f32 %v6350, %v6352
      %6472 = vadd.xlane.f32.xlu0 %v6471
      %v6473 = vpop.xlane.xlu0 %6472
      %v6474 = vadd.f32 %v6354, %v6356
      %6475 = vadd.xlane.f32.xlu0 %v6474
      %v6476 = vpop.xlane.xlu0 %6475
      %v6477 = vadd.f32 %v6358, %v6360
      %6478 = vadd.xlane.f32.xlu0 %v6477
      %v6479 = vpop.xlane.xlu0 %6478
      %v6480 = vadd.f32 %v6362, %v6364
      %6481 = vadd.xlane.f32.xlu0 %v6480
      %v6482 = vpop.xlane.xlu0 %6481
      %v6483 = vadd.f32 %v6366, %v6368
      %6484 = vadd.xlane.f32.xlu0 %v6483
      %v6485 = vpop.xlane.xlu0 %6484
      %v6486 = vadd.f32 %v6370, %v6372
      %6487 = vadd.xlane.f32.xlu0 %v6486
      %v6488 = vpop.xlane.xlu0 %6487
      %v6489 = vadd.f32 %v6374, %v6376
      %6490 = vadd.xlane.f32.xlu0 %v6489
      %v6491 = vpop.xlane.xlu0 %6490
      %v6492 = vadd.f32 %v6378, %v6380
      %6493 = vadd.xlane.f32.xlu0 %v6492
      %v6494 = vpop.xlane.xlu0 %6493
      %v6495 = vadd.f32 %v6382, %v6384
      %6496 = vadd.xlane.f32.xlu0 %v6495
      %v6497 = vpop.xlane.xlu0 %6496
      %v6498 = vadd.f32 %v6386, %v6388
      %6499 = vadd.xlane.f32.xlu0 %v6498
      %v6500 = vpop.xlane.xlu0 %6499
      %v6501 = vadd.f32 %v6390, %v6392
      %6502 = vadd.xlane.f32.xlu0 %v6501
      %v6503 = vpop.xlane.xlu0 %6502
      %v6504 = vadd.f32 %v6394, %v6396
      %6505 = vadd.xlane.f32.xlu0 %v6504
      %v6506 = vpop.xlane.xlu0 %6505
      %v6507 = vadd.f32 %v6398, %v6400
      %6508 = vadd.xlane.f32.xlu0 %v6507
      %v6509 = vpop.xlane.xlu0 %6508
      %v6510 = vadd.f32 %v6402, %v6404
      %6511 = vadd.xlane.f32.xlu0 %v6510
      %v6512 = vpop.xlane.xlu0 %6511
      %v6513 = vadd.f32 %v6406, %v6408
      %6514 = vadd.xlane.f32.xlu0 %v6513
      %v6515 = vpop.xlane.xlu0 %6514
      %v6516 = vadd.f32 %v6410, %v6412
      %6517 = vadd.xlane.f32.xlu0 %v6516
      %v6518 = vpop.xlane.xlu0 %6517
      %v6519 = vadd.f32 %v6414, %v6416
      %6520 = vadd.xlane.f32.xlu0 %v6519
      %v6521 = vpop.xlane.xlu0 %6520
      %v6522 = vadd.f32 %v6418, %v6420
      %6523 = vadd.xlane.f32.xlu0 %v6522
      %v6524 = vpop.xlane.xlu0 %6523
      %v6525 = vadd.f32 %v6422, %v6424
      %6526 = vadd.xlane.f32.xlu0 %v6525
      %v6527 = vpop.xlane.xlu0 %6526
      %v6528 = vadd.f32 %v6426, %v6428
      %6529 = vadd.xlane.f32.xlu0 %v6528
      %v6530 = vpop.xlane.xlu0 %6529
      %v6531 = vadd.f32 %v6430, %v6432
      %6532 = vadd.xlane.f32.xlu0 %v6531
      %v6533 = vpop.xlane.xlu0 %6532
      %v6534 = vadd.f32 %v6434, %v6436
      %6535 = vadd.xlane.f32.xlu0 %v6534
      %v6536 = vpop.xlane.xlu0 %6535
      %v6537 = vadd.f32 %v6438, %v6440
      %6538 = vadd.xlane.f32.xlu0 %v6537
      %v6539 = vpop.xlane.xlu0 %6538
      %v6540 = vadd.f32 %v6442, %v6444
      %6541 = vadd.xlane.f32.xlu0 %v6540
      %v6542 = vpop.xlane.xlu0 %6541
      %v6543 = vadd.f32 %v6446, %v6448
      %6544 = vadd.xlane.f32.xlu0 %v6543
      %v6545 = vpop.xlane.xlu0 %6544
      %v6546 = vadd.f32 %v6450, %v6452
      %6547 = vadd.xlane.f32.xlu0 %v6546
      %v6548 = vpop.xlane.xlu0 %6547
      %v6549 = vrcp.pop %v6455
      %v6550 = vrcp.pop %v6458
      %v6551 = vrcp.pop %v6461
      %v6552 = vrcp.pop %v6464
      %v6553 = vrcp.pop %v6467
      %v6554 = vrcp.pop %v6470
      %v6555 = vrcp.pop %v6473
      %v6556 = vrcp.pop %v6476
      %v6557 = vrcp.pop %v6479
      %v6558 = vrcp.pop %v6482
      %v6559 = vrcp.pop %v6485
      %v6560 = vrcp.pop %v6488
      %v6561 = vrcp.pop %v6491
      %v6562 = vrcp.pop %v6494
      %v6563 = vrcp.pop %v6497
      %v6564 = vrcp.pop %v6500
      %v6565 = vrcp.pop %v6503
      %v6566 = vrcp.pop %v6506
      %v6567 = vrcp.pop %v6509
      %v6568 = vrcp.pop %v6512
      %v6569 = vrcp.pop %v6515
      %v6570 = vrcp.pop %v6518
      %v6571 = vrcp.pop %v6521
      %v6572 = vrcp.pop %v6524
      %v6573 = vrcp.pop %v6527
      %v6574 = vrcp.pop %v6530
      %v6575 = vrcp.pop %v6533
      %v6576 = vrcp.pop %v6536
      %v6577 = vrcp.pop %v6539
      %v6578 = vrcp.pop %v6542
      %v6579 = vrcp.pop %v6545
      %v6580 = vrcp.pop %v6548
      %v6581 = vmul.f32 %v6326, %v6549
      %v6582 = vmul.f32 %v6328, %v6549
      %v6583 = vmul.f32 %v6330, %v6550
      %v6584 = vmul.f32 %v6332, %v6550
      %v6585 = vmul.f32 %v6334, %v6551
      %v6586 = vmul.f32 %v6336, %v6551
      %v6587 = vmul.f32 %v6338, %v6552
      %v6588 = vmul.f32 %v6340, %v6552
      %v6589 = vmul.f32 %v6342, %v6553
      %v6590 = vmul.f32 %v6344, %v6553
      %v6591 = vmul.f32 %v6346, %v6554
      %v6592 = vmul.f32 %v6348, %v6554
      %v6593 = vmul.f32 %v6350, %v6555
      %v6594 = vmul.f32 %v6352, %v6555
      %v6595 = vmul.f32 %v6354, %v6556
      %v6596 = vmul.f32 %v6356, %v6556
      %v6597 = vmul.f32 %v6358, %v6557
      %v6598 = vmul.f32 %v6360, %v6557
      %v6599 = vmul.f32 %v6362, %v6558
      %v6600 = vmul.f32 %v6364, %v6558
      %v6601 = vmul.f32 %v6366, %v6559
      %v6602 = vmul.f32 %v6368, %v6559
      %v6603 = vmul.f32 %v6370, %v6560
      %v6604 = vmul.f32 %v6372, %v6560
      %v6605 = vmul.f32 %v6374, %v6561
      %v6606 = vmul.f32 %v6376, %v6561
      %v6607 = vmul.f32 %v6378, %v6562
      %v6608 = vmul.f32 %v6380, %v6562
      %v6609 = vmul.f32 %v6382, %v6563
      %v6610 = vmul.f32 %v6384, %v6563
      %v6611 = vmul.f32 %v6386, %v6564
      %v6612 = vmul.f32 %v6388, %v6564
      %v6613 = vmul.f32 %v6390, %v6565
      %v6614 = vmul.f32 %v6392, %v6565
      %v6615 = vmul.f32 %v6394, %v6566
      %v6616 = vmul.f32 %v6396, %v6566
      %v6617 = vmul.f32 %v6398, %v6567
      %v6618 = vmul.f32 %v6400, %v6567
      %v6619 = vmul.f32 %v6402, %v6568
      %v6620 = vmul.f32 %v6404, %v6568
      %v6621 = vmul.f32 %v6406, %v6569
      %v6622 = vmul.f32 %v6408, %v6569
      %v6623 = vmul.f32 %v6410, %v6570
      %v6624 = vmul.f32 %v6412, %v6570
      %v6625 = vmul.f32 %v6414, %v6571
      %v6626 = vmul.f32 %v6416, %v6571
      %v6627 = vmul.f32 %v6418, %v6572
      %v6628 = vmul.f32 %v6420, %v6572
      %v6629 = vmul.f32 %v6422, %v6573
      %v6630 = vmul.f32 %v6424, %v6573
      %v6631 = vmul.f32 %v6426, %v6574
      %v6632 = vmul.f32 %v6428, %v6574
      %v6633 = vmul.f32 %v6430, %v6575
      %v6634 = vmul.f32 %v6432, %v6575
      %v6635 = vmul.f32 %v6434, %v6576
      %v6636 = vmul.f32 %v6436, %v6576
      %v6637 = vmul.f32 %v6438, %v6577
      %v6638 = vmul.f32 %v6440, %v6577
      %v6639 = vmul.f32 %v6442, %v6578
      %v6640 = vmul.f32 %v6444, %v6578
      %v6641 = vmul.f32 %v6446, %v6579
      %v6642 = vmul.f32 %v6448, %v6579
      %v6643 = vmul.f32 %v6450, %v6580
      %v6644 = vmul.f32 %v6452, %v6580
      %v6647 = vrot.slane %v924, 2
      %v6648 = vrot.slane %v947, 2
      %6651 = vmatpush.xpose.msra.mxu0 %v6611
      %6652 = vmatpush.xpose.msra.mxu0 %v6609
      %6653 = vmatpush.xpose.msra.mxu0 %v6607
      %6654 = vmatpush.xpose.msra.mxu0 %v6605
      %6655 = vmatpush.xpose.msra.mxu0 %v6603
      %6656 = vmatpush.xpose.msra.mxu0 %v6601
      %6657 = vmatpush.xpose.msra.mxu0 %v6599
      %6658 = vmatpush.xpose.msra.mxu0 %v6597
      %6659 = vmatpush.xpose.msra.mxu0 %v6595
      %6660 = vmatpush.xpose.msra.mxu0 %v6593
      %6661 = vmatpush.xpose.msra.mxu0 %v6591
      %6662 = vmatpush.xpose.msra.mxu0 %v6589
      %6663 = vmatpush.xpose.msra.mxu0 %v6587
      %6664 = vmatpush.xpose.msra.mxu0 %v6585
      %6665 = vmatpush.xpose.msra.mxu0 %v6583
      %6666 = vmatpush.xpose.msra.mxu0 %v6581
      %6667 = vmatmul.f32.gmra.mxu0 %v6647
      %v6668 = vpop.f32.mrf.mxu0
      %v6669 = vadd.f32 0.0, %v6668
      %6670 = vdwg.mxu0
      %6671 = vmatpush.xpose.msra.mxu0 %v6612
      %6672 = vmatpush.xpose.msra.mxu0 %v6610
      %6673 = vmatpush.xpose.msra.mxu0 %v6608
      %6674 = vmatpush.xpose.msra.mxu0 %v6606
      %6675 = vmatpush.xpose.msra.mxu0 %v6604
      %6676 = vmatpush.xpose.msra.mxu0 %v6602
      %6677 = vmatpush.xpose.msra.mxu0 %v6600
      %6678 = vmatpush.xpose.msra.mxu0 %v6598
      %6679 = vmatpush.xpose.msra.mxu0 %v6596
      %6680 = vmatpush.xpose.msra.mxu0 %v6594
      %6681 = vmatpush.xpose.msra.mxu0 %v6592
      %6682 = vmatpush.xpose.msra.mxu0 %v6590
      %6683 = vmatpush.xpose.msra.mxu0 %v6588
      %6684 = vmatpush.xpose.msra.mxu0 %v6586
      %6685 = vmatpush.xpose.msra.mxu0 %v6584
      %6686 = vmatpush.xpose.msra.mxu0 %v6582
      %6687 = vmatmul.f32.gmra.mxu0 %v6648
      %v6688 = vpop.f32.mrf.mxu0
      %v6689 = vadd.f32 %v6669, %v6688
      %6690 = vdwg.mxu0
      %6691 = vmatpush.xpose.msra.mxu0 %v6643
      %6692 = vmatpush.xpose.msra.mxu0 %v6641
      %6693 = vmatpush.xpose.msra.mxu0 %v6639
      %6694 = vmatpush.xpose.msra.mxu0 %v6637
      %6695 = vmatpush.xpose.msra.mxu0 %v6635
      %6696 = vmatpush.xpose.msra.mxu0 %v6633
      %6697 = vmatpush.xpose.msra.mxu0 %v6631
      %6698 = vmatpush.xpose.msra.mxu0 %v6629
      %6699 = vmatpush.xpose.msra.mxu0 %v6627
      %6700 = vmatpush.xpose.msra.mxu0 %v6625
      %6701 = vmatpush.xpose.msra.mxu0 %v6623
      %6702 = vmatpush.xpose.msra.mxu0 %v6621
      %6703 = vmatpush.xpose.msra.mxu0 %v6619
      %6704 = vmatpush.xpose.msra.mxu0 %v6617
      %6705 = vmatpush.xpose.msra.mxu0 %v6615
      %6706 = vmatpush.xpose.msra.mxu0 %v6613
      %6707 = vmatmul.f32.gmra.mxu0 %v6647
      %v6708 = vpop.f32.mrf.mxu0
      %v6709 = vadd.f32 0.0, %v6708
      %6710 = vdwg.mxu0
      %6711 = vmatpush.xpose.msra.mxu0 %v6644
      %6712 = vmatpush.xpose.msra.mxu0 %v6642
      %6713 = vmatpush.xpose.msra.mxu0 %v6640
      %6714 = vmatpush.xpose.msra.mxu0 %v6638
      %6715 = vmatpush.xpose.msra.mxu0 %v6636
      %6716 = vmatpush.xpose.msra.mxu0 %v6634
      %6717 = vmatpush.xpose.msra.mxu0 %v6632
      %6718 = vmatpush.xpose.msra.mxu0 %v6630
      %6719 = vmatpush.xpose.msra.mxu0 %v6628
      %6720 = vmatpush.xpose.msra.mxu0 %v6626
      %6721 = vmatpush.xpose.msra.mxu0 %v6624
      %6722 = vmatpush.xpose.msra.mxu0 %v6622
      %6723 = vmatpush.xpose.msra.mxu0 %v6620
      %6724 = vmatpush.xpose.msra.mxu0 %v6618
      %6725 = vmatpush.xpose.msra.mxu0 %v6616
      %6726 = vmatpush.xpose.msra.mxu0 %v6614
      %6727 = vmatmul.f32.gmra.mxu0 %v6648
      %v6728 = vpop.f32.mrf.mxu0
      %v6729 = vadd.f32 %v6709, %v6728
      %6730 = vdwg.mxu0
      %v6733 = vrot.slane %v6689, 6
      %v6734 = vrot.slane %v6729, 6
      %6737 = vst [vmem:[#allocation2 + $0x10] sm:$0xc] %v6733
      %6738 = vst [vmem:[#allocation2 + $0x18] sm:$0xc] %v6734
      %v6739 = vrot.slane %v792, 4
      %v6740 = vrot.slane %v815, 4
      %6743 = vxpose.xlu0.b32.start [1/16] %v6739, 128
      %6744 = vxpose.xlu0.b32.cont [2/16] 0.0, 128
      %6745 = vxpose.xlu0.b32.cont [3/16] 0.0, 128
      %6746 = vxpose.xlu0.b32.cont [4/16] 0.0, 128
      %6747 = vxpose.xlu0.b32.cont [5/16] 0.0, 128
      %6748 = vxpose.xlu0.b32.cont [6/16] 0.0, 128
      %6749 = vxpose.xlu0.b32.cont [7/16] 0.0, 128
      %6750 = vxpose.xlu0.b32.cont [8/16] 0.0, 128
      %6751 = vxpose.xlu0.b32.cont [9/16] 0.0, 128
      %6752 = vxpose.xlu0.b32.cont [10/16] 0.0, 128
      %6753 = vxpose.xlu0.b32.cont [11/16] 0.0, 128
      %6754 = vxpose.xlu0.b32.cont [12/16] 0.0, 128
      %6755 = vxpose.xlu0.b32.cont [13/16] 0.0, 128
      %6756 = vxpose.xlu0.b32.cont [14/16] 0.0, 128
      %6757 = vxpose.xlu0.b32.cont [15/16] 0.0, 128
      %6758 = vxpose.xlu0.b32.end [16/16] 0.0, 128
      %v6759 = vpop.trf.xlu0
      %v6760 = vpop.trf.xlu0
      %v6761 = vpop.trf.xlu0
      %v6762 = vpop.trf.xlu0
      %v6763 = vpop.trf.xlu0
      %v6764 = vpop.trf.xlu0
      %v6765 = vpop.trf.xlu0
      %v6766 = vpop.trf.xlu0
      %v6767 = vpop.trf.xlu0
      %v6768 = vpop.trf.xlu0
      %v6769 = vpop.trf.xlu0
      %v6770 = vpop.trf.xlu0
      %v6771 = vpop.trf.xlu0
      %v6772 = vpop.trf.xlu0
      %v6773 = vpop.trf.xlu0
      %v6774 = vpop.trf.xlu0
      %6775 = vxpose.xlu0.b32.start [1/16] %v6740, 128
      %6776 = vxpose.xlu0.b32.cont [2/16] 0.0, 128
      %6777 = vxpose.xlu0.b32.cont [3/16] 0.0, 128
      %6778 = vxpose.xlu0.b32.cont [4/16] 0.0, 128
      %6779 = vxpose.xlu0.b32.cont [5/16] 0.0, 128
      %6780 = vxpose.xlu0.b32.cont [6/16] 0.0, 128
      %6781 = vxpose.xlu0.b32.cont [7/16] 0.0, 128
      %6782 = vxpose.xlu0.b32.cont [8/16] 0.0, 128
      %6783 = vxpose.xlu0.b32.cont [9/16] 0.0, 128
      %6784 = vxpose.xlu0.b32.cont [10/16] 0.0, 128
      %6785 = vxpose.xlu0.b32.cont [11/16] 0.0, 128
      %6786 = vxpose.xlu0.b32.cont [12/16] 0.0, 128
      %6787 = vxpose.xlu0.b32.cont [13/16] 0.0, 128
      %6788 = vxpose.xlu0.b32.cont [14/16] 0.0, 128
      %6789 = vxpose.xlu0.b32.cont [15/16] 0.0, 128
      %6790 = vxpose.xlu0.b32.end [16/16] 0.0, 128
      %v6791 = vpop.trf.xlu0
      %v6792 = vpop.trf.xlu0
      %v6793 = vpop.trf.xlu0
      %v6794 = vpop.trf.xlu0
      %v6795 = vpop.trf.xlu0
      %v6796 = vpop.trf.xlu0
      %v6797 = vpop.trf.xlu0
      %v6798 = vpop.trf.xlu0
      %v6799 = vpop.trf.xlu0
      %v6800 = vpop.trf.xlu0
      %v6801 = vpop.trf.xlu0
      %v6802 = vpop.trf.xlu0
      %v6803 = vpop.trf.xlu0
      %v6804 = vpop.trf.xlu0
      %v6805 = vpop.trf.xlu0
      %v6806 = vpop.trf.xlu0
      %v6807 = vrot.slane %v858, 4
      %v6808 = vrot.slane %v881, 4
      %v6810 = vsel %vm1013, %v6759, 0
      %v6813 = vsel %vm1013, %v6760, 0
      %v6816 = vsel %vm1013, %v6761, 0
      %v6819 = vsel %vm1013, %v6762, 0
      %v6822 = vsel %vm1013, %v6763, 0
      %v6825 = vsel %vm1013, %v6764, 0
      %v6828 = vsel %vm1013, %v6765, 0
      %v6831 = vsel %vm1013, %v6766, 0
      %v6834 = vsel %vm1013, %v6767, 0
      %v6837 = vsel %vm1013, %v6768, 0
      %v6840 = vsel %vm1013, %v6769, 0
      %v6843 = vsel %vm1013, %v6770, 0
      %v6846 = vsel %vm1013, %v6771, 0
      %v6849 = vsel %vm1013, %v6772, 0
      %v6852 = vsel %vm1013, %v6773, 0
      %v6855 = vsel %vm1013, %v6774, 0
      %v6858 = vsel %vm1013, %v6791, 0
      %v6861 = vsel %vm1013, %v6792, 0
      %v6864 = vsel %vm1013, %v6793, 0
      %v6867 = vsel %vm1013, %v6794, 0
      %v6870 = vsel %vm1013, %v6795, 0
      %v6873 = vsel %vm1013, %v6796, 0
      %v6876 = vsel %vm1013, %v6797, 0
      %v6879 = vsel %vm1013, %v6798, 0
      %v6882 = vsel %vm1013, %v6799, 0
      %v6885 = vsel %vm1013, %v6800, 0
      %v6888 = vsel %vm1013, %v6801, 0
      %v6891 = vsel %vm1013, %v6802, 0
      %v6894 = vsel %vm1013, %v6803, 0
      %v6897 = vsel %vm1013, %v6804, 0
      %v6900 = vsel %vm1013, %v6805, 0
      %v6903 = vsel %vm1013, %v6806, 0
      %v6905 = vsel %vm1110, %v6807, 0
      %v6907 = vsel %vm1110, %v6808, 0
      %6909 = vmatpush.msra.mxu0 0.0
      %6910 = vmatpush.msra.mxu0 0.0
      %6911 = vmatpush.msra.mxu0 0.0
      %6912 = vmatpush.msra.mxu0 0.0
      %6913 = vmatpush.msra.mxu0 0.0
      %6914 = vmatpush.msra.mxu0 0.0
      %6915 = vmatpush.msra.mxu0 0.0
      %6916 = vmatpush.msra.mxu0 0.0
      %6917 = vmatpush.msra.mxu0 0.0
      %6918 = vmatpush.msra.mxu0 0.0
      %6919 = vmatpush.msra.mxu0 0.0
      %6920 = vmatpush.msra.mxu0 0.0
      %6921 = vmatpush.msra.mxu0 0.0
      %6922 = vmatpush.msra.mxu0 0.0
      %6923 = vmatpush.msra.mxu0 0.0
      %6924 = vmatpush.msra.mxu0 %v6905
      %6925 = vmatmul.f32.gmra.mxu0 %v6810
      %v6926 = vpop.f32.mrf.mxu0
      %v6927 = vadd.f32 0.0, %v6926
      %6928 = vmatmul.f32.gmra.mxu0 %v6813
      %v6929 = vpop.f32.mrf.mxu0
      %v6930 = vadd.f32 0.0, %v6929
      %6931 = vmatmul.f32.gmra.mxu0 %v6816
      %v6932 = vpop.f32.mrf.mxu0
      %v6933 = vadd.f32 0.0, %v6932
      %6934 = vmatmul.f32.gmra.mxu0 %v6819
      %v6935 = vpop.f32.mrf.mxu0
      %v6936 = vadd.f32 0.0, %v6935
      %6937 = vmatmul.f32.gmra.mxu0 %v6822
      %v6938 = vpop.f32.mrf.mxu0
      %v6939 = vadd.f32 0.0, %v6938
      %6940 = vmatmul.f32.gmra.mxu0 %v6825
      %v6941 = vpop.f32.mrf.mxu0
      %v6942 = vadd.f32 0.0, %v6941
      %6943 = vmatmul.f32.gmra.mxu0 %v6828
      %v6944 = vpop.f32.mrf.mxu0
      %v6945 = vadd.f32 0.0, %v6944
      %6946 = vmatmul.f32.gmra.mxu0 %v6831
      %v6947 = vpop.f32.mrf.mxu0
      %v6948 = vadd.f32 0.0, %v6947
      %6949 = vmatmul.f32.gmra.mxu0 %v6834
      %v6950 = vpop.f32.mrf.mxu0
      %v6951 = vadd.f32 0.0, %v6950
      %6952 = vmatmul.f32.gmra.mxu0 %v6837
      %v6953 = vpop.f32.mrf.mxu0
      %v6954 = vadd.f32 0.0, %v6953
      %6955 = vmatmul.f32.gmra.mxu0 %v6840
      %v6956 = vpop.f32.mrf.mxu0
      %v6957 = vadd.f32 0.0, %v6956
      %6958 = vmatmul.f32.gmra.mxu0 %v6843
      %v6959 = vpop.f32.mrf.mxu0
      %v6960 = vadd.f32 0.0, %v6959
      %6961 = vmatmul.f32.gmra.mxu0 %v6846
      %v6962 = vpop.f32.mrf.mxu0
      %v6963 = vadd.f32 0.0, %v6962
      %6964 = vmatmul.f32.gmra.mxu0 %v6849
      %v6965 = vpop.f32.mrf.mxu0
      %v6966 = vadd.f32 0.0, %v6965
      %6967 = vmatmul.f32.gmra.mxu0 %v6852
      %v6968 = vpop.f32.mrf.mxu0
      %v6969 = vadd.f32 0.0, %v6968
      %6970 = vmatmul.f32.gmra.mxu0 %v6855
      %v6971 = vpop.f32.mrf.mxu0
      %v6972 = vadd.f32 0.0, %v6971
      %6973 = vmatmul.f32.gmra.mxu0 %v6858
      %v6974 = vpop.f32.mrf.mxu0
      %v6975 = vadd.f32 0.0, %v6974
      %6976 = vmatmul.f32.gmra.mxu0 %v6861
      %v6977 = vpop.f32.mrf.mxu0
      %v6978 = vadd.f32 0.0, %v6977
      %6979 = vmatmul.f32.gmra.mxu0 %v6864
      %v6980 = vpop.f32.mrf.mxu0
      %v6981 = vadd.f32 0.0, %v6980
      %6982 = vmatmul.f32.gmra.mxu0 %v6867
      %v6983 = vpop.f32.mrf.mxu0
      %v6984 = vadd.f32 0.0, %v6983
      %6985 = vmatmul.f32.gmra.mxu0 %v6870
      %v6986 = vpop.f32.mrf.mxu0
      %v6987 = vadd.f32 0.0, %v6986
      %6988 = vmatmul.f32.gmra.mxu0 %v6873
      %v6989 = vpop.f32.mrf.mxu0
      %v6990 = vadd.f32 0.0, %v6989
      %6991 = vmatmul.f32.gmra.mxu0 %v6876
      %v6992 = vpop.f32.mrf.mxu0
      %v6993 = vadd.f32 0.0, %v6992
      %6994 = vmatmul.f32.gmra.mxu0 %v6879
      %v6995 = vpop.f32.mrf.mxu0
      %v6996 = vadd.f32 0.0, %v6995
      %6997 = vmatmul.f32.gmra.mxu0 %v6882
      %v6998 = vpop.f32.mrf.mxu0
      %v6999 = vadd.f32 0.0, %v6998
      %7000 = vmatmul.f32.gmra.mxu0 %v6885
      %v7001 = vpop.f32.mrf.mxu0
      %v7002 = vadd.f32 0.0, %v7001
      %7003 = vmatmul.f32.gmra.mxu0 %v6888
      %v7004 = vpop.f32.mrf.mxu0
      %v7005 = vadd.f32 0.0, %v7004
      %7006 = vmatmul.f32.gmra.mxu0 %v6891
      %v7007 = vpop.f32.mrf.mxu0
      %v7008 = vadd.f32 0.0, %v7007
      %7009 = vmatmul.f32.gmra.mxu0 %v6894
      %v7010 = vpop.f32.mrf.mxu0
      %v7011 = vadd.f32 0.0, %v7010
      %7012 = vmatmul.f32.gmra.mxu0 %v6897
      %v7013 = vpop.f32.mrf.mxu0
      %v7014 = vadd.f32 0.0, %v7013
      %7015 = vmatmul.f32.gmra.mxu0 %v6900
      %v7016 = vpop.f32.mrf.mxu0
      %v7017 = vadd.f32 0.0, %v7016
      %7018 = vmatmul.f32.gmra.mxu0 %v6903
      %v7019 = vpop.f32.mrf.mxu0
      %v7020 = vadd.f32 0.0, %v7019
      %7021 = vdwg.mxu0
      %7022 = vmatpush.msra.mxu0 0.0
      %7023 = vmatpush.msra.mxu0 0.0
      %7024 = vmatpush.msra.mxu0 0.0
      %7025 = vmatpush.msra.mxu0 0.0
      %7026 = vmatpush.msra.mxu0 0.0
      %7027 = vmatpush.msra.mxu0 0.0
      %7028 = vmatpush.msra.mxu0 0.0
      %7029 = vmatpush.msra.mxu0 0.0
      %7030 = vmatpush.msra.mxu0 0.0
      %7031 = vmatpush.msra.mxu0 0.0
      %7032 = vmatpush.msra.mxu0 0.0
      %7033 = vmatpush.msra.mxu0 0.0
      %7034 = vmatpush.msra.mxu0 0.0
      %7035 = vmatpush.msra.mxu0 0.0
      %7036 = vmatpush.msra.mxu0 0.0
      %7037 = vmatpush.msra.mxu0 %v6907
      %7038 = vmatmul.f32.gmra.mxu0 %v6810
      %v7039 = vpop.f32.mrf.mxu0
      %v7040 = vadd.f32 0.0, %v7039
      %7041 = vmatmul.f32.gmra.mxu0 %v6813
      %v7042 = vpop.f32.mrf.mxu0
      %v7043 = vadd.f32 0.0, %v7042
      %7044 = vmatmul.f32.gmra.mxu0 %v6816
      %v7045 = vpop.f32.mrf.mxu0
      %v7046 = vadd.f32 0.0, %v7045
      %7047 = vmatmul.f32.gmra.mxu0 %v6819
      %v7048 = vpop.f32.mrf.mxu0
      %v7049 = vadd.f32 0.0, %v7048
      %7050 = vmatmul.f32.gmra.mxu0 %v6822
      %v7051 = vpop.f32.mrf.mxu0
      %v7052 = vadd.f32 0.0, %v7051
      %7053 = vmatmul.f32.gmra.mxu0 %v6825
      %v7054 = vpop.f32.mrf.mxu0
      %v7055 = vadd.f32 0.0, %v7054
      %7056 = vmatmul.f32.gmra.mxu0 %v6828
      %v7057 = vpop.f32.mrf.mxu0
      %v7058 = vadd.f32 0.0, %v7057
      %7059 = vmatmul.f32.gmra.mxu0 %v6831
      %v7060 = vpop.f32.mrf.mxu0
      %v7061 = vadd.f32 0.0, %v7060
      %7062 = vmatmul.f32.gmra.mxu0 %v6834
      %v7063 = vpop.f32.mrf.mxu0
      %v7064 = vadd.f32 0.0, %v7063
      %7065 = vmatmul.f32.gmra.mxu0 %v6837
      %v7066 = vpop.f32.mrf.mxu0
      %v7067 = vadd.f32 0.0, %v7066
      %7068 = vmatmul.f32.gmra.mxu0 %v6840
      %v7069 = vpop.f32.mrf.mxu0
      %v7070 = vadd.f32 0.0, %v7069
      %7071 = vmatmul.f32.gmra.mxu0 %v6843
      %v7072 = vpop.f32.mrf.mxu0
      %v7073 = vadd.f32 0.0, %v7072
      %7074 = vmatmul.f32.gmra.mxu0 %v6846
      %v7075 = vpop.f32.mrf.mxu0
      %v7076 = vadd.f32 0.0, %v7075
      %7077 = vmatmul.f32.gmra.mxu0 %v6849
      %v7078 = vpop.f32.mrf.mxu0
      %v7079 = vadd.f32 0.0, %v7078
      %7080 = vmatmul.f32.gmra.mxu0 %v6852
      %v7081 = vpop.f32.mrf.mxu0
      %v7082 = vadd.f32 0.0, %v7081
      %7083 = vmatmul.f32.gmra.mxu0 %v6855
      %v7084 = vpop.f32.mrf.mxu0
      %v7085 = vadd.f32 0.0, %v7084
      %7086 = vmatmul.f32.gmra.mxu0 %v6858
      %v7087 = vpop.f32.mrf.mxu0
      %v7088 = vadd.f32 0.0, %v7087
      %7089 = vmatmul.f32.gmra.mxu0 %v6861
      %v7090 = vpop.f32.mrf.mxu0
      %v7091 = vadd.f32 0.0, %v7090
      %7092 = vmatmul.f32.gmra.mxu0 %v6864
      %v7093 = vpop.f32.mrf.mxu0
      %v7094 = vadd.f32 0.0, %v7093
      %7095 = vmatmul.f32.gmra.mxu0 %v6867
      %v7096 = vpop.f32.mrf.mxu0
      %v7097 = vadd.f32 0.0, %v7096
      %7098 = vmatmul.f32.gmra.mxu0 %v6870
      %v7099 = vpop.f32.mrf.mxu0
      %v7100 = vadd.f32 0.0, %v7099
      %7101 = vmatmul.f32.gmra.mxu0 %v6873
      %v7102 = vpop.f32.mrf.mxu0
      %v7103 = vadd.f32 0.0, %v7102
      %7104 = vmatmul.f32.gmra.mxu0 %v6876
      %v7105 = vpop.f32.mrf.mxu0
      %v7106 = vadd.f32 0.0, %v7105
      %7107 = vmatmul.f32.gmra.mxu0 %v6879
      %v7108 = vpop.f32.mrf.mxu0
      %v7109 = vadd.f32 0.0, %v7108
      %7110 = vmatmul.f32.gmra.mxu0 %v6882
      %v7111 = vpop.f32.mrf.mxu0
      %v7112 = vadd.f32 0.0, %v7111
      %7113 = vmatmul.f32.gmra.mxu0 %v6885
      %v7114 = vpop.f32.mrf.mxu0
      %v7115 = vadd.f32 0.0, %v7114
      %7116 = vmatmul.f32.gmra.mxu0 %v6888
      %v7117 = vpop.f32.mrf.mxu0
      %v7118 = vadd.f32 0.0, %v7117
      %7119 = vmatmul.f32.gmra.mxu0 %v6891
      %v7120 = vpop.f32.mrf.mxu0
      %v7121 = vadd.f32 0.0, %v7120
      %7122 = vmatmul.f32.gmra.mxu0 %v6894
      %v7123 = vpop.f32.mrf.mxu0
      %v7124 = vadd.f32 0.0, %v7123
      %7125 = vmatmul.f32.gmra.mxu0 %v6897
      %v7126 = vpop.f32.mrf.mxu0
      %v7127 = vadd.f32 0.0, %v7126
      %7128 = vmatmul.f32.gmra.mxu0 %v6900
      %v7129 = vpop.f32.mrf.mxu0
      %v7130 = vadd.f32 0.0, %v7129
      %7131 = vmatmul.f32.gmra.mxu0 %v6903
      %v7132 = vpop.f32.mrf.mxu0
      %v7133 = vadd.f32 0.0, %v7132
      %7134 = vdwg.mxu0
      %v7135 = vmax.f32 %v6927, %v7040
      %7136 = vmax.xlane.f32.xlu0 %v7135
      %v7137 = vpop.xlane.xlu0 %7136
      %v7138 = vmax.f32 %v6930, %v7043
      %7139 = vmax.xlane.f32.xlu0 %v7138
      %v7140 = vpop.xlane.xlu0 %7139
      %v7141 = vmax.f32 %v6933, %v7046
      %7142 = vmax.xlane.f32.xlu0 %v7141
      %v7143 = vpop.xlane.xlu0 %7142
      %v7144 = vmax.f32 %v6936, %v7049
      %7145 = vmax.xlane.f32.xlu0 %v7144
      %v7146 = vpop.xlane.xlu0 %7145
      %v7147 = vmax.f32 %v6939, %v7052
      %7148 = vmax.xlane.f32.xlu0 %v7147
      %v7149 = vpop.xlane.xlu0 %7148
      %v7150 = vmax.f32 %v6942, %v7055
      %7151 = vmax.xlane.f32.xlu0 %v7150
      %v7152 = vpop.xlane.xlu0 %7151
      %v7153 = vmax.f32 %v6945, %v7058
      %7154 = vmax.xlane.f32.xlu0 %v7153
      %v7155 = vpop.xlane.xlu0 %7154
      %v7156 = vmax.f32 %v6948, %v7061
      %7157 = vmax.xlane.f32.xlu0 %v7156
      %v7158 = vpop.xlane.xlu0 %7157
      %v7159 = vmax.f32 %v6951, %v7064
      %7160 = vmax.xlane.f32.xlu0 %v7159
      %v7161 = vpop.xlane.xlu0 %7160
      %v7162 = vmax.f32 %v6954, %v7067
      %7163 = vmax.xlane.f32.xlu0 %v7162
      %v7164 = vpop.xlane.xlu0 %7163
      %v7165 = vmax.f32 %v6957, %v7070
      %7166 = vmax.xlane.f32.xlu0 %v7165
      %v7167 = vpop.xlane.xlu0 %7166
      %v7168 = vmax.f32 %v6960, %v7073
      %7169 = vmax.xlane.f32.xlu0 %v7168
      %v7170 = vpop.xlane.xlu0 %7169
      %v7171 = vmax.f32 %v6963, %v7076
      %7172 = vmax.xlane.f32.xlu0 %v7171
      %v7173 = vpop.xlane.xlu0 %7172
      %v7174 = vmax.f32 %v6966, %v7079
      %7175 = vmax.xlane.f32.xlu0 %v7174
      %v7176 = vpop.xlane.xlu0 %7175
      %v7177 = vmax.f32 %v6969, %v7082
      %7178 = vmax.xlane.f32.xlu0 %v7177
      %v7179 = vpop.xlane.xlu0 %7178
      %v7180 = vmax.f32 %v6972, %v7085
      %7181 = vmax.xlane.f32.xlu0 %v7180
      %v7182 = vpop.xlane.xlu0 %7181
      %v7183 = vmax.f32 %v6975, %v7088
      %7184 = vmax.xlane.f32.xlu0 %v7183
      %v7185 = vpop.xlane.xlu0 %7184
      %v7186 = vmax.f32 %v6978, %v7091
      %7187 = vmax.xlane.f32.xlu0 %v7186
      %v7188 = vpop.xlane.xlu0 %7187
      %v7189 = vmax.f32 %v6981, %v7094
      %7190 = vmax.xlane.f32.xlu0 %v7189
      %v7191 = vpop.xlane.xlu0 %7190
      %v7192 = vmax.f32 %v6984, %v7097
      %7193 = vmax.xlane.f32.xlu0 %v7192
      %v7194 = vpop.xlane.xlu0 %7193
      %v7195 = vmax.f32 %v6987, %v7100
      %7196 = vmax.xlane.f32.xlu0 %v7195
      %v7197 = vpop.xlane.xlu0 %7196
      %v7198 = vmax.f32 %v6990, %v7103
      %7199 = vmax.xlane.f32.xlu0 %v7198
      %v7200 = vpop.xlane.xlu0 %7199
      %v7201 = vmax.f32 %v6993, %v7106
      %7202 = vmax.xlane.f32.xlu0 %v7201
      %v7203 = vpop.xlane.xlu0 %7202
      %v7204 = vmax.f32 %v6996, %v7109
      %7205 = vmax.xlane.f32.xlu0 %v7204
      %v7206 = vpop.xlane.xlu0 %7205
      %v7207 = vmax.f32 %v6999, %v7112
      %7208 = vmax.xlane.f32.xlu0 %v7207
      %v7209 = vpop.xlane.xlu0 %7208
      %v7210 = vmax.f32 %v7002, %v7115
      %7211 = vmax.xlane.f32.xlu0 %v7210
      %v7212 = vpop.xlane.xlu0 %7211
      %v7213 = vmax.f32 %v7005, %v7118
      %7214 = vmax.xlane.f32.xlu0 %v7213
      %v7215 = vpop.xlane.xlu0 %7214
      %v7216 = vmax.f32 %v7008, %v7121
      %7217 = vmax.xlane.f32.xlu0 %v7216
      %v7218 = vpop.xlane.xlu0 %7217
      %v7219 = vmax.f32 %v7011, %v7124
      %7220 = vmax.xlane.f32.xlu0 %v7219
      %v7221 = vpop.xlane.xlu0 %7220
      %v7222 = vmax.f32 %v7014, %v7127
      %7223 = vmax.xlane.f32.xlu0 %v7222
      %v7224 = vpop.xlane.xlu0 %7223
      %v7225 = vmax.f32 %v7017, %v7130
      %7226 = vmax.xlane.f32.xlu0 %v7225
      %v7227 = vpop.xlane.xlu0 %7226
      %v7228 = vmax.f32 %v7020, %v7133
      %7229 = vmax.xlane.f32.xlu0 %v7228
      %v7230 = vpop.xlane.xlu0 %7229
      %v7231 = vsub.f32 %v6927, %v7137
      %v7232 = vsub.f32 %v7040, %v7137
      %v7233 = vsub.f32 %v6930, %v7140
      %v7234 = vsub.f32 %v7043, %v7140
      %v7235 = vsub.f32 %v6933, %v7143
      %v7236 = vsub.f32 %v7046, %v7143
      %v7237 = vsub.f32 %v6936, %v7146
      %v7238 = vsub.f32 %v7049, %v7146
      %v7239 = vsub.f32 %v6939, %v7149
      %v7240 = vsub.f32 %v7052, %v7149
      %v7241 = vsub.f32 %v6942, %v7152
      %v7242 = vsub.f32 %v7055, %v7152
      %v7243 = vsub.f32 %v6945, %v7155
      %v7244 = vsub.f32 %v7058, %v7155
      %v7245 = vsub.f32 %v6948, %v7158
      %v7246 = vsub.f32 %v7061, %v7158
      %v7247 = vsub.f32 %v6951, %v7161
      %v7248 = vsub.f32 %v7064, %v7161
      %v7249 = vsub.f32 %v6954, %v7164
      %v7250 = vsub.f32 %v7067, %v7164
      %v7251 = vsub.f32 %v6957, %v7167
      %v7252 = vsub.f32 %v7070, %v7167
      %v7253 = vsub.f32 %v6960, %v7170
      %v7254 = vsub.f32 %v7073, %v7170
      %v7255 = vsub.f32 %v6963, %v7173
      %v7256 = vsub.f32 %v7076, %v7173
      %v7257 = vsub.f32 %v6966, %v7176
      %v7258 = vsub.f32 %v7079, %v7176
      %v7259 = vsub.f32 %v6969, %v7179
      %v7260 = vsub.f32 %v7082, %v7179
      %v7261 = vsub.f32 %v6972, %v7182
      %v7262 = vsub.f32 %v7085, %v7182
      %v7263 = vsub.f32 %v6975, %v7185
      %v7264 = vsub.f32 %v7088, %v7185
      %v7265 = vsub.f32 %v6978, %v7188
      %v7266 = vsub.f32 %v7091, %v7188
      %v7267 = vsub.f32 %v6981, %v7191
      %v7268 = vsub.f32 %v7094, %v7191
      %v7269 = vsub.f32 %v6984, %v7194
      %v7270 = vsub.f32 %v7097, %v7194
      %v7271 = vsub.f32 %v6987, %v7197
      %v7272 = vsub.f32 %v7100, %v7197
      %v7273 = vsub.f32 %v6990, %v7200
      %v7274 = vsub.f32 %v7103, %v7200
      %v7275 = vsub.f32 %v6993, %v7203
      %v7276 = vsub.f32 %v7106, %v7203
      %v7277 = vsub.f32 %v6996, %v7206
      %v7278 = vsub.f32 %v7109, %v7206
      %v7279 = vsub.f32 %v6999, %v7209
      %v7280 = vsub.f32 %v7112, %v7209
      %v7281 = vsub.f32 %v7002, %v7212
      %v7282 = vsub.f32 %v7115, %v7212
      %v7283 = vsub.f32 %v7005, %v7215
      %v7284 = vsub.f32 %v7118, %v7215
      %v7285 = vsub.f32 %v7008, %v7218
      %v7286 = vsub.f32 %v7121, %v7218
      %v7287 = vsub.f32 %v7011, %v7221
      %v7288 = vsub.f32 %v7124, %v7221
      %v7289 = vsub.f32 %v7014, %v7224
      %v7290 = vsub.f32 %v7127, %v7224
      %v7291 = vsub.f32 %v7017, %v7227
      %v7292 = vsub.f32 %v7130, %v7227
      %v7293 = vsub.f32 %v7020, %v7230
      %v7294 = vsub.f32 %v7133, %v7230
      %v7295 = vmul.f32 %v7231, 1.442695
      %v7296 = vpow.pop %v7295
      %v7297 = vmul.f32 %v7232, 1.442695
      %v7298 = vpow.pop %v7297
      %v7299 = vmul.f32 %v7233, 1.442695
      %v7300 = vpow.pop %v7299
      %v7301 = vmul.f32 %v7234, 1.442695
      %v7302 = vpow.pop %v7301
      %v7303 = vmul.f32 %v7235, 1.442695
      %v7304 = vpow.pop %v7303
      %v7305 = vmul.f32 %v7236, 1.442695
      %v7306 = vpow.pop %v7305
      %v7307 = vmul.f32 %v7237, 1.442695
      %v7308 = vpow.pop %v7307
      %v7309 = vmul.f32 %v7238, 1.442695
      %v7310 = vpow.pop %v7309
      %v7311 = vmul.f32 %v7239, 1.442695
      %v7312 = vpow.pop %v7311
      %v7313 = vmul.f32 %v7240, 1.442695
      %v7314 = vpow.pop %v7313
      %v7315 = vmul.f32 %v7241, 1.442695
      %v7316 = vpow.pop %v7315
      %v7317 = vmul.f32 %v7242, 1.442695
      %v7318 = vpow.pop %v7317
      %v7319 = vmul.f32 %v7243, 1.442695
      %v7320 = vpow.pop %v7319
      %v7321 = vmul.f32 %v7244, 1.442695
      %v7322 = vpow.pop %v7321
      %v7323 = vmul.f32 %v7245, 1.442695
      %v7324 = vpow.pop %v7323
      %v7325 = vmul.f32 %v7246, 1.442695
      %v7326 = vpow.pop %v7325
      %v7327 = vmul.f32 %v7247, 1.442695
      %v7328 = vpow.pop %v7327
      %v7329 = vmul.f32 %v7248, 1.442695
      %v7330 = vpow.pop %v7329
      %v7331 = vmul.f32 %v7249, 1.442695
      %v7332 = vpow.pop %v7331
      %v7333 = vmul.f32 %v7250, 1.442695
      %v7334 = vpow.pop %v7333
      %v7335 = vmul.f32 %v7251, 1.442695
      %v7336 = vpow.pop %v7335
      %v7337 = vmul.f32 %v7252, 1.442695
      %v7338 = vpow.pop %v7337
      %v7339 = vmul.f32 %v7253, 1.442695
      %v7340 = vpow.pop %v7339
      %v7341 = vmul.f32 %v7254, 1.442695
      %v7342 = vpow.pop %v7341
      %v7343 = vmul.f32 %v7255, 1.442695
      %v7344 = vpow.pop %v7343
      %v7345 = vmul.f32 %v7256, 1.442695
      %v7346 = vpow.pop %v7345
      %v7347 = vmul.f32 %v7257, 1.442695
      %v7348 = vpow.pop %v7347
      %v7349 = vmul.f32 %v7258, 1.442695
      %v7350 = vpow.pop %v7349
      %v7351 = vmul.f32 %v7259, 1.442695
      %v7352 = vpow.pop %v7351
      %v7353 = vmul.f32 %v7260, 1.442695
      %v7354 = vpow.pop %v7353
      %v7355 = vmul.f32 %v7261, 1.442695
      %v7356 = vpow.pop %v7355
      %v7357 = vmul.f32 %v7262, 1.442695
      %v7358 = vpow.pop %v7357
      %v7359 = vmul.f32 %v7263, 1.442695
      %v7360 = vpow.pop %v7359
      %v7361 = vmul.f32 %v7264, 1.442695
      %v7362 = vpow.pop %v7361
      %v7363 = vmul.f32 %v7265, 1.442695
      %v7364 = vpow.pop %v7363
      %v7365 = vmul.f32 %v7266, 1.442695
      %v7366 = vpow.pop %v7365
      %v7367 = vmul.f32 %v7267, 1.442695
      %v7368 = vpow.pop %v7367
      %v7369 = vmul.f32 %v7268, 1.442695
      %v7370 = vpow.pop %v7369
      %v7371 = vmul.f32 %v7269, 1.442695
      %v7372 = vpow.pop %v7371
      %v7373 = vmul.f32 %v7270, 1.442695
      %v7374 = vpow.pop %v7373
      %v7375 = vmul.f32 %v7271, 1.442695
      %v7376 = vpow.pop %v7375
      %v7377 = vmul.f32 %v7272, 1.442695
      %v7378 = vpow.pop %v7377
      %v7379 = vmul.f32 %v7273, 1.442695
      %v7380 = vpow.pop %v7379
      %v7381 = vmul.f32 %v7274, 1.442695
      %v7382 = vpow.pop %v7381
      %v7383 = vmul.f32 %v7275, 1.442695
      %v7384 = vpow.pop %v7383
      %v7385 = vmul.f32 %v7276, 1.442695
      %v7386 = vpow.pop %v7385
      %v7387 = vmul.f32 %v7277, 1.442695
      %v7388 = vpow.pop %v7387
      %v7389 = vmul.f32 %v7278, 1.442695
      %v7390 = vpow.pop %v7389
      %v7391 = vmul.f32 %v7279, 1.442695
      %v7392 = vpow.pop %v7391
      %v7393 = vmul.f32 %v7280, 1.442695
      %v7394 = vpow.pop %v7393
      %v7395 = vmul.f32 %v7281, 1.442695
      %v7396 = vpow.pop %v7395
      %v7397 = vmul.f32 %v7282, 1.442695
      %v7398 = vpow.pop %v7397
      %v7399 = vmul.f32 %v7283, 1.442695
      %v7400 = vpow.pop %v7399
      %v7401 = vmul.f32 %v7284, 1.442695
      %v7402 = vpow.pop %v7401
      %v7403 = vmul.f32 %v7285, 1.442695
      %v7404 = vpow.pop %v7403
      %v7405 = vmul.f32 %v7286, 1.442695
      %v7406 = vpow.pop %v7405
      %v7407 = vmul.f32 %v7287, 1.442695
      %v7408 = vpow.pop %v7407
      %v7409 = vmul.f32 %v7288, 1.442695
      %v7410 = vpow.pop %v7409
      %v7411 = vmul.f32 %v7289, 1.442695
      %v7412 = vpow.pop %v7411
      %v7413 = vmul.f32 %v7290, 1.442695
      %v7414 = vpow.pop %v7413
      %v7415 = vmul.f32 %v7291, 1.442695
      %v7416 = vpow.pop %v7415
      %v7417 = vmul.f32 %v7292, 1.442695
      %v7418 = vpow.pop %v7417
      %v7419 = vmul.f32 %v7293, 1.442695
      %v7420 = vpow.pop %v7419
      %v7421 = vmul.f32 %v7294, 1.442695
      %v7422 = vpow.pop %v7421
      %v7423 = vadd.f32 %v7296, %v7298
      %7424 = vadd.xlane.f32.xlu0 %v7423
      %v7425 = vpop.xlane.xlu0 %7424
      %v7426 = vadd.f32 %v7300, %v7302
      %7427 = vadd.xlane.f32.xlu0 %v7426
      %v7428 = vpop.xlane.xlu0 %7427
      %v7429 = vadd.f32 %v7304, %v7306
      %7430 = vadd.xlane.f32.xlu0 %v7429
      %v7431 = vpop.xlane.xlu0 %7430
      %v7432 = vadd.f32 %v7308, %v7310
      %7433 = vadd.xlane.f32.xlu0 %v7432
      %v7434 = vpop.xlane.xlu0 %7433
      %v7435 = vadd.f32 %v7312, %v7314
      %7436 = vadd.xlane.f32.xlu0 %v7435
      %v7437 = vpop.xlane.xlu0 %7436
      %v7438 = vadd.f32 %v7316, %v7318
      %7439 = vadd.xlane.f32.xlu0 %v7438
      %v7440 = vpop.xlane.xlu0 %7439
      %v7441 = vadd.f32 %v7320, %v7322
      %7442 = vadd.xlane.f32.xlu0 %v7441
      %v7443 = vpop.xlane.xlu0 %7442
      %v7444 = vadd.f32 %v7324, %v7326
      %7445 = vadd.xlane.f32.xlu0 %v7444
      %v7446 = vpop.xlane.xlu0 %7445
      %v7447 = vadd.f32 %v7328, %v7330
      %7448 = vadd.xlane.f32.xlu0 %v7447
      %v7449 = vpop.xlane.xlu0 %7448
      %v7450 = vadd.f32 %v7332, %v7334
      %7451 = vadd.xlane.f32.xlu0 %v7450
      %v7452 = vpop.xlane.xlu0 %7451
      %v7453 = vadd.f32 %v7336, %v7338
      %7454 = vadd.xlane.f32.xlu0 %v7453
      %v7455 = vpop.xlane.xlu0 %7454
      %v7456 = vadd.f32 %v7340, %v7342
      %7457 = vadd.xlane.f32.xlu0 %v7456
      %v7458 = vpop.xlane.xlu0 %7457
      %v7459 = vadd.f32 %v7344, %v7346
      %7460 = vadd.xlane.f32.xlu0 %v7459
      %v7461 = vpop.xlane.xlu0 %7460
      %v7462 = vadd.f32 %v7348, %v7350
      %7463 = vadd.xlane.f32.xlu0 %v7462
      %v7464 = vpop.xlane.xlu0 %7463
      %v7465 = vadd.f32 %v7352, %v7354
      %7466 = vadd.xlane.f32.xlu0 %v7465
      %v7467 = vpop.xlane.xlu0 %7466
      %v7468 = vadd.f32 %v7356, %v7358
      %7469 = vadd.xlane.f32.xlu0 %v7468
      %v7470 = vpop.xlane.xlu0 %7469
      %v7471 = vadd.f32 %v7360, %v7362
      %7472 = vadd.xlane.f32.xlu0 %v7471
      %v7473 = vpop.xlane.xlu0 %7472
      %v7474 = vadd.f32 %v7364, %v7366
      %7475 = vadd.xlane.f32.xlu0 %v7474
      %v7476 = vpop.xlane.xlu0 %7475
      %v7477 = vadd.f32 %v7368, %v7370
      %7478 = vadd.xlane.f32.xlu0 %v7477
      %v7479 = vpop.xlane.xlu0 %7478
      %v7480 = vadd.f32 %v7372, %v7374
      %7481 = vadd.xlane.f32.xlu0 %v7480
      %v7482 = vpop.xlane.xlu0 %7481
      %v7483 = vadd.f32 %v7376, %v7378
      %7484 = vadd.xlane.f32.xlu0 %v7483
      %v7485 = vpop.xlane.xlu0 %7484
      %v7486 = vadd.f32 %v7380, %v7382
      %7487 = vadd.xlane.f32.xlu0 %v7486
      %v7488 = vpop.xlane.xlu0 %7487
      %v7489 = vadd.f32 %v7384, %v7386
      %7490 = vadd.xlane.f32.xlu0 %v7489
      %v7491 = vpop.xlane.xlu0 %7490
      %v7492 = vadd.f32 %v7388, %v7390
      %7493 = vadd.xlane.f32.xlu0 %v7492
      %v7494 = vpop.xlane.xlu0 %7493
      %v7495 = vadd.f32 %v7392, %v7394
      %7496 = vadd.xlane.f32.xlu0 %v7495
      %v7497 = vpop.xlane.xlu0 %7496
      %v7498 = vadd.f32 %v7396, %v7398
      %7499 = vadd.xlane.f32.xlu0 %v7498
      %v7500 = vpop.xlane.xlu0 %7499
      %v7501 = vadd.f32 %v7400, %v7402
      %7502 = vadd.xlane.f32.xlu0 %v7501
      %v7503 = vpop.xlane.xlu0 %7502
      %v7504 = vadd.f32 %v7404, %v7406
      %7505 = vadd.xlane.f32.xlu0 %v7504
      %v7506 = vpop.xlane.xlu0 %7505
      %v7507 = vadd.f32 %v7408, %v7410
      %7508 = vadd.xlane.f32.xlu0 %v7507
      %v7509 = vpop.xlane.xlu0 %7508
      %v7510 = vadd.f32 %v7412, %v7414
      %7511 = vadd.xlane.f32.xlu0 %v7510
      %v7512 = vpop.xlane.xlu0 %7511
      %v7513 = vadd.f32 %v7416, %v7418
      %7514 = vadd.xlane.f32.xlu0 %v7513
      %v7515 = vpop.xlane.xlu0 %7514
      %v7516 = vadd.f32 %v7420, %v7422
      %7517 = vadd.xlane.f32.xlu0 %v7516
      %v7518 = vpop.xlane.xlu0 %7517
      %v7519 = vrcp.pop %v7425
      %v7520 = vrcp.pop %v7428
      %v7521 = vrcp.pop %v7431
      %v7522 = vrcp.pop %v7434
      %v7523 = vrcp.pop %v7437
      %v7524 = vrcp.pop %v7440
      %v7525 = vrcp.pop %v7443
      %v7526 = vrcp.pop %v7446
      %v7527 = vrcp.pop %v7449
      %v7528 = vrcp.pop %v7452
      %v7529 = vrcp.pop %v7455
      %v7530 = vrcp.pop %v7458
      %v7531 = vrcp.pop %v7461
      %v7532 = vrcp.pop %v7464
      %v7533 = vrcp.pop %v7467
      %v7534 = vrcp.pop %v7470
      %v7535 = vrcp.pop %v7473
      %v7536 = vrcp.pop %v7476
      %v7537 = vrcp.pop %v7479
      %v7538 = vrcp.pop %v7482
      %v7539 = vrcp.pop %v7485
      %v7540 = vrcp.pop %v7488
      %v7541 = vrcp.pop %v7491
      %v7542 = vrcp.pop %v7494
      %v7543 = vrcp.pop %v7497
      %v7544 = vrcp.pop %v7500
      %v7545 = vrcp.pop %v7503
      %v7546 = vrcp.pop %v7506
      %v7547 = vrcp.pop %v7509
      %v7548 = vrcp.pop %v7512
      %v7549 = vrcp.pop %v7515
      %v7550 = vrcp.pop %v7518
      %v7551 = vmul.f32 %v7296, %v7519
      %v7552 = vmul.f32 %v7298, %v7519
      %v7553 = vmul.f32 %v7300, %v7520
      %v7554 = vmul.f32 %v7302, %v7520
      %v7555 = vmul.f32 %v7304, %v7521
      %v7556 = vmul.f32 %v7306, %v7521
      %v7557 = vmul.f32 %v7308, %v7522
      %v7558 = vmul.f32 %v7310, %v7522
      %v7559 = vmul.f32 %v7312, %v7523
      %v7560 = vmul.f32 %v7314, %v7523
      %v7561 = vmul.f32 %v7316, %v7524
      %v7562 = vmul.f32 %v7318, %v7524
      %v7563 = vmul.f32 %v7320, %v7525
      %v7564 = vmul.f32 %v7322, %v7525
      %v7565 = vmul.f32 %v7324, %v7526
      %v7566 = vmul.f32 %v7326, %v7526
      %v7567 = vmul.f32 %v7328, %v7527
      %v7568 = vmul.f32 %v7330, %v7527
      %v7569 = vmul.f32 %v7332, %v7528
      %v7570 = vmul.f32 %v7334, %v7528
      %v7571 = vmul.f32 %v7336, %v7529
      %v7572 = vmul.f32 %v7338, %v7529
      %v7573 = vmul.f32 %v7340, %v7530
      %v7574 = vmul.f32 %v7342, %v7530
      %v7575 = vmul.f32 %v7344, %v7531
      %v7576 = vmul.f32 %v7346, %v7531
      %v7577 = vmul.f32 %v7348, %v7532
      %v7578 = vmul.f32 %v7350, %v7532
      %v7579 = vmul.f32 %v7352, %v7533
      %v7580 = vmul.f32 %v7354, %v7533
      %v7581 = vmul.f32 %v7356, %v7534
      %v7582 = vmul.f32 %v7358, %v7534
      %v7583 = vmul.f32 %v7360, %v7535
      %v7584 = vmul.f32 %v7362, %v7535
      %v7585 = vmul.f32 %v7364, %v7536
      %v7586 = vmul.f32 %v7366, %v7536
      %v7587 = vmul.f32 %v7368, %v7537
      %v7588 = vmul.f32 %v7370, %v7537
      %v7589 = vmul.f32 %v7372, %v7538
      %v7590 = vmul.f32 %v7374, %v7538
      %v7591 = vmul.f32 %v7376, %v7539
      %v7592 = vmul.f32 %v7378, %v7539
      %v7593 = vmul.f32 %v7380, %v7540
      %v7594 = vmul.f32 %v7382, %v7540
      %v7595 = vmul.f32 %v7384, %v7541
      %v7596 = vmul.f32 %v7386, %v7541
      %v7597 = vmul.f32 %v7388, %v7542
      %v7598 = vmul.f32 %v7390, %v7542
      %v7599 = vmul.f32 %v7392, %v7543
      %v7600 = vmul.f32 %v7394, %v7543
      %v7601 = vmul.f32 %v7396, %v7544
      %v7602 = vmul.f32 %v7398, %v7544
      %v7603 = vmul.f32 %v7400, %v7545
      %v7604 = vmul.f32 %v7402, %v7545
      %v7605 = vmul.f32 %v7404, %v7546
      %v7606 = vmul.f32 %v7406, %v7546
      %v7607 = vmul.f32 %v7408, %v7547
      %v7608 = vmul.f32 %v7410, %v7547
      %v7609 = vmul.f32 %v7412, %v7548
      %v7610 = vmul.f32 %v7414, %v7548
      %v7611 = vmul.f32 %v7416, %v7549
      %v7612 = vmul.f32 %v7418, %v7549
      %v7613 = vmul.f32 %v7420, %v7550
      %v7614 = vmul.f32 %v7422, %v7550
      %v7615 = vrot.slane %v924, 4
      %v7616 = vrot.slane %v947, 4
      %7619 = vmatpush.xpose.msra.mxu0 %v7581
      %7620 = vmatpush.xpose.msra.mxu0 %v7579
      %7621 = vmatpush.xpose.msra.mxu0 %v7577
      %7622 = vmatpush.xpose.msra.mxu0 %v7575
      %7623 = vmatpush.xpose.msra.mxu0 %v7573
      %7624 = vmatpush.xpose.msra.mxu0 %v7571
      %7625 = vmatpush.xpose.msra.mxu0 %v7569
      %7626 = vmatpush.xpose.msra.mxu0 %v7567
      %7627 = vmatpush.xpose.msra.mxu0 %v7565
      %7628 = vmatpush.xpose.msra.mxu0 %v7563
      %7629 = vmatpush.xpose.msra.mxu0 %v7561
      %7630 = vmatpush.xpose.msra.mxu0 %v7559
      %7631 = vmatpush.xpose.msra.mxu0 %v7557
      %7632 = vmatpush.xpose.msra.mxu0 %v7555
      %7633 = vmatpush.xpose.msra.mxu0 %v7553
      %7634 = vmatpush.xpose.msra.mxu0 %v7551
      %7635 = vmatmul.f32.gmra.mxu0 %v7615
      %v7636 = vpop.f32.mrf.mxu0
      %v7637 = vadd.f32 0.0, %v7636
      %7638 = vdwg.mxu0
      %7639 = vmatpush.xpose.msra.mxu0 %v7582
      %7640 = vmatpush.xpose.msra.mxu0 %v7580
      %7641 = vmatpush.xpose.msra.mxu0 %v7578
      %7642 = vmatpush.xpose.msra.mxu0 %v7576
      %7643 = vmatpush.xpose.msra.mxu0 %v7574
      %7644 = vmatpush.xpose.msra.mxu0 %v7572
      %7645 = vmatpush.xpose.msra.mxu0 %v7570
      %7646 = vmatpush.xpose.msra.mxu0 %v7568
      %7647 = vmatpush.xpose.msra.mxu0 %v7566
      %7648 = vmatpush.xpose.msra.mxu0 %v7564
      %7649 = vmatpush.xpose.msra.mxu0 %v7562
      %7650 = vmatpush.xpose.msra.mxu0 %v7560
      %7651 = vmatpush.xpose.msra.mxu0 %v7558
      %7652 = vmatpush.xpose.msra.mxu0 %v7556
      %7653 = vmatpush.xpose.msra.mxu0 %v7554
      %7654 = vmatpush.xpose.msra.mxu0 %v7552
      %7655 = vmatmul.f32.gmra.mxu0 %v7616
      %v7656 = vpop.f32.mrf.mxu0
      %v7657 = vadd.f32 %v7637, %v7656
      %7658 = vdwg.mxu0
      %7659 = vmatpush.xpose.msra.mxu0 %v7613
      %7660 = vmatpush.xpose.msra.mxu0 %v7611
      %7661 = vmatpush.xpose.msra.mxu0 %v7609
      %7662 = vmatpush.xpose.msra.mxu0 %v7607
      %7663 = vmatpush.xpose.msra.mxu0 %v7605
      %7664 = vmatpush.xpose.msra.mxu0 %v7603
      %7665 = vmatpush.xpose.msra.mxu0 %v7601
      %7666 = vmatpush.xpose.msra.mxu0 %v7599
      %7667 = vmatpush.xpose.msra.mxu0 %v7597
      %7668 = vmatpush.xpose.msra.mxu0 %v7595
      %7669 = vmatpush.xpose.msra.mxu0 %v7593
      %7670 = vmatpush.xpose.msra.mxu0 %v7591
      %7671 = vmatpush.xpose.msra.mxu0 %v7589
      %7672 = vmatpush.xpose.msra.mxu0 %v7587
      %7673 = vmatpush.xpose.msra.mxu0 %v7585
      %7674 = vmatpush.xpose.msra.mxu0 %v7583
      %7675 = vmatmul.f32.gmra.mxu0 %v7615
      %v7676 = vpop.f32.mrf.mxu0
      %v7677 = vadd.f32 0.0, %v7676
      %7678 = vdwg.mxu0
      %7679 = vmatpush.xpose.msra.mxu0 %v7614
      %7680 = vmatpush.xpose.msra.mxu0 %v7612
      %7681 = vmatpush.xpose.msra.mxu0 %v7610
      %7682 = vmatpush.xpose.msra.mxu0 %v7608
      %7683 = vmatpush.xpose.msra.mxu0 %v7606
      %7684 = vmatpush.xpose.msra.mxu0 %v7604
      %7685 = vmatpush.xpose.msra.mxu0 %v7602
      %7686 = vmatpush.xpose.msra.mxu0 %v7600
      %7687 = vmatpush.xpose.msra.mxu0 %v7598
      %7688 = vmatpush.xpose.msra.mxu0 %v7596
      %7689 = vmatpush.xpose.msra.mxu0 %v7594
      %7690 = vmatpush.xpose.msra.mxu0 %v7592
      %7691 = vmatpush.xpose.msra.mxu0 %v7590
      %7692 = vmatpush.xpose.msra.mxu0 %v7588
      %7693 = vmatpush.xpose.msra.mxu0 %v7586
      %7694 = vmatpush.xpose.msra.mxu0 %v7584
      %7695 = vmatmul.f32.gmra.mxu0 %v7616
      %v7696 = vpop.f32.mrf.mxu0
      %v7697 = vadd.f32 %v7677, %v7696
      %7698 = vdwg.mxu0
      %v7701 = vrot.slane %v7657, 4
      %v7702 = vrot.slane %v7697, 4
      %7705 = vst [vmem:[#allocation2 + $0x10] sm:$0x30] %v7701
      %7706 = vst [vmem:[#allocation2 + $0x18] sm:$0x30] %v7702
      %v7707 = vrot.slane %v792, 6
      %v7708 = vrot.slane %v815, 6
      %7711 = vxpose.xlu0.b32.start [1/16] %v7707, 128
      %7712 = vxpose.xlu0.b32.cont [2/16] 0.0, 128
      %7713 = vxpose.xlu0.b32.cont [3/16] 0.0, 128
      %7714 = vxpose.xlu0.b32.cont [4/16] 0.0, 128
      %7715 = vxpose.xlu0.b32.cont [5/16] 0.0, 128
      %7716 = vxpose.xlu0.b32.cont [6/16] 0.0, 128
      %7717 = vxpose.xlu0.b32.cont [7/16] 0.0, 128
      %7718 = vxpose.xlu0.b32.cont [8/16] 0.0, 128
      %7719 = vxpose.xlu0.b32.cont [9/16] 0.0, 128
      %7720 = vxpose.xlu0.b32.cont [10/16] 0.0, 128
      %7721 = vxpose.xlu0.b32.cont [11/16] 0.0, 128
      %7722 = vxpose.xlu0.b32.cont [12/16] 0.0, 128
      %7723 = vxpose.xlu0.b32.cont [13/16] 0.0, 128
      %7724 = vxpose.xlu0.b32.cont [14/16] 0.0, 128
      %7725 = vxpose.xlu0.b32.cont [15/16] 0.0, 128
      %7726 = vxpose.xlu0.b32.end [16/16] 0.0, 128
      %v7727 = vpop.trf.xlu0
      %v7728 = vpop.trf.xlu0
      %v7729 = vpop.trf.xlu0
      %v7730 = vpop.trf.xlu0
      %v7731 = vpop.trf.xlu0
      %v7732 = vpop.trf.xlu0
      %v7733 = vpop.trf.xlu0
      %v7734 = vpop.trf.xlu0
      %v7735 = vpop.trf.xlu0
      %v7736 = vpop.trf.xlu0
      %v7737 = vpop.trf.xlu0
      %v7738 = vpop.trf.xlu0
      %v7739 = vpop.trf.xlu0
      %v7740 = vpop.trf.xlu0
      %v7741 = vpop.trf.xlu0
      %v7742 = vpop.trf.xlu0
      %7743 = vxpose.xlu0.b32.start [1/16] %v7708, 128
      %7744 = vxpose.xlu0.b32.cont [2/16] 0.0, 128
      %7745 = vxpose.xlu0.b32.cont [3/16] 0.0, 128
      %7746 = vxpose.xlu0.b32.cont [4/16] 0.0, 128
      %7747 = vxpose.xlu0.b32.cont [5/16] 0.0, 128
      %7748 = vxpose.xlu0.b32.cont [6/16] 0.0, 128
      %7749 = vxpose.xlu0.b32.cont [7/16] 0.0, 128
      %7750 = vxpose.xlu0.b32.cont [8/16] 0.0, 128
      %7751 = vxpose.xlu0.b32.cont [9/16] 0.0, 128
      %7752 = vxpose.xlu0.b32.cont [10/16] 0.0, 128
      %7753 = vxpose.xlu0.b32.cont [11/16] 0.0, 128
      %7754 = vxpose.xlu0.b32.cont [12/16] 0.0, 128
      %7755 = vxpose.xlu0.b32.cont [13/16] 0.0, 128
      %7756 = vxpose.xlu0.b32.cont [14/16] 0.0, 128
      %7757 = vxpose.xlu0.b32.cont [15/16] 0.0, 128
      %7758 = vxpose.xlu0.b32.end [16/16] 0.0, 128
      %v7759 = vpop.trf.xlu0
      %v7760 = vpop.trf.xlu0
      %v7761 = vpop.trf.xlu0
      %v7762 = vpop.trf.xlu0
      %v7763 = vpop.trf.xlu0
      %v7764 = vpop.trf.xlu0
      %v7765 = vpop.trf.xlu0
      %v7766 = vpop.trf.xlu0
      %v7767 = vpop.trf.xlu0
      %v7768 = vpop.trf.xlu0
      %v7769 = vpop.trf.xlu0
      %v7770 = vpop.trf.xlu0
      %v7771 = vpop.trf.xlu0
      %v7772 = vpop.trf.xlu0
      %v7773 = vpop.trf.xlu0
      %v7774 = vpop.trf.xlu0
      %v7775 = vrot.slane %v858, 6
      %v7776 = vrot.slane %v881, 6
      %v7778 = vsel %vm1013, %v7727, 0
      %v7781 = vsel %vm1013, %v7728, 0
      %v7784 = vsel %vm1013, %v7729, 0
      %v7787 = vsel %vm1013, %v7730, 0
      %v7790 = vsel %vm1013, %v7731, 0
      %v7793 = vsel %vm1013, %v7732, 0
      %v7796 = vsel %vm1013, %v7733, 0
      %v7799 = vsel %vm1013, %v7734, 0
      %v7802 = vsel %vm1013, %v7735, 0
      %v7805 = vsel %vm1013, %v7736, 0
      %v7808 = vsel %vm1013, %v7737, 0
      %v7811 = vsel %vm1013, %v7738, 0
      %v7814 = vsel %vm1013, %v7739, 0
      %v7817 = vsel %vm1013, %v7740, 0
      %v7820 = vsel %vm1013, %v7741, 0
      %v7823 = vsel %vm1013, %v7742, 0
      %v7826 = vsel %vm1013, %v7759, 0
      %v7829 = vsel %vm1013, %v7760, 0
      %v7832 = vsel %vm1013, %v7761, 0
      %v7835 = vsel %vm1013, %v7762, 0
      %v7838 = vsel %vm1013, %v7763, 0
      %v7841 = vsel %vm1013, %v7764, 0
      %v7844 = vsel %vm1013, %v7765, 0
      %v7847 = vsel %vm1013, %v7766, 0
      %v7850 = vsel %vm1013, %v7767, 0
      %v7853 = vsel %vm1013, %v7768, 0
      %v7856 = vsel %vm1013, %v7769, 0
      %v7859 = vsel %vm1013, %v7770, 0
      %v7862 = vsel %vm1013, %v7771, 0
      %v7865 = vsel %vm1013, %v7772, 0
      %v7868 = vsel %vm1013, %v7773, 0
      %v7871 = vsel %vm1013, %v7774, 0
      %v7873 = vsel %vm1110, %v7775, 0
      %v7875 = vsel %vm1110, %v7776, 0
      %7877 = vmatpush.msra.mxu0 0.0
      %7878 = vmatpush.msra.mxu0 0.0
      %7879 = vmatpush.msra.mxu0 0.0
      %7880 = vmatpush.msra.mxu0 0.0
      %7881 = vmatpush.msra.mxu0 0.0
      %7882 = vmatpush.msra.mxu0 0.0
      %7883 = vmatpush.msra.mxu0 0.0
      %7884 = vmatpush.msra.mxu0 0.0
      %7885 = vmatpush.msra.mxu0 0.0
      %7886 = vmatpush.msra.mxu0 0.0
      %7887 = vmatpush.msra.mxu0 0.0
      %7888 = vmatpush.msra.mxu0 0.0
      %7889 = vmatpush.msra.mxu0 0.0
      %7890 = vmatpush.msra.mxu0 0.0
      %7891 = vmatpush.msra.mxu0 0.0
      %7892 = vmatpush.msra.mxu0 %v7873
      %7893 = vmatmul.f32.gmra.mxu0 %v7778
      %v7894 = vpop.f32.mrf.mxu0
      %v7895 = vadd.f32 0.0, %v7894
      %7896 = vmatmul.f32.gmra.mxu0 %v7781
      %v7897 = vpop.f32.mrf.mxu0
      %v7898 = vadd.f32 0.0, %v7897
      %7899 = vmatmul.f32.gmra.mxu0 %v7784
      %v7900 = vpop.f32.mrf.mxu0
      %v7901 = vadd.f32 0.0, %v7900
      %7902 = vmatmul.f32.gmra.mxu0 %v7787
      %v7903 = vpop.f32.mrf.mxu0
      %v7904 = vadd.f32 0.0, %v7903
      %7905 = vmatmul.f32.gmra.mxu0 %v7790
      %v7906 = vpop.f32.mrf.mxu0
      %v7907 = vadd.f32 0.0, %v7906
      %7908 = vmatmul.f32.gmra.mxu0 %v7793
      %v7909 = vpop.f32.mrf.mxu0
      %v7910 = vadd.f32 0.0, %v7909
      %7911 = vmatmul.f32.gmra.mxu0 %v7796
      %v7912 = vpop.f32.mrf.mxu0
      %v7913 = vadd.f32 0.0, %v7912
      %7914 = vmatmul.f32.gmra.mxu0 %v7799
      %v7915 = vpop.f32.mrf.mxu0
      %v7916 = vadd.f32 0.0, %v7915
      %7917 = vmatmul.f32.gmra.mxu0 %v7802
      %v7918 = vpop.f32.mrf.mxu0
      %v7919 = vadd.f32 0.0, %v7918
      %7920 = vmatmul.f32.gmra.mxu0 %v7805
      %v7921 = vpop.f32.mrf.mxu0
      %v7922 = vadd.f32 0.0, %v7921
      %7923 = vmatmul.f32.gmra.mxu0 %v7808
      %v7924 = vpop.f32.mrf.mxu0
      %v7925 = vadd.f32 0.0, %v7924
      %7926 = vmatmul.f32.gmra.mxu0 %v7811
      %v7927 = vpop.f32.mrf.mxu0
      %v7928 = vadd.f32 0.0, %v7927
      %7929 = vmatmul.f32.gmra.mxu0 %v7814
      %v7930 = vpop.f32.mrf.mxu0
      %v7931 = vadd.f32 0.0, %v7930
      %7932 = vmatmul.f32.gmra.mxu0 %v7817
      %v7933 = vpop.f32.mrf.mxu0
      %v7934 = vadd.f32 0.0, %v7933
      %7935 = vmatmul.f32.gmra.mxu0 %v7820
      %v7936 = vpop.f32.mrf.mxu0
      %v7937 = vadd.f32 0.0, %v7936
      %7938 = vmatmul.f32.gmra.mxu0 %v7823
      %v7939 = vpop.f32.mrf.mxu0
      %v7940 = vadd.f32 0.0, %v7939
      %7941 = vmatmul.f32.gmra.mxu0 %v7826
      %v7942 = vpop.f32.mrf.mxu0
      %v7943 = vadd.f32 0.0, %v7942
      %7944 = vmatmul.f32.gmra.mxu0 %v7829
      %v7945 = vpop.f32.mrf.mxu0
      %v7946 = vadd.f32 0.0, %v7945
      %7947 = vmatmul.f32.gmra.mxu0 %v7832
      %v7948 = vpop.f32.mrf.mxu0
      %v7949 = vadd.f32 0.0, %v7948
      %7950 = vmatmul.f32.gmra.mxu0 %v7835
      %v7951 = vpop.f32.mrf.mxu0
      %v7952 = vadd.f32 0.0, %v7951
      %7953 = vmatmul.f32.gmra.mxu0 %v7838
      %v7954 = vpop.f32.mrf.mxu0
      %v7955 = vadd.f32 0.0, %v7954
      %7956 = vmatmul.f32.gmra.mxu0 %v7841
      %v7957 = vpop.f32.mrf.mxu0
      %v7958 = vadd.f32 0.0, %v7957
      %7959 = vmatmul.f32.gmra.mxu0 %v7844
      %v7960 = vpop.f32.mrf.mxu0
      %v7961 = vadd.f32 0.0, %v7960
      %7962 = vmatmul.f32.gmra.mxu0 %v7847
      %v7963 = vpop.f32.mrf.mxu0
      %v7964 = vadd.f32 0.0, %v7963
      %7965 = vmatmul.f32.gmra.mxu0 %v7850
      %v7966 = vpop.f32.mrf.mxu0
      %v7967 = vadd.f32 0.0, %v7966
      %7968 = vmatmul.f32.gmra.mxu0 %v7853
      %v7969 = vpop.f32.mrf.mxu0
      %v7970 = vadd.f32 0.0, %v7969
      %7971 = vmatmul.f32.gmra.mxu0 %v7856
      %v7972 = vpop.f32.mrf.mxu0
      %v7973 = vadd.f32 0.0, %v7972
      %7974 = vmatmul.f32.gmra.mxu0 %v7859
      %v7975 = vpop.f32.mrf.mxu0
      %v7976 = vadd.f32 0.0, %v7975
      %7977 = vmatmul.f32.gmra.mxu0 %v7862
      %v7978 = vpop.f32.mrf.mxu0
      %v7979 = vadd.f32 0.0, %v7978
      %7980 = vmatmul.f32.gmra.mxu0 %v7865
      %v7981 = vpop.f32.mrf.mxu0
      %v7982 = vadd.f32 0.0, %v7981
      %7983 = vmatmul.f32.gmra.mxu0 %v7868
      %v7984 = vpop.f32.mrf.mxu0
      %v7985 = vadd.f32 0.0, %v7984
      %7986 = vmatmul.f32.gmra.mxu0 %v7871
      %v7987 = vpop.f32.mrf.mxu0
      %v7988 = vadd.f32 0.0, %v7987
      %7989 = vdwg.mxu0
      %7990 = vmatpush.msra.mxu0 0.0
      %7991 = vmatpush.msra.mxu0 0.0
      %7992 = vmatpush.msra.mxu0 0.0
      %7993 = vmatpush.msra.mxu0 0.0
      %7994 = vmatpush.msra.mxu0 0.0
      %7995 = vmatpush.msra.mxu0 0.0
      %7996 = vmatpush.msra.mxu0 0.0
      %7997 = vmatpush.msra.mxu0 0.0
      %7998 = vmatpush.msra.mxu0 0.0
      %7999 = vmatpush.msra.mxu0 0.0
      %8000 = vmatpush.msra.mxu0 0.0
      %8001 = vmatpush.msra.mxu0 0.0
      %8002 = vmatpush.msra.mxu0 0.0
      %8003 = vmatpush.msra.mxu0 0.0
      %8004 = vmatpush.msra.mxu0 0.0
      %8005 = vmatpush.msra.mxu0 %v7875
      %8006 = vmatmul.f32.gmra.mxu0 %v7778
      %v8007 = vpop.f32.mrf.mxu0
      %v8008 = vadd.f32 0.0, %v8007
      %8009 = vmatmul.f32.gmra.mxu0 %v7781
      %v8010 = vpop.f32.mrf.mxu0
      %v8011 = vadd.f32 0.0, %v8010
      %8012 = vmatmul.f32.gmra.mxu0 %v7784
      %v8013 = vpop.f32.mrf.mxu0
      %v8014 = vadd.f32 0.0, %v8013
      %8015 = vmatmul.f32.gmra.mxu0 %v7787
      %v8016 = vpop.f32.mrf.mxu0
      %v8017 = vadd.f32 0.0, %v8016
      %8018 = vmatmul.f32.gmra.mxu0 %v7790
      %v8019 = vpop.f32.mrf.mxu0
      %v8020 = vadd.f32 0.0, %v8019
      %8021 = vmatmul.f32.gmra.mxu0 %v7793
      %v8022 = vpop.f32.mrf.mxu0
      %v8023 = vadd.f32 0.0, %v8022
      %8024 = vmatmul.f32.gmra.mxu0 %v7796
      %v8025 = vpop.f32.mrf.mxu0
      %v8026 = vadd.f32 0.0, %v8025
      %8027 = vmatmul.f32.gmra.mxu0 %v7799
      %v8028 = vpop.f32.mrf.mxu0
      %v8029 = vadd.f32 0.0, %v8028
      %8030 = vmatmul.f32.gmra.mxu0 %v7802
      %v8031 = vpop.f32.mrf.mxu0
      %v8032 = vadd.f32 0.0, %v8031
      %8033 = vmatmul.f32.gmra.mxu0 %v7805
      %v8034 = vpop.f32.mrf.mxu0
      %v8035 = vadd.f32 0.0, %v8034
      %8036 = vmatmul.f32.gmra.mxu0 %v7808
      %v8037 = vpop.f32.mrf.mxu0
      %v8038 = vadd.f32 0.0, %v8037
      %8039 = vmatmul.f32.gmra.mxu0 %v7811
      %v8040 = vpop.f32.mrf.mxu0
      %v8041 = vadd.f32 0.0, %v8040
      %8042 = vmatmul.f32.gmra.mxu0 %v7814
      %v8043 = vpop.f32.mrf.mxu0
      %v8044 = vadd.f32 0.0, %v8043
      %8045 = vmatmul.f32.gmra.mxu0 %v7817
      %v8046 = vpop.f32.mrf.mxu0
      %v8047 = vadd.f32 0.0, %v8046
      %8048 = vmatmul.f32.gmra.mxu0 %v7820
      %v8049 = vpop.f32.mrf.mxu0
      %v8050 = vadd.f32 0.0, %v8049
      %8051 = vmatmul.f32.gmra.mxu0 %v7823
      %v8052 = vpop.f32.mrf.mxu0
      %v8053 = vadd.f32 0.0, %v8052
      %8054 = vmatmul.f32.gmra.mxu0 %v7826
      %v8055 = vpop.f32.mrf.mxu0
      %v8056 = vadd.f32 0.0, %v8055
      %8057 = vmatmul.f32.gmra.mxu0 %v7829
      %v8058 = vpop.f32.mrf.mxu0
      %v8059 = vadd.f32 0.0, %v8058
      %8060 = vmatmul.f32.gmra.mxu0 %v7832
      %v8061 = vpop.f32.mrf.mxu0
      %v8062 = vadd.f32 0.0, %v8061
      %8063 = vmatmul.f32.gmra.mxu0 %v7835
      %v8064 = vpop.f32.mrf.mxu0
      %v8065 = vadd.f32 0.0, %v8064
      %8066 = vmatmul.f32.gmra.mxu0 %v7838
      %v8067 = vpop.f32.mrf.mxu0
      %v8068 = vadd.f32 0.0, %v8067
      %8069 = vmatmul.f32.gmra.mxu0 %v7841
      %v8070 = vpop.f32.mrf.mxu0
      %v8071 = vadd.f32 0.0, %v8070
      %8072 = vmatmul.f32.gmra.mxu0 %v7844
      %v8073 = vpop.f32.mrf.mxu0
      %v8074 = vadd.f32 0.0, %v8073
      %8075 = vmatmul.f32.gmra.mxu0 %v7847
      %v8076 = vpop.f32.mrf.mxu0
      %v8077 = vadd.f32 0.0, %v8076
      %8078 = vmatmul.f32.gmra.mxu0 %v7850
      %v8079 = vpop.f32.mrf.mxu0
      %v8080 = vadd.f32 0.0, %v8079
      %8081 = vmatmul.f32.gmra.mxu0 %v7853
      %v8082 = vpop.f32.mrf.mxu0
      %v8083 = vadd.f32 0.0, %v8082
      %8084 = vmatmul.f32.gmra.mxu0 %v7856
      %v8085 = vpop.f32.mrf.mxu0
      %v8086 = vadd.f32 0.0, %v8085
      %8087 = vmatmul.f32.gmra.mxu0 %v7859
      %v8088 = vpop.f32.mrf.mxu0
      %v8089 = vadd.f32 0.0, %v8088
      %8090 = vmatmul.f32.gmra.mxu0 %v7862
      %v8091 = vpop.f32.mrf.mxu0
      %v8092 = vadd.f32 0.0, %v8091
      %8093 = vmatmul.f32.gmra.mxu0 %v7865
      %v8094 = vpop.f32.mrf.mxu0
      %v8095 = vadd.f32 0.0, %v8094
      %8096 = vmatmul.f32.gmra.mxu0 %v7868
      %v8097 = vpop.f32.mrf.mxu0
      %v8098 = vadd.f32 0.0, %v8097
      %8099 = vmatmul.f32.gmra.mxu0 %v7871
      %v8100 = vpop.f32.mrf.mxu0
      %v8101 = vadd.f32 0.0, %v8100
      %8102 = vdwg.mxu0
      %v8103 = vmax.f32 %v7895, %v8008
      %8104 = vmax.xlane.f32.xlu0 %v8103
      %v8105 = vpop.xlane.xlu0 %8104
      %v8106 = vmax.f32 %v7898, %v8011
      %8107 = vmax.xlane.f32.xlu0 %v8106
      %v8108 = vpop.xlane.xlu0 %8107
      %v8109 = vmax.f32 %v7901, %v8014
      %8110 = vmax.xlane.f32.xlu0 %v8109
      %v8111 = vpop.xlane.xlu0 %8110
      %v8112 = vmax.f32 %v7904, %v8017
      %8113 = vmax.xlane.f32.xlu0 %v8112
      %v8114 = vpop.xlane.xlu0 %8113
      %v8115 = vmax.f32 %v7907, %v8020
      %8116 = vmax.xlane.f32.xlu0 %v8115
      %v8117 = vpop.xlane.xlu0 %8116
      %v8118 = vmax.f32 %v7910, %v8023
      %8119 = vmax.xlane.f32.xlu0 %v8118
      %v8120 = vpop.xlane.xlu0 %8119
      %v8121 = vmax.f32 %v7913, %v8026
      %8122 = vmax.xlane.f32.xlu0 %v8121
      %v8123 = vpop.xlane.xlu0 %8122
      %v8124 = vmax.f32 %v7916, %v8029
      %8125 = vmax.xlane.f32.xlu0 %v8124
      %v8126 = vpop.xlane.xlu0 %8125
      %v8127 = vmax.f32 %v7919, %v8032
      %8128 = vmax.xlane.f32.xlu0 %v8127
      %v8129 = vpop.xlane.xlu0 %8128
      %v8130 = vmax.f32 %v7922, %v8035
      %8131 = vmax.xlane.f32.xlu0 %v8130
      %v8132 = vpop.xlane.xlu0 %8131
      %v8133 = vmax.f32 %v7925, %v8038
      %8134 = vmax.xlane.f32.xlu0 %v8133
      %v8135 = vpop.xlane.xlu0 %8134
      %v8136 = vmax.f32 %v7928, %v8041
      %8137 = vmax.xlane.f32.xlu0 %v8136
      %v8138 = vpop.xlane.xlu0 %8137
      %v8139 = vmax.f32 %v7931, %v8044
      %8140 = vmax.xlane.f32.xlu0 %v8139
      %v8141 = vpop.xlane.xlu0 %8140
      %v8142 = vmax.f32 %v7934, %v8047
      %8143 = vmax.xlane.f32.xlu0 %v8142
      %v8144 = vpop.xlane.xlu0 %8143
      %v8145 = vmax.f32 %v7937, %v8050
      %8146 = vmax.xlane.f32.xlu0 %v8145
      %v8147 = vpop.xlane.xlu0 %8146
      %v8148 = vmax.f32 %v7940, %v8053
      %8149 = vmax.xlane.f32.xlu0 %v8148
      %v8150 = vpop.xlane.xlu0 %8149
      %v8151 = vmax.f32 %v7943, %v8056
      %8152 = vmax.xlane.f32.xlu0 %v8151
      %v8153 = vpop.xlane.xlu0 %8152
      %v8154 = vmax.f32 %v7946, %v8059
      %8155 = vmax.xlane.f32.xlu0 %v8154
      %v8156 = vpop.xlane.xlu0 %8155
      %v8157 = vmax.f32 %v7949, %v8062
      %8158 = vmax.xlane.f32.xlu0 %v8157
      %v8159 = vpop.xlane.xlu0 %8158
      %v8160 = vmax.f32 %v7952, %v8065
      %8161 = vmax.xlane.f32.xlu0 %v8160
      %v8162 = vpop.xlane.xlu0 %8161
      %v8163 = vmax.f32 %v7955, %v8068
      %8164 = vmax.xlane.f32.xlu0 %v8163
      %v8165 = vpop.xlane.xlu0 %8164
      %v8166 = vmax.f32 %v7958, %v8071
      %8167 = vmax.xlane.f32.xlu0 %v8166
      %v8168 = vpop.xlane.xlu0 %8167
      %v8169 = vmax.f32 %v7961, %v8074
      %8170 = vmax.xlane.f32.xlu0 %v8169
      %v8171 = vpop.xlane.xlu0 %8170
      %v8172 = vmax.f32 %v7964, %v8077
      %8173 = vmax.xlane.f32.xlu0 %v8172
      %v8174 = vpop.xlane.xlu0 %8173
      %v8175 = vmax.f32 %v7967, %v8080
      %8176 = vmax.xlane.f32.xlu0 %v8175
      %v8177 = vpop.xlane.xlu0 %8176
      %v8178 = vmax.f32 %v7970, %v8083
      %8179 = vmax.xlane.f32.xlu0 %v8178
      %v8180 = vpop.xlane.xlu0 %8179
      %v8181 = vmax.f32 %v7973, %v8086
      %8182 = vmax.xlane.f32.xlu0 %v8181
      %v8183 = vpop.xlane.xlu0 %8182
      %v8184 = vmax.f32 %v7976, %v8089
      %8185 = vmax.xlane.f32.xlu0 %v8184
      %v8186 = vpop.xlane.xlu0 %8185
      %v8187 = vmax.f32 %v7979, %v8092
      %8188 = vmax.xlane.f32.xlu0 %v8187
      %v8189 = vpop.xlane.xlu0 %8188
      %v8190 = vmax.f32 %v7982, %v8095
      %8191 = vmax.xlane.f32.xlu0 %v8190
      %v8192 = vpop.xlane.xlu0 %8191
      %v8193 = vmax.f32 %v7985, %v8098
      %8194 = vmax.xlane.f32.xlu0 %v8193
      %v8195 = vpop.xlane.xlu0 %8194
      %v8196 = vmax.f32 %v7988, %v8101
      %8197 = vmax.xlane.f32.xlu0 %v8196
      %v8198 = vpop.xlane.xlu0 %8197
      %v8199 = vsub.f32 %v7895, %v8105
      %v8200 = vsub.f32 %v8008, %v8105
      %v8201 = vsub.f32 %v7898, %v8108
      %v8202 = vsub.f32 %v8011, %v8108
      %v8203 = vsub.f32 %v7901, %v8111
      %v8204 = vsub.f32 %v8014, %v8111
      %v8205 = vsub.f32 %v7904, %v8114
      %v8206 = vsub.f32 %v8017, %v8114
      %v8207 = vsub.f32 %v7907, %v8117
      %v8208 = vsub.f32 %v8020, %v8117
      %v8209 = vsub.f32 %v7910, %v8120
      %v8210 = vsub.f32 %v8023, %v8120
      %v8211 = vsub.f32 %v7913, %v8123
      %v8212 = vsub.f32 %v8026, %v8123
      %v8213 = vsub.f32 %v7916, %v8126
      %v8214 = vsub.f32 %v8029, %v8126
      %v8215 = vsub.f32 %v7919, %v8129
      %v8216 = vsub.f32 %v8032, %v8129
      %v8217 = vsub.f32 %v7922, %v8132
      %v8218 = vsub.f32 %v8035, %v8132
      %v8219 = vsub.f32 %v7925, %v8135
      %v8220 = vsub.f32 %v8038, %v8135
      %v8221 = vsub.f32 %v7928, %v8138
      %v8222 = vsub.f32 %v8041, %v8138
      %v8223 = vsub.f32 %v7931, %v8141
      %v8224 = vsub.f32 %v8044, %v8141
      %v8225 = vsub.f32 %v7934, %v8144
      %v8226 = vsub.f32 %v8047, %v8144
      %v8227 = vsub.f32 %v7937, %v8147
      %v8228 = vsub.f32 %v8050, %v8147
      %v8229 = vsub.f32 %v7940, %v8150
      %v8230 = vsub.f32 %v8053, %v8150
      %v8231 = vsub.f32 %v7943, %v8153
      %v8232 = vsub.f32 %v8056, %v8153
      %v8233 = vsub.f32 %v7946, %v8156
      %v8234 = vsub.f32 %v8059, %v8156
      %v8235 = vsub.f32 %v7949, %v8159
      %v8236 = vsub.f32 %v8062, %v8159
      %v8237 = vsub.f32 %v7952, %v8162
      %v8238 = vsub.f32 %v8065, %v8162
      %v8239 = vsub.f32 %v7955, %v8165
      %v8240 = vsub.f32 %v8068, %v8165
      %v8241 = vsub.f32 %v7958, %v8168
      %v8242 = vsub.f32 %v8071, %v8168
      %v8243 = vsub.f32 %v7961, %v8171
      %v8244 = vsub.f32 %v8074, %v8171
      %v8245 = vsub.f32 %v7964, %v8174
      %v8246 = vsub.f32 %v8077, %v8174
      %v8247 = vsub.f32 %v7967, %v8177
      %v8248 = vsub.f32 %v8080, %v8177
      %v8249 = vsub.f32 %v7970, %v8180
      %v8250 = vsub.f32 %v8083, %v8180
      %v8251 = vsub.f32 %v7973, %v8183
      %v8252 = vsub.f32 %v8086, %v8183
      %v8253 = vsub.f32 %v7976, %v8186
      %v8254 = vsub.f32 %v8089, %v8186
      %v8255 = vsub.f32 %v7979, %v8189
      %v8256 = vsub.f32 %v8092, %v8189
      %v8257 = vsub.f32 %v7982, %v8192
      %v8258 = vsub.f32 %v8095, %v8192
      %v8259 = vsub.f32 %v7985, %v8195
      %v8260 = vsub.f32 %v8098, %v8195
      %v8261 = vsub.f32 %v7988, %v8198
      %v8262 = vsub.f32 %v8101, %v8198
      %v8263 = vmul.f32 %v8199, 1.442695
      %v8264 = vpow.pop %v8263
      %v8265 = vmul.f32 %v8200, 1.442695
      %v8266 = vpow.pop %v8265
      %v8267 = vmul.f32 %v8201, 1.442695
      %v8268 = vpow.pop %v8267
      %v8269 = vmul.f32 %v8202, 1.442695
      %v8270 = vpow.pop %v8269
      %v8271 = vmul.f32 %v8203, 1.442695
      %v8272 = vpow.pop %v8271
      %v8273 = vmul.f32 %v8204, 1.442695
      %v8274 = vpow.pop %v8273
      %v8275 = vmul.f32 %v8205, 1.442695
      %v8276 = vpow.pop %v8275
      %v8277 = vmul.f32 %v8206, 1.442695
      %v8278 = vpow.pop %v8277
      %v8279 = vmul.f32 %v8207, 1.442695
      %v8280 = vpow.pop %v8279
      %v8281 = vmul.f32 %v8208, 1.442695
      %v8282 = vpow.pop %v8281
      %v8283 = vmul.f32 %v8209, 1.442695
      %v8284 = vpow.pop %v8283
      %v8285 = vmul.f32 %v8210, 1.442695
      %v8286 = vpow.pop %v8285
      %v8287 = vmul.f32 %v8211, 1.442695
      %v8288 = vpow.pop %v8287
      %v8289 = vmul.f32 %v8212, 1.442695
      %v8290 = vpow.pop %v8289
      %v8291 = vmul.f32 %v8213, 1.442695
      %v8292 = vpow.pop %v8291
      %v8293 = vmul.f32 %v8214, 1.442695
      %v8294 = vpow.pop %v8293
      %v8295 = vmul.f32 %v8215, 1.442695
      %v8296 = vpow.pop %v8295
      %v8297 = vmul.f32 %v8216, 1.442695
      %v8298 = vpow.pop %v8297
      %v8299 = vmul.f32 %v8217, 1.442695
      %v8300 = vpow.pop %v8299
      %v8301 = vmul.f32 %v8218, 1.442695
      %v8302 = vpow.pop %v8301
      %v8303 = vmul.f32 %v8219, 1.442695
      %v8304 = vpow.pop %v8303
      %v8305 = vmul.f32 %v8220, 1.442695
      %v8306 = vpow.pop %v8305
      %v8307 = vmul.f32 %v8221, 1.442695
      %v8308 = vpow.pop %v8307
      %v8309 = vmul.f32 %v8222, 1.442695
      %v8310 = vpow.pop %v8309
      %v8311 = vmul.f32 %v8223, 1.442695
      %v8312 = vpow.pop %v8311
      %v8313 = vmul.f32 %v8224, 1.442695
      %v8314 = vpow.pop %v8313
      %v8315 = vmul.f32 %v8225, 1.442695
      %v8316 = vpow.pop %v8315
      %v8317 = vmul.f32 %v8226, 1.442695
      %v8318 = vpow.pop %v8317
      %v8319 = vmul.f32 %v8227, 1.442695
      %v8320 = vpow.pop %v8319
      %v8321 = vmul.f32 %v8228, 1.442695
      %v8322 = vpow.pop %v8321
      %v8323 = vmul.f32 %v8229, 1.442695
      %v8324 = vpow.pop %v8323
      %v8325 = vmul.f32 %v8230, 1.442695
      %v8326 = vpow.pop %v8325
      %v8327 = vmul.f32 %v8231, 1.442695
      %v8328 = vpow.pop %v8327
      %v8329 = vmul.f32 %v8232, 1.442695
      %v8330 = vpow.pop %v8329
      %v8331 = vmul.f32 %v8233, 1.442695
      %v8332 = vpow.pop %v8331
      %v8333 = vmul.f32 %v8234, 1.442695
      %v8334 = vpow.pop %v8333
      %v8335 = vmul.f32 %v8235, 1.442695
      %v8336 = vpow.pop %v8335
      %v8337 = vmul.f32 %v8236, 1.442695
      %v8338 = vpow.pop %v8337
      %v8339 = vmul.f32 %v8237, 1.442695
      %v8340 = vpow.pop %v8339
      %v8341 = vmul.f32 %v8238, 1.442695
      %v8342 = vpow.pop %v8341
      %v8343 = vmul.f32 %v8239, 1.442695
      %v8344 = vpow.pop %v8343
      %v8345 = vmul.f32 %v8240, 1.442695
      %v8346 = vpow.pop %v8345
      %v8347 = vmul.f32 %v8241, 1.442695
      %v8348 = vpow.pop %v8347
      %v8349 = vmul.f32 %v8242, 1.442695
      %v8350 = vpow.pop %v8349
      %v8351 = vmul.f32 %v8243, 1.442695
      %v8352 = vpow.pop %v8351
      %v8353 = vmul.f32 %v8244, 1.442695
      %v8354 = vpow.pop %v8353
      %v8355 = vmul.f32 %v8245, 1.442695
      %v8356 = vpow.pop %v8355
      %v8357 = vmul.f32 %v8246, 1.442695
      %v8358 = vpow.pop %v8357
      %v8359 = vmul.f32 %v8247, 1.442695
      %v8360 = vpow.pop %v8359
      %v8361 = vmul.f32 %v8248, 1.442695
      %v8362 = vpow.pop %v8361
      %v8363 = vmul.f32 %v8249, 1.442695
      %v8364 = vpow.pop %v8363
      %v8365 = vmul.f32 %v8250, 1.442695
      %v8366 = vpow.pop %v8365
      %v8367 = vmul.f32 %v8251, 1.442695
      %v8368 = vpow.pop %v8367
      %v8369 = vmul.f32 %v8252, 1.442695
      %v8370 = vpow.pop %v8369
      %v8371 = vmul.f32 %v8253, 1.442695
      %v8372 = vpow.pop %v8371
      %v8373 = vmul.f32 %v8254, 1.442695
      %v8374 = vpow.pop %v8373
      %v8375 = vmul.f32 %v8255, 1.442695
      %v8376 = vpow.pop %v8375
      %v8377 = vmul.f32 %v8256, 1.442695
      %v8378 = vpow.pop %v8377
      %v8379 = vmul.f32 %v8257, 1.442695
      %v8380 = vpow.pop %v8379
      %v8381 = vmul.f32 %v8258, 1.442695
      %v8382 = vpow.pop %v8381
      %v8383 = vmul.f32 %v8259, 1.442695
      %v8384 = vpow.pop %v8383
      %v8385 = vmul.f32 %v8260, 1.442695
      %v8386 = vpow.pop %v8385
      %v8387 = vmul.f32 %v8261, 1.442695
      %v8388 = vpow.pop %v8387
      %v8389 = vmul.f32 %v8262, 1.442695
      %v8390 = vpow.pop %v8389
      %v8391 = vadd.f32 %v8264, %v8266
      %8392 = vadd.xlane.f32.xlu0 %v8391
      %v8393 = vpop.xlane.xlu0 %8392
      %v8394 = vadd.f32 %v8268, %v8270
      %8395 = vadd.xlane.f32.xlu0 %v8394
      %v8396 = vpop.xlane.xlu0 %8395
      %v8397 = vadd.f32 %v8272, %v8274
      %8398 = vadd.xlane.f32.xlu0 %v8397
      %v8399 = vpop.xlane.xlu0 %8398
      %v8400 = vadd.f32 %v8276, %v8278
      %8401 = vadd.xlane.f32.xlu0 %v8400
      %v8402 = vpop.xlane.xlu0 %8401
      %v8403 = vadd.f32 %v8280, %v8282
      %8404 = vadd.xlane.f32.xlu0 %v8403
      %v8405 = vpop.xlane.xlu0 %8404
      %v8406 = vadd.f32 %v8284, %v8286
      %8407 = vadd.xlane.f32.xlu0 %v8406
      %v8408 = vpop.xlane.xlu0 %8407
      %v8409 = vadd.f32 %v8288, %v8290
      %8410 = vadd.xlane.f32.xlu0 %v8409
      %v8411 = vpop.xlane.xlu0 %8410
      %v8412 = vadd.f32 %v8292, %v8294
      %8413 = vadd.xlane.f32.xlu0 %v8412
      %v8414 = vpop.xlane.xlu0 %8413
      %v8415 = vadd.f32 %v8296, %v8298
      %8416 = vadd.xlane.f32.xlu0 %v8415
      %v8417 = vpop.xlane.xlu0 %8416
      %v8418 = vadd.f32 %v8300, %v8302
      %8419 = vadd.xlane.f32.xlu0 %v8418
      %v8420 = vpop.xlane.xlu0 %8419
      %v8421 = vadd.f32 %v8304, %v8306
      %8422 = vadd.xlane.f32.xlu0 %v8421
      %v8423 = vpop.xlane.xlu0 %8422
      %v8424 = vadd.f32 %v8308, %v8310
      %8425 = vadd.xlane.f32.xlu0 %v8424
      %v8426 = vpop.xlane.xlu0 %8425
      %v8427 = vadd.f32 %v8312, %v8314
      %8428 = vadd.xlane.f32.xlu0 %v8427
      %v8429 = vpop.xlane.xlu0 %8428
      %v8430 = vadd.f32 %v8316, %v8318
      %8431 = vadd.xlane.f32.xlu0 %v8430
      %v8432 = vpop.xlane.xlu0 %8431
      %v8433 = vadd.f32 %v8320, %v8322
      %8434 = vadd.xlane.f32.xlu0 %v8433
      %v8435 = vpop.xlane.xlu0 %8434
      %v8436 = vadd.f32 %v8324, %v8326
      %8437 = vadd.xlane.f32.xlu0 %v8436
      %v8438 = vpop.xlane.xlu0 %8437
      %v8439 = vadd.f32 %v8328, %v8330
      %8440 = vadd.xlane.f32.xlu0 %v8439
      %v8441 = vpop.xlane.xlu0 %8440
      %v8442 = vadd.f32 %v8332, %v8334
      %8443 = vadd.xlane.f32.xlu0 %v8442
      %v8444 = vpop.xlane.xlu0 %8443
      %v8445 = vadd.f32 %v8336, %v8338
      %8446 = vadd.xlane.f32.xlu0 %v8445
      %v8447 = vpop.xlane.xlu0 %8446
      %v8448 = vadd.f32 %v8340, %v8342
      %8449 = vadd.xlane.f32.xlu0 %v8448
      %v8450 = vpop.xlane.xlu0 %8449
      %v8451 = vadd.f32 %v8344, %v8346
      %8452 = vadd.xlane.f32.xlu0 %v8451
      %v8453 = vpop.xlane.xlu0 %8452
      %v8454 = vadd.f32 %v8348, %v8350
      %8455 = vadd.xlane.f32.xlu0 %v8454
      %v8456 = vpop.xlane.xlu0 %8455
      %v8457 = vadd.f32 %v8352, %v8354
      %8458 = vadd.xlane.f32.xlu0 %v8457
      %v8459 = vpop.xlane.xlu0 %8458
      %v8460 = vadd.f32 %v8356, %v8358
      %8461 = vadd.xlane.f32.xlu0 %v8460
      %v8462 = vpop.xlane.xlu0 %8461
      %v8463 = vadd.f32 %v8360, %v8362
      %8464 = vadd.xlane.f32.xlu0 %v8463
      %v8465 = vpop.xlane.xlu0 %8464
      %v8466 = vadd.f32 %v8364, %v8366
      %8467 = vadd.xlane.f32.xlu0 %v8466
      %v8468 = vpop.xlane.xlu0 %8467
      %v8469 = vadd.f32 %v8368, %v8370
      %8470 = vadd.xlane.f32.xlu0 %v8469
      %v8471 = vpop.xlane.xlu0 %8470
      %v8472 = vadd.f32 %v8372, %v8374
      %8473 = vadd.xlane.f32.xlu0 %v8472
      %v8474 = vpop.xlane.xlu0 %8473
      %v8475 = vadd.f32 %v8376, %v8378
      %8476 = vadd.xlane.f32.xlu0 %v8475
      %v8477 = vpop.xlane.xlu0 %8476
      %v8478 = vadd.f32 %v8380, %v8382
      %8479 = vadd.xlane.f32.xlu0 %v8478
      %v8480 = vpop.xlane.xlu0 %8479
      %v8481 = vadd.f32 %v8384, %v8386
      %8482 = vadd.xlane.f32.xlu0 %v8481
      %v8483 = vpop.xlane.xlu0 %8482
      %v8484 = vadd.f32 %v8388, %v8390
      %8485 = vadd.xlane.f32.xlu0 %v8484
      %v8486 = vpop.xlane.xlu0 %8485
      %v8487 = vrcp.pop %v8393
      %v8488 = vrcp.pop %v8396
      %v8489 = vrcp.pop %v8399
      %v8490 = vrcp.pop %v8402
      %v8491 = vrcp.pop %v8405
      %v8492 = vrcp.pop %v8408
      %v8493 = vrcp.pop %v8411
      %v8494 = vrcp.pop %v8414
      %v8495 = vrcp.pop %v8417
      %v8496 = vrcp.pop %v8420
      %v8497 = vrcp.pop %v8423
      %v8498 = vrcp.pop %v8426
      %v8499 = vrcp.pop %v8429
      %v8500 = vrcp.pop %v8432
      %v8501 = vrcp.pop %v8435
      %v8502 = vrcp.pop %v8438
      %v8503 = vrcp.pop %v8441
      %v8504 = vrcp.pop %v8444
      %v8505 = vrcp.pop %v8447
      %v8506 = vrcp.pop %v8450
      %v8507 = vrcp.pop %v8453
      %v8508 = vrcp.pop %v8456
      %v8509 = vrcp.pop %v8459
      %v8510 = vrcp.pop %v8462
      %v8511 = vrcp.pop %v8465
      %v8512 = vrcp.pop %v8468
      %v8513 = vrcp.pop %v8471
      %v8514 = vrcp.pop %v8474
      %v8515 = vrcp.pop %v8477
      %v8516 = vrcp.pop %v8480
      %v8517 = vrcp.pop %v8483
      %v8518 = vrcp.pop %v8486
      %v8519 = vmul.f32 %v8264, %v8487
      %v8520 = vmul.f32 %v8266, %v8487
      %v8521 = vmul.f32 %v8268, %v8488
      %v8522 = vmul.f32 %v8270, %v8488
      %v8523 = vmul.f32 %v8272, %v8489
      %v8524 = vmul.f32 %v8274, %v8489
      %v8525 = vmul.f32 %v8276, %v8490
      %v8526 = vmul.f32 %v8278, %v8490
      %v8527 = vmul.f32 %v8280, %v8491
      %v8528 = vmul.f32 %v8282, %v8491
      %v8529 = vmul.f32 %v8284, %v8492
      %v8530 = vmul.f32 %v8286, %v8492
      %v8531 = vmul.f32 %v8288, %v8493
      %v8532 = vmul.f32 %v8290, %v8493
      %v8533 = vmul.f32 %v8292, %v8494
      %v8534 = vmul.f32 %v8294, %v8494
      %v8535 = vmul.f32 %v8296, %v8495
      %v8536 = vmul.f32 %v8298, %v8495
      %v8537 = vmul.f32 %v8300, %v8496
      %v8538 = vmul.f32 %v8302, %v8496
      %v8539 = vmul.f32 %v8304, %v8497
      %v8540 = vmul.f32 %v8306, %v8497
      %v8541 = vmul.f32 %v8308, %v8498
      %v8542 = vmul.f32 %v8310, %v8498
      %v8543 = vmul.f32 %v8312, %v8499
      %v8544 = vmul.f32 %v8314, %v8499
      %v8545 = vmul.f32 %v8316, %v8500
      %v8546 = vmul.f32 %v8318, %v8500
      %v8547 = vmul.f32 %v8320, %v8501
      %v8548 = vmul.f32 %v8322, %v8501
      %v8549 = vmul.f32 %v8324, %v8502
      %v8550 = vmul.f32 %v8326, %v8502
      %v8551 = vmul.f32 %v8328, %v8503
      %v8552 = vmul.f32 %v8330, %v8503
      %v8553 = vmul.f32 %v8332, %v8504
      %v8554 = vmul.f32 %v8334, %v8504
      %v8555 = vmul.f32 %v8336, %v8505
      %v8556 = vmul.f32 %v8338, %v8505
      %v8557 = vmul.f32 %v8340, %v8506
      %v8558 = vmul.f32 %v8342, %v8506
      %v8559 = vmul.f32 %v8344, %v8507
      %v8560 = vmul.f32 %v8346, %v8507
      %v8561 = vmul.f32 %v8348, %v8508
      %v8562 = vmul.f32 %v8350, %v8508
      %v8563 = vmul.f32 %v8352, %v8509
      %v8564 = vmul.f32 %v8354, %v8509
      %v8565 = vmul.f32 %v8356, %v8510
      %v8566 = vmul.f32 %v8358, %v8510
      %v8567 = vmul.f32 %v8360, %v8511
      %v8568 = vmul.f32 %v8362, %v8511
      %v8569 = vmul.f32 %v8364, %v8512
      %v8570 = vmul.f32 %v8366, %v8512
      %v8571 = vmul.f32 %v8368, %v8513
      %v8572 = vmul.f32 %v8370, %v8513
      %v8573 = vmul.f32 %v8372, %v8514
      %v8574 = vmul.f32 %v8374, %v8514
      %v8575 = vmul.f32 %v8376, %v8515
      %v8576 = vmul.f32 %v8378, %v8515
      %v8577 = vmul.f32 %v8380, %v8516
      %v8578 = vmul.f32 %v8382, %v8516
      %v8579 = vmul.f32 %v8384, %v8517
      %v8580 = vmul.f32 %v8386, %v8517
      %v8581 = vmul.f32 %v8388, %v8518
      %v8582 = vmul.f32 %v8390, %v8518
      %v8583 = vrot.slane %v924, 6
      %v8584 = vrot.slane %v947, 6
      %8587 = vmatpush.xpose.msra.mxu0 %v8549
      %8588 = vmatpush.xpose.msra.mxu0 %v8547
      %8589 = vmatpush.xpose.msra.mxu0 %v8545
      %8590 = vmatpush.xpose.msra.mxu0 %v8543
      %8591 = vmatpush.xpose.msra.mxu0 %v8541
      %8592 = vmatpush.xpose.msra.mxu0 %v8539
      %8593 = vmatpush.xpose.msra.mxu0 %v8537
      %8594 = vmatpush.xpose.msra.mxu0 %v8535
      %8595 = vmatpush.xpose.msra.mxu0 %v8533
      %8596 = vmatpush.xpose.msra.mxu0 %v8531
      %8597 = vmatpush.xpose.msra.mxu0 %v8529
      %8598 = vmatpush.xpose.msra.mxu0 %v8527
      %8599 = vmatpush.xpose.msra.mxu0 %v8525
      %8600 = vmatpush.xpose.msra.mxu0 %v8523
      %8601 = vmatpush.xpose.msra.mxu0 %v8521
      %8602 = vmatpush.xpose.msra.mxu0 %v8519
      %8603 = vmatmul.f32.gmra.mxu0 %v8583
      %v8604 = vpop.f32.mrf.mxu0
      %v8605 = vadd.f32 0.0, %v8604
      %8606 = vdwg.mxu0
      %8607 = vmatpush.xpose.msra.mxu0 %v8550
      %8608 = vmatpush.xpose.msra.mxu0 %v8548
      %8609 = vmatpush.xpose.msra.mxu0 %v8546
      %8610 = vmatpush.xpose.msra.mxu0 %v8544
      %8611 = vmatpush.xpose.msra.mxu0 %v8542
      %8612 = vmatpush.xpose.msra.mxu0 %v8540
      %8613 = vmatpush.xpose.msra.mxu0 %v8538
      %8614 = vmatpush.xpose.msra.mxu0 %v8536
      %8615 = vmatpush.xpose.msra.mxu0 %v8534
      %8616 = vmatpush.xpose.msra.mxu0 %v8532
      %8617 = vmatpush.xpose.msra.mxu0 %v8530
      %8618 = vmatpush.xpose.msra.mxu0 %v8528
      %8619 = vmatpush.xpose.msra.mxu0 %v8526
      %8620 = vmatpush.xpose.msra.mxu0 %v8524
      %8621 = vmatpush.xpose.msra.mxu0 %v8522
      %8622 = vmatpush.xpose.msra.mxu0 %v8520
      %8623 = vmatmul.f32.gmra.mxu0 %v8584
      %v8624 = vpop.f32.mrf.mxu0
      %v8625 = vadd.f32 %v8605, %v8624
      %8626 = vdwg.mxu0
      %8627 = vmatpush.xpose.msra.mxu0 %v8581
      %8628 = vmatpush.xpose.msra.mxu0 %v8579
      %8629 = vmatpush.xpose.msra.mxu0 %v8577
      %8630 = vmatpush.xpose.msra.mxu0 %v8575
      %8631 = vmatpush.xpose.msra.mxu0 %v8573
      %8632 = vmatpush.xpose.msra.mxu0 %v8571
      %8633 = vmatpush.xpose.msra.mxu0 %v8569
      %8634 = vmatpush.xpose.msra.mxu0 %v8567
      %8635 = vmatpush.xpose.msra.mxu0 %v8565
      %8636 = vmatpush.xpose.msra.mxu0 %v8563
      %8637 = vmatpush.xpose.msra.mxu0 %v8561
      %8638 = vmatpush.xpose.msra.mxu0 %v8559
      %8639 = vmatpush.xpose.msra.mxu0 %v8557
      %8640 = vmatpush.xpose.msra.mxu0 %v8555
      %8641 = vmatpush.xpose.msra.mxu0 %v8553
      %8642 = vmatpush.xpose.msra.mxu0 %v8551
      %8643 = vmatmul.f32.gmra.mxu0 %v8583
      %v8644 = vpop.f32.mrf.mxu0
      %v8645 = vadd.f32 0.0, %v8644
      %8646 = vdwg.mxu0
      %8647 = vmatpush.xpose.msra.mxu0 %v8582
      %8648 = vmatpush.xpose.msra.mxu0 %v8580
      %8649 = vmatpush.xpose.msra.mxu0 %v8578
      %8650 = vmatpush.xpose.msra.mxu0 %v8576
      %8651 = vmatpush.xpose.msra.mxu0 %v8574
      %8652 = vmatpush.xpose.msra.mxu0 %v8572
      %8653 = vmatpush.xpose.msra.mxu0 %v8570
      %8654 = vmatpush.xpose.msra.mxu0 %v8568
      %8655 = vmatpush.xpose.msra.mxu0 %v8566
      %8656 = vmatpush.xpose.msra.mxu0 %v8564
      %8657 = vmatpush.xpose.msra.mxu0 %v8562
      %8658 = vmatpush.xpose.msra.mxu0 %v8560
      %8659 = vmatpush.xpose.msra.mxu0 %v8558
      %8660 = vmatpush.xpose.msra.mxu0 %v8556
      %8661 = vmatpush.xpose.msra.mxu0 %v8554
      %8662 = vmatpush.xpose.msra.mxu0 %v8552
      %8663 = vmatmul.f32.gmra.mxu0 %v8584
      %v8664 = vpop.f32.mrf.mxu0
      %v8665 = vadd.f32 %v8645, %v8664
      %8666 = vdwg.mxu0
      %v8669 = vrot.slane %v8625, 2
      %v8670 = vrot.slane %v8665, 2
      %8673 = vst [vmem:[#allocation2 + $0x10] sm:$0xc0] %v8669
      %8674 = vst [vmem:[#allocation2 + $0x18] sm:$0xc0] %v8670
      %v8675 = vld [vmem:[%s9] sm:$0xff]
      %v8676 = vld [vmem:[%s9 + $0x8] sm:$0xff]
      %v8677 = vld [vmem:[#allocation2] sm:$0xff]
      %v8678 = vld [vmem:[#allocation2 + $0x8] sm:$0xff]
      %v8679 = vld [vmem:[#allocation2 + $0x10] sm:$0xff]
      %v8680 = vld [vmem:[#allocation2 + $0x18] sm:$0xff]
      %v8681 = vld [vmem:[%s10] sm:$0xff]
      %v8682 = vld [vmem:[%s10 + $0x8] sm:$0xff]
      %8684 = vset.pattern.permute.xlu0 0
      %8685 = vperm.xlu0 %8684, %v8681
      %v8686 = vpop.permute.xlu0 %8685
      %8689 = vset.pattern.permute.xlu0 0
      %8690 = vperm.xlu0 %8689, %v8682
      %v8691 = vpop.permute.xlu0 %8690
      %v8694 = vsel %vm552, %v8675, 0
      %v8697 = vsel %vm552, %v8676, 0
      %8699 = vmatpush.msra.mxu0 0.0
      %8700 = vmatpush.msra.mxu0 0.0
      %8701 = vmatpush.msra.mxu0 0.0
      %8702 = vmatpush.msra.mxu0 0.0
      %8703 = vmatpush.msra.mxu0 0.0
      %8704 = vmatpush.msra.mxu0 0.0
      %8705 = vmatpush.msra.mxu0 0.0
      %8706 = vmatpush.msra.mxu0 0.0
      %8707 = vmatpush.msra.mxu0 0.0
      %8708 = vmatpush.msra.mxu0 0.0
      %8709 = vmatpush.msra.mxu0 0.0
      %8710 = vmatpush.msra.mxu0 0.0
      %8711 = vmatpush.msra.mxu0 0.0
      %8712 = vmatpush.msra.mxu0 0.0
      %8713 = vmatpush.msra.mxu0 %v8679
      %8714 = vmatpush.msra.mxu0 %v8677
      %8715 = vmatmul.f32.gmra.mxu0 %v8694
      %v8716 = vpop.f32.mrf.mxu0
      %v8717 = vadd.f32 %v8686, %v8716
      %8718 = vmatmul.f32.gmra.mxu0 %v8697
      %v8719 = vpop.f32.mrf.mxu0
      %v8720 = vadd.f32 %v8691, %v8719
      %8721 = vdwg.mxu0
      %8722 = vmatpush.msra.mxu0 0.0
      %8723 = vmatpush.msra.mxu0 0.0
      %8724 = vmatpush.msra.mxu0 0.0
      %8725 = vmatpush.msra.mxu0 0.0
      %8726 = vmatpush.msra.mxu0 0.0
      %8727 = vmatpush.msra.mxu0 0.0
      %8728 = vmatpush.msra.mxu0 0.0
      %8729 = vmatpush.msra.mxu0 0.0
      %8730 = vmatpush.msra.mxu0 0.0
      %8731 = vmatpush.msra.mxu0 0.0
      %8732 = vmatpush.msra.mxu0 0.0
      %8733 = vmatpush.msra.mxu0 0.0
      %8734 = vmatpush.msra.mxu0 0.0
      %8735 = vmatpush.msra.mxu0 0.0
      %8736 = vmatpush.msra.mxu0 %v8680
      %8737 = vmatpush.msra.mxu0 %v8678
      %8738 = vmatmul.f32.gmra.mxu0 %v8694
      %v8739 = vpop.f32.mrf.mxu0
      %v8740 = vadd.f32 %v8686, %v8739
      %8741 = vmatmul.f32.gmra.mxu0 %v8697
      %v8742 = vpop.f32.mrf.mxu0
      %v8743 = vadd.f32 %v8691, %v8742
      %8744 = vdwg.mxu0
      %v8745 = vld [vmem:[%s15] sm:$0xff]
      %v8746 = vld [vmem:[%s15 + $0x8] sm:$0xff]
      %v8747 = vld [vmem:[%s15 + $0x10] sm:$0xff]
      %v8748 = vld [vmem:[%s15 + $0x18] sm:$0xff]
      %v8749 = vld [vmem:[%s15 + $0x20] sm:$0x3]
      %v8750 = vld [vmem:[%s15 + $0x28] sm:$0x3]
      %v8751 = vld [vmem:[%s11] sm:$0xff]
      %v8752 = vld [vmem:[%s11 + $0x8] sm:$0xff]
      %v8753 = vld [vmem:[%s12] sm:$0xff]
      %v8754 = vld [vmem:[%s12 + $0x8] sm:$0xff]
      %8755 = vrot.lane.b32.xlu0 %v747, 17
      %v8756 = vpop.permute.xlu0 %8755
      %8757 = vrot.lane.b32.xlu0 %v749, 17
      %v8758 = vpop.permute.xlu0 %8757
      %8759 = vrot.lane.b32.xlu0 %v748, 17
      %v8760 = vpop.permute.xlu0 %8759
      %8761 = vrot.lane.b32.xlu0 %v750, 17
      %v8762 = vpop.permute.xlu0 %8761
      %v8763 = vlaneseq
      %v8764 = vand.u32 %v8763, 127
      %vm8765 = vcmp.lt.s32.totalorder %v8764, 17
      %v8766 = vsel %vm8765, %v8756, %v8760
      %v8767 = vsel %vm8765, %v8758, %v8762
      %v8768 = vsel %vm8765, %v8760, %v8756
      %v8769 = vsel %vm8765, %v8762, %v8758
      %8771 = vset.pattern.permute.xlu0 0
      %8772 = vperm.xlu0 %8771, %v8751
      %v8773 = vpop.permute.xlu0 %8772
      %8776 = vset.pattern.permute.xlu0 0
      %8777 = vperm.xlu0 %8776, %v8752
      %v8778 = vpop.permute.xlu0 %8777
      %v8780 = vmul.f32 %v8768, %v8773
      %v8781 = vmul.f32 %v8766, %v8773
      %v8782 = vmul.f32 %v8769, %v8778
      %v8783 = vmul.f32 %v8767, %v8778
      %v8784 = vperm.slane %v8745, 0
      %v8785 = vperm.slane %v8746, 0
      %v8786 = vmul.f32 %v8780, %v8784
      %v8787 = vmul.f32 %v8781, %v8785
      %v8788 = vmul.f32 %v8782, %v8784
      %v8789 = vmul.f32 %v8783, %v8785
      %8790 = vrot.lane.b32.xlu0 %v747, 16
      %v8791 = vpop.permute.xlu0 %8790
      %8792 = vrot.lane.b32.xlu0 %v749, 16
      %v8793 = vpop.permute.xlu0 %8792
      %8794 = vrot.lane.b32.xlu0 %v748, 16
      %v8795 = vpop.permute.xlu0 %8794
      %8796 = vrot.lane.b32.xlu0 %v750, 16
      %v8797 = vpop.permute.xlu0 %8796
      %vm8798 = vcmp.lt.s32.totalorder %v8764, 16
      %v8799 = vsel %vm8798, %v8791, %v8795
      %v8800 = vsel %vm8798, %v8793, %v8797
      %v8801 = vsel %vm8798, %v8795, %v8791
      %v8802 = vsel %vm8798, %v8797, %v8793
      %8803 = vset.pattern.permute.xlu0 1
      %8804 = vperm.xlu0 %8803, %v8751
      %v8805 = vpop.permute.xlu0 %8804
      %8807 = vset.pattern.permute.xlu0 1
      %8808 = vperm.xlu0 %8807, %v8752
      %v8809 = vpop.permute.xlu0 %8808
      %v8811 = vmul.f32 %v8801, %v8805
      %v8812 = vmul.f32 %v8799, %v8805
      %v8813 = vmul.f32 %v8802, %v8809
      %v8814 = vmul.f32 %v8800, %v8809
      %v8815 = vperm.slane %v8745, 1
      %v8816 = vperm.slane %v8746, 1
      %v8817 = vmul.f32 %v8811, %v8815
      %v8818 = vmul.f32 %v8812, %v8816
      %v8819 = vmul.f32 %v8813, %v8815
      %v8820 = vmul.f32 %v8814, %v8816
      %v8821 = vadd.f32 %v8786, %v8817
      %v8822 = vadd.f32 %v8787, %v8818
      %v8823 = vadd.f32 %v8788, %v8819
      %v8824 = vadd.f32 %v8789, %v8820
      %8825 = vrot.lane.b32.xlu0 %v747, 15
      %v8826 = vpop.permute.xlu0 %8825
      %8827 = vrot.lane.b32.xlu0 %v749, 15
      %v8828 = vpop.permute.xlu0 %8827
      %8829 = vrot.lane.b32.xlu0 %v748, 15
      %v8830 = vpop.permute.xlu0 %8829
      %8831 = vrot.lane.b32.xlu0 %v750, 15
      %v8832 = vpop.permute.xlu0 %8831
      %vm8833 = vcmp.lt.s32.totalorder %v8764, 15
      %v8834 = vsel %vm8833, %v8826, %v8830
      %v8835 = vsel %vm8833, %v8828, %v8832
      %v8836 = vsel %vm8833, %v8830, %v8826
      %v8837 = vsel %vm8833, %v8832, %v8828
      %8838 = vset.pattern.permute.xlu0 2
      %8839 = vperm.xlu0 %8838, %v8751
      %v8840 = vpop.permute.xlu0 %8839
      %8842 = vset.pattern.permute.xlu0 2
      %8843 = vperm.xlu0 %8842, %v8752
      %v8844 = vpop.permute.xlu0 %8843
      %v8846 = vmul.f32 %v8836, %v8840
      %v8847 = vmul.f32 %v8834, %v8840
      %v8848 = vmul.f32 %v8837, %v8844
      %v8849 = vmul.f32 %v8835, %v8844
      %v8850 = vperm.slane %v8745, 2
      %v8851 = vperm.slane %v8746, 2
      %v8852 = vmul.f32 %v8846, %v8850
      %v8853 = vmul.f32 %v8847, %v8851
      %v8854 = vmul.f32 %v8848, %v8850
      %v8855 = vmul.f32 %v8849, %v8851
      %v8856 = vadd.f32 %v8821, %v8852
      %v8857 = vadd.f32 %v8822, %v8853
      %v8858 = vadd.f32 %v8823, %v8854
      %v8859 = vadd.f32 %v8824, %v8855
      %8860 = vrot.lane.b32.xlu0 %v747, 1
      %v8861 = vpop.permute.xlu0 %8860
      %8862 = vrot.lane.b32.xlu0 %v749, 1
      %v8863 = vpop.permute.xlu0 %8862
      %8864 = vrot.lane.b32.xlu0 %v748, 1
      %v8865 = vpop.permute.xlu0 %8864
      %8866 = vrot.lane.b32.xlu0 %v750, 1
      %v8867 = vpop.permute.xlu0 %8866
      %vm8868 = vcmp.lt.s32.totalorder %v8764, 1
      %v8869 = vsel %vm8868, %v8861, %v8865
      %v8870 = vsel %vm8868, %v8863, %v8867
      %v8871 = vsel %vm8868, %v8865, %v8861
      %v8872 = vsel %vm8868, %v8867, %v8863
      %8873 = vset.pattern.permute.xlu0 3
      %8874 = vperm.xlu0 %8873, %v8751
      %v8875 = vpop.permute.xlu0 %8874
      %8877 = vset.pattern.permute.xlu0 3
      %8878 = vperm.xlu0 %8877, %v8752
      %v8879 = vpop.permute.xlu0 %8878
      %v8881 = vmul.f32 %v8871, %v8875
      %v8882 = vmul.f32 %v8869, %v8875
      %v8883 = vmul.f32 %v8872, %v8879
      %v8884 = vmul.f32 %v8870, %v8879
      %v8885 = vperm.slane %v8745, 3
      %v8886 = vperm.slane %v8746, 3
      %v8887 = vmul.f32 %v8881, %v8885
      %v8888 = vmul.f32 %v8882, %v8886
      %v8889 = vmul.f32 %v8883, %v8885
      %v8890 = vmul.f32 %v8884, %v8886
      %v8891 = vadd.f32 %v8856, %v8887
      %v8892 = vadd.f32 %v8857, %v8888
      %v8893 = vadd.f32 %v8858, %v8889
      %v8894 = vadd.f32 %v8859, %v8890
      %8895 = vset.pattern.permute.xlu0 4
      %8896 = vperm.xlu0 %8895, %v8751
      %v8897 = vpop.permute.xlu0 %8896
      %8899 = vset.pattern.permute.xlu0 4
      %8900 = vperm.xlu0 %8899, %v8752
      %v8901 = vpop.permute.xlu0 %8900
      %v8903 = vmul.f32 %v747, %v8897
      %v8904 = vmul.f32 %v748, %v8897
      %v8905 = vmul.f32 %v749, %v8901
      %v8906 = vmul.f32 %v750, %v8901
      %v8907 = vadd.f32 %v8891, %v8903
      %v8908 = vadd.f32 %v8892, %v8904
      %v8909 = vadd.f32 %v8893, %v8905
      %v8910 = vadd.f32 %v8894, %v8906
      %8911 = vrot.lane.b32.xlu0 %v747, 127
      %v8912 = vpop.permute.xlu0 %8911
      %8913 = vrot.lane.b32.xlu0 %v749, 127
      %v8914 = vpop.permute.xlu0 %8913
      %8915 = vrot.lane.b32.xlu0 %v748, 127
      %v8916 = vpop.permute.xlu0 %8915
      %8917 = vrot.lane.b32.xlu0 %v750, 127
      %v8918 = vpop.permute.xlu0 %8917
      %vm8919 = vcmp.lt.s32.totalorder %v8764, 127
      %v8920 = vsel %vm8919, %v8912, %v8916
      %v8921 = vsel %vm8919, %v8914, %v8918
      %v8922 = vsel %vm8919, %v8916, %v8912
      %v8923 = vsel %vm8919, %v8918, %v8914
      %8924 = vset.pattern.permute.xlu0 5
      %8925 = vperm.xlu0 %8924, %v8751
      %v8926 = vpop.permute.xlu0 %8925
      %8928 = vset.pattern.permute.xlu0 5
      %8929 = vperm.xlu0 %8928, %v8752
      %v8930 = vpop.permute.xlu0 %8929
      %v8932 = vmul.f32 %v8920, %v8926
      %v8933 = vmul.f32 %v8922, %v8926
      %v8934 = vmul.f32 %v8921, %v8930
      %v8935 = vmul.f32 %v8923, %v8930
      %v8936 = vperm.slane %v8745, 5
      %v8937 = vperm.slane %v8746, 5
      %v8938 = vmul.f32 %v8932, %v8936
      %v8939 = vmul.f32 %v8933, %v8937
      %v8940 = vmul.f32 %v8934, %v8936
      %v8941 = vmul.f32 %v8935, %v8937
      %v8942 = vadd.f32 %v8907, %v8938
      %v8943 = vadd.f32 %v8908, %v8939
      %v8944 = vadd.f32 %v8909, %v8940
      %v8945 = vadd.f32 %v8910, %v8941
      %8946 = vrot.lane.b32.xlu0 %v747, 113
      %v8947 = vpop.permute.xlu0 %8946
      %8948 = vrot.lane.b32.xlu0 %v749, 113
      %v8949 = vpop.permute.xlu0 %8948
      %8950 = vrot.lane.b32.xlu0 %v748, 113
      %v8951 = vpop.permute.xlu0 %8950
      %8952 = vrot.lane.b32.xlu0 %v750, 113
      %v8953 = vpop.permute.xlu0 %8952
      %vm8954 = vcmp.lt.s32.totalorder %v8764, 113
      %v8955 = vsel %vm8954, %v8947, %v8951
      %v8956 = vsel %vm8954, %v8949, %v8953
      %v8957 = vsel %vm8954, %v8951, %v8947
      %v8958 = vsel %vm8954, %v8953, %v8949
      %8959 = vset.pattern.permute.xlu0 6
      %8960 = vperm.xlu0 %8959, %v8751
      %v8961 = vpop.permute.xlu0 %8960
      %8963 = vset.pattern.permute.xlu0 6
      %8964 = vperm.xlu0 %8963, %v8752
      %v8965 = vpop.permute.xlu0 %8964
      %v8967 = vmul.f32 %v8955, %v8961
      %v8968 = vmul.f32 %v8957, %v8961
      %v8969 = vmul.f32 %v8956, %v8965
      %v8970 = vmul.f32 %v8958, %v8965
      %v8971 = vperm.slane %v8745, 6
      %v8972 = vperm.slane %v8746, 6
      %v8973 = vmul.f32 %v8967, %v8971
      %v8974 = vmul.f32 %v8968, %v8972
      %v8975 = vmul.f32 %v8969, %v8971
      %v8976 = vmul.f32 %v8970, %v8972
      %v8977 = vadd.f32 %v8942, %v8973
      %v8978 = vadd.f32 %v8943, %v8974
      %v8979 = vadd.f32 %v8944, %v8975
      %v8980 = vadd.f32 %v8945, %v8976
      %8981 = vrot.lane.b32.xlu0 %v747, 112
      %v8982 = vpop.permute.xlu0 %8981
      %8983 = vrot.lane.b32.xlu0 %v749, 112
      %v8984 = vpop.permute.xlu0 %8983
      %8985 = vrot.lane.b32.xlu0 %v748, 112
      %v8986 = vpop.permute.xlu0 %8985
      %8987 = vrot.lane.b32.xlu0 %v750, 112
      %v8988 = vpop.permute.xlu0 %8987
      %vm8989 = vcmp.lt.s32.totalorder %v8764, 112
      %v8990 = vsel %vm8989, %v8982, %v8986
      %v8991 = vsel %vm8989, %v8984, %v8988
      %v8992 = vsel %vm8989, %v8986, %v8982
      %v8993 = vsel %vm8989, %v8988, %v8984
      %8994 = vset.pattern.permute.xlu0 7
      %8995 = vperm.xlu0 %8994, %v8751
      %v8996 = vpop.permute.xlu0 %8995
      %8998 = vset.pattern.permute.xlu0 7
      %8999 = vperm.xlu0 %8998, %v8752
      %v9000 = vpop.permute.xlu0 %8999
      %v9002 = vmul.f32 %v8990, %v8996
      %v9003 = vmul.f32 %v8992, %v8996
      %v9004 = vmul.f32 %v8991, %v9000
      %v9005 = vmul.f32 %v8993, %v9000
      %v9006 = vperm.slane %v8745, 7
      %v9007 = vperm.slane %v8746, 7
      %v9008 = vmul.f32 %v9002, %v9006
      %v9009 = vmul.f32 %v9003, %v9007
      %v9010 = vmul.f32 %v9004, %v9006
      %v9011 = vmul.f32 %v9005, %v9007
      %v9012 = vadd.f32 %v8977, %v9008
      %v9013 = vadd.f32 %v8978, %v9009
      %v9014 = vadd.f32 %v8979, %v9010
      %v9015 = vadd.f32 %v8980, %v9011
      %9016 = vrot.lane.b32.xlu0 %v747, 111
      %v9017 = vpop.permute.xlu0 %9016
      %9018 = vrot.lane.b32.xlu0 %v749, 111
      %v9019 = vpop.permute.xlu0 %9018
      %9020 = vrot.lane.b32.xlu0 %v748, 111
      %v9021 = vpop.permute.xlu0 %9020
      %9022 = vrot.lane.b32.xlu0 %v750, 111
      %v9023 = vpop.permute.xlu0 %9022
      %vm9024 = vcmp.lt.s32.totalorder %v8764, 111
      %v9025 = vsel %vm9024, %v9017, %v9021
      %v9026 = vsel %vm9024, %v9019, %v9023
      %v9027 = vsel %vm9024, %v9021, %v9017
      %v9028 = vsel %vm9024, %v9023, %v9019
      %9029 = vset.pattern.permute.xlu0 8
      %9030 = vperm.xlu0 %9029, %v8751
      %v9031 = vpop.permute.xlu0 %9030
      %9033 = vset.pattern.permute.xlu0 8
      %9034 = vperm.xlu0 %9033, %v8752
      %v9035 = vpop.permute.xlu0 %9034
      %v9037 = vmul.f32 %v9025, %v9031
      %v9038 = vmul.f32 %v9027, %v9031
      %v9039 = vmul.f32 %v9026, %v9035
      %v9040 = vmul.f32 %v9028, %v9035
      %v9041 = vperm.slane %v8747, 0
      %v9042 = vperm.slane %v8748, 0
      %v9043 = vmul.f32 %v9037, %v9041
      %v9044 = vmul.f32 %v9038, %v9042
      %v9045 = vmul.f32 %v9039, %v9041
      %v9046 = vmul.f32 %v9040, %v9042
      %v9047 = vadd.f32 %v9012, %v9043
      %v9048 = vadd.f32 %v9013, %v9044
      %v9049 = vadd.f32 %v9014, %v9045
      %v9050 = vadd.f32 %v9015, %v9046
      %9052 = vset.pattern.permute.xlu0 0
      %9053 = vperm.xlu0 %9052, %v8753
      %v9054 = vpop.permute.xlu0 %9053
      %9057 = vset.pattern.permute.xlu0 0
      %9058 = vperm.xlu0 %9057, %v8754
      %v9059 = vpop.permute.xlu0 %9058
      %v9061 = vadd.f32 %v9047, %v9054
      %v9062 = vadd.f32 %v9048, %v9054
      %v9063 = vadd.f32 %v9049, %v9059
      %v9064 = vadd.f32 %v9050, %v9059
      %v9065 = vld [vmem:[%s13] sm:$0xff]
      %v9066 = vld [vmem:[%s13 + $0x8] sm:$0xff]
      %v9067 = vld [vmem:[%s14] sm:$0xff]
      %v9068 = vld [vmem:[%s14 + $0x8] sm:$0xff]
      %9069 = vrot.lane.b32.xlu0 %v9061, 34
      %v9070 = vpop.permute.xlu0 %9069
      %9071 = vrot.lane.b32.xlu0 %v9063, 34
      %v9072 = vpop.permute.xlu0 %9071
      %9073 = vrot.lane.b32.xlu0 %v9062, 34
      %v9074 = vpop.permute.xlu0 %9073
      %9075 = vrot.lane.b32.xlu0 %v9064, 34
      %v9076 = vpop.permute.xlu0 %9075
      %vm9077 = vcmp.lt.s32.totalorder %v8764, 34
      %v9078 = vsel %vm9077, %v9070, %v9074
      %v9079 = vsel %vm9077, %v9072, %v9076
      %v9080 = vsel %vm9077, %v9074, %v9070
      %v9081 = vsel %vm9077, %v9076, %v9072
      %9083 = vset.pattern.permute.xlu0 0
      %9084 = vperm.xlu0 %9083, %v9065
      %v9085 = vpop.permute.xlu0 %9084
      %9088 = vset.pattern.permute.xlu0 0
      %9089 = vperm.xlu0 %9088, %v9066
      %v9090 = vpop.permute.xlu0 %9089
      %v9092 = vmul.f32 %v9080, %v9085
      %v9093 = vmul.f32 %v9078, %v9085
      %v9094 = vmul.f32 %v9081, %v9090
      %v9095 = vmul.f32 %v9079, %v9090
      %v9096 = vperm.slane %v8747, 1
      %v9097 = vperm.slane %v8748, 1
      %v9098 = vmul.f32 %v9092, %v9096
      %v9099 = vmul.f32 %v9093, %v9097
      %v9100 = vmul.f32 %v9094, %v9096
      %v9101 = vmul.f32 %v9095, %v9097
      %9102 = vrot.lane.b32.xlu0 %v9061, 32
      %v9103 = vpop.permute.xlu0 %9102
      %9104 = vrot.lane.b32.xlu0 %v9063, 32
      %v9105 = vpop.permute.xlu0 %9104
      %9106 = vrot.lane.b32.xlu0 %v9062, 32
      %v9107 = vpop.permute.xlu0 %9106
      %9108 = vrot.lane.b32.xlu0 %v9064, 32
      %v9109 = vpop.permute.xlu0 %9108
      %vm9110 = vcmp.lt.s32.totalorder %v8764, 32
      %v9111 = vsel %vm9110, %v9103, %v9107
      %v9112 = vsel %vm9110, %v9105, %v9109
      %v9113 = vsel %vm9110, %v9107, %v9103
      %v9114 = vsel %vm9110, %v9109, %v9105
      %9115 = vset.pattern.permute.xlu0 1
      %9116 = vperm.xlu0 %9115, %v9065
      %v9117 = vpop.permute.xlu0 %9116
      %9119 = vset.pattern.permute.xlu0 1
      %9120 = vperm.xlu0 %9119, %v9066
      %v9121 = vpop.permute.xlu0 %9120
      %v9123 = vmul.f32 %v9113, %v9117
      %v9124 = vmul.f32 %v9111, %v9117
      %v9125 = vmul.f32 %v9114, %v9121
      %v9126 = vmul.f32 %v9112, %v9121
      %v9127 = vperm.slane %v8747, 2
      %v9128 = vperm.slane %v8748, 2
      %v9129 = vmul.f32 %v9123, %v9127
      %v9130 = vmul.f32 %v9124, %v9128
      %v9131 = vmul.f32 %v9125, %v9127
      %v9132 = vmul.f32 %v9126, %v9128
      %v9133 = vadd.f32 %v9098, %v9129
      %v9134 = vadd.f32 %v9099, %v9130
      %v9135 = vadd.f32 %v9100, %v9131
      %v9136 = vadd.f32 %v9101, %v9132
      %9137 = vrot.lane.b32.xlu0 %v9061, 30
      %v9138 = vpop.permute.xlu0 %9137
      %9139 = vrot.lane.b32.xlu0 %v9063, 30
      %v9140 = vpop.permute.xlu0 %9139
      %9141 = vrot.lane.b32.xlu0 %v9062, 30
      %v9142 = vpop.permute.xlu0 %9141
      %9143 = vrot.lane.b32.xlu0 %v9064, 30
      %v9144 = vpop.permute.xlu0 %9143
      %vm9145 = vcmp.lt.s32.totalorder %v8764, 30
      %v9146 = vsel %vm9145, %v9138, %v9142
      %v9147 = vsel %vm9145, %v9140, %v9144
      %v9148 = vsel %vm9145, %v9142, %v9138
      %v9149 = vsel %vm9145, %v9144, %v9140
      %9150 = vset.pattern.permute.xlu0 2
      %9151 = vperm.xlu0 %9150, %v9065
      %v9152 = vpop.permute.xlu0 %9151
      %9154 = vset.pattern.permute.xlu0 2
      %9155 = vperm.xlu0 %9154, %v9066
      %v9156 = vpop.permute.xlu0 %9155
      %v9158 = vmul.f32 %v9148, %v9152
      %v9159 = vmul.f32 %v9146, %v9152
      %v9160 = vmul.f32 %v9149, %v9156
      %v9161 = vmul.f32 %v9147, %v9156
      %v9162 = vperm.slane %v8747, 3
      %v9163 = vperm.slane %v8748, 3
      %v9164 = vmul.f32 %v9158, %v9162
      %v9165 = vmul.f32 %v9159, %v9163
      %v9166 = vmul.f32 %v9160, %v9162
      %v9167 = vmul.f32 %v9161, %v9163
      %v9168 = vadd.f32 %v9133, %v9164
      %v9169 = vadd.f32 %v9134, %v9165
      %v9170 = vadd.f32 %v9135, %v9166
      %v9171 = vadd.f32 %v9136, %v9167
      %9172 = vrot.lane.b32.xlu0 %v9061, 2
      %v9173 = vpop.permute.xlu0 %9172
      %9174 = vrot.lane.b32.xlu0 %v9063, 2
      %v9175 = vpop.permute.xlu0 %9174
      %9176 = vrot.lane.b32.xlu0 %v9062, 2
      %v9177 = vpop.permute.xlu0 %9176
      %9178 = vrot.lane.b32.xlu0 %v9064, 2
      %v9179 = vpop.permute.xlu0 %9178
      %vm9180 = vcmp.lt.s32.totalorder %v8764, 2
      %v9181 = vsel %vm9180, %v9173, %v9177
      %v9182 = vsel %vm9180, %v9175, %v9179
      %v9183 = vsel %vm9180, %v9177, %v9173
      %v9184 = vsel %vm9180, %v9179, %v9175
      %9185 = vset.pattern.permute.xlu0 3
      %9186 = vperm.xlu0 %9185, %v9065
      %v9187 = vpop.permute.xlu0 %9186
      %9189 = vset.pattern.permute.xlu0 3
      %9190 = vperm.xlu0 %9189, %v9066
      %v9191 = vpop.permute.xlu0 %9190
      %v9193 = vmul.f32 %v9183, %v9187
      %v9194 = vmul.f32 %v9181, %v9187
      %v9195 = vmul.f32 %v9184, %v9191
      %v9196 = vmul.f32 %v9182, %v9191
      %v9197 = vperm.slane %v8747, 4
      %v9198 = vperm.slane %v8748, 4
      %v9199 = vmul.f32 %v9193, %v9197
      %v9200 = vmul.f32 %v9194, %v9198
      %v9201 = vmul.f32 %v9195, %v9197
      %v9202 = vmul.f32 %v9196, %v9198
      %v9203 = vadd.f32 %v9168, %v9199
      %v9204 = vadd.f32 %v9169, %v9200
      %v9205 = vadd.f32 %v9170, %v9201
      %v9206 = vadd.f32 %v9171, %v9202
      %9207 = vset.pattern.permute.xlu0 4
      %9208 = vperm.xlu0 %9207, %v9065
      %v9209 = vpop.permute.xlu0 %9208
      %9211 = vset.pattern.permute.xlu0 4
      %9212 = vperm.xlu0 %9211, %v9066
      %v9213 = vpop.permute.xlu0 %9212
      %v9215 = vmul.f32 %v9061, %v9209
      %v9216 = vmul.f32 %v9062, %v9209
      %v9217 = vmul.f32 %v9063, %v9213
      %v9218 = vmul.f32 %v9064, %v9213
      %v9219 = vadd.f32 %v9203, %v9215
      %v9220 = vadd.f32 %v9204, %v9216
      %v9221 = vadd.f32 %v9205, %v9217
      %v9222 = vadd.f32 %v9206, %v9218
      %9223 = vrot.lane.b32.xlu0 %v9061, 126
      %v9224 = vpop.permute.xlu0 %9223
      %9225 = vrot.lane.b32.xlu0 %v9063, 126
      %v9226 = vpop.permute.xlu0 %9225
      %9227 = vrot.lane.b32.xlu0 %v9062, 126
      %v9228 = vpop.permute.xlu0 %9227
      %9229 = vrot.lane.b32.xlu0 %v9064, 126
      %v9230 = vpop.permute.xlu0 %9229
      %vm9231 = vcmp.lt.s32.totalorder %v8764, 126
      %v9232 = vsel %vm9231, %v9224, %v9228
      %v9233 = vsel %vm9231, %v9226, %v9230
      %v9234 = vsel %vm9231, %v9228, %v9224
      %v9235 = vsel %vm9231, %v9230, %v9226
      %9236 = vset.pattern.permute.xlu0 5
      %9237 = vperm.xlu0 %9236, %v9065
      %v9238 = vpop.permute.xlu0 %9237
      %9240 = vset.pattern.permute.xlu0 5
      %9241 = vperm.xlu0 %9240, %v9066
      %v9242 = vpop.permute.xlu0 %9241
      %v9244 = vmul.f32 %v9232, %v9238
      %v9245 = vmul.f32 %v9234, %v9238
      %v9246 = vmul.f32 %v9233, %v9242
      %v9247 = vmul.f32 %v9235, %v9242
      %v9248 = vperm.slane %v8747, 6
      %v9249 = vperm.slane %v8748, 6
      %v9250 = vmul.f32 %v9244, %v9248
      %v9251 = vmul.f32 %v9245, %v9249
      %v9252 = vmul.f32 %v9246, %v9248
      %v9253 = vmul.f32 %v9247, %v9249
      %v9254 = vadd.f32 %v9219, %v9250
      %v9255 = vadd.f32 %v9220, %v9251
      %v9256 = vadd.f32 %v9221, %v9252
      %v9257 = vadd.f32 %v9222, %v9253
      %9258 = vrot.lane.b32.xlu0 %v9061, 98
      %v9259 = vpop.permute.xlu0 %9258
      %9260 = vrot.lane.b32.xlu0 %v9063, 98
      %v9261 = vpop.permute.xlu0 %9260
      %9262 = vrot.lane.b32.xlu0 %v9062, 98
      %v9263 = vpop.permute.xlu0 %9262
      %9264 = vrot.lane.b32.xlu0 %v9064, 98
      %v9265 = vpop.permute.xlu0 %9264
      %vm9266 = vcmp.lt.s32.totalorder %v8764, 98
      %v9267 = vsel %vm9266, %v9259, %v9263
      %v9268 = vsel %vm9266, %v9261, %v9265
      %v9269 = vsel %vm9266, %v9263, %v9259
      %v9270 = vsel %vm9266, %v9265, %v9261
      %9271 = vset.pattern.permute.xlu0 6
      %9272 = vperm.xlu0 %9271, %v9065
      %v9273 = vpop.permute.xlu0 %9272
      %9275 = vset.pattern.permute.xlu0 6
      %9276 = vperm.xlu0 %9275, %v9066
      %v9277 = vpop.permute.xlu0 %9276
      %v9279 = vmul.f32 %v9267, %v9273
      %v9280 = vmul.f32 %v9269, %v9273
      %v9281 = vmul.f32 %v9268, %v9277
      %v9282 = vmul.f32 %v9270, %v9277
      %v9283 = vperm.slane %v8747, 7
      %v9284 = vperm.slane %v8748, 7
      %v9285 = vmul.f32 %v9279, %v9283
      %v9286 = vmul.f32 %v9280, %v9284
      %v9287 = vmul.f32 %v9281, %v9283
      %v9288 = vmul.f32 %v9282, %v9284
      %v9289 = vadd.f32 %v9254, %v9285
      %v9290 = vadd.f32 %v9255, %v9286
      %v9291 = vadd.f32 %v9256, %v9287
      %v9292 = vadd.f32 %v9257, %v9288
      %9293 = vrot.lane.b32.xlu0 %v9061, 96
      %v9294 = vpop.permute.xlu0 %9293
      %9295 = vrot.lane.b32.xlu0 %v9063, 96
      %v9296 = vpop.permute.xlu0 %9295
      %9297 = vrot.lane.b32.xlu0 %v9062, 96
      %v9298 = vpop.permute.xlu0 %9297
      %9299 = vrot.lane.b32.xlu0 %v9064, 96
      %v9300 = vpop.permute.xlu0 %9299
      %vm9301 = vcmp.lt.s32.totalorder %v8764, 96
      %v9302 = vsel %vm9301, %v9294, %v9298
      %v9303 = vsel %vm9301, %v9296, %v9300
      %v9304 = vsel %vm9301, %v9298, %v9294
      %v9305 = vsel %vm9301, %v9300, %v9296
      %9306 = vset.pattern.permute.xlu0 7
      %9307 = vperm.xlu0 %9306, %v9065
      %v9308 = vpop.permute.xlu0 %9307
      %9310 = vset.pattern.permute.xlu0 7
      %9311 = vperm.xlu0 %9310, %v9066
      %v9312 = vpop.permute.xlu0 %9311
      %v9314 = vmul.f32 %v9302, %v9308
      %v9315 = vmul.f32 %v9304, %v9308
      %v9316 = vmul.f32 %v9303, %v9312
      %v9317 = vmul.f32 %v9305, %v9312
      %v9318 = vperm.slane %v8749, 0
      %v9319 = vperm.slane %v8750, 0
      %v9320 = vmul.f32 %v9314, %v9318
      %v9321 = vmul.f32 %v9315, %v9319
      %v9322 = vmul.f32 %v9316, %v9318
      %v9323 = vmul.f32 %v9317, %v9319
      %v9324 = vadd.f32 %v9289, %v9320
      %v9325 = vadd.f32 %v9290, %v9321
      %v9326 = vadd.f32 %v9291, %v9322
      %v9327 = vadd.f32 %v9292, %v9323
      %9328 = vrot.lane.b32.xlu0 %v9061, 94
      %v9329 = vpop.permute.xlu0 %9328
      %9330 = vrot.lane.b32.xlu0 %v9063, 94
      %v9331 = vpop.permute.xlu0 %9330
      %9332 = vrot.lane.b32.xlu0 %v9062, 94
      %v9333 = vpop.permute.xlu0 %9332
      %9334 = vrot.lane.b32.xlu0 %v9064, 94
      %v9335 = vpop.permute.xlu0 %9334
      %vm9336 = vcmp.lt.s32.totalorder %v8764, 94
      %v9337 = vsel %vm9336, %v9329, %v9333
      %v9338 = vsel %vm9336, %v9331, %v9335
      %v9339 = vsel %vm9336, %v9333, %v9329
      %v9340 = vsel %vm9336, %v9335, %v9331
      %9341 = vset.pattern.permute.xlu0 8
      %9342 = vperm.xlu0 %9341, %v9065
      %v9343 = vpop.permute.xlu0 %9342
      %9345 = vset.pattern.permute.xlu0 8
      %9346 = vperm.xlu0 %9345, %v9066
      %v9347 = vpop.permute.xlu0 %9346
      %v9349 = vmul.f32 %v9337, %v9343
      %v9350 = vmul.f32 %v9339, %v9343
      %v9351 = vmul.f32 %v9338, %v9347
      %v9352 = vmul.f32 %v9340, %v9347
      %v9353 = vperm.slane %v8749, 1
      %v9354 = vperm.slane %v8750, 1
      %v9355 = vmul.f32 %v9349, %v9353
      %v9356 = vmul.f32 %v9350, %v9354
      %v9357 = vmul.f32 %v9351, %v9353
      %v9358 = vmul.f32 %v9352, %v9354
      %v9359 = vadd.f32 %v9324, %v9355
      %v9360 = vadd.f32 %v9325, %v9356
      %v9361 = vadd.f32 %v9326, %v9357
      %v9362 = vadd.f32 %v9327, %v9358
      %9364 = vset.pattern.permute.xlu0 0
      %9365 = vperm.xlu0 %9364, %v9067
      %v9366 = vpop.permute.xlu0 %9365
      %9369 = vset.pattern.permute.xlu0 0
      %9370 = vperm.xlu0 %9369, %v9068
      %v9371 = vpop.permute.xlu0 %9370
      %v9373 = vadd.f32 %v9359, %v9366
      %v9374 = vadd.f32 %v9360, %v9366
      %v9375 = vadd.f32 %v9361, %v9371
      %v9376 = vadd.f32 %v9362, %v9371
      %v9377 = vadd.f32 %v8717, %v9373
      %v9378 = vadd.f32 %v8740, %v9374
      %v9379 = vadd.f32 %v8720, %v9375
      %v9380 = vadd.f32 %v8743, %v9376
      %9381 = vst [vmem:[%s521] sm:$0xff] %v9377
      %9382 = vst [vmem:[%s521 + $0x8] sm:$0xff] %v9378
      %9383 = vst [vmem:[%s521 + $0x10] sm:$0xff] %v9379
      %9384 = vst [vmem:[%s521 + $0x18] sm:$0xff] %v9380
      %p9385 = scmp.lt.s32.totalorder %s27, 1
      %s9386 = scalar_select %p9385, %s27, 1
      %s9387 = smul.addr %s9386, 4
      %s9388 = smul.addr %s9387, 8
      %s9389 = scalar_lea.vmem %s16, %s9388
      // Predicated region
      $region85: #{wavelet_downsample_forward.1} parent=83 // pred_check
        %p9390 = pneg %p386
      $region86: #{wavelet_downsample_forward.1} parent=83 // pred_check_branch
        %9392 = sbr.rel (%p9390) target = $region88
      $region87: #{wavelet_downsample_forward.1} parent=83 // pred_region
        _
      $region88: #{wavelet_downsample_forward.1} parent=83 // pred_fallthru
        _
    $region84: #{wavelet_downsample_forward.1} parent=5 // pred_fallthru
      _
    %p9393 = scmp.le.s32.totalorder 2, %s22
    // Predicated region
    $region89: #{wavelet_downsample_forward.1} parent=5 // pred_check
      %p9394 = pneg %p9393
    $region90: #{wavelet_downsample_forward.1} parent=5 // pred_check_branch
      %9396 = sbr.rel (%p9394) target = $region92
    $region91: #{wavelet_downsample_forward.1} parent=5 // pred_region
      %s9397 = ssub.s32 %s22, 2
      // Predicated region
      $region93: #{wavelet_downsample_forward.1} parent=91 // pred_check
        %p9398 = pneg %p392
      $region94: #{wavelet_downsample_forward.1} parent=91 // pred_check_branch
        %9400 = sbr.rel (%p9398) target = $region96
      $region95: #{wavelet_downsample_forward.1} parent=91 // pred_region
        %p9401 = scmp.lt.s32.totalorder %s28, 1
        %s9402 = scalar_select %p9401, %s28, 1
        %s9403 = smul.addr %s9402, 4
        %s9404 = smul.addr %s9403, 8
        %s9405 = scalar_lea.vmem %s16, %s9404
      $region96: #{wavelet_downsample_forward.1} parent=91 // pred_fallthru
        _
    $region92: #{wavelet_downsample_forward.1} parent=5 // pred_fallthru
      _
  $region6: #{wavelet_downsample_forward.1} parent=0 // loop_footer
    %s26 = sadd.s32 1, %s22
  $region7: #{wavelet_downsample_forward.1} parent=0 // loop_footer_branch
    %21 = sbr.rel target = $region3
  $region8: #{wavelet_downsample_forward.1} parent=0 // loop_exit
    _

</llo_original>
